<compile_context>
chip_gen: v7x
topology: tpu7x:2x2x1
jax: 0.10.0
libtpu: 0.0.40
codegen_flags: <defaults>
</compile_context>

<pallas_src>
import jax
import jax.numpy as jnp
from jax.experimental import pallas as pl
from jax.experimental.pallas import tpu as pltpu


# ----------------------------- tiled matmul kernel ---------------------------

def _matmul_bias_kernel(x_ref, w_ref, b_ref, o_ref):
    o_ref[...] = (
        jnp.dot(x_ref[...], w_ref[...], preferred_element_type=jnp.float32)
        + b_ref[...]
    ).astype(o_ref.dtype)


def matmul_bias(x, w, b, tm=2048):
    """(M,K) @ (K,N) + b[N] -> (M,N) bf16.

    bf16 MXU operands, f32 accumulation + bias, M tiled with a "parallel" grid axis.
    No XLA-side pad of M: the ragged last tile is handled by Pallas boundary masking.
    K and N are kept whole (small here); N should be lane-dense (multiple of 128).
    """
    M, K = x.shape
    N = w.shape[1]
    if x.dtype != jnp.bfloat16:           # caller already emits bf16; this is a no-op
        x = x.astype(jnp.bfloat16)
    w = w.astype(jnp.bfloat16)
    b2 = b.reshape(1, N).astype(jnp.float32)

    tm_eff = min(tm, ((M + 7) // 8) * 8)  # keep sublane dim a multiple of 8
    grid_m = pl.cdiv(M, tm_eff)

    return pl.pallas_call(
        _matmul_bias_kernel,
        out_shape=jax.ShapeDtypeStruct((M, N), jnp.bfloat16),
        grid=(grid_m,),
        in_specs=[
            pl.BlockSpec((tm_eff, K), lambda i: (i, 0)),
            pl.BlockSpec((K, N), lambda i: (0, 0)),
            pl.BlockSpec((1, N), lambda i: (0, 0)),
        ],
        out_specs=pl.BlockSpec((tm_eff, N), lambda i: (i, 0)),
        compiler_params=pltpu.CompilerParams(dimension_semantics=("parallel",)),
    )(x, w, b2)


# ------------------ deconv(2x2,s2) + conv(3x3) phase fusion -------------------

# For output parity a (row) / b (col), window index r/s, the list of
# (3x3-conv tap index dyi=dy+1, deconv kernel index kh) that land there.
_TAPS = {0: {0: ((0, 1),), 1: ((1, 0), (2, 1))},
         1: {0: ((0, 0), (1, 1)), 1: ((2, 0),)}}


def _fuse_block_weights(tw, tb, cw, cb):
    """Compose ConvTranspose2d(k=2,s=2) with Conv2d(3x3,pad=1).

    Returns:
      wf: (4, 4*(Cin+1), Cout) bf16 — one fused 2x2-conv weight per output parity
          (phase index = 2*a + b); K layout = [(r,s) major, then Cin real channels
          followed by the "ones" channel that carries the deconv bias].
      b3: (1, Cout) f32 — the Conv2d bias.
    """
    cin = tw.shape[0]
    cout = cw.shape[-1]
    tw = tw.astype(jnp.float32)
    tb = tb.astype(jnp.float32)
    cw = cw.astype(jnp.float32)
    cb = cb.astype(jnp.float32)

    phase_ws = []
    for a in range(2):
        for b in range(2):
            rs_blocks = []
            for r in range(2):
                for s in range(2):
                    wk = jnp.zeros((cin, cout), jnp.float32)
                    bk = jnp.zeros((cout,), jnp.float32)
                    for dyi, kh in _TAPS[a][r]:
                        for dxi, kw in _TAPS[b][s]:
                            wk = wk + tw[:, kh, kw, :] @ cw[dyi, dxi]
                            bk = bk + tb @ cw[dyi, dxi]
                    rs_blocks.append(jnp.concatenate([wk, bk[None, :]], axis=0))
            phase_ws.append(jnp.concatenate(rs_blocks, axis=0))     # (4*(Cin+1), Cout)
    wf = jnp.stack(phase_ws, axis=0).astype(jnp.bfloat16)            # (4, 4*(Cin+1), Cout)
    b3 = cb.reshape(1, cout).astype(jnp.float32)
    return wf, b3


# ------------------- fused FeatUpsampleBlock chain kernel --------------------

def _make_upchain_kernel(cfgs):
    """Kernel running a whole nn.Sequential of (phase-fused) FeatUpsampleBlocks.

    cfgs: tuple of (H, W, Cin, C) static shapes, one per block.
    Ref order: x, then per block (wf, b3), then the output ref.
    """
    n = len(cfgs)

    def kernel(*refs):
        x_ref = refs[0]
        o_ref = refs[-1]
        w_refs = refs[1:-1]

        H0, W0, C0, _ = cfgs[0]
        cur = x_ref[0].reshape(H0, W0, C0)                 # (H, W, Cin) bf16
        for j, (H, W, Cin, C) in enumerate(cfgs):
            wf_ref, b3_ref = w_refs[2 * j: 2 * j + 2]
            Cp = Cin + 1

            # Augment with a ones channel (carries the deconv bias; zero in padding
            # so image borders stay exact), then zero-pad by 1 on the SMALL grid.
            ones = jnp.ones((H, W, 1), jnp.bfloat16)
            xa = jnp.concatenate([cur, ones], axis=-1)               # (H, W, Cp)
            zr = jnp.zeros((1, W, Cp), jnp.bfloat16)
            xa = jnp.concatenate([zr, xa, zr], axis=0)               # (H+2, W, Cp)
            zc = jnp.zeros((H + 2, 1, Cp), jnp.bfloat16)
            xa = jnp.concatenate([zc, xa, zc], axis=1)               # (H+2, W+2, Cp)

            # 4 phase convolutions (2x2, K = 4*Cp) over the un-upsampled grid.
            phases = []
            for a in range(2):
                for b in range(2):
                    op = jnp.concatenate(
                        [xa[a:a + H,     b:b + W,     :],            # (r=0, s=0)
                         xa[a:a + H,     b + 1:b + W + 1, :],        # (r=0, s=1)
                         xa[a + 1:a + H + 1, b:b + W,     :],        # (r=1, s=0)
                         xa[a + 1:a + H + 1, b + 1:b + W + 1, :]],   # (r=1, s=1)
                        axis=-1).reshape(H * W, 4 * Cp)
                    ph = (jnp.dot(op, wf_ref[2 * a + b],
                                  preferred_element_type=jnp.float32)
                          + b3_ref[...])                             # (H*W, C) f32
                    phases.append(ph.reshape(H, W, C))

            if j + 1 < n:                                            # interleave in bf16
                phases = [p.astype(jnp.bfloat16) for p in phases]

            # Single 2x2 pixel interleave per block: out[2h+a, 2w+b] = phases[2a+b][h,w]
            row0 = jnp.stack([phases[0], phases[1]], axis=2).reshape(H, 2 * W, C)
            row1 = jnp.stack([phases[2], phases[3]], axis=2).reshape(H, 2 * W, C)
            z = jnp.stack([row0, row1], axis=1).reshape(2 * H, 2 * W, C)

            if j + 1 < n:
                cur = z                                   # feeds next block; stays in VMEM
            else:
                # Lane-dense store: (1, Hp, Wp*C), unmasked vst when Wp*C % 128 == 0.
                o_ref[...] = z.reshape(1, 2 * H, 2 * W * C).astype(o_ref.dtype)

    return kernel


def upsample_chain(x_nhwc, blocks):
    """Run an `up{i}` Sequential of FeatUpsampleBlocks as ONE fused Pallas kernel."""
    B, H, W, Cin = x_nhwc.shape
    x2d = x_nhwc.reshape(B, H, W * Cin).astype(jnp.bfloat16)   # lane-dense input

    cfgs, operands, in_specs = [], [x2d], [pl.BlockSpec((1, H, W * Cin), lambda b: (b, 0, 0))]
    h, w, cin = H, W, Cin
    for blk in blocks:
        c = blk["tw"].shape[-1]
        wf, b3 = _fuse_block_weights(blk["tw"], blk["tb"], blk["cw"], blk["cb"])
        cfgs.append((h, w, cin, c))
        kdim = 4 * (cin + 1)
        operands += [wf, b3]
        in_specs += [pl.BlockSpec((4, kdim, c), lambda b: (0, 0, 0)),
                     pl.BlockSpec((1, c), lambda b: (0, 0))]
        h, w, cin = 2 * h, 2 * w, c

    out = pl.pallas_call(
        _make_upchain_kernel(tuple(cfgs)),
        out_shape=jax.ShapeDtypeStruct((B, h, w * cin), jnp.float32),
        grid=(B,),                                   # batch axis shards across TCs
        in_specs=in_specs,
        out_specs=pl.BlockSpec((1, h, w * cin), lambda b: (b, 0, 0)),
        compiler_params=pltpu.CompilerParams(dimension_semantics=("parallel",)),
    )(*operands)
    # TODO(synk): at production cellseg resolutions, add a leading "parallel" row-block
    # grid axis (1-row halo per block on the un-upsampled grid) so the per-image chain
    # working set fits v7x's 64 MiB VMEM and both its TensorCores stay busy at B=1-2.
    return out.reshape(B, h, w, cin)                 # NHWC, f32


# ------------------------------ parameter init --------------------------------

BACKBONE_CHS = (16, 24, 32)   # backbone.feature_info num_chs (shallow -> deep)
PATCH = 4                     # ViT-like backbone: all features at reduction=PATCH
OUT_CHANNELS = (64, 32, 16)   # EncoderUpsampler out_channels (deepest-first order)


def _init_linear(key, fan_in, shape_w, shape_b):
    kw, kb = jax.random.split(key)
    bound = 1.0 / (fan_in ** 0.5)
    w = jax.random.uniform(kw, shape_w, jnp.float32, -bound, bound)
    b = jax.random.uniform(kb, shape_b, jnp.float32, -bound, bound)
    return w, b


def init_backbone_params(key, in_chs=3, patch=PATCH):
    fan = in_chs * patch * patch
    params = []
    for i, c in enumerate(BACKBONE_CHS):
        w, b = _init_linear(jax.random.fold_in(key, i), fan, (fan, c), (c,))
        params.append({"w": w, "b": b})
    return params


def init_upsampler_params(key, backbone_chs=BACKBONE_CHS, out_channels=OUT_CHANNELS):
    rev_chs = backbone_chs[::-1]              # deepest first (mirrors __init__)
    params = {}
    bw, bb = _init_linear(jax.random.fold_in(key, 0), rev_chs[0],
                          (rev_chs[0], out_channels[0]), (out_channels[0],))
    params["bottleneck"] = {"w": bw, "b": bb}
    for i, (out_chls, in_chs) in enumerate(zip(out_channels[1:], rev_chs[1:]), start=1):
        n_blocks = i
        squeeze_rates = list(range(n_blocks))[::-1]
        blocks = []
        cur_in = in_chs
        for j, sq in zip(range(n_blocks), squeeze_rates):
            oc = out_chls * 2 ** sq
            k = jax.random.fold_in(key, 100 * i + j)
            k1, k2 = jax.random.split(k)
            # ConvTranspose2d weights stored as (Cin, kH, kW, Cout)
            tw, tb = _init_linear(k1, cur_in * 4, (cur_in, 2, 2, oc), (oc,))
            # Conv2d 3x3 weights stored as (kH, kW, Cin, Cout)
            cw, cb = _init_linear(k2, oc * 9, (3, 3, oc, oc), (oc,))
            blocks.append({"tw": tw, "tb": tb, "cw": cw, "cb": cb})
            cur_in = oc
        params[f"up{i}"] = blocks
    return params


# --------------------------------- forward ------------------------------------

def backbone_and_bottleneck(bb_params, bneck_params, x_nchw, patch=PATCH):
    """Synthetic ViT-like backbone (3 patch-embed projections) + the bottleneck 1x1 conv,
    fused into ONE lane-dense tiled Pallas matmul (single HBM read of the patch matrix,
    emitted directly in bf16, bf16 writeback)."""
    B, C, H, W = x_nchw.shape
    h, w = H // patch, W // patch
    p = x_nchw.astype(jnp.bfloat16).reshape(B, C, h, patch, w, patch)
    p = p.transpose(0, 2, 4, 1, 3, 5).reshape(B * h * w, C * patch * patch)   # bf16

    ws = [prm["w"] for prm in bb_params]
    bs = [prm["b"] for prm in bb_params]
    # Compose the bottleneck Conv2d 1x1 with the deepest projection (f32 weight algebra),
    # then concatenate all output channels along N and pad N to a lane-dense multiple of 128.
    w_bn = ws[-1] @ bneck_params["w"]
    b_bn = bs[-1] @ bneck_params["w"] + bneck_params["b"]
    w_cat = jnp.concatenate(ws + [w_bn], axis=1)
    b_cat = jnp.concatenate(bs + [b_bn], axis=0)
    n_tot = w_cat.shape[1]
    n_pad = ((n_tot + 127) // 128) * 128
    w_cat = jnp.pad(w_cat, ((0, 0), (0, n_pad - n_tot)))
    b_cat = jnp.pad(b_cat, ((0, n_pad - n_tot),))

    y = matmul_bias(p, w_cat, b_cat)                       # (B*h*w, n_pad) bf16

    feats, off = [], 0
    for wi in ws:
        c = wi.shape[1]
        feats.append(y[:, off:off + c].reshape(B, h, w, c))          # bf16
        off += c
    c_bn = bneck_params["w"].shape[1]
    bneck = y[:, off:off + c_bn].reshape(B, h, w, c_bn).astype(jnp.float32)
    final_feat = jnp.mean(feats[-1].astype(jnp.float32), axis=(1, 2))   # f32 mean
    return final_feat, feats, bneck


def encoder_upsampler_forward(up_params, bb_params, x_nchw):
    """Mirrors EncoderUpsampler.forward.  Returns (final_feat, tuple(feats_nchw))."""
    final_feat, feats, bneck = backbone_and_bottleneck(
        bb_params, up_params["bottleneck"], x_nchw)
    feats = feats[::-1]                                    # deepest first
    intermediate = [bneck]                                 # bottleneck (fused into matmul)
    for i in range(1, len(feats)):
        intermediate.append(upsample_chain(feats[i], up_params[f"up{i}"]))
    # NCHW only at the module boundary (PyTorch convention).
    out = tuple(t.transpose(0, 3, 1, 2) for t in intermediate[::-1])
    return final_feat, out


# ----------------------------------- main --------------------------------------

if __name__ == "__main__":
    key = jax.random.PRNGKey(0)
    kx, kb, ku = jax.random.split(key, 3)

    x = jax.random.normal(kx, (2, 3, 16, 16), jnp.float32)   # NCHW input image
    bb_params = init_backbone_params(kb)
    up_params = init_upsampler_params(ku)

    fwd = jax.jit(encoder_upsampler_forward)
    final_feat, feats = fwd(up_params, bb_params, x)
    jax.block_until_ready((final_feat, feats))

    # PyTorch-equivalent NCHW shapes (shallow-most first):
    assert final_feat.shape == (2, 32)
    assert tuple(f.shape for f in feats) == ((2, 16, 16, 16), (2, 32, 8, 8), (2, 64, 4, 4))
    assert all(f.dtype == jnp.float32 for f in feats)

    print("KERNEL_OK")
</pallas_src>

<mosaic_0001>
module attributes {stable_mosaic.version = 11 : i64} {
  func.func @_matmul_bias_kernel(%arg0: i32, %arg1: memref<32x48xbf16, #tpu.memory_space<vmem>>, %arg2: memref<48x256xbf16, #tpu.memory_space<vmem>>, %arg3: memref<1x256xf32, #tpu.memory_space<vmem>>, %arg4: memref<32x256xbf16, #tpu.memory_space<vmem>>) attributes {dimension_semantics = [#tpu.dimension_semantics<parallel>], iteration_bounds = array<i64: 1>, scalar_prefetch = 0 : i64, scratch_operands = 0 : i64, tpu.core_type = #tpu.core_type<tc>, window_params = [{transform_indices = @transform_0, window_bounds = array<i64: 32, 48>}, {pipeline_mode = #tpu.pipeline_mode<synchronous>, transform_indices = @transform_1, window_bounds = array<i64: 48, 256>}, {pipeline_mode = #tpu.pipeline_mode<synchronous>, transform_indices = @transform_2, window_bounds = array<i64: 1, 256>}, {transform_indices = @transform_3, window_bounds = array<i64: 32, 256>}]} {
    %c0 = arith.constant 0 : index
    %c0_0 = arith.constant 0 : index
    %0 = vector.load %arg1[%c0, %c0_0] : memref<32x48xbf16, #tpu.memory_space<vmem>>, vector<32x48xbf16>
    %c0_1 = arith.constant 0 : index
    %c0_2 = arith.constant 0 : index
    %1 = vector.load %arg2[%c0_1, %c0_2] : memref<48x256xbf16, #tpu.memory_space<vmem>>, vector<48x256xbf16>
    %cst = arith.constant dense<0.000000e+00> : vector<32x256xf32>
    %2 = tpu.matmul %0, %1, %cst {dimension_numbers = #tpu.dot_dimension_numbers<[1], [0], [0], [1], [0, 0, 1, 1], [], []>} : vector<32x48xbf16>, vector<48x256xbf16>, vector<32x256xf32> -> vector<32x256xf32>
    %c0_3 = arith.constant 0 : index
    %c0_4 = arith.constant 0 : index
    %3 = vector.load %arg3[%c0_3, %c0_4] : memref<1x256xf32, #tpu.memory_space<vmem>>, vector<1x256xf32>
    %4 = vector.broadcast %3 : vector<1x256xf32> to vector<32x256xf32>
    %5 = arith.addf %2, %4 : vector<32x256xf32>
    %6 = arith.truncf %5 : vector<32x256xf32> to vector<32x256xbf16>
    %c0_5 = arith.constant 0 : index
    %c0_6 = arith.constant 0 : index
    %7 = vector.load %arg4[%c0_5, %c0_6] : memref<32x256xbf16, #tpu.memory_space<vmem>>, vector<32x256xbf16>
    tpu.vector_store %arg4[%c0_5, %c0_6], %6 {strides = array<i32>} : memref<32x256xbf16, #tpu.memory_space<vmem>>, vector<32x256xbf16>,
    return
  }
  func.func @transform_0(%arg0: i32) -> (i32, i32) {
    %c0_i32 = arith.constant 0 : i32
    %c0_i32_0 = arith.constant 0 : i32
    return %arg0, %c0_i32 : i32, i32
  }
  func.func @transform_1(%arg0: i32) -> (i32, i32) {
    %c0_i32 = arith.constant 0 : i32
    %c0_i32_0 = arith.constant 0 : i32
    %c0_i32_1 = arith.constant 0 : i32
    return %c0_i32, %c0_i32_0 : i32, i32
  }
  func.func @transform_2(%arg0: i32) -> (i32, i32) {
    %c0_i32 = arith.constant 0 : i32
    %c0_i32_0 = arith.constant 0 : i32
    %c0_i32_1 = arith.constant 0 : i32
    return %c0_i32, %c0_i32_0 : i32, i32
  }
  func.func @transform_3(%arg0: i32) -> (i32, i32) {
    %c0_i32 = arith.constant 0 : i32
    %c0_i32_0 = arith.constant 0 : i32
    return %arg0, %c0_i32 : i32, i32
  }
}

module attributes {stable_mosaic.version = 11 : i64} {
  func.func @kernel(%arg0: i32, %arg1: memref<1x4x64xbf16, #tpu.memory_space<vmem>>, %arg2: memref<4x68x32xbf16, #tpu.memory_space<vmem>>, %arg3: memref<1x32xf32, #tpu.memory_space<vmem>>, %arg4: memref<4x132x16xbf16, #tpu.memory_space<vmem>>, %arg5: memref<1x16xf32, #tpu.memory_space<vmem>>, %arg6: memref<1x16x256xf32, #tpu.memory_space<vmem>>) attributes {dimension_semantics = [#tpu.dimension_semantics<parallel>], iteration_bounds = array<i64: 2>, scalar_prefetch = 0 : i64, scratch_operands = 0 : i64, tpu.core_type = #tpu.core_type<tc>, window_params = [{transform_indices = @transform_0, window_bounds = array<i64: 1, 4, 64>}, {pipeline_mode = #tpu.pipeline_mode<synchronous>, transform_indices = @transform_1, window_bounds = array<i64: 4, 68, 32>}, {pipeline_mode = #tpu.pipeline_mode<synchronous>, transform_indices = @transform_2, window_bounds = array<i64: 1, 32>}, {pipeline_mode = #tpu.pipeline_mode<synchronous>, transform_indices = @transform_3, window_bounds = array<i64: 4, 132, 16>}, {pipeline_mode = #tpu.pipeline_mode<synchronous>, transform_indices = @transform_4, window_bounds = array<i64: 1, 16>}, {transform_indices = @transform_5, window_bounds = array<i64: 1, 16, 256>}]} {
    %c0 = arith.constant 0 : index
    %c0_0 = arith.constant 0 : index
    %c0_1 = arith.constant 0 : index
    %0 = vector.load %arg1[%c0, %c0_0, %c0_1] : memref<1x4x64xbf16, #tpu.memory_space<vmem>>, vector<1x4x64xbf16>
    %1 = vector.shape_cast %0 : vector<1x4x64xbf16> to vector<4x64xbf16>
    %2 = vector.shape_cast %1 : vector<4x64xbf16> to vector<4x4x16xbf16>
    %cst = arith.constant 1.000000e+00 : bf16
    %3 = vector.broadcast %cst : bf16 to vector<4x4x1xbf16>
    %4 = tpu.concatenate %2, %3 in 2 : vector<4x4x16xbf16>, vector<4x4x1xbf16> -> vector<4x4x17xbf16>
    %cst_2 = arith.constant 0.000000e+00 : bf16
    %5 = vector.broadcast %cst_2 : bf16 to vector<1x4x17xbf16>
    %6 = tpu.concatenate %5, %4, %5 in 0 : vector<1x4x17xbf16>, vector<4x4x17xbf16>, vector<1x4x17xbf16> -> vector<6x4x17xbf16>
    %cst_3 = arith.constant 0.000000e+00 : bf16
    %7 = vector.broadcast %cst_3 : bf16 to vector<6x1x17xbf16>
    %8 = tpu.concatenate %7, %6, %7 in 1 : vector<6x1x17xbf16>, vector<6x4x17xbf16>, vector<6x1x17xbf16> -> vector<6x6x17xbf16>
    %9 = vector.extract_strided_slice %8 {offsets = [0, 0, 0], sizes = [4, 4, 17], strides = [1, 1, 1]} : vector<6x6x17xbf16> to vector<4x4x17xbf16>
    %10 = vector.extract_strided_slice %8 {offsets = [0, 1, 0], sizes = [4, 4, 17], strides = [1, 1, 1]} : vector<6x6x17xbf16> to vector<4x4x17xbf16>
    %11 = vector.extract_strided_slice %8 {offsets = [1, 0, 0], sizes = [4, 4, 17], strides = [1, 1, 1]} : vector<6x6x17xbf16> to vector<4x4x17xbf16>
    %12 = vector.extract_strided_slice %8 {offsets = [1, 1, 0], sizes = [4, 4, 17], strides = [1, 1, 1]} : vector<6x6x17xbf16> to vector<4x4x17xbf16>
    %13 = tpu.concatenate %9, %10, %11, %12 in 2 : vector<4x4x17xbf16>, vector<4x4x17xbf16>, vector<4x4x17xbf16>, vector<4x4x17xbf16> -> vector<4x4x68xbf16>
    %14 = vector.shape_cast %13 : vector<4x4x68xbf16> to vector<16x68xbf16>
    %c0_4 = arith.constant 0 : index
    %c0_5 = arith.constant 0 : index
    %c0_6 = arith.constant 0 : index
    %15 = vector.load %arg2[%c0_4, %c0_5, %c0_6] : memref<4x68x32xbf16, #tpu.memory_space<vmem>>, vector<1x68x32xbf16>
    %16 = vector.shape_cast %15 : vector<1x68x32xbf16> to vector<68x32xbf16>
    %cst_7 = arith.constant dense<0.000000e+00> : vector<16x32xf32>
    %17 = tpu.matmul %14, %16, %cst_7 {dimension_numbers = #tpu.dot_dimension_numbers<[1], [0], [0], [1], [0, 0, 1, 1], [], []>} : vector<16x68xbf16>, vector<68x32xbf16>, vector<16x32xf32> -> vector<16x32xf32>
    %c0_8 = arith.constant 0 : index
    %c0_9 = arith.constant 0 : index
    %18 = vector.load %arg3[%c0_8, %c0_9] : memref<1x32xf32, #tpu.memory_space<vmem>>, vector<1x32xf32>
    %19 = vector.broadcast %18 : vector<1x32xf32> to vector<16x32xf32>
    %20 = arith.addf %17, %19 : vector<16x32xf32>
    %21 = vector.shape_cast %20 : vector<16x32xf32> to vector<4x4x32xf32>
    %22 = vector.extract_strided_slice %8 {offsets = [0, 1, 0], sizes = [4, 4, 17], strides = [1, 1, 1]} : vector<6x6x17xbf16> to vector<4x4x17xbf16>
    %23 = vector.extract_strided_slice %8 {offsets = [0, 2, 0], sizes = [4, 4, 17], strides = [1, 1, 1]} : vector<6x6x17xbf16> to vector<4x4x17xbf16>
    %24 = vector.extract_strided_slice %8 {offsets = [1, 1, 0], sizes = [4, 4, 17], strides = [1, 1, 1]} : vector<6x6x17xbf16> to vector<4x4x17xbf16>
    %25 = vector.extract_strided_slice %8 {offsets = [1, 2, 0], sizes = [4, 4, 17], strides = [1, 1, 1]} : vector<6x6x17xbf16> to vector<4x4x17xbf16>
    %26 = tpu.concatenate %22, %23, %24, %25 in 2 : vector<4x4x17xbf16>, vector<4x4x17xbf16>, vector<4x4x17xbf16>, vector<4x4x17xbf16> -> vector<4x4x68xbf16>
    %27 = vector.shape_cast %26 : vector<4x4x68xbf16> to vector<16x68xbf16>
    %c1 = arith.constant 1 : index
    %c0_10 = arith.constant 0 : index
    %c0_11 = arith.constant 0 : index
    %28 = vector.load %arg2[%c1, %c0_10, %c0_11] : memref<4x68x32xbf16, #tpu.memory_space<vmem>>, vector<1x68x32xbf16>
    %29 = vector.shape_cast %28 : vector<1x68x32xbf16> to vector<68x32xbf16>
    %cst_12 = arith.constant dense<0.000000e+00> : vector<16x32xf32>
    %30 = tpu.matmul %27, %29, %cst_12 {dimension_numbers = #tpu.dot_dimension_numbers<[1], [0], [0], [1], [0, 0, 1, 1], [], []>} : vector<16x68xbf16>, vector<68x32xbf16>, vector<16x32xf32> -> vector<16x32xf32>
    %c0_13 = arith.constant 0 : index
    %c0_14 = arith.constant 0 : index
    %31 = vector.load %arg3[%c0_13, %c0_14] : memref<1x32xf32, #tpu.memory_space<vmem>>, vector<1x32xf32>
    %32 = vector.broadcast %31 : vector<1x32xf32> to vector<16x32xf32>
    %33 = arith.addf %30, %32 : vector<16x32xf32>
    %34 = vector.shape_cast %33 : vector<16x32xf32> to vector<4x4x32xf32>
    %35 = vector.extract_strided_slice %8 {offsets = [1, 0, 0], sizes = [4, 4, 17], strides = [1, 1, 1]} : vector<6x6x17xbf16> to vector<4x4x17xbf16>
    %36 = vector.extract_strided_slice %8 {offsets = [1, 1, 0], sizes = [4, 4, 17], strides = [1, 1, 1]} : vector<6x6x17xbf16> to vector<4x4x17xbf16>
    %37 = vector.extract_strided_slice %8 {offsets = [2, 0, 0], sizes = [4, 4, 17], strides = [1, 1, 1]} : vector<6x6x17xbf16> to vector<4x4x17xbf16>
    %38 = vector.extract_strided_slice %8 {offsets = [2, 1, 0], sizes = [4, 4, 17], strides = [1, 1, 1]} : vector<6x6x17xbf16> to vector<4x4x17xbf16>
    %39 = tpu.concatenate %35, %36, %37, %38 in 2 : vector<4x4x17xbf16>, vector<4x4x17xbf16>, vector<4x4x17xbf16>, vector<4x4x17xbf16> -> vector<4x4x68xbf16>
    %40 = vector.shape_cast %39 : vector<4x4x68xbf16> to vector<16x68xbf16>
    %c2 = arith.constant 2 : index
    %c0_15 = arith.constant 0 : index
    %c0_16 = arith.constant 0 : index
    %41 = vector.load %arg2[%c2, %c0_15, %c0_16] : memref<4x68x32xbf16, #tpu.memory_space<vmem>>, vector<1x68x32xbf16>
    %42 = vector.shape_cast %41 : vector<1x68x32xbf16> to vector<68x32xbf16>
    %cst_17 = arith.constant dense<0.000000e+00> : vector<16x32xf32>
    %43 = tpu.matmul %40, %42, %cst_17 {dimension_numbers = #tpu.dot_dimension_numbers<[1], [0], [0], [1], [0, 0, 1, 1], [], []>} : vector<16x68xbf16>, vector<68x32xbf16>, vector<16x32xf32> -> vector<16x32xf32>
    %c0_18 = arith.constant 0 : index
    %c0_19 = arith.constant 0 : index
    %44 = vector.load %arg3[%c0_18, %c0_19] : memref<1x32xf32, #tpu.memory_space<vmem>>, vector<1x32xf32>
    %45 = vector.broadcast %44 : vector<1x32xf32> to vector<16x32xf32>
    %46 = arith.addf %43, %45 : vector<16x32xf32>
    %47 = vector.shape_cast %46 : vector<16x32xf32> to vector<4x4x32xf32>
    %48 = vector.extract_strided_slice %8 {offsets = [1, 1, 0], sizes = [4, 4, 17], strides = [1, 1, 1]} : vector<6x6x17xbf16> to vector<4x4x17xbf16>
    %49 = vector.extract_strided_slice %8 {offsets = [1, 2, 0], sizes = [4, 4, 17], strides = [1, 1, 1]} : vector<6x6x17xbf16> to vector<4x4x17xbf16>
    %50 = vector.extract_strided_slice %8 {offsets = [2, 1, 0], sizes = [4, 4, 17], strides = [1, 1, 1]} : vector<6x6x17xbf16> to vector<4x4x17xbf16>
    %51 = vector.extract_strided_slice %8 {offsets = [2, 2, 0], sizes = [4, 4, 17], strides = [1, 1, 1]} : vector<6x6x17xbf16> to vector<4x4x17xbf16>
    %52 = tpu.concatenate %48, %49, %50, %51 in 2 : vector<4x4x17xbf16>, vector<4x4x17xbf16>, vector<4x4x17xbf16>, vector<4x4x17xbf16> -> vector<4x4x68xbf16>
    %53 = vector.shape_cast %52 : vector<4x4x68xbf16> to vector<16x68xbf16>
    %c3 = arith.constant 3 : index
    %c0_20 = arith.constant 0 : index
    %c0_21 = arith.constant 0 : index
    %54 = vector.load %arg2[%c3, %c0_20, %c0_21] : memref<4x68x32xbf16, #tpu.memory_space<vmem>>, vector<1x68x32xbf16>
    %55 = vector.shape_cast %54 : vector<1x68x32xbf16> to vector<68x32xbf16>
    %cst_22 = arith.constant dense<0.000000e+00> : vector<16x32xf32>
    %56 = tpu.matmul %53, %55, %cst_22 {dimension_numbers = #tpu.dot_dimension_numbers<[1], [0], [0], [1], [0, 0, 1, 1], [], []>} : vector<16x68xbf16>, vector<68x32xbf16>, vector<16x32xf32> -> vector<16x32xf32>
    %c0_23 = arith.constant 0 : index
    %c0_24 = arith.constant 0 : index
    %57 = vector.load %arg3[%c0_23, %c0_24] : memref<1x32xf32, #tpu.memory_space<vmem>>, vector<1x32xf32>
    %58 = vector.broadcast %57 : vector<1x32xf32> to vector<16x32xf32>
    %59 = arith.addf %56, %58 : vector<16x32xf32>
    %60 = vector.shape_cast %59 : vector<16x32xf32> to vector<4x4x32xf32>
    %61 = arith.truncf %21 : vector<4x4x32xf32> to vector<4x4x32xbf16>
    %62 = arith.truncf %34 : vector<4x4x32xf32> to vector<4x4x32xbf16>
    %63 = arith.truncf %47 : vector<4x4x32xf32> to vector<4x4x32xbf16>
    %64 = arith.truncf %60 : vector<4x4x32xf32> to vector<4x4x32xbf16>
    %65 = vector.shape_cast %61 : vector<4x4x32xbf16> to vector<4x4x1x32xbf16>
    %66 = vector.shape_cast %62 : vector<4x4x32xbf16> to vector<4x4x1x32xbf16>
    %67 = tpu.concatenate %65, %66 in 2 : vector<4x4x1x32xbf16>, vector<4x4x1x32xbf16> -> vector<4x4x2x32xbf16>
    %68 = vector.shape_cast %67 : vector<4x4x2x32xbf16> to vector<4x8x32xbf16>
    %69 = vector.shape_cast %63 : vector<4x4x32xbf16> to vector<4x4x1x32xbf16>
    %70 = vector.shape_cast %64 : vector<4x4x32xbf16> to vector<4x4x1x32xbf16>
    %71 = tpu.concatenate %69, %70 in 2 : vector<4x4x1x32xbf16>, vector<4x4x1x32xbf16> -> vector<4x4x2x32xbf16>
    %72 = vector.shape_cast %71 : vector<4x4x2x32xbf16> to vector<4x8x32xbf16>
    %73 = vector.shape_cast %68 : vector<4x8x32xbf16> to vector<4x1x8x32xbf16>
    %74 = vector.shape_cast %72 : vector<4x8x32xbf16> to vector<4x1x8x32xbf16>
    %75 = tpu.concatenate %73, %74 in 1 : vector<4x1x8x32xbf16>, vector<4x1x8x32xbf16> -> vector<4x2x8x32xbf16>
    %76 = vector.shape_cast %75 : vector<4x2x8x32xbf16> to vector<8x8x32xbf16>
    %cst_25 = arith.constant 1.000000e+00 : bf16
    %77 = vector.broadcast %cst_25 : bf16 to vector<8x8x1xbf16>
    %78 = tpu.concatenate %76, %77 in 2 : vector<8x8x32xbf16>, vector<8x8x1xbf16> -> vector<8x8x33xbf16>
    %cst_26 = arith.constant 0.000000e+00 : bf16
    %79 = vector.broadcast %cst_26 : bf16 to vector<1x8x33xbf16>
    %80 = tpu.concatenate %79, %78, %79 in 0 : vector<1x8x33xbf16>, vector<8x8x33xbf16>, vector<1x8x33xbf16> -> vector<10x8x33xbf16>
    %cst_27 = arith.constant 0.000000e+00 : bf16
    %81 = vector.broadcast %cst_27 : bf16 to vector<10x1x33xbf16>
    %82 = tpu.concatenate %81, %80, %81 in 1 : vector<10x1x33xbf16>, vector<10x8x33xbf16>, vector<10x1x33xbf16> -> vector<10x10x33xbf16>
    %83 = vector.extract_strided_slice %82 {offsets = [0, 0, 0], sizes = [8, 8, 33], strides = [1, 1, 1]} : vector<10x10x33xbf16> to vector<8x8x33xbf16>
    %84 = vector.extract_strided_slice %82 {offsets = [0, 1, 0], sizes = [8, 8, 33], strides = [1, 1, 1]} : vector<10x10x33xbf16> to vector<8x8x33xbf16>
    %85 = vector.extract_strided_slice %82 {offsets = [1, 0, 0], sizes = [8, 8, 33], strides = [1, 1, 1]} : vector<10x10x33xbf16> to vector<8x8x33xbf16>
    %86 = vector.extract_strided_slice %82 {offsets = [1, 1, 0], sizes = [8, 8, 33], strides = [1, 1, 1]} : vector<10x10x33xbf16> to vector<8x8x33xbf16>
    %87 = tpu.concatenate %83, %84, %85, %86 in 2 : vector<8x8x33xbf16>, vector<8x8x33xbf16>, vector<8x8x33xbf16>, vector<8x8x33xbf16> -> vector<8x8x132xbf16>
    %88 = vector.shape_cast %87 : vector<8x8x132xbf16> to vector<64x132xbf16>
    %c0_28 = arith.constant 0 : index
    %c0_29 = arith.constant 0 : index
    %c0_30 = arith.constant 0 : index
    %89 = vector.load %arg4[%c0_28, %c0_29, %c0_30] : memref<4x132x16xbf16, #tpu.memory_space<vmem>>, vector<1x132x16xbf16>
    %90 = vector.shape_cast %89 : vector<1x132x16xbf16> to vector<132x16xbf16>
    %cst_31 = arith.constant dense<0.000000e+00> : vector<64x16xf32>
    %91 = tpu.matmul %88, %90, %cst_31 {dimension_numbers = #tpu.dot_dimension_numbers<[1], [0], [0], [1], [0, 0, 1, 1], [], []>} : vector<64x132xbf16>, vector<132x16xbf16>, vector<64x16xf32> -> vector<64x16xf32>
    %c0_32 = arith.constant 0 : index
    %c0_33 = arith.constant 0 : index
    %92 = vector.load %arg5[%c0_32, %c0_33] : memref<1x16xf32, #tpu.memory_space<vmem>>, vector<1x16xf32>
    %93 = vector.broadcast %92 : vector<1x16xf32> to vector<64x16xf32>
    %94 = arith.addf %91, %93 : vector<64x16xf32>
    %95 = vector.shape_cast %94 : vector<64x16xf32> to vector<8x8x16xf32>
    %96 = vector.extract_strided_slice %82 {offsets = [0, 1, 0], sizes = [8, 8, 33], strides = [1, 1, 1]} : vector<10x10x33xbf16> to vector<8x8x33xbf16>
    %97 = vector.extract_strided_slice %82 {offsets = [0, 2, 0], sizes = [8, 8, 33], strides = [1, 1, 1]} : vector<10x10x33xbf16> to vector<8x8x33xbf16>
    %98 = vector.extract_strided_slice %82 {offsets = [1, 1, 0], sizes = [8, 8, 33], strides = [1, 1, 1]} : vector<10x10x33xbf16> to vector<8x8x33xbf16>
    %99 = vector.extract_strided_slice %82 {offsets = [1, 2, 0], sizes = [8, 8, 33], strides = [1, 1, 1]} : vector<10x10x33xbf16> to vector<8x8x33xbf16>
    %100 = tpu.concatenate %96, %97, %98, %99 in 2 : vector<8x8x33xbf16>, vector<8x8x33xbf16>, vector<8x8x33xbf16>, vector<8x8x33xbf16> -> vector<8x8x132xbf16>
    %101 = vector.shape_cast %100 : vector<8x8x132xbf16> to vector<64x132xbf16>
    %c1_34 = arith.constant 1 : index
    %c0_35 = arith.constant 0 : index
    %c0_36 = arith.constant 0 : index
    %102 = vector.load %arg4[%c1_34, %c0_35, %c0_36] : memref<4x132x16xbf16, #tpu.memory_space<vmem>>, vector<1x132x16xbf16>
    %103 = vector.shape_cast %102 : vector<1x132x16xbf16> to vector<132x16xbf16>
    %cst_37 = arith.constant dense<0.000000e+00> : vector<64x16xf32>
    %104 = tpu.matmul %101, %103, %cst_37 {dimension_numbers = #tpu.dot_dimension_numbers<[1], [0], [0], [1], [0, 0, 1, 1], [], []>} : vector<64x132xbf16>, vector<132x16xbf16>, vector<64x16xf32> -> vector<64x16xf32>
    %c0_38 = arith.constant 0 : index
    %c0_39 = arith.constant 0 : index
    %105 = vector.load %arg5[%c0_38, %c0_39] : memref<1x16xf32, #tpu.memory_space<vmem>>, vector<1x16xf32>
    %106 = vector.broadcast %105 : vector<1x16xf32> to vector<64x16xf32>
    %107 = arith.addf %104, %106 : vector<64x16xf32>
    %108 = vector.shape_cast %107 : vector<64x16xf32> to vector<8x8x16xf32>
    %109 = vector.extract_strided_slice %82 {offsets = [1, 0, 0], sizes = [8, 8, 33], strides = [1, 1, 1]} : vector<10x10x33xbf16> to vector<8x8x33xbf16>
    %110 = vector.extract_strided_slice %82 {offsets = [1, 1, 0], sizes = [8, 8, 33], strides = [1, 1, 1]} : vector<10x10x33xbf16> to vector<8x8x33xbf16>
    %111 = vector.extract_strided_slice %82 {offsets = [2, 0, 0], sizes = [8, 8, 33], strides = [1, 1, 1]} : vector<10x10x33xbf16> to vector<8x8x33xbf16>
    %112 = vector.extract_strided_slice %82 {offsets = [2, 1, 0], sizes = [8, 8, 33], strides = [1, 1, 1]} : vector<10x10x33xbf16> to vector<8x8x33xbf16>
    %113 = tpu.concatenate %109, %110, %111, %112 in 2 : vector<8x8x33xbf16>, vector<8x8x33xbf16>, vector<8x8x33xbf16>, vector<8x8x33xbf16> -> vector<8x8x132xbf16>
    %114 = vector.shape_cast %113 : vector<8x8x132xbf16> to vector<64x132xbf16>
    %c2_40 = arith.constant 2 : index
    %c0_41 = arith.constant 0 : index
    %c0_42 = arith.constant 0 : index
    %115 = vector.load %arg4[%c2_40, %c0_41, %c0_42] : memref<4x132x16xbf16, #tpu.memory_space<vmem>>, vector<1x132x16xbf16>
    %116 = vector.shape_cast %115 : vector<1x132x16xbf16> to vector<132x16xbf16>
    %cst_43 = arith.constant dense<0.000000e+00> : vector<64x16xf32>
    %117 = tpu.matmul %114, %116, %cst_43 {dimension_numbers = #tpu.dot_dimension_numbers<[1], [0], [0], [1], [0, 0, 1, 1], [], []>} : vector<64x132xbf16>, vector<132x16xbf16>, vector<64x16xf32> -> vector<64x16xf32>
    %c0_44 = arith.constant 0 : index
    %c0_45 = arith.constant 0 : index
    %118 = vector.load %arg5[%c0_44, %c0_45] : memref<1x16xf32, #tpu.memory_space<vmem>>, vector<1x16xf32>
    %119 = vector.broadcast %118 : vector<1x16xf32> to vector<64x16xf32>
    %120 = arith.addf %117, %119 : vector<64x16xf32>
    %121 = vector.shape_cast %120 : vector<64x16xf32> to vector<8x8x16xf32>
    %122 = vector.extract_strided_slice %82 {offsets = [1, 1, 0], sizes = [8, 8, 33], strides = [1, 1, 1]} : vector<10x10x33xbf16> to vector<8x8x33xbf16>
    %123 = vector.extract_strided_slice %82 {offsets = [1, 2, 0], sizes = [8, 8, 33], strides = [1, 1, 1]} : vector<10x10x33xbf16> to vector<8x8x33xbf16>
    %124 = vector.extract_strided_slice %82 {offsets = [2, 1, 0], sizes = [8, 8, 33], strides = [1, 1, 1]} : vector<10x10x33xbf16> to vector<8x8x33xbf16>
    %125 = vector.extract_strided_slice %82 {offsets = [2, 2, 0], sizes = [8, 8, 33], strides = [1, 1, 1]} : vector<10x10x33xbf16> to vector<8x8x33xbf16>
    %126 = tpu.concatenate %122, %123, %124, %125 in 2 : vector<8x8x33xbf16>, vector<8x8x33xbf16>, vector<8x8x33xbf16>, vector<8x8x33xbf16> -> vector<8x8x132xbf16>
    %127 = vector.shape_cast %126 : vector<8x8x132xbf16> to vector<64x132xbf16>
    %c3_46 = arith.constant 3 : index
    %c0_47 = arith.constant 0 : index
    %c0_48 = arith.constant 0 : index
    %128 = vector.load %arg4[%c3_46, %c0_47, %c0_48] : memref<4x132x16xbf16, #tpu.memory_space<vmem>>, vector<1x132x16xbf16>
    %129 = vector.shape_cast %128 : vector<1x132x16xbf16> to vector<132x16xbf16>
    %cst_49 = arith.constant dense<0.000000e+00> : vector<64x16xf32>
    %130 = tpu.matmul %127, %129, %cst_49 {dimension_numbers = #tpu.dot_dimension_numbers<[1], [0], [0], [1], [0, 0, 1, 1], [], []>} : vector<64x132xbf16>, vector<132x16xbf16>, vector<64x16xf32> -> vector<64x16xf32>
    %c0_50 = arith.constant 0 : index
    %c0_51 = arith.constant 0 : index
    %131 = vector.load %arg5[%c0_50, %c0_51] : memref<1x16xf32, #tpu.memory_space<vmem>>, vector<1x16xf32>
    %132 = vector.broadcast %131 : vector<1x16xf32> to vector<64x16xf32>
    %133 = arith.addf %130, %132 : vector<64x16xf32>
    %134 = vector.shape_cast %133 : vector<64x16xf32> to vector<8x8x16xf32>
    %135 = vector.shape_cast %95 : vector<8x8x16xf32> to vector<8x8x1x16xf32>
    %136 = vector.shape_cast %108 : vector<8x8x16xf32> to vector<8x8x1x16xf32>
    %137 = tpu.concatenate %135, %136 in 2 : vector<8x8x1x16xf32>, vector<8x8x1x16xf32> -> vector<8x8x2x16xf32>
    %138 = vector.shape_cast %137 : vector<8x8x2x16xf32> to vector<8x16x16xf32>
    %139 = vector.shape_cast %121 : vector<8x8x16xf32> to vector<8x8x1x16xf32>
    %140 = vector.shape_cast %134 : vector<8x8x16xf32> to vector<8x8x1x16xf32>
    %141 = tpu.concatenate %139, %140 in 2 : vector<8x8x1x16xf32>, vector<8x8x1x16xf32> -> vector<8x8x2x16xf32>
    %142 = vector.shape_cast %141 : vector<8x8x2x16xf32> to vector<8x16x16xf32>
    %143 = vector.shape_cast %138 : vector<8x16x16xf32> to vector<8x1x16x16xf32>
    %144 = vector.shape_cast %142 : vector<8x16x16xf32> to vector<8x1x16x16xf32>
    %145 = tpu.concatenate %143, %144 in 1 : vector<8x1x16x16xf32>, vector<8x1x16x16xf32> -> vector<8x2x16x16xf32>
    %146 = vector.shape_cast %145 : vector<8x2x16x16xf32> to vector<16x16x16xf32>
    %147 = vector.shape_cast %146 : vector<16x16x16xf32> to vector<1x16x256xf32>
    %c0_52 = arith.constant 0 : index
    %c0_53 = arith.constant 0 : index
    %c0_54 = arith.constant 0 : index
    %148 = vector.load %arg6[%c0_52, %c0_53, %c0_54] : memref<1x16x256xf32, #tpu.memory_space<vmem>>, vector<1x16x256xf32>
    tpu.vector_store %arg6[%c0_52, %c0_53, %c0_54], %147 {strides = array<i32>} : memref<1x16x256xf32, #tpu.memory_space<vmem>>, vector<1x16x256xf32>,
    return
  }
  func.func @transform_0(%arg0: i32) -> (i32, i32, i32) {
    %c0_i32 = arith.constant 0 : i32
    %c0_i32_0 = arith.constant 0 : i32
    %c0_i32_1 = arith.constant 0 : i32
    return %arg0, %c0_i32, %c0_i32_0 : i32, i32, i32
  }
  func.func @transform_1(%arg0: i32) -> (i32, i32, i32) {
    %c0_i32 = arith.constant 0 : i32
    %c0_i32_0 = arith.constant 0 : i32
    %c0_i32_1 = arith.constant 0 : i32
    %c0_i32_2 = arith.constant 0 : i32
    return %c0_i32, %c0_i32_0, %c0_i32_1 : i32, i32, i32
  }
  func.func @transform_2(%arg0: i32) -> (i32, i32) {
    %c0_i32 = arith.constant 0 : i32
    %c0_i32_0 = arith.constant 0 : i32
    %c0_i32_1 = arith.constant 0 : i32
    return %c0_i32, %c0_i32_0 : i32, i32
  }
  func.func @transform_3(%arg0: i32) -> (i32, i32, i32) {
    %c0_i32 = arith.constant 0 : i32
    %c0_i32_0 = arith.constant 0 : i32
    %c0_i32_1 = arith.constant 0 : i32
    %c0_i32_2 = arith.constant 0 : i32
    return %c0_i32, %c0_i32_0, %c0_i32_1 : i32, i32, i32
  }
  func.func @transform_4(%arg0: i32) -> (i32, i32) {
    %c0_i32 = arith.constant 0 : i32
    %c0_i32_0 = arith.constant 0 : i32
    %c0_i32_1 = arith.constant 0 : i32
    return %c0_i32, %c0_i32_0 : i32, i32
  }
  func.func @transform_5(%arg0: i32) -> (i32, i32, i32) {
    %c0_i32 = arith.constant 0 : i32
    %c0_i32_0 = arith.constant 0 : i32
    %c0_i32_1 = arith.constant 0 : i32
    return %arg0, %c0_i32, %c0_i32_0 : i32, i32, i32
  }
}

module attributes {stable_mosaic.version = 11 : i64} {
  func.func @kernel(%arg0: i32, %arg1: memref<1x4x96xbf16, #tpu.memory_space<vmem>>, %arg2: memref<4x100x32xbf16, #tpu.memory_space<vmem>>, %arg3: memref<1x32xf32, #tpu.memory_space<vmem>>, %arg4: memref<1x8x256xf32, #tpu.memory_space<vmem>>) attributes {dimension_semantics = [#tpu.dimension_semantics<parallel>], iteration_bounds = array<i64: 2>, scalar_prefetch = 0 : i64, scratch_operands = 0 : i64, tpu.core_type = #tpu.core_type<tc>, window_params = [{transform_indices = @transform_0, window_bounds = array<i64: 1, 4, 96>}, {pipeline_mode = #tpu.pipeline_mode<synchronous>, transform_indices = @transform_1, window_bounds = array<i64: 4, 100, 32>}, {pipeline_mode = #tpu.pipeline_mode<synchronous>, transform_indices = @transform_2, window_bounds = array<i64: 1, 32>}, {transform_indices = @transform_3, window_bounds = array<i64: 1, 8, 256>}]} {
    %c0 = arith.constant 0 : index
    %c0_0 = arith.constant 0 : index
    %c0_1 = arith.constant 0 : index
    %0 = vector.load %arg1[%c0, %c0_0, %c0_1] : memref<1x4x96xbf16, #tpu.memory_space<vmem>>, vector<1x4x96xbf16>
    %1 = vector.shape_cast %0 : vector<1x4x96xbf16> to vector<4x96xbf16>
    %2 = vector.shape_cast %1 : vector<4x96xbf16> to vector<4x4x24xbf16>
    %cst = arith.constant 1.000000e+00 : bf16
    %3 = vector.broadcast %cst : bf16 to vector<4x4x1xbf16>
    %4 = tpu.concatenate %2, %3 in 2 : vector<4x4x24xbf16>, vector<4x4x1xbf16> -> vector<4x4x25xbf16>
    %cst_2 = arith.constant 0.000000e+00 : bf16
    %5 = vector.broadcast %cst_2 : bf16 to vector<1x4x25xbf16>
    %6 = tpu.concatenate %5, %4, %5 in 0 : vector<1x4x25xbf16>, vector<4x4x25xbf16>, vector<1x4x25xbf16> -> vector<6x4x25xbf16>
    %cst_3 = arith.constant 0.000000e+00 : bf16
    %7 = vector.broadcast %cst_3 : bf16 to vector<6x1x25xbf16>
    %8 = tpu.concatenate %7, %6, %7 in 1 : vector<6x1x25xbf16>, vector<6x4x25xbf16>, vector<6x1x25xbf16> -> vector<6x6x25xbf16>
    %9 = vector.extract_strided_slice %8 {offsets = [0, 0, 0], sizes = [4, 4, 25], strides = [1, 1, 1]} : vector<6x6x25xbf16> to vector<4x4x25xbf16>
    %10 = vector.extract_strided_slice %8 {offsets = [0, 1, 0], sizes = [4, 4, 25], strides = [1, 1, 1]} : vector<6x6x25xbf16> to vector<4x4x25xbf16>
    %11 = vector.extract_strided_slice %8 {offsets = [1, 0, 0], sizes = [4, 4, 25], strides = [1, 1, 1]} : vector<6x6x25xbf16> to vector<4x4x25xbf16>
    %12 = vector.extract_strided_slice %8 {offsets = [1, 1, 0], sizes = [4, 4, 25], strides = [1, 1, 1]} : vector<6x6x25xbf16> to vector<4x4x25xbf16>
    %13 = tpu.concatenate %9, %10, %11, %12 in 2 : vector<4x4x25xbf16>, vector<4x4x25xbf16>, vector<4x4x25xbf16>, vector<4x4x25xbf16> -> vector<4x4x100xbf16>
    %14 = vector.shape_cast %13 : vector<4x4x100xbf16> to vector<16x100xbf16>
    %c0_4 = arith.constant 0 : index
    %c0_5 = arith.constant 0 : index
    %c0_6 = arith.constant 0 : index
    %15 = vector.load %arg2[%c0_4, %c0_5, %c0_6] : memref<4x100x32xbf16, #tpu.memory_space<vmem>>, vector<1x100x32xbf16>
    %16 = vector.shape_cast %15 : vector<1x100x32xbf16> to vector<100x32xbf16>
    %cst_7 = arith.constant dense<0.000000e+00> : vector<16x32xf32>
    %17 = tpu.matmul %14, %16, %cst_7 {dimension_numbers = #tpu.dot_dimension_numbers<[1], [0], [0], [1], [0, 0, 1, 1], [], []>} : vector<16x100xbf16>, vector<100x32xbf16>, vector<16x32xf32> -> vector<16x32xf32>
    %c0_8 = arith.constant 0 : index
    %c0_9 = arith.constant 0 : index
    %18 = vector.load %arg3[%c0_8, %c0_9] : memref<1x32xf32, #tpu.memory_space<vmem>>, vector<1x32xf32>
    %19 = vector.broadcast %18 : vector<1x32xf32> to vector<16x32xf32>
    %20 = arith.addf %17, %19 : vector<16x32xf32>
    %21 = vector.shape_cast %20 : vector<16x32xf32> to vector<4x4x32xf32>
    %22 = vector.extract_strided_slice %8 {offsets = [0, 1, 0], sizes = [4, 4, 25], strides = [1, 1, 1]} : vector<6x6x25xbf16> to vector<4x4x25xbf16>
    %23 = vector.extract_strided_slice %8 {offsets = [0, 2, 0], sizes = [4, 4, 25], strides = [1, 1, 1]} : vector<6x6x25xbf16> to vector<4x4x25xbf16>
    %24 = vector.extract_strided_slice %8 {offsets = [1, 1, 0], sizes = [4, 4, 25], strides = [1, 1, 1]} : vector<6x6x25xbf16> to vector<4x4x25xbf16>
    %25 = vector.extract_strided_slice %8 {offsets = [1, 2, 0], sizes = [4, 4, 25], strides = [1, 1, 1]} : vector<6x6x25xbf16> to vector<4x4x25xbf16>
    %26 = tpu.concatenate %22, %23, %24, %25 in 2 : vector<4x4x25xbf16>, vector<4x4x25xbf16>, vector<4x4x25xbf16>, vector<4x4x25xbf16> -> vector<4x4x100xbf16>
    %27 = vector.shape_cast %26 : vector<4x4x100xbf16> to vector<16x100xbf16>
    %c1 = arith.constant 1 : index
    %c0_10 = arith.constant 0 : index
    %c0_11 = arith.constant 0 : index
    %28 = vector.load %arg2[%c1, %c0_10, %c0_11] : memref<4x100x32xbf16, #tpu.memory_space<vmem>>, vector<1x100x32xbf16>
    %29 = vector.shape_cast %28 : vector<1x100x32xbf16> to vector<100x32xbf16>
    %cst_12 = arith.constant dense<0.000000e+00> : vector<16x32xf32>
    %30 = tpu.matmul %27, %29, %cst_12 {dimension_numbers = #tpu.dot_dimension_numbers<[1], [0], [0], [1], [0, 0, 1, 1], [], []>} : vector<16x100xbf16>, vector<100x32xbf16>, vector<16x32xf32> -> vector<16x32xf32>
    %c0_13 = arith.constant 0 : index
    %c0_14 = arith.constant 0 : index
    %31 = vector.load %arg3[%c0_13, %c0_14] : memref<1x32xf32, #tpu.memory_space<vmem>>, vector<1x32xf32>
    %32 = vector.broadcast %31 : vector<1x32xf32> to vector<16x32xf32>
    %33 = arith.addf %30, %32 : vector<16x32xf32>
    %34 = vector.shape_cast %33 : vector<16x32xf32> to vector<4x4x32xf32>
    %35 = vector.extract_strided_slice %8 {offsets = [1, 0, 0], sizes = [4, 4, 25], strides = [1, 1, 1]} : vector<6x6x25xbf16> to vector<4x4x25xbf16>
    %36 = vector.extract_strided_slice %8 {offsets = [1, 1, 0], sizes = [4, 4, 25], strides = [1, 1, 1]} : vector<6x6x25xbf16> to vector<4x4x25xbf16>
    %37 = vector.extract_strided_slice %8 {offsets = [2, 0, 0], sizes = [4, 4, 25], strides = [1, 1, 1]} : vector<6x6x25xbf16> to vector<4x4x25xbf16>
    %38 = vector.extract_strided_slice %8 {offsets = [2, 1, 0], sizes = [4, 4, 25], strides = [1, 1, 1]} : vector<6x6x25xbf16> to vector<4x4x25xbf16>
    %39 = tpu.concatenate %35, %36, %37, %38 in 2 : vector<4x4x25xbf16>, vector<4x4x25xbf16>, vector<4x4x25xbf16>, vector<4x4x25xbf16> -> vector<4x4x100xbf16>
    %40 = vector.shape_cast %39 : vector<4x4x100xbf16> to vector<16x100xbf16>
    %c2 = arith.constant 2 : index
    %c0_15 = arith.constant 0 : index
    %c0_16 = arith.constant 0 : index
    %41 = vector.load %arg2[%c2, %c0_15, %c0_16] : memref<4x100x32xbf16, #tpu.memory_space<vmem>>, vector<1x100x32xbf16>
    %42 = vector.shape_cast %41 : vector<1x100x32xbf16> to vector<100x32xbf16>
    %cst_17 = arith.constant dense<0.000000e+00> : vector<16x32xf32>
    %43 = tpu.matmul %40, %42, %cst_17 {dimension_numbers = #tpu.dot_dimension_numbers<[1], [0], [0], [1], [0, 0, 1, 1], [], []>} : vector<16x100xbf16>, vector<100x32xbf16>, vector<16x32xf32> -> vector<16x32xf32>
    %c0_18 = arith.constant 0 : index
    %c0_19 = arith.constant 0 : index
    %44 = vector.load %arg3[%c0_18, %c0_19] : memref<1x32xf32, #tpu.memory_space<vmem>>, vector<1x32xf32>
    %45 = vector.broadcast %44 : vector<1x32xf32> to vector<16x32xf32>
    %46 = arith.addf %43, %45 : vector<16x32xf32>
    %47 = vector.shape_cast %46 : vector<16x32xf32> to vector<4x4x32xf32>
    %48 = vector.extract_strided_slice %8 {offsets = [1, 1, 0], sizes = [4, 4, 25], strides = [1, 1, 1]} : vector<6x6x25xbf16> to vector<4x4x25xbf16>
    %49 = vector.extract_strided_slice %8 {offsets = [1, 2, 0], sizes = [4, 4, 25], strides = [1, 1, 1]} : vector<6x6x25xbf16> to vector<4x4x25xbf16>
    %50 = vector.extract_strided_slice %8 {offsets = [2, 1, 0], sizes = [4, 4, 25], strides = [1, 1, 1]} : vector<6x6x25xbf16> to vector<4x4x25xbf16>
    %51 = vector.extract_strided_slice %8 {offsets = [2, 2, 0], sizes = [4, 4, 25], strides = [1, 1, 1]} : vector<6x6x25xbf16> to vector<4x4x25xbf16>
    %52 = tpu.concatenate %48, %49, %50, %51 in 2 : vector<4x4x25xbf16>, vector<4x4x25xbf16>, vector<4x4x25xbf16>, vector<4x4x25xbf16> -> vector<4x4x100xbf16>
    %53 = vector.shape_cast %52 : vector<4x4x100xbf16> to vector<16x100xbf16>
    %c3 = arith.constant 3 : index
    %c0_20 = arith.constant 0 : index
    %c0_21 = arith.constant 0 : index
    %54 = vector.load %arg2[%c3, %c0_20, %c0_21] : memref<4x100x32xbf16, #tpu.memory_space<vmem>>, vector<1x100x32xbf16>
    %55 = vector.shape_cast %54 : vector<1x100x32xbf16> to vector<100x32xbf16>
    %cst_22 = arith.constant dense<0.000000e+00> : vector<16x32xf32>
    %56 = tpu.matmul %53, %55, %cst_22 {dimension_numbers = #tpu.dot_dimension_numbers<[1], [0], [0], [1], [0, 0, 1, 1], [], []>} : vector<16x100xbf16>, vector<100x32xbf16>, vector<16x32xf32> -> vector<16x32xf32>
    %c0_23 = arith.constant 0 : index
    %c0_24 = arith.constant 0 : index
    %57 = vector.load %arg3[%c0_23, %c0_24] : memref<1x32xf32, #tpu.memory_space<vmem>>, vector<1x32xf32>
    %58 = vector.broadcast %57 : vector<1x32xf32> to vector<16x32xf32>
    %59 = arith.addf %56, %58 : vector<16x32xf32>
    %60 = vector.shape_cast %59 : vector<16x32xf32> to vector<4x4x32xf32>
    %61 = vector.shape_cast %21 : vector<4x4x32xf32> to vector<4x4x1x32xf32>
    %62 = vector.shape_cast %34 : vector<4x4x32xf32> to vector<4x4x1x32xf32>
    %63 = tpu.concatenate %61, %62 in 2 : vector<4x4x1x32xf32>, vector<4x4x1x32xf32> -> vector<4x4x2x32xf32>
    %64 = vector.shape_cast %63 : vector<4x4x2x32xf32> to vector<4x8x32xf32>
    %65 = vector.shape_cast %47 : vector<4x4x32xf32> to vector<4x4x1x32xf32>
    %66 = vector.shape_cast %60 : vector<4x4x32xf32> to vector<4x4x1x32xf32>
    %67 = tpu.concatenate %65, %66 in 2 : vector<4x4x1x32xf32>, vector<4x4x1x32xf32> -> vector<4x4x2x32xf32>
    %68 = vector.shape_cast %67 : vector<4x4x2x32xf32> to vector<4x8x32xf32>
    %69 = vector.shape_cast %64 : vector<4x8x32xf32> to vector<4x1x8x32xf32>
    %70 = vector.shape_cast %68 : vector<4x8x32xf32> to vector<4x1x8x32xf32>
    %71 = tpu.concatenate %69, %70 in 1 : vector<4x1x8x32xf32>, vector<4x1x8x32xf32> -> vector<4x2x8x32xf32>
    %72 = vector.shape_cast %71 : vector<4x2x8x32xf32> to vector<8x8x32xf32>
    %73 = vector.shape_cast %72 : vector<8x8x32xf32> to vector<1x8x256xf32>
    %c0_25 = arith.constant 0 : index
    %c0_26 = arith.constant 0 : index
    %c0_27 = arith.constant 0 : index
    %74 = vector.load %arg4[%c0_25, %c0_26, %c0_27] : memref<1x8x256xf32, #tpu.memory_space<vmem>>, vector<1x8x256xf32>
    tpu.vector_store %arg4[%c0_25, %c0_26, %c0_27], %73 {strides = array<i32>} : memref<1x8x256xf32, #tpu.memory_space<vmem>>, vector<1x8x256xf32>,
    return
  }
  func.func @transform_0(%arg0: i32) -> (i32, i32, i32) {
    %c0_i32 = arith.constant 0 : i32
    %c0_i32_0 = arith.constant 0 : i32
    %c0_i32_1 = arith.constant 0 : i32
    return %arg0, %c0_i32, %c0_i32_0 : i32, i32, i32
  }
  func.func @transform_1(%arg0: i32) -> (i32, i32, i32) {
    %c0_i32 = arith.constant 0 : i32
    %c0_i32_0 = arith.constant 0 : i32
    %c0_i32_1 = arith.constant 0 : i32
    %c0_i32_2 = arith.constant 0 : i32
    return %c0_i32, %c0_i32_0, %c0_i32_1 : i32, i32, i32
  }
  func.func @transform_2(%arg0: i32) -> (i32, i32) {
    %c0_i32 = arith.constant 0 : i32
    %c0_i32_0 = arith.constant 0 : i32
    %c0_i32_1 = arith.constant 0 : i32
    return %c0_i32, %c0_i32_0 : i32, i32
  }
  func.func @transform_3(%arg0: i32) -> (i32, i32, i32) {
    %c0_i32 = arith.constant 0 : i32
    %c0_i32_0 = arith.constant 0 : i32
    %c0_i32_1 = arith.constant 0 : i32
    return %arg0, %c0_i32, %c0_i32_0 : i32, i32, i32
  }
}

</mosaic_0001>

<llo_original>
// kernel: encoder_upsampler_forward.3
$region0: #{encoder_upsampler_forward.3}
  #allocation0 [shape = 'u32[]', space=smem, size = 0x4, offset = 0x4, fixed_abs, tag = 'smem constant byte address 0x4 - core index']
  #allocation1 [shape = 'u32[144,128]{1,0:T(1,128)}', space=vmem, size = 0x12000, scoped, tag = 'internal scratch']
  %s0 = inlined_call_operand.vmem [shape: bf16[32,48], index: 0, kind: input, shape index: {}]
  %s1 = inlined_call_operand.vmem [shape: bf16[48,256], index: 1, kind: input, shape index: {}]
  %s2 = inlined_call_operand.vmem [shape: f32[1,256], index: 2, kind: input, shape index: {}]
  %s3 = inlined_call_operand.vmem [shape: bf16[32,256], index: 3, kind: output, shape index: {}]
  %s4 = sld [smem:[#allocation0]]
  $region22: #{encoder_upsampler_forward.3} parent=0
    _
  %s6 = ssub.s32 1, %s4
  %s7 = scalar_select 0, %s6, %s4
  // Predicated region
  $region2: #{encoder_upsampler_forward.3} parent=0 // pred_check
    _
  $region3: #{encoder_upsampler_forward.3} parent=0 // pred_check_branch
    %9 = sbr.rel (0) target = $region5
  $region4: #{encoder_upsampler_forward.3} parent=0 // pred_region
    _
  $region5: #{encoder_upsampler_forward.3} parent=0 // pred_fallthru
    _
  // Predicated region
  $region6: #{encoder_upsampler_forward.3} parent=0 // pred_check
    _
  $region7: #{encoder_upsampler_forward.3} parent=0 // pred_check_branch
    %11 = sbr.rel (0) target = $region9
  $region8: #{encoder_upsampler_forward.3} parent=0 // pred_region
    _
  $region9: #{encoder_upsampler_forward.3} parent=0 // pred_fallthru
    _
  // Predicated region
  $region10: #{encoder_upsampler_forward.3} parent=0 // pred_check
    _
  $region11: #{encoder_upsampler_forward.3} parent=0 // pred_check_branch
    %13 = sbr.rel (0) target = $region13
  $region12: #{encoder_upsampler_forward.3} parent=0 // pred_region
    _
  $region13: #{encoder_upsampler_forward.3} parent=0 // pred_fallthru
    _
  %v15 = vld [vmem:[%s0] sm:$0xf]
  %v16 = vld [vmem:[%s0 + $0x4] sm:$0xf]
  %v17 = vld [vmem:[%s0 + $0x8] sm:$0xf]
  %v18 = vld [vmem:[%s0 + $0xc] sm:$0xf]
  %v19 = vld [vmem:[%s1] sm:$0xff]
  %v20 = vld [vmem:[%s1 + $0x8] sm:$0xff]
  %v21 = vld [vmem:[%s1 + $0x10] sm:$0xff]
  %v22 = vld [vmem:[%s1 + $0x18] sm:$0xff]
  %v23 = vld [vmem:[%s1 + $0x20] sm:$0xff]
  %v24 = vld [vmem:[%s1 + $0x28] sm:$0xff]
  %v25 = vld [vmem:[%s2] sm:$0x3]
  %v27 = vlaneseq
  %v28 = vshrl.u32 %v27, 7
  %v29 = vsub.s32 0, %v28
  %v30 = vrot.slane %v25, %v29
  %v31 = vlaneseq
  %v32 = vshrl.u32 %v31, 7
  %v33 = vsub.s32 1, %v32
  %v34 = vrot.slane %v25, %v33
  %v41 = vunpack.c.l.b16 %v15
  %v42 = vunpack.c.l.b16 %v16
  %v43 = vunpack.c.l.b16 %v17
  %v44 = vunpack.c.l.b16 %v18
  %v45 = vpack.c.b16 %v42, %v41
  %v46 = vpack.c.b16 %v44, %v43
  %v53 = vunpack.c.l.b16 %v19
  %v54 = vunpack.c.h.b16 %v19
  %v55 = vunpack.c.l.b16 %v20
  %v56 = vunpack.c.h.b16 %v20
  %v57 = vunpack.c.l.b16 %v21
  %v58 = vunpack.c.h.b16 %v21
  %v59 = vunpack.c.l.b16 %v22
  %v60 = vunpack.c.h.b16 %v22
  %v61 = vunpack.c.l.b16 %v23
  %v62 = vunpack.c.h.b16 %v23
  %v63 = vunpack.c.l.b16 %v24
  %v64 = vunpack.c.h.b16 %v24
  %v65 = vpack.c.b16 %v55, %v53
  %v66 = vpack.c.b16 %v56, %v54
  %v67 = vpack.c.b16 %v59, %v57
  %v68 = vpack.c.b16 %v60, %v58
  %v69 = vpack.c.b16 %v63, %v61
  %v70 = vpack.c.b16 %v64, %v62
  %vm77 = vcmask 392192
  %v79 = vsel %vm77, %v45, 0
  %v82 = vsel %vm77, %v46, 0
  %84 = vmatprep.subr.bf16.mxu0 %v66
  %85 = vmatpush1.bf16.msra.mxu0 %v65
  %86 = vmatprep.subr.bf16.mxu0 %v68
  %87 = vmatpush1.bf16.msra.mxu0 %v67
  %88 = vmatprep.subr.bf16.mxu0 %v70
  %89 = vmatpush1.bf16.msra.mxu0 %v69
  %90 = vmatprep.subr.bf16.mxu0 0
  %91 = vmatpush1.bf16.msra.mxu0 0
  %92 = vmatprep.subr.bf16.mxu0 0
  %93 = vmatpush1.bf16.msra.mxu0 0
  %94 = vmatprep.subr.bf16.mxu0 0
  %95 = vmatpush1.bf16.msra.mxu0 0
  %96 = vmatprep.subr.bf16.mxu0 0
  %97 = vmatpush1.bf16.msra.mxu0 0
  %98 = vmatprep.subr.bf16.mxu0 0
  %99 = vmatpush1.bf16.msra.mxu0 0
  %100 = vmatprep.subr.bf16.mxu0 0
  %101 = vmatpush1.bf16.msra.mxu0 0
  %102 = vmatprep.subr.bf16.mxu0 0
  %103 = vmatpush1.bf16.msra.mxu0 0
  %104 = vmatprep.subr.bf16.mxu0 0
  %105 = vmatpush1.bf16.msra.mxu0 0
  %106 = vmatprep.subr.bf16.mxu0 0
  %107 = vmatpush1.bf16.msra.mxu0 0
  %108 = vmatprep.subr.bf16.mxu0 0
  %109 = vmatpush1.bf16.msra.mxu0 0
  %110 = vmatprep.subr.bf16.mxu0 0
  %111 = vmatpush1.bf16.msra.mxu0 0
  %112 = vmatprep.subr.bf16.mxu0 0
  %113 = vmatpush1.bf16.msra.mxu0 0
  %114 = vmatprep.subr.bf16.mxu0 0
  %115 = vmatpush1.bf16.msra.mxu0 0
  %116 = vmatprep.mubr.bf16.mxu0 0
  %117 = vmatmul.mubr.bf16.gmra.mrb[0].mxu0 %v79
  %v118 = vpop.f32.mrb[0].mxu0
  %v119 = vadd.f32 %v30, %v118
  %v120 = vpop.f32.mrb[0].mxu0
  %v121 = vadd.f32 %v34, %v120
  %v122 = vpop.f32.mrb[0].mxu0
  %v123 = vadd.f32 %v30, %v122
  %v124 = vpop.f32.mrb[0].mxu0
  %v125 = vadd.f32 %v34, %v124
  %126 = vmatprep.mubr.bf16.mxu0 0
  %127 = vmatmul.mubr.bf16.gmra.mrb[0].mxu0 %v82
  %v128 = vpop.f32.mrb[0].mxu0
  %v129 = vadd.f32 %v30, %v128
  %v130 = vpop.f32.mrb[0].mxu0
  %v131 = vadd.f32 %v34, %v130
  %v132 = vpop.f32.mrb[0].mxu0
  %v133 = vadd.f32 %v30, %v132
  %v134 = vpop.f32.mrb[0].mxu0
  %v135 = vadd.f32 %v34, %v134
  %136 = vdwg.mxu0
  %v137 = vpack.c.bf16 %v123, %v119
  %v138 = vpack.c.bf16 %v125, %v121
  %v139 = vpack.c.bf16 %v133, %v129
  %v140 = vpack.c.bf16 %v135, %v131
  %v145 = vunpack.c.l.b16 %v137
  %v146 = vunpack.c.l.b16 %v138
  %v147 = vunpack.c.h.b16 %v137
  %v148 = vunpack.c.h.b16 %v138
  %v149 = vunpack.c.l.b16 %v139
  %v150 = vunpack.c.l.b16 %v140
  %v151 = vunpack.c.h.b16 %v139
  %v152 = vunpack.c.h.b16 %v140
  %v153 = vpack.c.b16 %v146, %v145
  %v154 = vpack.c.b16 %v148, %v147
  %v155 = vpack.c.b16 %v150, %v149
  %v156 = vpack.c.b16 %v152, %v151
  %161 = vst [vmem:[%s3] sm:$0xff] %v153
  %162 = vst [vmem:[%s3 + $0x8] sm:$0xff] %v154
  %163 = vst [vmem:[%s3 + $0x10] sm:$0xff] %v155
  %164 = vst [vmem:[%s3 + $0x18] sm:$0xff] %v156
  // Predicated region
  $region14: #{encoder_upsampler_forward.3} parent=0 // pred_check
    _
  $region15: #{encoder_upsampler_forward.3} parent=0 // pred_check_branch
    %166 = sbr.rel (0) target = $region17
  $region16: #{encoder_upsampler_forward.3} parent=0 // pred_region
    _
  $region17: #{encoder_upsampler_forward.3} parent=0 // pred_fallthru
    _
  // Predicated region
  $region18: #{encoder_upsampler_forward.3} parent=0 // pred_check
    _
  $region19: #{encoder_upsampler_forward.3} parent=0 // pred_check_branch
    %168 = sbr.rel (0) target = $region21
  $region20: #{encoder_upsampler_forward.3} parent=0 // pred_region
    _
  $region21: #{encoder_upsampler_forward.3} parent=0 // pred_fallthru
    _

// kernel: encoder_upsampler_forward.4
$region0: #{encoder_upsampler_forward.4}
  #allocation0 [shape = 'u32[]', space=smem, size = 0x4, offset = 0x4, fixed_abs, tag = 'smem constant byte address 0x4 - core index']
  #allocation1 [shape = 'u32[144,128]{1,0:T(1,128)}', space=vmem, size = 0x12000, scoped, tag = 'internal scratch']
  %s0 = inlined_call_operand.vmem [shape: bf16[2,4,96], index: 0, kind: input, shape index: {}]
  %s1 = inlined_call_operand.vmem [shape: bf16[4,100,32], index: 1, kind: input, shape index: {}]
  %s2 = inlined_call_operand.vmem [shape: f32[1,32], index: 2, kind: input, shape index: {}]
  %s3 = inlined_call_operand.vmem [shape: f32[2,8,256], index: 3, kind: output, shape index: {}]
  %s4 = sld [smem:[#allocation0]]
  $region45: #{encoder_upsampler_forward.4} parent=0
    _
  %s6 = ssub.s32 1, %s4
  %s7 = scalar_select 0, %s6, %s4
  loop: start=0, step=1, limit=4
  $region2: #{encoder_upsampler_forward.4} parent=0 // loop_pre_header
    _
  $region3: #{encoder_upsampler_forward.4} parent=0 // loop_header
    %s9 = sphi 0, %s13
    %p10 = scmp.ge.s32.totalorder %s9, 4
    %s19 = sphi 0, %s21
    %s22 = sphi 0, %s19
    %s23 = sphi 0, %s22
    %s39 = sphi 0, %s23
    %s43 = sphi 0, %s43
    %s45 = sphi 0, %s43
    %s46 = sphi 0, %s45
    %s60 = sphi 0, %s46
    %s64 = sphi 0, %s64
    %s66 = sphi 0, %s64
    %s67 = sphi 0, %s66
    %s81 = sphi 0, %s67
    %s87 = sphi 0, %s89
    %s90 = sphi 0, %s87
    %s91 = sphi 0, %s90
    %s107 = sphi 0, %s91
  $region4: #{encoder_upsampler_forward.4} parent=0 // loop_header_branch
    %12 = sbr.rel (%p10) target = $region8
  $region5: #{encoder_upsampler_forward.4} parent=0 // loop_body
    %s14 = ssub.s32 %s9, 1
    %s15 = ssub.s32 %s9, 2
    %s16 = sadd.s32 %s9, 1
    %s17 = ssub.s32 %s9, %s16
    %p18 = scmp.eq.s32.totalorder %s17, 0
    %s20 = sadd.s32 %s19, 1
    %s21 = scalar_select %p18, %s19, %s20
    %p24 = pneg %p18
    %p25 = scmp.eq.s32.totalorder %s9, 1
    %p26 = por %p24, %p25
    %p27 = scmp.ne.s32.totalorder %s19, %s22
    %p28 = scmp.eq.s32.totalorder %s9, 0
    %p29 = por %p27, %p28
    %p30 = scmp.ne.s32.totalorder %s19, %s22
    %p31 = scmp.eq.s32.totalorder %s14, 1
    %p32 = por %p30, %p31
    %p33 = scmp.ne.s32.totalorder %s22, %s23
    %p34 = scmp.eq.s32.totalorder %s14, 0
    %p35 = por %p33, %p34
    %p36 = scmp.ne.s32.totalorder %s22, %s23
    %p37 = scmp.eq.s32.totalorder %s15, 1
    %p38 = por %p36, %p37
    %p40 = scmp.ne.s32.totalorder %s23, %s39
    %p41 = scmp.eq.s32.totalorder %s15, 0
    %p42 = por %p40, %p41
    %s44 = sadd.s32 %s43, 1
    %p47 = scmp.eq.s32.totalorder %s9, 1
    %p48 = scmp.ne.s32.totalorder %s43, %s45
    %p49 = scmp.eq.s32.totalorder %s9, 0
    %p50 = por %p48, %p49
    %p51 = scmp.ne.s32.totalorder %s43, %s45
    %p52 = scmp.eq.s32.totalorder %s14, 1
    %p53 = por %p51, %p52
    %p54 = scmp.ne.s32.totalorder %s45, %s46
    %p55 = scmp.eq.s32.totalorder %s14, 0
    %p56 = por %p54, %p55
    %p57 = scmp.ne.s32.totalorder %s45, %s46
    %p58 = scmp.eq.s32.totalorder %s15, 1
    %p59 = por %p57, %p58
    %p61 = scmp.ne.s32.totalorder %s46, %s60
    %p62 = scmp.eq.s32.totalorder %s15, 0
    %p63 = por %p61, %p62
    %s65 = sadd.s32 %s64, 1
    %p68 = scmp.eq.s32.totalorder %s9, 1
    %p69 = scmp.ne.s32.totalorder %s64, %s66
    %p70 = scmp.eq.s32.totalorder %s9, 0
    %p71 = por %p69, %p70
    %p72 = scmp.ne.s32.totalorder %s64, %s66
    %p73 = scmp.eq.s32.totalorder %s14, 1
    %p74 = por %p72, %p73
    %p75 = scmp.ne.s32.totalorder %s66, %s67
    %p76 = scmp.eq.s32.totalorder %s14, 0
    %p77 = por %p75, %p76
    %p78 = scmp.ne.s32.totalorder %s66, %s67
    %p79 = scmp.eq.s32.totalorder %s15, 1
    %p80 = por %p78, %p79
    %p82 = scmp.ne.s32.totalorder %s67, %s81
    %p83 = scmp.eq.s32.totalorder %s15, 0
    %p84 = por %p82, %p83
    %s85 = ssub.s32 %s9, %s16
    %p86 = scmp.eq.s32.totalorder %s85, 0
    %s88 = sadd.s32 %s87, 1
    %s89 = scalar_select %p86, %s87, %s88
    %p92 = pneg %p86
    %p93 = scmp.eq.s32.totalorder %s9, 1
    %p94 = por %p92, %p93
    %p95 = scmp.ne.s32.totalorder %s87, %s90
    %p96 = scmp.eq.s32.totalorder %s9, 0
    %p97 = por %p95, %p96
    %p98 = scmp.ne.s32.totalorder %s87, %s90
    %p99 = scmp.eq.s32.totalorder %s14, 1
    %p100 = por %p98, %p99
    %p101 = scmp.ne.s32.totalorder %s90, %s91
    %p102 = scmp.eq.s32.totalorder %s14, 0
    %p103 = por %p101, %p102
    %p104 = scmp.ne.s32.totalorder %s90, %s91
    %p105 = scmp.eq.s32.totalorder %s15, 1
    %p106 = por %p104, %p105
    %p108 = scmp.ne.s32.totalorder %s91, %s107
    %p109 = scmp.eq.s32.totalorder %s15, 0
    %p110 = por %p108, %p109
    %p111 = scmp.le.s32.totalorder 1, %s9
    %p112 = scmp.lt.s32.totalorder %s9, 3
    %p113 = pnand %p111, %p112
    %p114 = pneg %p113
    // Predicated region
    $region9: #{encoder_upsampler_forward.4} parent=5 // pred_check
      _
    $region10: #{encoder_upsampler_forward.4} parent=5 // pred_check_branch
      %116 = sbr.rel (%p113) target = $region12
    $region11: #{encoder_upsampler_forward.4} parent=5 // pred_region
      %s117 = ssub.s32 %s9, 1
      // Predicated region
      $region13: #{encoder_upsampler_forward.4} parent=11 // pred_check
        %p118 = pneg %p56
      $region14: #{encoder_upsampler_forward.4} parent=11 // pred_check_branch
        %120 = sbr.rel (%p118) target = $region16
      $region15: #{encoder_upsampler_forward.4} parent=11 // pred_region
        _
      $region16: #{encoder_upsampler_forward.4} parent=11 // pred_fallthru
        _
      // Predicated region
      $region17: #{encoder_upsampler_forward.4} parent=11 // pred_check
        %p121 = pneg %p77
      $region18: #{encoder_upsampler_forward.4} parent=11 // pred_check_branch
        %123 = sbr.rel (%p121) target = $region20
      $region19: #{encoder_upsampler_forward.4} parent=11 // pred_region
        _
      $region20: #{encoder_upsampler_forward.4} parent=11 // pred_fallthru
        _
    $region12: #{encoder_upsampler_forward.4} parent=5 // pred_fallthru
      _
    %p124 = scmp.lt.s32.totalorder %s9, 2
    // Predicated region
    $region21: #{encoder_upsampler_forward.4} parent=5 // pred_check
      %p125 = pneg %p124
    $region22: #{encoder_upsampler_forward.4} parent=5 // pred_check_branch
      %127 = sbr.rel (%p125) target = $region24
    $region23: #{encoder_upsampler_forward.4} parent=5 // pred_region
      // Predicated region
      $region25: #{encoder_upsampler_forward.4} parent=23 // pred_check
        %p128 = pneg %p29
      $region26: #{encoder_upsampler_forward.4} parent=23 // pred_check_branch
        %130 = sbr.rel (%p128) target = $region28
      $region27: #{encoder_upsampler_forward.4} parent=23 // pred_region
        %p131 = scmp.lt.s32.totalorder %s9, 1
        %s132 = scalar_select %p131, %s9, 1
        %s133 = smul.addr %s132, 2
        %s134 = scalar_lea.vmem %s0, %s133
      $region28: #{encoder_upsampler_forward.4} parent=23 // pred_fallthru
        _
    $region24: #{encoder_upsampler_forward.4} parent=5 // pred_fallthru
      _
    %p135 = scmp.le.s32.totalorder 1, %s9
    %p136 = scmp.lt.s32.totalorder %s9, 3
    %p137 = pnand %p135, %p136
    %p138 = pneg %p137
    // Predicated region
    $region29: #{encoder_upsampler_forward.4} parent=5 // pred_check
      _
    $region30: #{encoder_upsampler_forward.4} parent=5 // pred_check_branch
      %140 = sbr.rel (%p137) target = $region32
    $region31: #{encoder_upsampler_forward.4} parent=5 // pred_region
      %s141 = ssub.s32 %s9, 1
      %p142 = scmp.lt.s32.totalorder %s14, 1
      %s143 = scalar_select %p142, %s14, 1
      %s144 = smul.addr %s143, 2
      %s145 = scalar_lea.vmem %s0, %s144
      %p146 = pneg %p35
      %p147 = pneg %p32
      %p148 = pneg %p56
      %p149 = pneg %p53
      %p150 = pneg %p77
      %p151 = pneg %p74
      %p152 = pneg %p103
      %p153 = pneg %p100
      %p154 = scmp.lt.s32.totalorder %s14, 1
      %s155 = scalar_select %p154, %s14, 1
      %s156 = smul.addr %s155, 2
      %s157 = smul.addr %s156, 8
      %s158 = scalar_lea.vmem %s3, %s157
      %p159 = scmp.lt.s32.totalorder %s14, 1
      %s160 = scalar_select %p159, %s14, 1
      %s161 = smul.addr %s160, 2
      %s162 = scalar_lea.vmem %s0, %s161
      %p163 = scmp.lt.s32.totalorder %s14, 1
      %s164 = scalar_select %p163, %s14, 1
      %s165 = smul.addr %s164, 2
      %s166 = smul.addr %s165, 8
      %s167 = scalar_lea.vmem %s3, %s166
      %v170 = vld [vmem:[%s162] sm:$0x3]
      %172 = vrot.lane.b32.xlu0 %v170, 104
      %v173 = vpop.permute.xlu0 %172
      %175 = vrot.lane.b32.xlu0 %v170, 80
      %v176 = vpop.permute.xlu0 %175
      %178 = vrot.lane.b32.xlu0 %v170, 56
      %v179 = vpop.permute.xlu0 %178
      %v181 = vcombine.low %v170, %v176
      %v183 = vunpack.c.l.s4 1934713408
      %v184 = vunpack.c.0.s8 %v183
      %v185 = vlaneseq
      %v186 = vshrl.u32 %v185, 7
      %v187 = vsub.s32 %v184, %v186
      %v188 = vrot.slane %v181, %v187
      %v189 = vcombine.high %v188, 0
      %v190 = vcombine.low %v173, %v179
      %v192 = vunpack.c.l.s4 1934713408
      %v193 = vunpack.c.0.s8 %v192
      %v194 = vlaneseq
      %v195 = vshrl.u32 %v194, 7
      %v196 = vsub.s32 %v193, %v195
      %v197 = vrot.slane %v190, %v196
      %v198 = vcombine.high %v197, 0
      %v201 = vpack.i.b16 %v197, %v188
      %v202 = vshrl.u32 %v188, 16
      %v203 = vshrl.u32 %v197, 16
      %v204 = vpack.i.b16 %v203, %v202
      %v207 = vpack.i.b16 %v198, %v189
      %v208 = vshrl.u32 %v189, 16
      %v209 = vshrl.u32 %v198, 16
      %v210 = vpack.i.b16 %v209, %v208
      %vm211 = vcmask 195584
      %v214 = vsel %vm211, %v201, 1065369472
      %v216 = vsel %vm211, %v204, 1065369472
      %v218 = vsel %vm211, %v207, 1065369472
      %v220 = vsel %vm211, %v210, 1065369472
      %v222 = vshrl.u32 0, 16
      %v224 = vrot.slane %v222, 7
      %v225 = vshll.u32 0, 16
      %v227 = vor.u32 %v224, %v225
      %v228 = vshrl.u32 %v214, 16
      %v230 = vrot.slane %v228, 7
      %v231 = vshll.u32 %v214, 16
      %v233 = vor.u32 %v230, %v231
      %v234 = vshrl.u32 %v216, 16
      %v236 = vrot.slane %v234, 7
      %v237 = vshll.u32 %v216, 16
      %v239 = vor.u32 %v236, %v237
      %v240 = vshrl.u32 %v218, 16
      %v242 = vrot.slane %v240, 7
      %v243 = vshll.u32 %v218, 16
      %v245 = vor.u32 %v242, %v243
      %v246 = vshrl.u32 %v220, 16
      %v248 = vrot.slane %v246, 7
      %v249 = vshll.u32 %v220, 16
      %v251 = vor.u32 %v248, %v249
      %vm257 = vcmask 1040384
      %vm258 = vsmask.f32 256
      %vm259 = vmand %vm257, %vm258
      %v260 = vsel %vm259, 0, %v227
      %v261 = vsel %vm259, 0, %v233
      %v262 = vsel %vm259, 0, %v239
      %v263 = vsel %vm259, 0, %v245
      %v264 = vsel %vm259, 0, %v251
      %vm265 = vcmask 1042432
      %vm266 = vsmask.f32 2304
      %vm267 = vmand %vm265, %vm266
      %v268 = vsel %vm267, %v260, 0
      %v269 = vsel %vm267, %v261, 0
      %v270 = vsel %vm267, %v262, 0
      %v271 = vsel %vm267, %v263, 0
      %v272 = vsel %vm267, %v264, 0
      %v274 = vshrl.u32 %v268, 16
      %v276 = vshll.u32 %v268, 16
      %v278 = vrot.slane %v276, 1
      %v279 = vor.u32 %v274, %v278
      %v281 = vshrl.u32 %v269, 16
      %v283 = vshll.u32 %v269, 16
      %v285 = vrot.slane %v283, 1
      %v286 = vor.u32 %v281, %v285
      %v288 = vshrl.u32 %v270, 16
      %v290 = vshll.u32 %v270, 16
      %v292 = vrot.slane %v290, 1
      %v293 = vor.u32 %v288, %v292
      %v295 = vshrl.u32 %v271, 16
      %v297 = vshll.u32 %v271, 16
      %v299 = vrot.slane %v297, 1
      %v300 = vor.u32 %v295, %v299
      %301 = vrot.lane.b32.xlu0 %v279, 25
      %v302 = vpop.permute.xlu0 %301
      %303 = vrot.lane.b32.xlu0 %v286, 25
      %v304 = vpop.permute.xlu0 %303
      %305 = vrot.lane.b32.xlu0 %v293, 25
      %v306 = vpop.permute.xlu0 %305
      %307 = vrot.lane.b32.xlu0 %v300, 25
      %v308 = vpop.permute.xlu0 %307
      %313 = vrot.lane.b32.xlu0 %v269, 50
      %v314 = vpop.permute.xlu0 %313
      %315 = vrot.lane.b32.xlu0 %v270, 50
      %v316 = vpop.permute.xlu0 %315
      %317 = vrot.lane.b32.xlu0 %v271, 50
      %v318 = vpop.permute.xlu0 %317
      %319 = vrot.lane.b32.xlu0 %v272, 50
      %v320 = vpop.permute.xlu0 %319
      %v322 = vshrl.u32 %v272, 16
      %v324 = vshll.u32 %v272, 16
      %v326 = vrot.slane %v324, 1
      %v327 = vor.u32 %v322, %v326
      %328 = vrot.lane.b32.xlu0 %v286, 75
      %v329 = vpop.permute.xlu0 %328
      %330 = vrot.lane.b32.xlu0 %v293, 75
      %v331 = vpop.permute.xlu0 %330
      %332 = vrot.lane.b32.xlu0 %v300, 75
      %v333 = vpop.permute.xlu0 %332
      %334 = vrot.lane.b32.xlu0 %v327, 75
      %v335 = vpop.permute.xlu0 %334
      %vm336 = vcmask 203776
      %v338 = vsel %vm336, %v268, %v302
      %v340 = vsel %vm336, %v269, %v304
      %v342 = vsel %vm336, %v270, %v306
      %v344 = vsel %vm336, %v271, %v308
      %vm345 = vcmask 408576
      %v347 = vsel %vm345, %v338, %v314
      %v349 = vsel %vm345, %v340, %v316
      %v351 = vsel %vm345, %v342, %v318
      %v353 = vsel %vm345, %v344, %v320
      %vm354 = vcmask 613376
      %v356 = vsel %vm354, %v347, %v329
      %v358 = vsel %vm354, %v349, %v331
      %v360 = vsel %vm354, %v351, %v333
      %v362 = vsel %vm354, %v353, %v335
      %v363 = vld [vmem:[%s1] sm:$0xf]
      %v364 = vld [vmem:[%s1 + $0x4] sm:$0xf]
      %v365 = vld [vmem:[%s1 + $0x8] sm:$0xf]
      %v366 = vld [vmem:[%s1 + $0xc] sm:$0xf]
      %v367 = vld [vmem:[%s1 + $0x10] sm:$0xf]
      %v368 = vld [vmem:[%s1 + $0x14] sm:$0xf]
      %v369 = vld [vmem:[%s1 + $0x18] sm:$0xf]
      %v370 = vld [vmem:[%s1 + $0x1c] sm:$0xf]
      %v371 = vld [vmem:[%s1 + $0x20] sm:$0xf]
      %v372 = vld [vmem:[%s1 + $0x24] sm:$0xf]
      %v373 = vld [vmem:[%s1 + $0x28] sm:$0xf]
      %v374 = vld [vmem:[%s1 + $0x2c] sm:$0xf]
      %v375 = vld [vmem:[%s1 + $0x30] sm:$0x3]
      %v376 = vld [vmem:[%s2] sm:$0x1]
      %v378 = vlaneseq
      %v379 = vshrl.u32 %v378, 7
      %v380 = vsub.s32 0, %v379
      %v381 = vrot.slane %v376, %v380
      %v387 = vcombine.low %v356, %v358
      %v388 = vcombine.low %v360, %v362
      %v390 = vunpack.c.l.s4 1983009808
      %v391 = vunpack.c.0.s8 %v390
      %v392 = vlaneseq
      %v393 = vshrl.u32 %v392, 7
      %v394 = vsub.s32 %v391, %v393
      %v395 = vrot.slane %v387, %v394
      %v397 = vunpack.c.l.s4 1983009808
      %v398 = vunpack.c.0.s8 %v397
      %v399 = vlaneseq
      %v400 = vshrl.u32 %v399, 7
      %v401 = vsub.s32 %v398, %v400
      %v402 = vrot.slane %v388, %v401
      %v403 = vcombine.low %v395, %v402
      %v417 = vunpack.c.l.b16 %v363
      %v418 = vunpack.c.l.b16 %v364
      %v419 = vunpack.c.l.b16 %v365
      %v420 = vunpack.c.l.b16 %v366
      %v421 = vunpack.c.l.b16 %v367
      %v422 = vunpack.c.l.b16 %v368
      %v423 = vunpack.c.l.b16 %v369
      %v424 = vunpack.c.l.b16 %v370
      %v425 = vunpack.c.l.b16 %v371
      %v426 = vunpack.c.l.b16 %v372
      %v427 = vunpack.c.l.b16 %v373
      %v428 = vunpack.c.l.b16 %v374
      %v429 = vunpack.c.l.b16 %v375
      %v430 = vpack.c.b16 %v418, %v417
      %v431 = vpack.c.b16 %v420, %v419
      %v432 = vpack.c.b16 %v422, %v421
      %v433 = vpack.c.b16 %v424, %v423
      %v434 = vpack.c.b16 %v426, %v425
      %v435 = vpack.c.b16 %v428, %v427
      %v436 = vpack.c.b16 %v429, %v429
      %vm443 = vcmask 818176
      %v445 = vsel %vm443, %v403, 0
      %vm447 = vcmask 1041408
      %v449 = vsel %vm447, %v436, 0
      %451 = vmatprep.subr.bf16.mxu0 0
      %452 = vmatpush1.bf16.msra.mxu0 %v430
      %453 = vmatprep.subr.bf16.mxu0 0
      %454 = vmatpush1.bf16.msra.mxu0 %v431
      %455 = vmatprep.subr.bf16.mxu0 0
      %456 = vmatpush1.bf16.msra.mxu0 %v432
      %457 = vmatprep.subr.bf16.mxu0 0
      %458 = vmatpush1.bf16.msra.mxu0 %v433
      %459 = vmatprep.subr.bf16.mxu0 0
      %460 = vmatpush1.bf16.msra.mxu0 %v434
      %461 = vmatprep.subr.bf16.mxu0 0
      %462 = vmatpush1.bf16.msra.mxu0 %v435
      %463 = vmatprep.subr.bf16.mxu0 0
      %464 = vmatpush1.bf16.msra.mxu0 %v449
      %465 = vmatprep.subr.bf16.mxu0 0
      %466 = vmatpush1.bf16.msra.mxu0 0
      %467 = vmatprep.subr.bf16.mxu0 0
      %468 = vmatpush1.bf16.msra.mxu0 0
      %469 = vmatprep.subr.bf16.mxu0 0
      %470 = vmatpush1.bf16.msra.mxu0 0
      %471 = vmatprep.subr.bf16.mxu0 0
      %472 = vmatpush1.bf16.msra.mxu0 0
      %473 = vmatprep.subr.bf16.mxu0 0
      %474 = vmatpush1.bf16.msra.mxu0 0
      %475 = vmatprep.subr.bf16.mxu0 0
      %476 = vmatpush1.bf16.msra.mxu0 0
      %477 = vmatprep.subr.bf16.mxu0 0
      %478 = vmatpush1.bf16.msra.mxu0 0
      %479 = vmatprep.subr.bf16.mxu0 0
      %480 = vmatpush1.bf16.msra.mxu0 0
      %481 = vmatprep.subr.bf16.mxu0 0
      %482 = vmatpush1.bf16.msra.mxu0 0
      %483 = vmatprep.mubr.bf16.mxu0 0
      %484 = vmatmul.mubr.bf16.gmra.mrb[0].mxu0 %v445
      %v485 = vpop.f32.mrb[0].mxu0
      %v486 = vadd.f32 %v381, %v485
      %v487 = vpop.f32.mrb[0].mxu0
      %v488 = vpop.f32.mrb[0].mxu0
      %v489 = vadd.f32 %v381, %v488
      %v490 = vpop.f32.mrb[0].mxu0
      %491 = vdwg.mxu0
      %v493 = vunpack.c.l.s4 1983009808
      %v494 = vunpack.c.0.s8 %v493
      %v495 = vlaneseq
      %v496 = vshrl.u32 %v495, 7
      %v497 = vsub.s32 %v494, %v496
      %v498 = vrot.slane %v356, %v497
      %v499 = vcombine.high %v498, %v498
      %v501 = vunpack.c.l.s4 1983009808
      %v502 = vunpack.c.0.s8 %v501
      %v503 = vlaneseq
      %v504 = vshrl.u32 %v503, 7
      %v505 = vsub.s32 %v502, %v504
      %v506 = vrot.slane %v358, %v505
      %v507 = vcombine.high %v506, %v506
      %v509 = vunpack.c.l.s4 1983009808
      %v510 = vunpack.c.0.s8 %v509
      %v511 = vlaneseq
      %v512 = vshrl.u32 %v511, 7
      %v513 = vsub.s32 %v510, %v512
      %v514 = vrot.slane %v360, %v513
      %v515 = vcombine.high %v514, %v514
      %v517 = vunpack.c.l.s4 1983009808
      %v518 = vunpack.c.0.s8 %v517
      %v519 = vlaneseq
      %v520 = vshrl.u32 %v519, 7
      %v521 = vsub.s32 %v518, %v520
      %v522 = vrot.slane %v362, %v521
      %v523 = vcombine.high %v522, %v522
      %vm524 = vsmask.f32 1280
      %vm525 = vsmask.f32 3336
      %vm526 = vmor %vm524, %vm525
      %vm527 = vsmask.f32 5392
      %vm528 = vmor %vm526, %vm527
      %vm529 = vsmask.f32 7448
      %vm530 = vmor %vm528, %vm529
      %v532 = vshrl.u32 %v498, 16
      %v534 = vrot.slane %v532, 6
      %v535 = vshll.u32 %v498, 16
      %v537 = vrot.slane %v535, 7
      %v538 = vor.u32 %v534, %v537
      %v539 = vrot.slane %v538, 2
      %v541 = vshll.u32 %v499, 16
      %v543 = vrot.slane %v541, 7
      %v544 = vsel %vm530, %v539, %v543
      %v546 = vshrl.u32 %v506, 16
      %v548 = vrot.slane %v546, 6
      %v549 = vshll.u32 %v506, 16
      %v551 = vrot.slane %v549, 7
      %v552 = vor.u32 %v548, %v551
      %v553 = vrot.slane %v552, 2
      %v555 = vshll.u32 %v507, 16
      %v557 = vrot.slane %v555, 7
      %v558 = vsel %vm530, %v553, %v557
      %v560 = vshrl.u32 %v514, 16
      %v562 = vrot.slane %v560, 6
      %v563 = vshll.u32 %v514, 16
      %v565 = vrot.slane %v563, 7
      %v566 = vor.u32 %v562, %v565
      %v567 = vrot.slane %v566, 2
      %v569 = vshll.u32 %v515, 16
      %v571 = vrot.slane %v569, 7
      %v572 = vsel %vm530, %v567, %v571
      %v574 = vshrl.u32 %v522, 16
      %v576 = vrot.slane %v574, 6
      %v577 = vshll.u32 %v522, 16
      %v579 = vrot.slane %v577, 7
      %v580 = vor.u32 %v576, %v579
      %v581 = vrot.slane %v580, 2
      %v583 = vshll.u32 %v523, 16
      %v585 = vrot.slane %v583, 7
      %v586 = vsel %vm530, %v581, %v585
      %s587 = scalar_lea.vmem %s1, 52
      %v588 = vld [vmem:[%s587] sm:$0xf]
      %v589 = vld [vmem:[%s587 + $0x4] sm:$0xf]
      %v590 = vld [vmem:[%s587 + $0x8] sm:$0xf]
      %v591 = vld [vmem:[%s587 + $0xc] sm:$0xf]
      %v592 = vld [vmem:[%s587 + $0x10] sm:$0xf]
      %v593 = vld [vmem:[%s587 + $0x14] sm:$0xf]
      %v594 = vld [vmem:[%s587 + $0x18] sm:$0xf]
      %v595 = vld [vmem:[%s587 + $0x1c] sm:$0xf]
      %v596 = vld [vmem:[%s587 + $0x20] sm:$0xf]
      %v597 = vld [vmem:[%s587 + $0x24] sm:$0xf]
      %v598 = vld [vmem:[%s587 + $0x28] sm:$0xf]
      %v599 = vld [vmem:[%s587 + $0x2c] sm:$0xf]
      %v600 = vld [vmem:[%s587 + $0x30] sm:$0x3]
      %v601 = vcombine.low %v544, %v558
      %v602 = vcombine.low %v572, %v586
      %v604 = vunpack.c.l.s4 1983009808
      %v605 = vunpack.c.0.s8 %v604
      %v606 = vlaneseq
      %v607 = vshrl.u32 %v606, 7
      %v608 = vsub.s32 %v605, %v607
      %v609 = vrot.slane %v601, %v608
      %v611 = vunpack.c.l.s4 1983009808
      %v612 = vunpack.c.0.s8 %v611
      %v613 = vlaneseq
      %v614 = vshrl.u32 %v613, 7
      %v615 = vsub.s32 %v612, %v614
      %v616 = vrot.slane %v602, %v615
      %v617 = vcombine.low %v609, %v616
      %v631 = vunpack.c.l.b16 %v588
      %v632 = vunpack.c.l.b16 %v589
      %v633 = vunpack.c.l.b16 %v590
      %v634 = vunpack.c.l.b16 %v591
      %v635 = vunpack.c.l.b16 %v592
      %v636 = vunpack.c.l.b16 %v593
      %v637 = vunpack.c.l.b16 %v594
      %v638 = vunpack.c.l.b16 %v595
      %v639 = vunpack.c.l.b16 %v596
      %v640 = vunpack.c.l.b16 %v597
      %v641 = vunpack.c.l.b16 %v598
      %v642 = vunpack.c.l.b16 %v599
      %v643 = vunpack.c.l.b16 %v600
      %v644 = vpack.c.b16 %v632, %v631
      %v645 = vpack.c.b16 %v634, %v633
      %v646 = vpack.c.b16 %v636, %v635
      %v647 = vpack.c.b16 %v638, %v637
      %v648 = vpack.c.b16 %v640, %v639
      %v649 = vpack.c.b16 %v642, %v641
      %v650 = vpack.c.b16 %v643, %v643
      %v658 = vsel %vm443, %v617, 0
      %v661 = vsel %vm447, %v650, 0
      %663 = vmatprep.subr.bf16.mxu0 0
      %664 = vmatpush1.bf16.msra.mxu0 %v644
      %665 = vmatprep.subr.bf16.mxu0 0
      %666 = vmatpush1.bf16.msra.mxu0 %v645
      %667 = vmatprep.subr.bf16.mxu0 0
      %668 = vmatpush1.bf16.msra.mxu0 %v646
      %669 = vmatprep.subr.bf16.mxu0 0
      %670 = vmatpush1.bf16.msra.mxu0 %v647
      %671 = vmatprep.subr.bf16.mxu0 0
      %672 = vmatpush1.bf16.msra.mxu0 %v648
      %673 = vmatprep.subr.bf16.mxu0 0
      %674 = vmatpush1.bf16.msra.mxu0 %v649
      %675 = vmatprep.subr.bf16.mxu0 0
      %676 = vmatpush1.bf16.msra.mxu0 %v661
      %677 = vmatprep.subr.bf16.mxu0 0
      %678 = vmatpush1.bf16.msra.mxu0 0
      %679 = vmatprep.subr.bf16.mxu0 0
      %680 = vmatpush1.bf16.msra.mxu0 0
      %681 = vmatprep.subr.bf16.mxu0 0
      %682 = vmatpush1.bf16.msra.mxu0 0
      %683 = vmatprep.subr.bf16.mxu0 0
      %684 = vmatpush1.bf16.msra.mxu0 0
      %685 = vmatprep.subr.bf16.mxu0 0
      %686 = vmatpush1.bf16.msra.mxu0 0
      %687 = vmatprep.subr.bf16.mxu0 0
      %688 = vmatpush1.bf16.msra.mxu0 0
      %689 = vmatprep.subr.bf16.mxu0 0
      %690 = vmatpush1.bf16.msra.mxu0 0
      %691 = vmatprep.subr.bf16.mxu0 0
      %692 = vmatpush1.bf16.msra.mxu0 0
      %693 = vmatprep.subr.bf16.mxu0 0
      %694 = vmatpush1.bf16.msra.mxu0 0
      %695 = vmatprep.mubr.bf16.mxu0 0
      %696 = vmatmul.mubr.bf16.gmra.mrb[0].mxu0 %v658
      %v697 = vpop.f32.mrb[0].mxu0
      %v698 = vadd.f32 %v381, %v697
      %v699 = vpop.f32.mrb[0].mxu0
      %v700 = vpop.f32.mrb[0].mxu0
      %v701 = vadd.f32 %v381, %v700
      %v702 = vpop.f32.mrb[0].mxu0
      %703 = vdwg.mxu0
      %704 = vrot.lane.b32.xlu0 %v327, 25
      %v705 = vpop.permute.xlu0 %704
      %707 = vrot.lane.b32.xlu0 %v268, 50
      %v708 = vpop.permute.xlu0 %707
      %709 = vrot.lane.b32.xlu0 %v279, 75
      %v710 = vpop.permute.xlu0 %709
      %v712 = vsel %vm336, %v272, %v705
      %v714 = vsel %vm345, %v712, %v708
      %v716 = vsel %vm354, %v714, %v710
      %s717 = scalar_lea.vmem %s1, 104
      %v718 = vld [vmem:[%s717] sm:$0xf]
      %v719 = vld [vmem:[%s717 + $0x4] sm:$0xf]
      %v720 = vld [vmem:[%s717 + $0x8] sm:$0xf]
      %v721 = vld [vmem:[%s717 + $0xc] sm:$0xf]
      %v722 = vld [vmem:[%s717 + $0x10] sm:$0xf]
      %v723 = vld [vmem:[%s717 + $0x14] sm:$0xf]
      %v724 = vld [vmem:[%s717 + $0x18] sm:$0xf]
      %v725 = vld [vmem:[%s717 + $0x1c] sm:$0xf]
      %v726 = vld [vmem:[%s717 + $0x20] sm:$0xf]
      %v727 = vld [vmem:[%s717 + $0x24] sm:$0xf]
      %v728 = vld [vmem:[%s717 + $0x28] sm:$0xf]
      %v729 = vld [vmem:[%s717 + $0x2c] sm:$0xf]
      %v730 = vld [vmem:[%s717 + $0x30] sm:$0x3]
      %v732 = vcombine.low %v358, %v360
      %v733 = vcombine.low %v362, %v716
      %v735 = vunpack.c.l.s4 1983009808
      %v736 = vunpack.c.0.s8 %v735
      %v737 = vlaneseq
      %v738 = vshrl.u32 %v737, 7
      %v739 = vsub.s32 %v736, %v738
      %v740 = vrot.slane %v732, %v739
      %v742 = vunpack.c.l.s4 1983009808
      %v743 = vunpack.c.0.s8 %v742
      %v744 = vlaneseq
      %v745 = vshrl.u32 %v744, 7
      %v746 = vsub.s32 %v743, %v745
      %v747 = vrot.slane %v733, %v746
      %v748 = vcombine.low %v740, %v747
      %v762 = vunpack.c.l.b16 %v718
      %v763 = vunpack.c.l.b16 %v719
      %v764 = vunpack.c.l.b16 %v720
      %v765 = vunpack.c.l.b16 %v721
      %v766 = vunpack.c.l.b16 %v722
      %v767 = vunpack.c.l.b16 %v723
      %v768 = vunpack.c.l.b16 %v724
      %v769 = vunpack.c.l.b16 %v725
      %v770 = vunpack.c.l.b16 %v726
      %v771 = vunpack.c.l.b16 %v727
      %v772 = vunpack.c.l.b16 %v728
      %v773 = vunpack.c.l.b16 %v729
      %v774 = vunpack.c.l.b16 %v730
      %v775 = vpack.c.b16 %v763, %v762
      %v776 = vpack.c.b16 %v765, %v764
      %v777 = vpack.c.b16 %v767, %v766
      %v778 = vpack.c.b16 %v769, %v768
      %v779 = vpack.c.b16 %v771, %v770
      %v780 = vpack.c.b16 %v773, %v772
      %v781 = vpack.c.b16 %v774, %v774
      %v789 = vsel %vm443, %v748, 0
      %v792 = vsel %vm447, %v781, 0
      %794 = vmatprep.subr.bf16.mxu0 0
      %795 = vmatpush1.bf16.msra.mxu0 %v775
      %796 = vmatprep.subr.bf16.mxu0 0
      %797 = vmatpush1.bf16.msra.mxu0 %v776
      %798 = vmatprep.subr.bf16.mxu0 0
      %799 = vmatpush1.bf16.msra.mxu0 %v777
      %800 = vmatprep.subr.bf16.mxu0 0
      %801 = vmatpush1.bf16.msra.mxu0 %v778
      %802 = vmatprep.subr.bf16.mxu0 0
      %803 = vmatpush1.bf16.msra.mxu0 %v779
      %804 = vmatprep.subr.bf16.mxu0 0
      %805 = vmatpush1.bf16.msra.mxu0 %v780
      %806 = vmatprep.subr.bf16.mxu0 0
      %807 = vmatpush1.bf16.msra.mxu0 %v792
      %808 = vmatprep.subr.bf16.mxu0 0
      %809 = vmatpush1.bf16.msra.mxu0 0
      %810 = vmatprep.subr.bf16.mxu0 0
      %811 = vmatpush1.bf16.msra.mxu0 0
      %812 = vmatprep.subr.bf16.mxu0 0
      %813 = vmatpush1.bf16.msra.mxu0 0
      %814 = vmatprep.subr.bf16.mxu0 0
      %815 = vmatpush1.bf16.msra.mxu0 0
      %816 = vmatprep.subr.bf16.mxu0 0
      %817 = vmatpush1.bf16.msra.mxu0 0
      %818 = vmatprep.subr.bf16.mxu0 0
      %819 = vmatpush1.bf16.msra.mxu0 0
      %820 = vmatprep.subr.bf16.mxu0 0
      %821 = vmatpush1.bf16.msra.mxu0 0
      %822 = vmatprep.subr.bf16.mxu0 0
      %823 = vmatpush1.bf16.msra.mxu0 0
      %824 = vmatprep.subr.bf16.mxu0 0
      %825 = vmatpush1.bf16.msra.mxu0 0
      %826 = vmatprep.mubr.bf16.mxu0 0
      %827 = vmatmul.mubr.bf16.gmra.mrb[0].mxu0 %v789
      %v828 = vpop.f32.mrb[0].mxu0
      %v829 = vadd.f32 %v381, %v828
      %v830 = vpop.f32.mrb[0].mxu0
      %v831 = vpop.f32.mrb[0].mxu0
      %v832 = vadd.f32 %v381, %v831
      %v833 = vpop.f32.mrb[0].mxu0
      %834 = vdwg.mxu0
      %v836 = vunpack.c.l.s4 1983009808
      %v837 = vunpack.c.0.s8 %v836
      %v838 = vlaneseq
      %v839 = vshrl.u32 %v838, 7
      %v840 = vsub.s32 %v837, %v839
      %v841 = vrot.slane %v716, %v840
      %v842 = vcombine.high %v841, %v841
      %v844 = vshrl.u32 %v841, 16
      %v846 = vrot.slane %v844, 6
      %v847 = vshll.u32 %v841, 16
      %v849 = vrot.slane %v847, 7
      %v850 = vor.u32 %v846, %v849
      %v851 = vrot.slane %v850, 2
      %v853 = vshll.u32 %v842, 16
      %v855 = vrot.slane %v853, 7
      %v856 = vsel %vm530, %v851, %v855
      %s857 = scalar_lea.vmem %s1, 156
      %v858 = vld [vmem:[%s857] sm:$0xf]
      %v859 = vld [vmem:[%s857 + $0x4] sm:$0xf]
      %v860 = vld [vmem:[%s857 + $0x8] sm:$0xf]
      %v861 = vld [vmem:[%s857 + $0xc] sm:$0xf]
      %v862 = vld [vmem:[%s857 + $0x10] sm:$0xf]
      %v863 = vld [vmem:[%s857 + $0x14] sm:$0xf]
      %v864 = vld [vmem:[%s857 + $0x18] sm:$0xf]
      %v865 = vld [vmem:[%s857 + $0x1c] sm:$0xf]
      %v866 = vld [vmem:[%s857 + $0x20] sm:$0xf]
      %v867 = vld [vmem:[%s857 + $0x24] sm:$0xf]
      %v868 = vld [vmem:[%s857 + $0x28] sm:$0xf]
      %v869 = vld [vmem:[%s857 + $0x2c] sm:$0xf]
      %v870 = vld [vmem:[%s857 + $0x30] sm:$0x3]
      %v871 = vcombine.low %v558, %v572
      %v872 = vcombine.low %v586, %v856
      %v874 = vunpack.c.l.s4 1983009808
      %v875 = vunpack.c.0.s8 %v874
      %v876 = vlaneseq
      %v877 = vshrl.u32 %v876, 7
      %v878 = vsub.s32 %v875, %v877
      %v879 = vrot.slane %v871, %v878
      %v881 = vunpack.c.l.s4 1983009808
      %v882 = vunpack.c.0.s8 %v881
      %v883 = vlaneseq
      %v884 = vshrl.u32 %v883, 7
      %v885 = vsub.s32 %v882, %v884
      %v886 = vrot.slane %v872, %v885
      %v887 = vcombine.low %v879, %v886
      %v901 = vunpack.c.l.b16 %v858
      %v902 = vunpack.c.l.b16 %v859
      %v903 = vunpack.c.l.b16 %v860
      %v904 = vunpack.c.l.b16 %v861
      %v905 = vunpack.c.l.b16 %v862
      %v906 = vunpack.c.l.b16 %v863
      %v907 = vunpack.c.l.b16 %v864
      %v908 = vunpack.c.l.b16 %v865
      %v909 = vunpack.c.l.b16 %v866
      %v910 = vunpack.c.l.b16 %v867
      %v911 = vunpack.c.l.b16 %v868
      %v912 = vunpack.c.l.b16 %v869
      %v913 = vunpack.c.l.b16 %v870
      %v914 = vpack.c.b16 %v902, %v901
      %v915 = vpack.c.b16 %v904, %v903
      %v916 = vpack.c.b16 %v906, %v905
      %v917 = vpack.c.b16 %v908, %v907
      %v918 = vpack.c.b16 %v910, %v909
      %v919 = vpack.c.b16 %v912, %v911
      %v920 = vpack.c.b16 %v913, %v913
      %v928 = vsel %vm443, %v887, 0
      %v931 = vsel %vm447, %v920, 0
      %933 = vmatprep.subr.bf16.mxu0 0
      %934 = vmatpush1.bf16.msra.mxu0 %v914
      %935 = vmatprep.subr.bf16.mxu0 0
      %936 = vmatpush1.bf16.msra.mxu0 %v915
      %937 = vmatprep.subr.bf16.mxu0 0
      %938 = vmatpush1.bf16.msra.mxu0 %v916
      %939 = vmatprep.subr.bf16.mxu0 0
      %940 = vmatpush1.bf16.msra.mxu0 %v917
      %941 = vmatprep.subr.bf16.mxu0 0
      %942 = vmatpush1.bf16.msra.mxu0 %v918
      %943 = vmatprep.subr.bf16.mxu0 0
      %944 = vmatpush1.bf16.msra.mxu0 %v919
      %945 = vmatprep.subr.bf16.mxu0 0
      %946 = vmatpush1.bf16.msra.mxu0 %v931
      %947 = vmatprep.subr.bf16.mxu0 0
      %948 = vmatpush1.bf16.msra.mxu0 0
      %949 = vmatprep.subr.bf16.mxu0 0
      %950 = vmatpush1.bf16.msra.mxu0 0
      %951 = vmatprep.subr.bf16.mxu0 0
      %952 = vmatpush1.bf16.msra.mxu0 0
      %953 = vmatprep.subr.bf16.mxu0 0
      %954 = vmatpush1.bf16.msra.mxu0 0
      %955 = vmatprep.subr.bf16.mxu0 0
      %956 = vmatpush1.bf16.msra.mxu0 0
      %957 = vmatprep.subr.bf16.mxu0 0
      %958 = vmatpush1.bf16.msra.mxu0 0
      %959 = vmatprep.subr.bf16.mxu0 0
      %960 = vmatpush1.bf16.msra.mxu0 0
      %961 = vmatprep.subr.bf16.mxu0 0
      %962 = vmatpush1.bf16.msra.mxu0 0
      %963 = vmatprep.subr.bf16.mxu0 0
      %964 = vmatpush1.bf16.msra.mxu0 0
      %965 = vmatprep.mubr.bf16.mxu0 0
      %966 = vmatmul.mubr.bf16.gmra.mrb[0].mxu0 %v928
      %v967 = vpop.f32.mrb[0].mxu0
      %v968 = vadd.f32 %v381, %v967
      %v969 = vpop.f32.mrb[0].mxu0
      %v970 = vpop.f32.mrb[0].mxu0
      %v971 = vadd.f32 %v381, %v970
      %v972 = vpop.f32.mrb[0].mxu0
      %973 = vdwg.mxu0
      %v976 = vcombine.high %v486, %v486
      %v978 = vunpack.c.l.s4 1966171168
      %v979 = vunpack.c.0.s8 %v978
      %v980 = vlaneseq
      %v981 = vshrl.u32 %v980, 7
      %v982 = vsub.s32 %v979, %v981
      %v983 = vrot.slane %v486, %v982
      %v985 = vunpack.c.l.s4 1966171168
      %v986 = vunpack.c.0.s8 %v985
      %v987 = vlaneseq
      %v988 = vshrl.u32 %v987, 7
      %v989 = vsub.s32 %v986, %v988
      %v990 = vrot.slane %v976, %v989
      %v991 = vcombine.high %v983, %v983
      %v992 = vcombine.high %v990, %v990
      %v994 = vunpack.c.l.s4 1966171168
      %v995 = vunpack.c.0.s8 %v994
      %v996 = vlaneseq
      %v997 = vshrl.u32 %v996, 7
      %v998 = vsub.s32 %v995, %v997
      %v999 = vrot.slane %v983, %v998
      %v1001 = vunpack.c.l.s4 1966171168
      %v1002 = vunpack.c.0.s8 %v1001
      %v1003 = vlaneseq
      %v1004 = vshrl.u32 %v1003, 7
      %v1005 = vsub.s32 %v1002, %v1004
      %v1006 = vrot.slane %v990, %v1005
      %v1008 = vunpack.c.l.s4 1966171168
      %v1009 = vunpack.c.0.s8 %v1008
      %v1010 = vlaneseq
      %v1011 = vshrl.u32 %v1010, 7
      %v1012 = vsub.s32 %v1009, %v1011
      %v1013 = vrot.slane %v991, %v1012
      %v1015 = vunpack.c.l.s4 1966171168
      %v1016 = vunpack.c.0.s8 %v1015
      %v1017 = vlaneseq
      %v1018 = vshrl.u32 %v1017, 7
      %v1019 = vsub.s32 %v1016, %v1018
      %v1020 = vrot.slane %v992, %v1019
      %v1021 = vcombine.high %v999, %v999
      %v1022 = vcombine.high %v1006, %v1006
      %v1023 = vcombine.high %v1013, %v1013
      %v1024 = vcombine.high %v1020, %v1020
      %v1025 = vcombine.high %v489, %v489
      %v1027 = vunpack.c.l.s4 1966171168
      %v1028 = vunpack.c.0.s8 %v1027
      %v1029 = vlaneseq
      %v1030 = vshrl.u32 %v1029, 7
      %v1031 = vsub.s32 %v1028, %v1030
      %v1032 = vrot.slane %v489, %v1031
      %v1034 = vunpack.c.l.s4 1966171168
      %v1035 = vunpack.c.0.s8 %v1034
      %v1036 = vlaneseq
      %v1037 = vshrl.u32 %v1036, 7
      %v1038 = vsub.s32 %v1035, %v1037
      %v1039 = vrot.slane %v1025, %v1038
      %v1040 = vcombine.high %v1032, %v1032
      %v1041 = vcombine.high %v1039, %v1039
      %v1043 = vunpack.c.l.s4 1966171168
      %v1044 = vunpack.c.0.s8 %v1043
      %v1045 = vlaneseq
      %v1046 = vshrl.u32 %v1045, 7
      %v1047 = vsub.s32 %v1044, %v1046
      %v1048 = vrot.slane %v1032, %v1047
      %v1050 = vunpack.c.l.s4 1966171168
      %v1051 = vunpack.c.0.s8 %v1050
      %v1052 = vlaneseq
      %v1053 = vshrl.u32 %v1052, 7
      %v1054 = vsub.s32 %v1051, %v1053
      %v1055 = vrot.slane %v1039, %v1054
      %v1057 = vunpack.c.l.s4 1966171168
      %v1058 = vunpack.c.0.s8 %v1057
      %v1059 = vlaneseq
      %v1060 = vshrl.u32 %v1059, 7
      %v1061 = vsub.s32 %v1058, %v1060
      %v1062 = vrot.slane %v1040, %v1061
      %v1064 = vunpack.c.l.s4 1966171168
      %v1065 = vunpack.c.0.s8 %v1064
      %v1066 = vlaneseq
      %v1067 = vshrl.u32 %v1066, 7
      %v1068 = vsub.s32 %v1065, %v1067
      %v1069 = vrot.slane %v1041, %v1068
      %v1070 = vcombine.high %v1048, %v1048
      %v1071 = vcombine.high %v1055, %v1055
      %v1072 = vcombine.high %v1062, %v1062
      %v1073 = vcombine.high %v1069, %v1069
      %v1092 = vcombine.high %v698, %v698
      %v1094 = vunpack.c.l.s4 1966171168
      %v1095 = vunpack.c.0.s8 %v1094
      %v1096 = vlaneseq
      %v1097 = vshrl.u32 %v1096, 7
      %v1098 = vsub.s32 %v1095, %v1097
      %v1099 = vrot.slane %v698, %v1098
      %v1101 = vunpack.c.l.s4 1966171168
      %v1102 = vunpack.c.0.s8 %v1101
      %v1103 = vlaneseq
      %v1104 = vshrl.u32 %v1103, 7
      %v1105 = vsub.s32 %v1102, %v1104
      %v1106 = vrot.slane %v1092, %v1105
      %v1107 = vcombine.high %v1099, %v1099
      %v1108 = vcombine.high %v1106, %v1106
      %v1110 = vunpack.c.l.s4 1966171168
      %v1111 = vunpack.c.0.s8 %v1110
      %v1112 = vlaneseq
      %v1113 = vshrl.u32 %v1112, 7
      %v1114 = vsub.s32 %v1111, %v1113
      %v1115 = vrot.slane %v1099, %v1114
      %v1117 = vunpack.c.l.s4 1966171168
      %v1118 = vunpack.c.0.s8 %v1117
      %v1119 = vlaneseq
      %v1120 = vshrl.u32 %v1119, 7
      %v1121 = vsub.s32 %v1118, %v1120
      %v1122 = vrot.slane %v1106, %v1121
      %v1124 = vunpack.c.l.s4 1966171168
      %v1125 = vunpack.c.0.s8 %v1124
      %v1126 = vlaneseq
      %v1127 = vshrl.u32 %v1126, 7
      %v1128 = vsub.s32 %v1125, %v1127
      %v1129 = vrot.slane %v1107, %v1128
      %v1131 = vunpack.c.l.s4 1966171168
      %v1132 = vunpack.c.0.s8 %v1131
      %v1133 = vlaneseq
      %v1134 = vshrl.u32 %v1133, 7
      %v1135 = vsub.s32 %v1132, %v1134
      %v1136 = vrot.slane %v1108, %v1135
      %v1137 = vcombine.high %v1115, %v1115
      %v1138 = vcombine.high %v1122, %v1122
      %v1139 = vcombine.high %v1129, %v1129
      %v1140 = vcombine.high %v1136, %v1136
      %v1141 = vcombine.high %v701, %v701
      %v1143 = vunpack.c.l.s4 1966171168
      %v1144 = vunpack.c.0.s8 %v1143
      %v1145 = vlaneseq
      %v1146 = vshrl.u32 %v1145, 7
      %v1147 = vsub.s32 %v1144, %v1146
      %v1148 = vrot.slane %v701, %v1147
      %v1150 = vunpack.c.l.s4 1966171168
      %v1151 = vunpack.c.0.s8 %v1150
      %v1152 = vlaneseq
      %v1153 = vshrl.u32 %v1152, 7
      %v1154 = vsub.s32 %v1151, %v1153
      %v1155 = vrot.slane %v1141, %v1154
      %v1156 = vcombine.high %v1148, %v1148
      %v1157 = vcombine.high %v1155, %v1155
      %v1159 = vunpack.c.l.s4 1966171168
      %v1160 = vunpack.c.0.s8 %v1159
      %v1161 = vlaneseq
      %v1162 = vshrl.u32 %v1161, 7
      %v1163 = vsub.s32 %v1160, %v1162
      %v1164 = vrot.slane %v1148, %v1163
      %v1166 = vunpack.c.l.s4 1966171168
      %v1167 = vunpack.c.0.s8 %v1166
      %v1168 = vlaneseq
      %v1169 = vshrl.u32 %v1168, 7
      %v1170 = vsub.s32 %v1167, %v1169
      %v1171 = vrot.slane %v1155, %v1170
      %v1173 = vunpack.c.l.s4 1966171168
      %v1174 = vunpack.c.0.s8 %v1173
      %v1175 = vlaneseq
      %v1176 = vshrl.u32 %v1175, 7
      %v1177 = vsub.s32 %v1174, %v1176
      %v1178 = vrot.slane %v1156, %v1177
      %v1180 = vunpack.c.l.s4 1966171168
      %v1181 = vunpack.c.0.s8 %v1180
      %v1182 = vlaneseq
      %v1183 = vshrl.u32 %v1182, 7
      %v1184 = vsub.s32 %v1181, %v1183
      %v1185 = vrot.slane %v1157, %v1184
      %v1186 = vcombine.high %v1164, %v1164
      %v1187 = vcombine.high %v1171, %v1171
      %v1188 = vcombine.high %v1178, %v1178
      %v1189 = vcombine.high %v1185, %v1185
      %v1190 = vlaneseq
      %v1191 = vshrl.u32 %v1190, 7
      %v1192 = vsub.s32 0, %v1191
      %v1193 = vrot.slane %v1115, %v1192
      %v1194 = vlaneseq
      %v1195 = vshrl.u32 %v1194, 7
      %v1196 = vsub.s32 0, %v1195
      %v1197 = vrot.slane %v1129, %v1196
      %v1198 = vlaneseq
      %v1199 = vshrl.u32 %v1198, 7
      %v1200 = vsub.s32 0, %v1199
      %v1201 = vrot.slane %v1137, %v1200
      %v1202 = vlaneseq
      %v1203 = vshrl.u32 %v1202, 7
      %v1204 = vsub.s32 0, %v1203
      %v1205 = vrot.slane %v1139, %v1204
      %v1206 = vlaneseq
      %v1207 = vshrl.u32 %v1206, 7
      %v1208 = vsub.s32 0, %v1207
      %v1209 = vrot.slane %v1122, %v1208
      %v1210 = vlaneseq
      %v1211 = vshrl.u32 %v1210, 7
      %v1212 = vsub.s32 0, %v1211
      %v1213 = vrot.slane %v1136, %v1212
      %v1214 = vlaneseq
      %v1215 = vshrl.u32 %v1214, 7
      %v1216 = vsub.s32 0, %v1215
      %v1217 = vrot.slane %v1138, %v1216
      %v1218 = vlaneseq
      %v1219 = vshrl.u32 %v1218, 7
      %v1220 = vsub.s32 0, %v1219
      %v1221 = vrot.slane %v1140, %v1220
      %v1222 = vlaneseq
      %v1223 = vshrl.u32 %v1222, 7
      %v1224 = vsub.s32 0, %v1223
      %v1225 = vrot.slane %v1164, %v1224
      %v1226 = vlaneseq
      %v1227 = vshrl.u32 %v1226, 7
      %v1228 = vsub.s32 0, %v1227
      %v1229 = vrot.slane %v1178, %v1228
      %v1230 = vlaneseq
      %v1231 = vshrl.u32 %v1230, 7
      %v1232 = vsub.s32 0, %v1231
      %v1233 = vrot.slane %v1186, %v1232
      %v1234 = vlaneseq
      %v1235 = vshrl.u32 %v1234, 7
      %v1236 = vsub.s32 0, %v1235
      %v1237 = vrot.slane %v1188, %v1236
      %v1238 = vlaneseq
      %v1239 = vshrl.u32 %v1238, 7
      %v1240 = vsub.s32 0, %v1239
      %v1241 = vrot.slane %v1171, %v1240
      %v1242 = vlaneseq
      %v1243 = vshrl.u32 %v1242, 7
      %v1244 = vsub.s32 0, %v1243
      %v1245 = vrot.slane %v1185, %v1244
      %v1246 = vlaneseq
      %v1247 = vshrl.u32 %v1246, 7
      %v1248 = vsub.s32 0, %v1247
      %v1249 = vrot.slane %v1187, %v1248
      %v1250 = vlaneseq
      %v1251 = vshrl.u32 %v1250, 7
      %v1252 = vsub.s32 0, %v1251
      %v1253 = vrot.slane %v1189, %v1252
      %vm1270 = vcmask 1040384
      %v1271 = vsel %vm1270, %v999, %v1193
      %v1272 = vsel %vm1270, %v1013, %v1197
      %v1273 = vsel %vm1270, %v1021, %v1201
      %v1274 = vsel %vm1270, %v1023, %v1205
      %v1275 = vsel %vm1270, %v1006, %v1209
      %v1276 = vsel %vm1270, %v1020, %v1213
      %v1277 = vsel %vm1270, %v1022, %v1217
      %v1278 = vsel %vm1270, %v1024, %v1221
      %v1279 = vsel %vm1270, %v1048, %v1225
      %v1280 = vsel %vm1270, %v1062, %v1229
      %v1281 = vsel %vm1270, %v1070, %v1233
      %v1282 = vsel %vm1270, %v1072, %v1237
      %v1283 = vsel %vm1270, %v1055, %v1241
      %v1284 = vsel %vm1270, %v1069, %v1245
      %v1285 = vsel %vm1270, %v1071, %v1249
      %v1286 = vsel %vm1270, %v1073, %v1253
      %v1289 = vcombine.high %v829, %v829
      %v1291 = vunpack.c.l.s4 1966171168
      %v1292 = vunpack.c.0.s8 %v1291
      %v1293 = vlaneseq
      %v1294 = vshrl.u32 %v1293, 7
      %v1295 = vsub.s32 %v1292, %v1294
      %v1296 = vrot.slane %v829, %v1295
      %v1298 = vunpack.c.l.s4 1966171168
      %v1299 = vunpack.c.0.s8 %v1298
      %v1300 = vlaneseq
      %v1301 = vshrl.u32 %v1300, 7
      %v1302 = vsub.s32 %v1299, %v1301
      %v1303 = vrot.slane %v1289, %v1302
      %v1304 = vcombine.high %v1296, %v1296
      %v1305 = vcombine.high %v1303, %v1303
      %v1307 = vunpack.c.l.s4 1966171168
      %v1308 = vunpack.c.0.s8 %v1307
      %v1309 = vlaneseq
      %v1310 = vshrl.u32 %v1309, 7
      %v1311 = vsub.s32 %v1308, %v1310
      %v1312 = vrot.slane %v1296, %v1311
      %v1314 = vunpack.c.l.s4 1966171168
      %v1315 = vunpack.c.0.s8 %v1314
      %v1316 = vlaneseq
      %v1317 = vshrl.u32 %v1316, 7
      %v1318 = vsub.s32 %v1315, %v1317
      %v1319 = vrot.slane %v1303, %v1318
      %v1321 = vunpack.c.l.s4 1966171168
      %v1322 = vunpack.c.0.s8 %v1321
      %v1323 = vlaneseq
      %v1324 = vshrl.u32 %v1323, 7
      %v1325 = vsub.s32 %v1322, %v1324
      %v1326 = vrot.slane %v1304, %v1325
      %v1328 = vunpack.c.l.s4 1966171168
      %v1329 = vunpack.c.0.s8 %v1328
      %v1330 = vlaneseq
      %v1331 = vshrl.u32 %v1330, 7
      %v1332 = vsub.s32 %v1329, %v1331
      %v1333 = vrot.slane %v1305, %v1332
      %v1334 = vcombine.high %v1312, %v1312
      %v1335 = vcombine.high %v1319, %v1319
      %v1336 = vcombine.high %v1326, %v1326
      %v1337 = vcombine.high %v1333, %v1333
      %v1338 = vcombine.high %v832, %v832
      %v1340 = vunpack.c.l.s4 1966171168
      %v1341 = vunpack.c.0.s8 %v1340
      %v1342 = vlaneseq
      %v1343 = vshrl.u32 %v1342, 7
      %v1344 = vsub.s32 %v1341, %v1343
      %v1345 = vrot.slane %v832, %v1344
      %v1347 = vunpack.c.l.s4 1966171168
      %v1348 = vunpack.c.0.s8 %v1347
      %v1349 = vlaneseq
      %v1350 = vshrl.u32 %v1349, 7
      %v1351 = vsub.s32 %v1348, %v1350
      %v1352 = vrot.slane %v1338, %v1351
      %v1353 = vcombine.high %v1345, %v1345
      %v1354 = vcombine.high %v1352, %v1352
      %v1356 = vunpack.c.l.s4 1966171168
      %v1357 = vunpack.c.0.s8 %v1356
      %v1358 = vlaneseq
      %v1359 = vshrl.u32 %v1358, 7
      %v1360 = vsub.s32 %v1357, %v1359
      %v1361 = vrot.slane %v1345, %v1360
      %v1363 = vunpack.c.l.s4 1966171168
      %v1364 = vunpack.c.0.s8 %v1363
      %v1365 = vlaneseq
      %v1366 = vshrl.u32 %v1365, 7
      %v1367 = vsub.s32 %v1364, %v1366
      %v1368 = vrot.slane %v1352, %v1367
      %v1370 = vunpack.c.l.s4 1966171168
      %v1371 = vunpack.c.0.s8 %v1370
      %v1372 = vlaneseq
      %v1373 = vshrl.u32 %v1372, 7
      %v1374 = vsub.s32 %v1371, %v1373
      %v1375 = vrot.slane %v1353, %v1374
      %v1377 = vunpack.c.l.s4 1966171168
      %v1378 = vunpack.c.0.s8 %v1377
      %v1379 = vlaneseq
      %v1380 = vshrl.u32 %v1379, 7
      %v1381 = vsub.s32 %v1378, %v1380
      %v1382 = vrot.slane %v1354, %v1381
      %v1383 = vcombine.high %v1361, %v1361
      %v1384 = vcombine.high %v1368, %v1368
      %v1385 = vcombine.high %v1375, %v1375
      %v1386 = vcombine.high %v1382, %v1382
      %v1405 = vcombine.high %v968, %v968
      %v1407 = vunpack.c.l.s4 1966171168
      %v1408 = vunpack.c.0.s8 %v1407
      %v1409 = vlaneseq
      %v1410 = vshrl.u32 %v1409, 7
      %v1411 = vsub.s32 %v1408, %v1410
      %v1412 = vrot.slane %v968, %v1411
      %v1414 = vunpack.c.l.s4 1966171168
      %v1415 = vunpack.c.0.s8 %v1414
      %v1416 = vlaneseq
      %v1417 = vshrl.u32 %v1416, 7
      %v1418 = vsub.s32 %v1415, %v1417
      %v1419 = vrot.slane %v1405, %v1418
      %v1420 = vcombine.high %v1412, %v1412
      %v1421 = vcombine.high %v1419, %v1419
      %v1423 = vunpack.c.l.s4 1966171168
      %v1424 = vunpack.c.0.s8 %v1423
      %v1425 = vlaneseq
      %v1426 = vshrl.u32 %v1425, 7
      %v1427 = vsub.s32 %v1424, %v1426
      %v1428 = vrot.slane %v1412, %v1427
      %v1430 = vunpack.c.l.s4 1966171168
      %v1431 = vunpack.c.0.s8 %v1430
      %v1432 = vlaneseq
      %v1433 = vshrl.u32 %v1432, 7
      %v1434 = vsub.s32 %v1431, %v1433
      %v1435 = vrot.slane %v1419, %v1434
      %v1437 = vunpack.c.l.s4 1966171168
      %v1438 = vunpack.c.0.s8 %v1437
      %v1439 = vlaneseq
      %v1440 = vshrl.u32 %v1439, 7
      %v1441 = vsub.s32 %v1438, %v1440
      %v1442 = vrot.slane %v1420, %v1441
      %v1444 = vunpack.c.l.s4 1966171168
      %v1445 = vunpack.c.0.s8 %v1444
      %v1446 = vlaneseq
      %v1447 = vshrl.u32 %v1446, 7
      %v1448 = vsub.s32 %v1445, %v1447
      %v1449 = vrot.slane %v1421, %v1448
      %v1450 = vcombine.high %v1428, %v1428
      %v1451 = vcombine.high %v1435, %v1435
      %v1452 = vcombine.high %v1442, %v1442
      %v1453 = vcombine.high %v1449, %v1449
      %v1454 = vcombine.high %v971, %v971
      %v1456 = vunpack.c.l.s4 1966171168
      %v1457 = vunpack.c.0.s8 %v1456
      %v1458 = vlaneseq
      %v1459 = vshrl.u32 %v1458, 7
      %v1460 = vsub.s32 %v1457, %v1459
      %v1461 = vrot.slane %v971, %v1460
      %v1463 = vunpack.c.l.s4 1966171168
      %v1464 = vunpack.c.0.s8 %v1463
      %v1465 = vlaneseq
      %v1466 = vshrl.u32 %v1465, 7
      %v1467 = vsub.s32 %v1464, %v1466
      %v1468 = vrot.slane %v1454, %v1467
      %v1469 = vcombine.high %v1461, %v1461
      %v1470 = vcombine.high %v1468, %v1468
      %v1472 = vunpack.c.l.s4 1966171168
      %v1473 = vunpack.c.0.s8 %v1472
      %v1474 = vlaneseq
      %v1475 = vshrl.u32 %v1474, 7
      %v1476 = vsub.s32 %v1473, %v1475
      %v1477 = vrot.slane %v1461, %v1476
      %v1479 = vunpack.c.l.s4 1966171168
      %v1480 = vunpack.c.0.s8 %v1479
      %v1481 = vlaneseq
      %v1482 = vshrl.u32 %v1481, 7
      %v1483 = vsub.s32 %v1480, %v1482
      %v1484 = vrot.slane %v1468, %v1483
      %v1486 = vunpack.c.l.s4 1966171168
      %v1487 = vunpack.c.0.s8 %v1486
      %v1488 = vlaneseq
      %v1489 = vshrl.u32 %v1488, 7
      %v1490 = vsub.s32 %v1487, %v1489
      %v1491 = vrot.slane %v1469, %v1490
      %v1493 = vunpack.c.l.s4 1966171168
      %v1494 = vunpack.c.0.s8 %v1493
      %v1495 = vlaneseq
      %v1496 = vshrl.u32 %v1495, 7
      %v1497 = vsub.s32 %v1494, %v1496
      %v1498 = vrot.slane %v1470, %v1497
      %v1499 = vcombine.high %v1477, %v1477
      %v1500 = vcombine.high %v1484, %v1484
      %v1501 = vcombine.high %v1491, %v1491
      %v1502 = vcombine.high %v1498, %v1498
      %v1503 = vlaneseq
      %v1504 = vshrl.u32 %v1503, 7
      %v1505 = vsub.s32 0, %v1504
      %v1506 = vrot.slane %v1428, %v1505
      %v1507 = vlaneseq
      %v1508 = vshrl.u32 %v1507, 7
      %v1509 = vsub.s32 0, %v1508
      %v1510 = vrot.slane %v1442, %v1509
      %v1511 = vlaneseq
      %v1512 = vshrl.u32 %v1511, 7
      %v1513 = vsub.s32 0, %v1512
      %v1514 = vrot.slane %v1450, %v1513
      %v1515 = vlaneseq
      %v1516 = vshrl.u32 %v1515, 7
      %v1517 = vsub.s32 0, %v1516
      %v1518 = vrot.slane %v1452, %v1517
      %v1519 = vlaneseq
      %v1520 = vshrl.u32 %v1519, 7
      %v1521 = vsub.s32 0, %v1520
      %v1522 = vrot.slane %v1435, %v1521
      %v1523 = vlaneseq
      %v1524 = vshrl.u32 %v1523, 7
      %v1525 = vsub.s32 0, %v1524
      %v1526 = vrot.slane %v1449, %v1525
      %v1527 = vlaneseq
      %v1528 = vshrl.u32 %v1527, 7
      %v1529 = vsub.s32 0, %v1528
      %v1530 = vrot.slane %v1451, %v1529
      %v1531 = vlaneseq
      %v1532 = vshrl.u32 %v1531, 7
      %v1533 = vsub.s32 0, %v1532
      %v1534 = vrot.slane %v1453, %v1533
      %v1535 = vlaneseq
      %v1536 = vshrl.u32 %v1535, 7
      %v1537 = vsub.s32 0, %v1536
      %v1538 = vrot.slane %v1477, %v1537
      %v1539 = vlaneseq
      %v1540 = vshrl.u32 %v1539, 7
      %v1541 = vsub.s32 0, %v1540
      %v1542 = vrot.slane %v1491, %v1541
      %v1543 = vlaneseq
      %v1544 = vshrl.u32 %v1543, 7
      %v1545 = vsub.s32 0, %v1544
      %v1546 = vrot.slane %v1499, %v1545
      %v1547 = vlaneseq
      %v1548 = vshrl.u32 %v1547, 7
      %v1549 = vsub.s32 0, %v1548
      %v1550 = vrot.slane %v1501, %v1549
      %v1551 = vlaneseq
      %v1552 = vshrl.u32 %v1551, 7
      %v1553 = vsub.s32 0, %v1552
      %v1554 = vrot.slane %v1484, %v1553
      %v1555 = vlaneseq
      %v1556 = vshrl.u32 %v1555, 7
      %v1557 = vsub.s32 0, %v1556
      %v1558 = vrot.slane %v1498, %v1557
      %v1559 = vlaneseq
      %v1560 = vshrl.u32 %v1559, 7
      %v1561 = vsub.s32 0, %v1560
      %v1562 = vrot.slane %v1500, %v1561
      %v1563 = vlaneseq
      %v1564 = vshrl.u32 %v1563, 7
      %v1565 = vsub.s32 0, %v1564
      %v1566 = vrot.slane %v1502, %v1565
      %v1583 = vsel %vm1270, %v1312, %v1506
      %v1584 = vsel %vm1270, %v1326, %v1510
      %v1585 = vsel %vm1270, %v1334, %v1514
      %v1586 = vsel %vm1270, %v1336, %v1518
      %v1587 = vsel %vm1270, %v1319, %v1522
      %v1588 = vsel %vm1270, %v1333, %v1526
      %v1589 = vsel %vm1270, %v1335, %v1530
      %v1590 = vsel %vm1270, %v1337, %v1534
      %v1591 = vsel %vm1270, %v1361, %v1538
      %v1592 = vsel %vm1270, %v1375, %v1542
      %v1593 = vsel %vm1270, %v1383, %v1546
      %v1594 = vsel %vm1270, %v1385, %v1550
      %v1595 = vsel %vm1270, %v1368, %v1554
      %v1596 = vsel %vm1270, %v1382, %v1558
      %v1597 = vsel %vm1270, %v1384, %v1562
      %v1598 = vsel %vm1270, %v1386, %v1566
      %v1599 = vcombine.low %v1271, %v1583
      %v1601 = vunpack.c.l.s4 1934713408
      %v1602 = vunpack.c.0.s8 %v1601
      %v1603 = vlaneseq
      %v1604 = vshrl.u32 %v1603, 7
      %v1605 = vsub.s32 %v1602, %v1604
      %v1606 = vrot.slane %v1599, %v1605
      %v1607 = vcombine.high %v1606, 0.0
      %v1608 = vcombine.low %v1275, %v1587
      %v1610 = vunpack.c.l.s4 1934713408
      %v1611 = vunpack.c.0.s8 %v1610
      %v1612 = vlaneseq
      %v1613 = vshrl.u32 %v1612, 7
      %v1614 = vsub.s32 %v1611, %v1613
      %v1615 = vrot.slane %v1608, %v1614
      %v1616 = vcombine.high %v1615, 0.0
      %v1617 = vcombine.low %v1279, %v1591
      %v1619 = vunpack.c.l.s4 1934713408
      %v1620 = vunpack.c.0.s8 %v1619
      %v1621 = vlaneseq
      %v1622 = vshrl.u32 %v1621, 7
      %v1623 = vsub.s32 %v1620, %v1622
      %v1624 = vrot.slane %v1617, %v1623
      %v1625 = vcombine.high %v1624, 0.0
      %v1626 = vcombine.low %v1283, %v1595
      %v1628 = vunpack.c.l.s4 1934713408
      %v1629 = vunpack.c.0.s8 %v1628
      %v1630 = vlaneseq
      %v1631 = vshrl.u32 %v1630, 7
      %v1632 = vsub.s32 %v1629, %v1631
      %v1633 = vrot.slane %v1626, %v1632
      %v1634 = vcombine.high %v1633, 0.0
      %v1635 = vcombine.low %v1272, %v1584
      %v1637 = vunpack.c.l.s4 1934713408
      %v1638 = vunpack.c.0.s8 %v1637
      %v1639 = vlaneseq
      %v1640 = vshrl.u32 %v1639, 7
      %v1641 = vsub.s32 %v1638, %v1640
      %v1642 = vrot.slane %v1635, %v1641
      %v1643 = vcombine.high %v1642, 0.0
      %v1644 = vcombine.low %v1276, %v1588
      %v1646 = vunpack.c.l.s4 1934713408
      %v1647 = vunpack.c.0.s8 %v1646
      %v1648 = vlaneseq
      %v1649 = vshrl.u32 %v1648, 7
      %v1650 = vsub.s32 %v1647, %v1649
      %v1651 = vrot.slane %v1644, %v1650
      %v1652 = vcombine.high %v1651, 0.0
      %v1653 = vcombine.low %v1280, %v1592
      %v1655 = vunpack.c.l.s4 1934713408
      %v1656 = vunpack.c.0.s8 %v1655
      %v1657 = vlaneseq
      %v1658 = vshrl.u32 %v1657, 7
      %v1659 = vsub.s32 %v1656, %v1658
      %v1660 = vrot.slane %v1653, %v1659
      %v1661 = vcombine.high %v1660, 0.0
      %v1662 = vcombine.low %v1284, %v1596
      %v1664 = vunpack.c.l.s4 1934713408
      %v1665 = vunpack.c.0.s8 %v1664
      %v1666 = vlaneseq
      %v1667 = vshrl.u32 %v1666, 7
      %v1668 = vsub.s32 %v1665, %v1667
      %v1669 = vrot.slane %v1662, %v1668
      %v1670 = vcombine.high %v1669, 0.0
      %v1671 = vcombine.low %v1273, %v1585
      %v1673 = vunpack.c.l.s4 1934713408
      %v1674 = vunpack.c.0.s8 %v1673
      %v1675 = vlaneseq
      %v1676 = vshrl.u32 %v1675, 7
      %v1677 = vsub.s32 %v1674, %v1676
      %v1678 = vrot.slane %v1671, %v1677
      %v1679 = vcombine.high %v1678, 0.0
      %v1680 = vcombine.low %v1277, %v1589
      %v1682 = vunpack.c.l.s4 1934713408
      %v1683 = vunpack.c.0.s8 %v1682
      %v1684 = vlaneseq
      %v1685 = vshrl.u32 %v1684, 7
      %v1686 = vsub.s32 %v1683, %v1685
      %v1687 = vrot.slane %v1680, %v1686
      %v1688 = vcombine.high %v1687, 0.0
      %v1689 = vcombine.low %v1281, %v1593
      %v1691 = vunpack.c.l.s4 1934713408
      %v1692 = vunpack.c.0.s8 %v1691
      %v1693 = vlaneseq
      %v1694 = vshrl.u32 %v1693, 7
      %v1695 = vsub.s32 %v1692, %v1694
      %v1696 = vrot.slane %v1689, %v1695
      %v1697 = vcombine.high %v1696, 0.0
      %v1698 = vcombine.low %v1285, %v1597
      %v1700 = vunpack.c.l.s4 1934713408
      %v1701 = vunpack.c.0.s8 %v1700
      %v1702 = vlaneseq
      %v1703 = vshrl.u32 %v1702, 7
      %v1704 = vsub.s32 %v1701, %v1703
      %v1705 = vrot.slane %v1698, %v1704
      %v1706 = vcombine.high %v1705, 0.0
      %v1707 = vcombine.low %v1274, %v1586
      %v1709 = vunpack.c.l.s4 1934713408
      %v1710 = vunpack.c.0.s8 %v1709
      %v1711 = vlaneseq
      %v1712 = vshrl.u32 %v1711, 7
      %v1713 = vsub.s32 %v1710, %v1712
      %v1714 = vrot.slane %v1707, %v1713
      %v1715 = vcombine.high %v1714, 0.0
      %v1716 = vcombine.low %v1278, %v1590
      %v1718 = vunpack.c.l.s4 1934713408
      %v1719 = vunpack.c.0.s8 %v1718
      %v1720 = vlaneseq
      %v1721 = vshrl.u32 %v1720, 7
      %v1722 = vsub.s32 %v1719, %v1721
      %v1723 = vrot.slane %v1716, %v1722
      %v1724 = vcombine.high %v1723, 0.0
      %v1725 = vcombine.low %v1282, %v1594
      %v1727 = vunpack.c.l.s4 1934713408
      %v1728 = vunpack.c.0.s8 %v1727
      %v1729 = vlaneseq
      %v1730 = vshrl.u32 %v1729, 7
      %v1731 = vsub.s32 %v1728, %v1730
      %v1732 = vrot.slane %v1725, %v1731
      %v1733 = vcombine.high %v1732, 0.0
      %v1734 = vcombine.low %v1286, %v1598
      %v1736 = vunpack.c.l.s4 1934713408
      %v1737 = vunpack.c.0.s8 %v1736
      %v1738 = vlaneseq
      %v1739 = vshrl.u32 %v1738, 7
      %v1740 = vsub.s32 %v1737, %v1739
      %v1741 = vrot.slane %v1734, %v1740
      %v1742 = vcombine.high %v1741, 0.0
      %v1747 = vcombine.low %v1606, %v1615
      %v1748 = vcombine.low %v1624, %v1633
      %v1750 = vunpack.c.l.s4 1983009808
      %v1751 = vunpack.c.0.s8 %v1750
      %v1752 = vlaneseq
      %v1753 = vshrl.u32 %v1752, 7
      %v1754 = vsub.s32 %v1751, %v1753
      %v1755 = vrot.slane %v1747, %v1754
      %v1757 = vunpack.c.l.s4 1983009808
      %v1758 = vunpack.c.0.s8 %v1757
      %v1759 = vlaneseq
      %v1760 = vshrl.u32 %v1759, 7
      %v1761 = vsub.s32 %v1758, %v1760
      %v1762 = vrot.slane %v1748, %v1761
      %v1763 = vcombine.low %v1755, %v1762
      %v1769 = vcombine.low %v1607, %v1616
      %v1770 = vcombine.low %v1625, %v1634
      %v1772 = vunpack.c.l.s4 1983009808
      %v1773 = vunpack.c.0.s8 %v1772
      %v1774 = vlaneseq
      %v1775 = vshrl.u32 %v1774, 7
      %v1776 = vsub.s32 %v1773, %v1775
      %v1777 = vrot.slane %v1769, %v1776
      %v1779 = vunpack.c.l.s4 1983009808
      %v1780 = vunpack.c.0.s8 %v1779
      %v1781 = vlaneseq
      %v1782 = vshrl.u32 %v1781, 7
      %v1783 = vsub.s32 %v1780, %v1782
      %v1784 = vrot.slane %v1770, %v1783
      %v1785 = vcombine.low %v1777, %v1784
      %1786 = vrot.lane.b32.xlu0 %v1785, 32
      %v1787 = vpop.permute.xlu0 %1786
      %v1793 = vcombine.low %v1642, %v1651
      %v1794 = vcombine.low %v1660, %v1669
      %v1796 = vunpack.c.l.s4 1983009808
      %v1797 = vunpack.c.0.s8 %v1796
      %v1798 = vlaneseq
      %v1799 = vshrl.u32 %v1798, 7
      %v1800 = vsub.s32 %v1797, %v1799
      %v1801 = vrot.slane %v1793, %v1800
      %v1803 = vunpack.c.l.s4 1983009808
      %v1804 = vunpack.c.0.s8 %v1803
      %v1805 = vlaneseq
      %v1806 = vshrl.u32 %v1805, 7
      %v1807 = vsub.s32 %v1804, %v1806
      %v1808 = vrot.slane %v1794, %v1807
      %v1809 = vcombine.low %v1801, %v1808
      %1810 = vrot.lane.b32.xlu0 %v1809, 64
      %v1811 = vpop.permute.xlu0 %1810
      %v1817 = vcombine.low %v1643, %v1652
      %v1818 = vcombine.low %v1661, %v1670
      %v1820 = vunpack.c.l.s4 1983009808
      %v1821 = vunpack.c.0.s8 %v1820
      %v1822 = vlaneseq
      %v1823 = vshrl.u32 %v1822, 7
      %v1824 = vsub.s32 %v1821, %v1823
      %v1825 = vrot.slane %v1817, %v1824
      %v1827 = vunpack.c.l.s4 1983009808
      %v1828 = vunpack.c.0.s8 %v1827
      %v1829 = vlaneseq
      %v1830 = vshrl.u32 %v1829, 7
      %v1831 = vsub.s32 %v1828, %v1830
      %v1832 = vrot.slane %v1818, %v1831
      %v1833 = vcombine.low %v1825, %v1832
      %1834 = vrot.lane.b32.xlu0 %v1833, 96
      %v1835 = vpop.permute.xlu0 %1834
      %v1841 = vcombine.low %v1678, %v1687
      %v1842 = vcombine.low %v1696, %v1705
      %v1844 = vunpack.c.l.s4 1983009808
      %v1845 = vunpack.c.0.s8 %v1844
      %v1846 = vlaneseq
      %v1847 = vshrl.u32 %v1846, 7
      %v1848 = vsub.s32 %v1845, %v1847
      %v1849 = vrot.slane %v1841, %v1848
      %v1851 = vunpack.c.l.s4 1983009808
      %v1852 = vunpack.c.0.s8 %v1851
      %v1853 = vlaneseq
      %v1854 = vshrl.u32 %v1853, 7
      %v1855 = vsub.s32 %v1852, %v1854
      %v1856 = vrot.slane %v1842, %v1855
      %v1857 = vcombine.low %v1849, %v1856
      %v1863 = vcombine.low %v1679, %v1688
      %v1864 = vcombine.low %v1697, %v1706
      %v1866 = vunpack.c.l.s4 1983009808
      %v1867 = vunpack.c.0.s8 %v1866
      %v1868 = vlaneseq
      %v1869 = vshrl.u32 %v1868, 7
      %v1870 = vsub.s32 %v1867, %v1869
      %v1871 = vrot.slane %v1863, %v1870
      %v1873 = vunpack.c.l.s4 1983009808
      %v1874 = vunpack.c.0.s8 %v1873
      %v1875 = vlaneseq
      %v1876 = vshrl.u32 %v1875, 7
      %v1877 = vsub.s32 %v1874, %v1876
      %v1878 = vrot.slane %v1864, %v1877
      %v1879 = vcombine.low %v1871, %v1878
      %1880 = vrot.lane.b32.xlu0 %v1879, 32
      %v1881 = vpop.permute.xlu0 %1880
      %v1887 = vcombine.low %v1714, %v1723
      %v1888 = vcombine.low %v1732, %v1741
      %v1890 = vunpack.c.l.s4 1983009808
      %v1891 = vunpack.c.0.s8 %v1890
      %v1892 = vlaneseq
      %v1893 = vshrl.u32 %v1892, 7
      %v1894 = vsub.s32 %v1891, %v1893
      %v1895 = vrot.slane %v1887, %v1894
      %v1897 = vunpack.c.l.s4 1983009808
      %v1898 = vunpack.c.0.s8 %v1897
      %v1899 = vlaneseq
      %v1900 = vshrl.u32 %v1899, 7
      %v1901 = vsub.s32 %v1898, %v1900
      %v1902 = vrot.slane %v1888, %v1901
      %v1903 = vcombine.low %v1895, %v1902
      %1904 = vrot.lane.b32.xlu0 %v1903, 64
      %v1905 = vpop.permute.xlu0 %1904
      %v1911 = vcombine.low %v1715, %v1724
      %v1912 = vcombine.low %v1733, %v1742
      %v1914 = vunpack.c.l.s4 1983009808
      %v1915 = vunpack.c.0.s8 %v1914
      %v1916 = vlaneseq
      %v1917 = vshrl.u32 %v1916, 7
      %v1918 = vsub.s32 %v1915, %v1917
      %v1919 = vrot.slane %v1911, %v1918
      %v1921 = vunpack.c.l.s4 1983009808
      %v1922 = vunpack.c.0.s8 %v1921
      %v1923 = vlaneseq
      %v1924 = vshrl.u32 %v1923, 7
      %v1925 = vsub.s32 %v1922, %v1924
      %v1926 = vrot.slane %v1912, %v1925
      %v1927 = vcombine.low %v1919, %v1926
      %1928 = vrot.lane.b32.xlu0 %v1927, 96
      %v1929 = vpop.permute.xlu0 %1928
      %vm1931 = vcmask 261120
      %v1932 = vsel %vm1931, %v1763, %v1787
      %vm1933 = vcmask 523264
      %v1934 = vsel %vm1933, %v1932, %v1811
      %vm1935 = vcmask 785408
      %v1936 = vsel %vm1935, %v1934, %v1835
      %v1937 = vsel %vm1931, %v1857, %v1881
      %v1938 = vsel %vm1933, %v1937, %v1905
      %v1939 = vsel %vm1935, %v1938, %v1929
      %1940 = vst [vmem:[%s167] sm:$0xff] %v1936
      %1941 = vst [vmem:[%s167 + $0x8] sm:$0xff] %v1939
      %p1942 = scmp.lt.s32.totalorder %s14, 1
      %s1943 = scalar_select %p1942, %s14, 1
      %s1944 = smul.addr %s1943, 2
      %s1945 = smul.addr %s1944, 8
      %s1946 = scalar_lea.vmem %s3, %s1945
      // Predicated region
      $region33: #{encoder_upsampler_forward.4} parent=31 // pred_check
        %p1947 = pneg %p100
      $region34: #{encoder_upsampler_forward.4} parent=31 // pred_check_branch
        %1949 = sbr.rel (%p1947) target = $region36
      $region35: #{encoder_upsampler_forward.4} parent=31 // pred_region
        _
      $region36: #{encoder_upsampler_forward.4} parent=31 // pred_fallthru
        _
    $region32: #{encoder_upsampler_forward.4} parent=5 // pred_fallthru
      _
    %p1950 = scmp.le.s32.totalorder 2, %s9
    // Predicated region
    $region37: #{encoder_upsampler_forward.4} parent=5 // pred_check
      %p1951 = pneg %p1950
    $region38: #{encoder_upsampler_forward.4} parent=5 // pred_check_branch
      %1953 = sbr.rel (%p1951) target = $region40
    $region39: #{encoder_upsampler_forward.4} parent=5 // pred_region
      %s1954 = ssub.s32 %s9, 2
      // Predicated region
      $region41: #{encoder_upsampler_forward.4} parent=39 // pred_check
        %p1955 = pneg %p106
      $region42: #{encoder_upsampler_forward.4} parent=39 // pred_check_branch
        %1957 = sbr.rel (%p1955) target = $region44
      $region43: #{encoder_upsampler_forward.4} parent=39 // pred_region
        %p1958 = scmp.lt.s32.totalorder %s15, 1
        %s1959 = scalar_select %p1958, %s15, 1
        %s1960 = smul.addr %s1959, 2
        %s1961 = smul.addr %s1960, 8
        %s1962 = scalar_lea.vmem %s3, %s1961
      $region44: #{encoder_upsampler_forward.4} parent=39 // pred_fallthru
        _
    $region40: #{encoder_upsampler_forward.4} parent=5 // pred_fallthru
      _
  $region6: #{encoder_upsampler_forward.4} parent=0 // loop_footer
    %s13 = sadd.s32 1, %s9
  $region7: #{encoder_upsampler_forward.4} parent=0 // loop_footer_branch
    %8 = sbr.rel target = $region3
  $region8: #{encoder_upsampler_forward.4} parent=0 // loop_exit
    _

// kernel: encoder_upsampler_forward.5
$region0: #{encoder_upsampler_forward.5}
  #allocation0 [shape = 'u32[]', space=smem, size = 0x4, offset = 0x4, fixed_abs, tag = 'smem constant byte address 0x4 - core index']
  #allocation1 [shape = 'u32[144,128]{1,0:T(1,128)}', space=vmem, size = 0x12000, scoped, tag = 'internal scratch']
  %s0 = inlined_call_operand.vmem [shape: bf16[2,4,64], index: 0, kind: input, shape index: {}]
  %s1 = inlined_call_operand.vmem [shape: bf16[4,68,32], index: 1, kind: input, shape index: {}]
  %s2 = inlined_call_operand.vmem [shape: f32[1,32], index: 2, kind: input, shape index: {}]
  %s3 = inlined_call_operand.vmem [shape: bf16[4,132,16], index: 3, kind: input, shape index: {}]
  %s4 = inlined_call_operand.vmem [shape: f32[1,16], index: 4, kind: input, shape index: {}]
  %s5 = inlined_call_operand.vmem [shape: f32[2,16,256], index: 5, kind: output, shape index: {}]
  %s6 = sld [smem:[#allocation0]]
  $region53: #{encoder_upsampler_forward.5} parent=0
    _
  %s8 = ssub.s32 1, %s6
  %s9 = scalar_select 0, %s8, %s6
  loop: start=0, step=1, limit=4
  $region2: #{encoder_upsampler_forward.5} parent=0 // loop_pre_header
    _
  $region3: #{encoder_upsampler_forward.5} parent=0 // loop_header
    %s11 = sphi 0, %s15
    %p12 = scmp.ge.s32.totalorder %s11, 4
    %s21 = sphi 0, %s23
    %s24 = sphi 0, %s21
    %s25 = sphi 0, %s24
    %s41 = sphi 0, %s25
    %s45 = sphi 0, %s45
    %s47 = sphi 0, %s45
    %s48 = sphi 0, %s47
    %s62 = sphi 0, %s48
    %s66 = sphi 0, %s66
    %s68 = sphi 0, %s66
    %s69 = sphi 0, %s68
    %s83 = sphi 0, %s69
    %s87 = sphi 0, %s87
    %s89 = sphi 0, %s87
    %s90 = sphi 0, %s89
    %s104 = sphi 0, %s90
    %s108 = sphi 0, %s108
    %s110 = sphi 0, %s108
    %s111 = sphi 0, %s110
    %s125 = sphi 0, %s111
    %s131 = sphi 0, %s133
    %s134 = sphi 0, %s131
    %s135 = sphi 0, %s134
    %s151 = sphi 0, %s135
  $region4: #{encoder_upsampler_forward.5} parent=0 // loop_header_branch
    %14 = sbr.rel (%p12) target = $region8
  $region5: #{encoder_upsampler_forward.5} parent=0 // loop_body
    %s16 = ssub.s32 %s11, 1
    %s17 = ssub.s32 %s11, 2
    %s18 = sadd.s32 %s11, 1
    %s19 = ssub.s32 %s11, %s18
    %p20 = scmp.eq.s32.totalorder %s19, 0
    %s22 = sadd.s32 %s21, 1
    %s23 = scalar_select %p20, %s21, %s22
    %p26 = pneg %p20
    %p27 = scmp.eq.s32.totalorder %s11, 1
    %p28 = por %p26, %p27
    %p29 = scmp.ne.s32.totalorder %s21, %s24
    %p30 = scmp.eq.s32.totalorder %s11, 0
    %p31 = por %p29, %p30
    %p32 = scmp.ne.s32.totalorder %s21, %s24
    %p33 = scmp.eq.s32.totalorder %s16, 1
    %p34 = por %p32, %p33
    %p35 = scmp.ne.s32.totalorder %s24, %s25
    %p36 = scmp.eq.s32.totalorder %s16, 0
    %p37 = por %p35, %p36
    %p38 = scmp.ne.s32.totalorder %s24, %s25
    %p39 = scmp.eq.s32.totalorder %s17, 1
    %p40 = por %p38, %p39
    %p42 = scmp.ne.s32.totalorder %s25, %s41
    %p43 = scmp.eq.s32.totalorder %s17, 0
    %p44 = por %p42, %p43
    %s46 = sadd.s32 %s45, 1
    %p49 = scmp.eq.s32.totalorder %s11, 1
    %p50 = scmp.ne.s32.totalorder %s45, %s47
    %p51 = scmp.eq.s32.totalorder %s11, 0
    %p52 = por %p50, %p51
    %p53 = scmp.ne.s32.totalorder %s45, %s47
    %p54 = scmp.eq.s32.totalorder %s16, 1
    %p55 = por %p53, %p54
    %p56 = scmp.ne.s32.totalorder %s47, %s48
    %p57 = scmp.eq.s32.totalorder %s16, 0
    %p58 = por %p56, %p57
    %p59 = scmp.ne.s32.totalorder %s47, %s48
    %p60 = scmp.eq.s32.totalorder %s17, 1
    %p61 = por %p59, %p60
    %p63 = scmp.ne.s32.totalorder %s48, %s62
    %p64 = scmp.eq.s32.totalorder %s17, 0
    %p65 = por %p63, %p64
    %s67 = sadd.s32 %s66, 1
    %p70 = scmp.eq.s32.totalorder %s11, 1
    %p71 = scmp.ne.s32.totalorder %s66, %s68
    %p72 = scmp.eq.s32.totalorder %s11, 0
    %p73 = por %p71, %p72
    %p74 = scmp.ne.s32.totalorder %s66, %s68
    %p75 = scmp.eq.s32.totalorder %s16, 1
    %p76 = por %p74, %p75
    %p77 = scmp.ne.s32.totalorder %s68, %s69
    %p78 = scmp.eq.s32.totalorder %s16, 0
    %p79 = por %p77, %p78
    %p80 = scmp.ne.s32.totalorder %s68, %s69
    %p81 = scmp.eq.s32.totalorder %s17, 1
    %p82 = por %p80, %p81
    %p84 = scmp.ne.s32.totalorder %s69, %s83
    %p85 = scmp.eq.s32.totalorder %s17, 0
    %p86 = por %p84, %p85
    %s88 = sadd.s32 %s87, 1
    %p91 = scmp.eq.s32.totalorder %s11, 1
    %p92 = scmp.ne.s32.totalorder %s87, %s89
    %p93 = scmp.eq.s32.totalorder %s11, 0
    %p94 = por %p92, %p93
    %p95 = scmp.ne.s32.totalorder %s87, %s89
    %p96 = scmp.eq.s32.totalorder %s16, 1
    %p97 = por %p95, %p96
    %p98 = scmp.ne.s32.totalorder %s89, %s90
    %p99 = scmp.eq.s32.totalorder %s16, 0
    %p100 = por %p98, %p99
    %p101 = scmp.ne.s32.totalorder %s89, %s90
    %p102 = scmp.eq.s32.totalorder %s17, 1
    %p103 = por %p101, %p102
    %p105 = scmp.ne.s32.totalorder %s90, %s104
    %p106 = scmp.eq.s32.totalorder %s17, 0
    %p107 = por %p105, %p106
    %s109 = sadd.s32 %s108, 1
    %p112 = scmp.eq.s32.totalorder %s11, 1
    %p113 = scmp.ne.s32.totalorder %s108, %s110
    %p114 = scmp.eq.s32.totalorder %s11, 0
    %p115 = por %p113, %p114
    %p116 = scmp.ne.s32.totalorder %s108, %s110
    %p117 = scmp.eq.s32.totalorder %s16, 1
    %p118 = por %p116, %p117
    %p119 = scmp.ne.s32.totalorder %s110, %s111
    %p120 = scmp.eq.s32.totalorder %s16, 0
    %p121 = por %p119, %p120
    %p122 = scmp.ne.s32.totalorder %s110, %s111
    %p123 = scmp.eq.s32.totalorder %s17, 1
    %p124 = por %p122, %p123
    %p126 = scmp.ne.s32.totalorder %s111, %s125
    %p127 = scmp.eq.s32.totalorder %s17, 0
    %p128 = por %p126, %p127
    %s129 = ssub.s32 %s11, %s18
    %p130 = scmp.eq.s32.totalorder %s129, 0
    %s132 = sadd.s32 %s131, 1
    %s133 = scalar_select %p130, %s131, %s132
    %p136 = pneg %p130
    %p137 = scmp.eq.s32.totalorder %s11, 1
    %p138 = por %p136, %p137
    %p139 = scmp.ne.s32.totalorder %s131, %s134
    %p140 = scmp.eq.s32.totalorder %s11, 0
    %p141 = por %p139, %p140
    %p142 = scmp.ne.s32.totalorder %s131, %s134
    %p143 = scmp.eq.s32.totalorder %s16, 1
    %p144 = por %p142, %p143
    %p145 = scmp.ne.s32.totalorder %s134, %s135
    %p146 = scmp.eq.s32.totalorder %s16, 0
    %p147 = por %p145, %p146
    %p148 = scmp.ne.s32.totalorder %s134, %s135
    %p149 = scmp.eq.s32.totalorder %s17, 1
    %p150 = por %p148, %p149
    %p152 = scmp.ne.s32.totalorder %s135, %s151
    %p153 = scmp.eq.s32.totalorder %s17, 0
    %p154 = por %p152, %p153
    %p155 = scmp.le.s32.totalorder 1, %s11
    %p156 = scmp.lt.s32.totalorder %s11, 3
    %p157 = pnand %p155, %p156
    %p158 = pneg %p157
    // Predicated region
    $region9: #{encoder_upsampler_forward.5} parent=5 // pred_check
      _
    $region10: #{encoder_upsampler_forward.5} parent=5 // pred_check_branch
      %160 = sbr.rel (%p157) target = $region12
    $region11: #{encoder_upsampler_forward.5} parent=5 // pred_region
      %s161 = ssub.s32 %s11, 1
      // Predicated region
      $region13: #{encoder_upsampler_forward.5} parent=11 // pred_check
        %p162 = pneg %p58
      $region14: #{encoder_upsampler_forward.5} parent=11 // pred_check_branch
        %164 = sbr.rel (%p162) target = $region16
      $region15: #{encoder_upsampler_forward.5} parent=11 // pred_region
        _
      $region16: #{encoder_upsampler_forward.5} parent=11 // pred_fallthru
        _
      // Predicated region
      $region17: #{encoder_upsampler_forward.5} parent=11 // pred_check
        %p165 = pneg %p79
      $region18: #{encoder_upsampler_forward.5} parent=11 // pred_check_branch
        %167 = sbr.rel (%p165) target = $region20
      $region19: #{encoder_upsampler_forward.5} parent=11 // pred_region
        _
      $region20: #{encoder_upsampler_forward.5} parent=11 // pred_fallthru
        _
      // Predicated region
      $region21: #{encoder_upsampler_forward.5} parent=11 // pred_check
        %p168 = pneg %p100
      $region22: #{encoder_upsampler_forward.5} parent=11 // pred_check_branch
        %170 = sbr.rel (%p168) target = $region24
      $region23: #{encoder_upsampler_forward.5} parent=11 // pred_region
        _
      $region24: #{encoder_upsampler_forward.5} parent=11 // pred_fallthru
        _
      // Predicated region
      $region25: #{encoder_upsampler_forward.5} parent=11 // pred_check
        %p171 = pneg %p121
      $region26: #{encoder_upsampler_forward.5} parent=11 // pred_check_branch
        %173 = sbr.rel (%p171) target = $region28
      $region27: #{encoder_upsampler_forward.5} parent=11 // pred_region
        _
      $region28: #{encoder_upsampler_forward.5} parent=11 // pred_fallthru
        _
    $region12: #{encoder_upsampler_forward.5} parent=5 // pred_fallthru
      _
    %p174 = scmp.lt.s32.totalorder %s11, 2
    // Predicated region
    $region29: #{encoder_upsampler_forward.5} parent=5 // pred_check
      %p175 = pneg %p174
    $region30: #{encoder_upsampler_forward.5} parent=5 // pred_check_branch
      %177 = sbr.rel (%p175) target = $region32
    $region31: #{encoder_upsampler_forward.5} parent=5 // pred_region
      // Predicated region
      $region33: #{encoder_upsampler_forward.5} parent=31 // pred_check
        %p178 = pneg %p31
      $region34: #{encoder_upsampler_forward.5} parent=31 // pred_check_branch
        %180 = sbr.rel (%p178) target = $region36
      $region35: #{encoder_upsampler_forward.5} parent=31 // pred_region
        %p181 = scmp.lt.s32.totalorder %s11, 1
        %s182 = scalar_select %p181, %s11, 1
        %s183 = smul.addr %s182, 2
        %s184 = scalar_lea.vmem %s0, %s183
      $region36: #{encoder_upsampler_forward.5} parent=31 // pred_fallthru
        _
    $region32: #{encoder_upsampler_forward.5} parent=5 // pred_fallthru
      _
    %p185 = scmp.le.s32.totalorder 1, %s11
    %p186 = scmp.lt.s32.totalorder %s11, 3
    %p187 = pnand %p185, %p186
    %p188 = pneg %p187
    // Predicated region
    $region37: #{encoder_upsampler_forward.5} parent=5 // pred_check
      _
    $region38: #{encoder_upsampler_forward.5} parent=5 // pred_check_branch
      %190 = sbr.rel (%p187) target = $region40
    $region39: #{encoder_upsampler_forward.5} parent=5 // pred_region
      %s191 = ssub.s32 %s11, 1
      %p192 = scmp.lt.s32.totalorder %s16, 1
      %s193 = scalar_select %p192, %s16, 1
      %s194 = smul.addr %s193, 2
      %s195 = scalar_lea.vmem %s0, %s194
      %p196 = pneg %p37
      %p197 = pneg %p34
      %p198 = pneg %p58
      %p199 = pneg %p55
      %p200 = pneg %p79
      %p201 = pneg %p76
      %p202 = pneg %p100
      %p203 = pneg %p97
      %p204 = pneg %p121
      %p205 = pneg %p118
      %p206 = pneg %p147
      %p207 = pneg %p144
      %p208 = scmp.lt.s32.totalorder %s16, 1
      %s209 = scalar_select %p208, %s16, 1
      %s210 = smul.addr %s209, 4
      %s211 = smul.addr %s210, 8
      %s212 = scalar_lea.vmem %s5, %s211
      %p213 = scmp.lt.s32.totalorder %s16, 1
      %s214 = scalar_select %p213, %s16, 1
      %s215 = smul.addr %s214, 2
      %s216 = scalar_lea.vmem %s0, %s215
      %p217 = scmp.lt.s32.totalorder %s16, 1
      %s218 = scalar_select %p217, %s16, 1
      %s219 = smul.addr %s218, 4
      %s220 = smul.addr %s219, 8
      %s221 = scalar_lea.vmem %s5, %s220
      %v224 = vld [vmem:[%s216] sm:$0x3]
      %226 = vrot.lane.b32.xlu0 %v224, 112
      %v227 = vpop.permute.xlu0 %226
      %229 = vrot.lane.b32.xlu0 %v224, 96
      %v230 = vpop.permute.xlu0 %229
      %232 = vrot.lane.b32.xlu0 %v224, 80
      %v233 = vpop.permute.xlu0 %232
      %v235 = vcombine.low %v224, %v230
      %v237 = vunpack.c.l.s4 1934713408
      %v238 = vunpack.c.0.s8 %v237
      %v239 = vlaneseq
      %v240 = vshrl.u32 %v239, 7
      %v241 = vsub.s32 %v238, %v240
      %v242 = vrot.slane %v235, %v241
      %v243 = vcombine.high %v242, 0
      %v244 = vcombine.low %v227, %v233
      %v246 = vunpack.c.l.s4 1934713408
      %v247 = vunpack.c.0.s8 %v246
      %v248 = vlaneseq
      %v249 = vshrl.u32 %v248, 7
      %v250 = vsub.s32 %v247, %v249
      %v251 = vrot.slane %v244, %v250
      %v252 = vcombine.high %v251, 0
      %v255 = vpack.i.b16 %v251, %v242
      %v256 = vshrl.u32 %v242, 16
      %v257 = vshrl.u32 %v251, 16
      %v258 = vpack.i.b16 %v257, %v256
      %v261 = vpack.i.b16 %v252, %v243
      %v262 = vshrl.u32 %v243, 16
      %v263 = vshrl.u32 %v252, 16
      %v264 = vpack.i.b16 %v263, %v262
      %vm265 = vcmask 130048
      %v268 = vsel %vm265, %v255, 1065369472
      %v270 = vsel %vm265, %v258, 1065369472
      %v272 = vsel %vm265, %v261, 1065369472
      %v274 = vsel %vm265, %v264, 1065369472
      %v276 = vshrl.u32 0, 16
      %v278 = vrot.slane %v276, 7
      %v279 = vshll.u32 0, 16
      %v281 = vor.u32 %v278, %v279
      %v282 = vshrl.u32 %v268, 16
      %v284 = vrot.slane %v282, 7
      %v285 = vshll.u32 %v268, 16
      %v287 = vor.u32 %v284, %v285
      %v288 = vshrl.u32 %v270, 16
      %v290 = vrot.slane %v288, 7
      %v291 = vshll.u32 %v270, 16
      %v293 = vor.u32 %v290, %v291
      %v294 = vshrl.u32 %v272, 16
      %v296 = vrot.slane %v294, 7
      %v297 = vshll.u32 %v272, 16
      %v299 = vor.u32 %v296, %v297
      %v300 = vshrl.u32 %v274, 16
      %v302 = vrot.slane %v300, 7
      %v303 = vshll.u32 %v274, 16
      %v305 = vor.u32 %v302, %v303
      %vm311 = vcmask 1040384
      %vm312 = vsmask.f32 256
      %vm313 = vmand %vm311, %vm312
      %v314 = vsel %vm313, 0, %v281
      %v315 = vsel %vm313, 0, %v287
      %v316 = vsel %vm313, 0, %v293
      %v317 = vsel %vm313, 0, %v299
      %v318 = vsel %vm313, 0, %v305
      %vm319 = vcmask 1042432
      %vm320 = vsmask.f32 2304
      %vm321 = vmand %vm319, %vm320
      %v322 = vsel %vm321, %v314, 0
      %v323 = vsel %vm321, %v315, 0
      %v324 = vsel %vm321, %v316, 0
      %v325 = vsel %vm321, %v317, 0
      %v326 = vsel %vm321, %v318, 0
      %v328 = vshrl.u32 %v322, 16
      %v330 = vshll.u32 %v322, 16
      %v332 = vrot.slane %v330, 1
      %v333 = vor.u32 %v328, %v332
      %v335 = vshrl.u32 %v323, 16
      %v337 = vshll.u32 %v323, 16
      %v339 = vrot.slane %v337, 1
      %v340 = vor.u32 %v335, %v339
      %v342 = vshrl.u32 %v324, 16
      %v344 = vshll.u32 %v324, 16
      %v346 = vrot.slane %v344, 1
      %v347 = vor.u32 %v342, %v346
      %v349 = vshrl.u32 %v325, 16
      %v351 = vshll.u32 %v325, 16
      %v353 = vrot.slane %v351, 1
      %v354 = vor.u32 %v349, %v353
      %355 = vrot.lane.b32.xlu0 %v333, 17
      %v356 = vpop.permute.xlu0 %355
      %357 = vrot.lane.b32.xlu0 %v340, 17
      %v358 = vpop.permute.xlu0 %357
      %359 = vrot.lane.b32.xlu0 %v347, 17
      %v360 = vpop.permute.xlu0 %359
      %361 = vrot.lane.b32.xlu0 %v354, 17
      %v362 = vpop.permute.xlu0 %361
      %367 = vrot.lane.b32.xlu0 %v323, 34
      %v368 = vpop.permute.xlu0 %367
      %369 = vrot.lane.b32.xlu0 %v324, 34
      %v370 = vpop.permute.xlu0 %369
      %371 = vrot.lane.b32.xlu0 %v325, 34
      %v372 = vpop.permute.xlu0 %371
      %373 = vrot.lane.b32.xlu0 %v326, 34
      %v374 = vpop.permute.xlu0 %373
      %v376 = vshrl.u32 %v326, 16
      %v378 = vshll.u32 %v326, 16
      %v380 = vrot.slane %v378, 1
      %v381 = vor.u32 %v376, %v380
      %382 = vrot.lane.b32.xlu0 %v340, 51
      %v383 = vpop.permute.xlu0 %382
      %384 = vrot.lane.b32.xlu0 %v347, 51
      %v385 = vpop.permute.xlu0 %384
      %386 = vrot.lane.b32.xlu0 %v354, 51
      %v387 = vpop.permute.xlu0 %386
      %388 = vrot.lane.b32.xlu0 %v381, 51
      %v389 = vpop.permute.xlu0 %388
      %vm390 = vcmask 138240
      %v392 = vsel %vm390, %v322, %v356
      %v394 = vsel %vm390, %v323, %v358
      %v396 = vsel %vm390, %v324, %v360
      %v398 = vsel %vm390, %v325, %v362
      %vm399 = vcmask 277504
      %v401 = vsel %vm399, %v392, %v368
      %v403 = vsel %vm399, %v394, %v370
      %v405 = vsel %vm399, %v396, %v372
      %v407 = vsel %vm399, %v398, %v374
      %vm408 = vcmask 416768
      %v410 = vsel %vm408, %v401, %v383
      %v412 = vsel %vm408, %v403, %v385
      %v414 = vsel %vm408, %v405, %v387
      %v416 = vsel %vm408, %v407, %v389
      %v417 = vld [vmem:[%s1] sm:$0xf]
      %v418 = vld [vmem:[%s1 + $0x4] sm:$0xf]
      %v419 = vld [vmem:[%s1 + $0x8] sm:$0xf]
      %v420 = vld [vmem:[%s1 + $0xc] sm:$0xf]
      %v421 = vld [vmem:[%s1 + $0x10] sm:$0xf]
      %v422 = vld [vmem:[%s1 + $0x14] sm:$0xf]
      %v423 = vld [vmem:[%s1 + $0x18] sm:$0xf]
      %v424 = vld [vmem:[%s1 + $0x1c] sm:$0xf]
      %v425 = vld [vmem:[%s1 + $0x20] sm:$0x3]
      %v426 = vld [vmem:[%s2] sm:$0x1]
      %v428 = vlaneseq
      %v429 = vshrl.u32 %v428, 7
      %v430 = vsub.s32 0, %v429
      %v431 = vrot.slane %v426, %v430
      %v437 = vcombine.low %v410, %v412
      %v438 = vcombine.low %v414, %v416
      %v440 = vunpack.c.l.s4 1983009808
      %v441 = vunpack.c.0.s8 %v440
      %v442 = vlaneseq
      %v443 = vshrl.u32 %v442, 7
      %v444 = vsub.s32 %v441, %v443
      %v445 = vrot.slane %v437, %v444
      %v447 = vunpack.c.l.s4 1983009808
      %v448 = vunpack.c.0.s8 %v447
      %v449 = vlaneseq
      %v450 = vshrl.u32 %v449, 7
      %v451 = vsub.s32 %v448, %v450
      %v452 = vrot.slane %v438, %v451
      %v453 = vcombine.low %v445, %v452
      %v463 = vunpack.c.l.b16 %v417
      %v464 = vunpack.c.l.b16 %v418
      %v465 = vunpack.c.l.b16 %v419
      %v466 = vunpack.c.l.b16 %v420
      %v467 = vunpack.c.l.b16 %v421
      %v468 = vunpack.c.l.b16 %v422
      %v469 = vunpack.c.l.b16 %v423
      %v470 = vunpack.c.l.b16 %v424
      %v471 = vunpack.c.l.b16 %v425
      %v472 = vpack.c.b16 %v464, %v463
      %v473 = vpack.c.b16 %v466, %v465
      %v474 = vpack.c.b16 %v468, %v467
      %v475 = vpack.c.b16 %v470, %v469
      %v476 = vpack.c.b16 %v471, %v471
      %vm481 = vcmask 556032
      %v483 = vsel %vm481, %v453, 0
      %vm485 = vcmask 1041408
      %v487 = vsel %vm485, %v476, 0
      %489 = vmatprep.subr.bf16.mxu0 0
      %490 = vmatpush1.bf16.msra.mxu0 %v472
      %491 = vmatprep.subr.bf16.mxu0 0
      %492 = vmatpush1.bf16.msra.mxu0 %v473
      %493 = vmatprep.subr.bf16.mxu0 0
      %494 = vmatpush1.bf16.msra.mxu0 %v474
      %495 = vmatprep.subr.bf16.mxu0 0
      %496 = vmatpush1.bf16.msra.mxu0 %v475
      %497 = vmatprep.subr.bf16.mxu0 0
      %498 = vmatpush1.bf16.msra.mxu0 %v487
      %499 = vmatprep.subr.bf16.mxu0 0
      %500 = vmatpush1.bf16.msra.mxu0 0
      %501 = vmatprep.subr.bf16.mxu0 0
      %502 = vmatpush1.bf16.msra.mxu0 0
      %503 = vmatprep.subr.bf16.mxu0 0
      %504 = vmatpush1.bf16.msra.mxu0 0
      %505 = vmatprep.subr.bf16.mxu0 0
      %506 = vmatpush1.bf16.msra.mxu0 0
      %507 = vmatprep.subr.bf16.mxu0 0
      %508 = vmatpush1.bf16.msra.mxu0 0
      %509 = vmatprep.subr.bf16.mxu0 0
      %510 = vmatpush1.bf16.msra.mxu0 0
      %511 = vmatprep.subr.bf16.mxu0 0
      %512 = vmatpush1.bf16.msra.mxu0 0
      %513 = vmatprep.subr.bf16.mxu0 0
      %514 = vmatpush1.bf16.msra.mxu0 0
      %515 = vmatprep.subr.bf16.mxu0 0
      %516 = vmatpush1.bf16.msra.mxu0 0
      %517 = vmatprep.subr.bf16.mxu0 0
      %518 = vmatpush1.bf16.msra.mxu0 0
      %519 = vmatprep.subr.bf16.mxu0 0
      %520 = vmatpush1.bf16.msra.mxu0 0
      %521 = vmatprep.mubr.bf16.mxu0 0
      %522 = vmatmul.mubr.bf16.gmra.mrb[0].mxu0 %v483
      %v523 = vpop.f32.mrb[0].mxu0
      %v524 = vadd.f32 %v431, %v523
      %v525 = vpop.f32.mrb[0].mxu0
      %v526 = vpop.f32.mrb[0].mxu0
      %v527 = vadd.f32 %v431, %v526
      %v528 = vpop.f32.mrb[0].mxu0
      %529 = vdwg.mxu0
      %v532 = vcombine.high %v524, %v524
      %v533 = vcombine.high %v527, %v527
      %v537 = vunpack.c.l.s4 1983009808
      %v538 = vunpack.c.0.s8 %v537
      %v539 = vlaneseq
      %v540 = vshrl.u32 %v539, 7
      %v541 = vsub.s32 %v538, %v540
      %v542 = vrot.slane %v410, %v541
      %v543 = vcombine.high %v542, %v542
      %v545 = vunpack.c.l.s4 1983009808
      %v546 = vunpack.c.0.s8 %v545
      %v547 = vlaneseq
      %v548 = vshrl.u32 %v547, 7
      %v549 = vsub.s32 %v546, %v548
      %v550 = vrot.slane %v412, %v549
      %v551 = vcombine.high %v550, %v550
      %v553 = vunpack.c.l.s4 1983009808
      %v554 = vunpack.c.0.s8 %v553
      %v555 = vlaneseq
      %v556 = vshrl.u32 %v555, 7
      %v557 = vsub.s32 %v554, %v556
      %v558 = vrot.slane %v414, %v557
      %v559 = vcombine.high %v558, %v558
      %v561 = vunpack.c.l.s4 1983009808
      %v562 = vunpack.c.0.s8 %v561
      %v563 = vlaneseq
      %v564 = vshrl.u32 %v563, 7
      %v565 = vsub.s32 %v562, %v564
      %v566 = vrot.slane %v416, %v565
      %v567 = vcombine.high %v566, %v566
      %vm568 = vsmask.f32 1280
      %vm569 = vsmask.f32 3336
      %vm570 = vmor %vm568, %vm569
      %vm571 = vsmask.f32 5392
      %vm572 = vmor %vm570, %vm571
      %vm573 = vsmask.f32 7448
      %vm574 = vmor %vm572, %vm573
      %v576 = vshrl.u32 %v542, 16
      %v578 = vrot.slane %v576, 6
      %v579 = vshll.u32 %v542, 16
      %v581 = vrot.slane %v579, 7
      %v582 = vor.u32 %v578, %v581
      %v583 = vrot.slane %v582, 2
      %v585 = vshll.u32 %v543, 16
      %v587 = vrot.slane %v585, 7
      %v588 = vsel %vm574, %v583, %v587
      %v590 = vshrl.u32 %v550, 16
      %v592 = vrot.slane %v590, 6
      %v593 = vshll.u32 %v550, 16
      %v595 = vrot.slane %v593, 7
      %v596 = vor.u32 %v592, %v595
      %v597 = vrot.slane %v596, 2
      %v599 = vshll.u32 %v551, 16
      %v601 = vrot.slane %v599, 7
      %v602 = vsel %vm574, %v597, %v601
      %v604 = vshrl.u32 %v558, 16
      %v606 = vrot.slane %v604, 6
      %v607 = vshll.u32 %v558, 16
      %v609 = vrot.slane %v607, 7
      %v610 = vor.u32 %v606, %v609
      %v611 = vrot.slane %v610, 2
      %v613 = vshll.u32 %v559, 16
      %v615 = vrot.slane %v613, 7
      %v616 = vsel %vm574, %v611, %v615
      %v618 = vshrl.u32 %v566, 16
      %v620 = vrot.slane %v618, 6
      %v621 = vshll.u32 %v566, 16
      %v623 = vrot.slane %v621, 7
      %v624 = vor.u32 %v620, %v623
      %v625 = vrot.slane %v624, 2
      %v627 = vshll.u32 %v567, 16
      %v629 = vrot.slane %v627, 7
      %v630 = vsel %vm574, %v625, %v629
      %s631 = scalar_lea.vmem %s1, 36
      %v632 = vld [vmem:[%s631] sm:$0xf]
      %v633 = vld [vmem:[%s631 + $0x4] sm:$0xf]
      %v634 = vld [vmem:[%s631 + $0x8] sm:$0xf]
      %v635 = vld [vmem:[%s631 + $0xc] sm:$0xf]
      %v636 = vld [vmem:[%s631 + $0x10] sm:$0xf]
      %v637 = vld [vmem:[%s631 + $0x14] sm:$0xf]
      %v638 = vld [vmem:[%s631 + $0x18] sm:$0xf]
      %v639 = vld [vmem:[%s631 + $0x1c] sm:$0xf]
      %v640 = vld [vmem:[%s631 + $0x20] sm:$0x3]
      %v641 = vcombine.low %v588, %v602
      %v642 = vcombine.low %v616, %v630
      %v644 = vunpack.c.l.s4 1983009808
      %v645 = vunpack.c.0.s8 %v644
      %v646 = vlaneseq
      %v647 = vshrl.u32 %v646, 7
      %v648 = vsub.s32 %v645, %v647
      %v649 = vrot.slane %v641, %v648
      %v651 = vunpack.c.l.s4 1983009808
      %v652 = vunpack.c.0.s8 %v651
      %v653 = vlaneseq
      %v654 = vshrl.u32 %v653, 7
      %v655 = vsub.s32 %v652, %v654
      %v656 = vrot.slane %v642, %v655
      %v657 = vcombine.low %v649, %v656
      %v667 = vunpack.c.l.b16 %v632
      %v668 = vunpack.c.l.b16 %v633
      %v669 = vunpack.c.l.b16 %v634
      %v670 = vunpack.c.l.b16 %v635
      %v671 = vunpack.c.l.b16 %v636
      %v672 = vunpack.c.l.b16 %v637
      %v673 = vunpack.c.l.b16 %v638
      %v674 = vunpack.c.l.b16 %v639
      %v675 = vunpack.c.l.b16 %v640
      %v676 = vpack.c.b16 %v668, %v667
      %v677 = vpack.c.b16 %v670, %v669
      %v678 = vpack.c.b16 %v672, %v671
      %v679 = vpack.c.b16 %v674, %v673
      %v680 = vpack.c.b16 %v675, %v675
      %v686 = vsel %vm481, %v657, 0
      %v689 = vsel %vm485, %v680, 0
      %691 = vmatprep.subr.bf16.mxu0 0
      %692 = vmatpush1.bf16.msra.mxu0 %v676
      %693 = vmatprep.subr.bf16.mxu0 0
      %694 = vmatpush1.bf16.msra.mxu0 %v677
      %695 = vmatprep.subr.bf16.mxu0 0
      %696 = vmatpush1.bf16.msra.mxu0 %v678
      %697 = vmatprep.subr.bf16.mxu0 0
      %698 = vmatpush1.bf16.msra.mxu0 %v679
      %699 = vmatprep.subr.bf16.mxu0 0
      %700 = vmatpush1.bf16.msra.mxu0 %v689
      %701 = vmatprep.subr.bf16.mxu0 0
      %702 = vmatpush1.bf16.msra.mxu0 0
      %703 = vmatprep.subr.bf16.mxu0 0
      %704 = vmatpush1.bf16.msra.mxu0 0
      %705 = vmatprep.subr.bf16.mxu0 0
      %706 = vmatpush1.bf16.msra.mxu0 0
      %707 = vmatprep.subr.bf16.mxu0 0
      %708 = vmatpush1.bf16.msra.mxu0 0
      %709 = vmatprep.subr.bf16.mxu0 0
      %710 = vmatpush1.bf16.msra.mxu0 0
      %711 = vmatprep.subr.bf16.mxu0 0
      %712 = vmatpush1.bf16.msra.mxu0 0
      %713 = vmatprep.subr.bf16.mxu0 0
      %714 = vmatpush1.bf16.msra.mxu0 0
      %715 = vmatprep.subr.bf16.mxu0 0
      %716 = vmatpush1.bf16.msra.mxu0 0
      %717 = vmatprep.subr.bf16.mxu0 0
      %718 = vmatpush1.bf16.msra.mxu0 0
      %719 = vmatprep.subr.bf16.mxu0 0
      %720 = vmatpush1.bf16.msra.mxu0 0
      %721 = vmatprep.subr.bf16.mxu0 0
      %722 = vmatpush1.bf16.msra.mxu0 0
      %723 = vmatprep.mubr.bf16.mxu0 0
      %724 = vmatmul.mubr.bf16.gmra.mrb[0].mxu0 %v686
      %v725 = vpop.f32.mrb[0].mxu0
      %v726 = vadd.f32 %v431, %v725
      %v727 = vpop.f32.mrb[0].mxu0
      %v728 = vpop.f32.mrb[0].mxu0
      %v729 = vadd.f32 %v431, %v728
      %v730 = vpop.f32.mrb[0].mxu0
      %731 = vdwg.mxu0
      %v734 = vcombine.high %v726, %v726
      %v735 = vcombine.high %v729, %v729
      %738 = vrot.lane.b32.xlu0 %v381, 17
      %v739 = vpop.permute.xlu0 %738
      %741 = vrot.lane.b32.xlu0 %v322, 34
      %v742 = vpop.permute.xlu0 %741
      %743 = vrot.lane.b32.xlu0 %v333, 51
      %v744 = vpop.permute.xlu0 %743
      %v746 = vsel %vm390, %v326, %v739
      %v748 = vsel %vm399, %v746, %v742
      %v750 = vsel %vm408, %v748, %v744
      %s751 = scalar_lea.vmem %s1, 72
      %v752 = vld [vmem:[%s751] sm:$0xf]
      %v753 = vld [vmem:[%s751 + $0x4] sm:$0xf]
      %v754 = vld [vmem:[%s751 + $0x8] sm:$0xf]
      %v755 = vld [vmem:[%s751 + $0xc] sm:$0xf]
      %v756 = vld [vmem:[%s751 + $0x10] sm:$0xf]
      %v757 = vld [vmem:[%s751 + $0x14] sm:$0xf]
      %v758 = vld [vmem:[%s751 + $0x18] sm:$0xf]
      %v759 = vld [vmem:[%s751 + $0x1c] sm:$0xf]
      %v760 = vld [vmem:[%s751 + $0x20] sm:$0x3]
      %v762 = vcombine.low %v412, %v414
      %v763 = vcombine.low %v416, %v750
      %v765 = vunpack.c.l.s4 1983009808
      %v766 = vunpack.c.0.s8 %v765
      %v767 = vlaneseq
      %v768 = vshrl.u32 %v767, 7
      %v769 = vsub.s32 %v766, %v768
      %v770 = vrot.slane %v762, %v769
      %v772 = vunpack.c.l.s4 1983009808
      %v773 = vunpack.c.0.s8 %v772
      %v774 = vlaneseq
      %v775 = vshrl.u32 %v774, 7
      %v776 = vsub.s32 %v773, %v775
      %v777 = vrot.slane %v763, %v776
      %v778 = vcombine.low %v770, %v777
      %v788 = vunpack.c.l.b16 %v752
      %v789 = vunpack.c.l.b16 %v753
      %v790 = vunpack.c.l.b16 %v754
      %v791 = vunpack.c.l.b16 %v755
      %v792 = vunpack.c.l.b16 %v756
      %v793 = vunpack.c.l.b16 %v757
      %v794 = vunpack.c.l.b16 %v758
      %v795 = vunpack.c.l.b16 %v759
      %v796 = vunpack.c.l.b16 %v760
      %v797 = vpack.c.b16 %v789, %v788
      %v798 = vpack.c.b16 %v791, %v790
      %v799 = vpack.c.b16 %v793, %v792
      %v800 = vpack.c.b16 %v795, %v794
      %v801 = vpack.c.b16 %v796, %v796
      %v807 = vsel %vm481, %v778, 0
      %v810 = vsel %vm485, %v801, 0
      %812 = vmatprep.subr.bf16.mxu0 0
      %813 = vmatpush1.bf16.msra.mxu0 %v797
      %814 = vmatprep.subr.bf16.mxu0 0
      %815 = vmatpush1.bf16.msra.mxu0 %v798
      %816 = vmatprep.subr.bf16.mxu0 0
      %817 = vmatpush1.bf16.msra.mxu0 %v799
      %818 = vmatprep.subr.bf16.mxu0 0
      %819 = vmatpush1.bf16.msra.mxu0 %v800
      %820 = vmatprep.subr.bf16.mxu0 0
      %821 = vmatpush1.bf16.msra.mxu0 %v810
      %822 = vmatprep.subr.bf16.mxu0 0
      %823 = vmatpush1.bf16.msra.mxu0 0
      %824 = vmatprep.subr.bf16.mxu0 0
      %825 = vmatpush1.bf16.msra.mxu0 0
      %826 = vmatprep.subr.bf16.mxu0 0
      %827 = vmatpush1.bf16.msra.mxu0 0
      %828 = vmatprep.subr.bf16.mxu0 0
      %829 = vmatpush1.bf16.msra.mxu0 0
      %830 = vmatprep.subr.bf16.mxu0 0
      %831 = vmatpush1.bf16.msra.mxu0 0
      %832 = vmatprep.subr.bf16.mxu0 0
      %833 = vmatpush1.bf16.msra.mxu0 0
      %834 = vmatprep.subr.bf16.mxu0 0
      %835 = vmatpush1.bf16.msra.mxu0 0
      %836 = vmatprep.subr.bf16.mxu0 0
      %837 = vmatpush1.bf16.msra.mxu0 0
      %838 = vmatprep.subr.bf16.mxu0 0
      %839 = vmatpush1.bf16.msra.mxu0 0
      %840 = vmatprep.subr.bf16.mxu0 0
      %841 = vmatpush1.bf16.msra.mxu0 0
      %842 = vmatprep.subr.bf16.mxu0 0
      %843 = vmatpush1.bf16.msra.mxu0 0
      %844 = vmatprep.mubr.bf16.mxu0 0
      %845 = vmatmul.mubr.bf16.gmra.mrb[0].mxu0 %v807
      %v846 = vpop.f32.mrb[0].mxu0
      %v847 = vadd.f32 %v431, %v846
      %v848 = vpop.f32.mrb[0].mxu0
      %v849 = vpop.f32.mrb[0].mxu0
      %v850 = vadd.f32 %v431, %v849
      %v851 = vpop.f32.mrb[0].mxu0
      %852 = vdwg.mxu0
      %v855 = vcombine.high %v847, %v847
      %v856 = vcombine.high %v850, %v850
      %v860 = vunpack.c.l.s4 1983009808
      %v861 = vunpack.c.0.s8 %v860
      %v862 = vlaneseq
      %v863 = vshrl.u32 %v862, 7
      %v864 = vsub.s32 %v861, %v863
      %v865 = vrot.slane %v750, %v864
      %v866 = vcombine.high %v865, %v865
      %v868 = vshrl.u32 %v865, 16
      %v870 = vrot.slane %v868, 6
      %v871 = vshll.u32 %v865, 16
      %v873 = vrot.slane %v871, 7
      %v874 = vor.u32 %v870, %v873
      %v875 = vrot.slane %v874, 2
      %v877 = vshll.u32 %v866, 16
      %v879 = vrot.slane %v877, 7
      %v880 = vsel %vm574, %v875, %v879
      %s881 = scalar_lea.vmem %s1, 108
      %v882 = vld [vmem:[%s881] sm:$0xf]
      %v883 = vld [vmem:[%s881 + $0x4] sm:$0xf]
      %v884 = vld [vmem:[%s881 + $0x8] sm:$0xf]
      %v885 = vld [vmem:[%s881 + $0xc] sm:$0xf]
      %v886 = vld [vmem:[%s881 + $0x10] sm:$0xf]
      %v887 = vld [vmem:[%s881 + $0x14] sm:$0xf]
      %v888 = vld [vmem:[%s881 + $0x18] sm:$0xf]
      %v889 = vld [vmem:[%s881 + $0x1c] sm:$0xf]
      %v890 = vld [vmem:[%s881 + $0x20] sm:$0x3]
      %v891 = vcombine.low %v602, %v616
      %v892 = vcombine.low %v630, %v880
      %v894 = vunpack.c.l.s4 1983009808
      %v895 = vunpack.c.0.s8 %v894
      %v896 = vlaneseq
      %v897 = vshrl.u32 %v896, 7
      %v898 = vsub.s32 %v895, %v897
      %v899 = vrot.slane %v891, %v898
      %v901 = vunpack.c.l.s4 1983009808
      %v902 = vunpack.c.0.s8 %v901
      %v903 = vlaneseq
      %v904 = vshrl.u32 %v903, 7
      %v905 = vsub.s32 %v902, %v904
      %v906 = vrot.slane %v892, %v905
      %v907 = vcombine.low %v899, %v906
      %v917 = vunpack.c.l.b16 %v882
      %v918 = vunpack.c.l.b16 %v883
      %v919 = vunpack.c.l.b16 %v884
      %v920 = vunpack.c.l.b16 %v885
      %v921 = vunpack.c.l.b16 %v886
      %v922 = vunpack.c.l.b16 %v887
      %v923 = vunpack.c.l.b16 %v888
      %v924 = vunpack.c.l.b16 %v889
      %v925 = vunpack.c.l.b16 %v890
      %v926 = vpack.c.b16 %v918, %v917
      %v927 = vpack.c.b16 %v920, %v919
      %v928 = vpack.c.b16 %v922, %v921
      %v929 = vpack.c.b16 %v924, %v923
      %v930 = vpack.c.b16 %v925, %v925
      %v936 = vsel %vm481, %v907, 0
      %v939 = vsel %vm485, %v930, 0
      %941 = vmatprep.subr.bf16.mxu0 0
      %942 = vmatpush1.bf16.msra.mxu0 %v926
      %943 = vmatprep.subr.bf16.mxu0 0
      %944 = vmatpush1.bf16.msra.mxu0 %v927
      %945 = vmatprep.subr.bf16.mxu0 0
      %946 = vmatpush1.bf16.msra.mxu0 %v928
      %947 = vmatprep.subr.bf16.mxu0 0
      %948 = vmatpush1.bf16.msra.mxu0 %v929
      %949 = vmatprep.subr.bf16.mxu0 0
      %950 = vmatpush1.bf16.msra.mxu0 %v939
      %951 = vmatprep.subr.bf16.mxu0 0
      %952 = vmatpush1.bf16.msra.mxu0 0
      %953 = vmatprep.subr.bf16.mxu0 0
      %954 = vmatpush1.bf16.msra.mxu0 0
      %955 = vmatprep.subr.bf16.mxu0 0
      %956 = vmatpush1.bf16.msra.mxu0 0
      %957 = vmatprep.subr.bf16.mxu0 0
      %958 = vmatpush1.bf16.msra.mxu0 0
      %959 = vmatprep.subr.bf16.mxu0 0
      %960 = vmatpush1.bf16.msra.mxu0 0
      %961 = vmatprep.subr.bf16.mxu0 0
      %962 = vmatpush1.bf16.msra.mxu0 0
      %963 = vmatprep.subr.bf16.mxu0 0
      %964 = vmatpush1.bf16.msra.mxu0 0
      %965 = vmatprep.subr.bf16.mxu0 0
      %966 = vmatpush1.bf16.msra.mxu0 0
      %967 = vmatprep.subr.bf16.mxu0 0
      %968 = vmatpush1.bf16.msra.mxu0 0
      %969 = vmatprep.subr.bf16.mxu0 0
      %970 = vmatpush1.bf16.msra.mxu0 0
      %971 = vmatprep.subr.bf16.mxu0 0
      %972 = vmatpush1.bf16.msra.mxu0 0
      %973 = vmatprep.mubr.bf16.mxu0 0
      %974 = vmatmul.mubr.bf16.gmra.mrb[0].mxu0 %v936
      %v975 = vpop.f32.mrb[0].mxu0
      %v976 = vadd.f32 %v431, %v975
      %v977 = vpop.f32.mrb[0].mxu0
      %v978 = vpop.f32.mrb[0].mxu0
      %v979 = vadd.f32 %v431, %v978
      %v980 = vpop.f32.mrb[0].mxu0
      %981 = vdwg.mxu0
      %v984 = vcombine.high %v976, %v976
      %v985 = vcombine.high %v979, %v979
      %v988 = vpack.c.bf16 %v524, %v524
      %v989 = vpack.c.bf16 %v532, %v532
      %v990 = vpack.c.bf16 %v527, %v527
      %v991 = vpack.c.bf16 %v533, %v533
      %v992 = vpack.c.bf16 %v726, %v726
      %v993 = vpack.c.bf16 %v734, %v734
      %v994 = vpack.c.bf16 %v729, %v729
      %v995 = vpack.c.bf16 %v735, %v735
      %v996 = vpack.c.bf16 %v847, %v847
      %v997 = vpack.c.bf16 %v855, %v855
      %v998 = vpack.c.bf16 %v850, %v850
      %v999 = vpack.c.bf16 %v856, %v856
      %v1000 = vpack.c.bf16 %v976, %v976
      %v1001 = vpack.c.bf16 %v984, %v984
      %v1002 = vpack.c.bf16 %v979, %v979
      %v1003 = vpack.c.bf16 %v985, %v985
      %v1009 = vunpack.c.l.s4 1966171168
      %v1010 = vunpack.c.0.s8 %v1009
      %v1011 = vlaneseq
      %v1012 = vshrl.u32 %v1011, 7
      %v1013 = vsub.s32 %v1010, %v1012
      %v1014 = vrot.slane %v988, %v1013
      %v1015 = vcombine.high %v1014, %v1014
      %v1017 = vunpack.c.l.s4 1966171168
      %v1018 = vunpack.c.0.s8 %v1017
      %v1019 = vlaneseq
      %v1020 = vshrl.u32 %v1019, 7
      %v1021 = vsub.s32 %v1018, %v1020
      %v1022 = vrot.slane %v1014, %v1021
      %v1024 = vunpack.c.l.s4 1966171168
      %v1025 = vunpack.c.0.s8 %v1024
      %v1026 = vlaneseq
      %v1027 = vshrl.u32 %v1026, 7
      %v1028 = vsub.s32 %v1025, %v1027
      %v1029 = vrot.slane %v1015, %v1028
      %v1031 = vunpack.c.l.s4 1966171168
      %v1032 = vunpack.c.0.s8 %v1031
      %v1033 = vlaneseq
      %v1034 = vshrl.u32 %v1033, 7
      %v1035 = vsub.s32 %v1032, %v1034
      %v1036 = vrot.slane %v989, %v1035
      %v1037 = vcombine.high %v1036, %v1036
      %v1039 = vunpack.c.l.s4 1966171168
      %v1040 = vunpack.c.0.s8 %v1039
      %v1041 = vlaneseq
      %v1042 = vshrl.u32 %v1041, 7
      %v1043 = vsub.s32 %v1040, %v1042
      %v1044 = vrot.slane %v1036, %v1043
      %v1046 = vunpack.c.l.s4 1966171168
      %v1047 = vunpack.c.0.s8 %v1046
      %v1048 = vlaneseq
      %v1049 = vshrl.u32 %v1048, 7
      %v1050 = vsub.s32 %v1047, %v1049
      %v1051 = vrot.slane %v1037, %v1050
      %v1053 = vunpack.c.l.s4 1966171168
      %v1054 = vunpack.c.0.s8 %v1053
      %v1055 = vlaneseq
      %v1056 = vshrl.u32 %v1055, 7
      %v1057 = vsub.s32 %v1054, %v1056
      %v1058 = vrot.slane %v990, %v1057
      %v1059 = vcombine.high %v1058, %v1058
      %v1061 = vunpack.c.l.s4 1966171168
      %v1062 = vunpack.c.0.s8 %v1061
      %v1063 = vlaneseq
      %v1064 = vshrl.u32 %v1063, 7
      %v1065 = vsub.s32 %v1062, %v1064
      %v1066 = vrot.slane %v1058, %v1065
      %v1068 = vunpack.c.l.s4 1966171168
      %v1069 = vunpack.c.0.s8 %v1068
      %v1070 = vlaneseq
      %v1071 = vshrl.u32 %v1070, 7
      %v1072 = vsub.s32 %v1069, %v1071
      %v1073 = vrot.slane %v1059, %v1072
      %v1075 = vunpack.c.l.s4 1966171168
      %v1076 = vunpack.c.0.s8 %v1075
      %v1077 = vlaneseq
      %v1078 = vshrl.u32 %v1077, 7
      %v1079 = vsub.s32 %v1076, %v1078
      %v1080 = vrot.slane %v991, %v1079
      %v1081 = vcombine.high %v1080, %v1080
      %v1083 = vunpack.c.l.s4 1966171168
      %v1084 = vunpack.c.0.s8 %v1083
      %v1085 = vlaneseq
      %v1086 = vshrl.u32 %v1085, 7
      %v1087 = vsub.s32 %v1084, %v1086
      %v1088 = vrot.slane %v1080, %v1087
      %v1090 = vunpack.c.l.s4 1966171168
      %v1091 = vunpack.c.0.s8 %v1090
      %v1092 = vlaneseq
      %v1093 = vshrl.u32 %v1092, 7
      %v1094 = vsub.s32 %v1091, %v1093
      %v1095 = vrot.slane %v1081, %v1094
      %v1096 = vunpack.i.l.s16 %v1022
      %v1097 = vunpack.i.h.s16 %v1022
      %v1098 = vunpack.i.l.s16 %v1029
      %v1099 = vunpack.i.h.s16 %v1029
      %v1100 = vunpack.i.l.s16 %v1044
      %v1101 = vunpack.i.h.s16 %v1044
      %v1102 = vunpack.i.l.s16 %v1051
      %v1103 = vunpack.i.h.s16 %v1051
      %v1104 = vunpack.i.l.s16 %v1066
      %v1105 = vunpack.i.h.s16 %v1066
      %v1106 = vunpack.i.l.s16 %v1073
      %v1107 = vunpack.i.h.s16 %v1073
      %v1108 = vunpack.i.l.s16 %v1088
      %v1109 = vunpack.i.h.s16 %v1088
      %v1110 = vunpack.i.l.s16 %v1095
      %v1111 = vunpack.i.h.s16 %v1095
      %v1117 = vunpack.c.l.s4 1966171168
      %v1118 = vunpack.c.0.s8 %v1117
      %v1119 = vlaneseq
      %v1120 = vshrl.u32 %v1119, 7
      %v1121 = vsub.s32 %v1118, %v1120
      %v1122 = vrot.slane %v992, %v1121
      %v1123 = vcombine.high %v1122, %v1122
      %v1125 = vunpack.c.l.s4 1966171168
      %v1126 = vunpack.c.0.s8 %v1125
      %v1127 = vlaneseq
      %v1128 = vshrl.u32 %v1127, 7
      %v1129 = vsub.s32 %v1126, %v1128
      %v1130 = vrot.slane %v1122, %v1129
      %v1132 = vunpack.c.l.s4 1966171168
      %v1133 = vunpack.c.0.s8 %v1132
      %v1134 = vlaneseq
      %v1135 = vshrl.u32 %v1134, 7
      %v1136 = vsub.s32 %v1133, %v1135
      %v1137 = vrot.slane %v1123, %v1136
      %v1139 = vunpack.c.l.s4 1966171168
      %v1140 = vunpack.c.0.s8 %v1139
      %v1141 = vlaneseq
      %v1142 = vshrl.u32 %v1141, 7
      %v1143 = vsub.s32 %v1140, %v1142
      %v1144 = vrot.slane %v993, %v1143
      %v1145 = vcombine.high %v1144, %v1144
      %v1147 = vunpack.c.l.s4 1966171168
      %v1148 = vunpack.c.0.s8 %v1147
      %v1149 = vlaneseq
      %v1150 = vshrl.u32 %v1149, 7
      %v1151 = vsub.s32 %v1148, %v1150
      %v1152 = vrot.slane %v1144, %v1151
      %v1154 = vunpack.c.l.s4 1966171168
      %v1155 = vunpack.c.0.s8 %v1154
      %v1156 = vlaneseq
      %v1157 = vshrl.u32 %v1156, 7
      %v1158 = vsub.s32 %v1155, %v1157
      %v1159 = vrot.slane %v1145, %v1158
      %v1161 = vunpack.c.l.s4 1966171168
      %v1162 = vunpack.c.0.s8 %v1161
      %v1163 = vlaneseq
      %v1164 = vshrl.u32 %v1163, 7
      %v1165 = vsub.s32 %v1162, %v1164
      %v1166 = vrot.slane %v994, %v1165
      %v1167 = vcombine.high %v1166, %v1166
      %v1169 = vunpack.c.l.s4 1966171168
      %v1170 = vunpack.c.0.s8 %v1169
      %v1171 = vlaneseq
      %v1172 = vshrl.u32 %v1171, 7
      %v1173 = vsub.s32 %v1170, %v1172
      %v1174 = vrot.slane %v1166, %v1173
      %v1176 = vunpack.c.l.s4 1966171168
      %v1177 = vunpack.c.0.s8 %v1176
      %v1178 = vlaneseq
      %v1179 = vshrl.u32 %v1178, 7
      %v1180 = vsub.s32 %v1177, %v1179
      %v1181 = vrot.slane %v1167, %v1180
      %v1183 = vunpack.c.l.s4 1966171168
      %v1184 = vunpack.c.0.s8 %v1183
      %v1185 = vlaneseq
      %v1186 = vshrl.u32 %v1185, 7
      %v1187 = vsub.s32 %v1184, %v1186
      %v1188 = vrot.slane %v995, %v1187
      %v1189 = vcombine.high %v1188, %v1188
      %v1191 = vunpack.c.l.s4 1966171168
      %v1192 = vunpack.c.0.s8 %v1191
      %v1193 = vlaneseq
      %v1194 = vshrl.u32 %v1193, 7
      %v1195 = vsub.s32 %v1192, %v1194
      %v1196 = vrot.slane %v1188, %v1195
      %v1198 = vunpack.c.l.s4 1966171168
      %v1199 = vunpack.c.0.s8 %v1198
      %v1200 = vlaneseq
      %v1201 = vshrl.u32 %v1200, 7
      %v1202 = vsub.s32 %v1199, %v1201
      %v1203 = vrot.slane %v1189, %v1202
      %v1204 = vunpack.i.l.s16 %v1130
      %v1205 = vunpack.i.h.s16 %v1130
      %v1206 = vunpack.i.l.s16 %v1137
      %v1207 = vunpack.i.h.s16 %v1137
      %v1208 = vunpack.i.l.s16 %v1152
      %v1209 = vunpack.i.h.s16 %v1152
      %v1210 = vunpack.i.l.s16 %v1159
      %v1211 = vunpack.i.h.s16 %v1159
      %v1212 = vunpack.i.l.s16 %v1174
      %v1213 = vunpack.i.h.s16 %v1174
      %v1214 = vunpack.i.l.s16 %v1181
      %v1215 = vunpack.i.h.s16 %v1181
      %v1216 = vunpack.i.l.s16 %v1196
      %v1217 = vunpack.i.h.s16 %v1196
      %v1218 = vunpack.i.l.s16 %v1203
      %v1219 = vunpack.i.h.s16 %v1203
      %v1220 = vpack.i.b16 %v1096, %v1096
      %v1221 = vpack.i.b16 %v1097, %v1097
      %v1222 = vpack.i.b16 %v1098, %v1098
      %v1223 = vpack.i.b16 %v1099, %v1099
      %v1224 = vpack.i.b16 %v1100, %v1100
      %v1225 = vpack.i.b16 %v1101, %v1101
      %v1226 = vpack.i.b16 %v1102, %v1102
      %v1227 = vpack.i.b16 %v1103, %v1103
      %v1228 = vpack.i.b16 %v1104, %v1104
      %v1229 = vpack.i.b16 %v1105, %v1105
      %v1230 = vpack.i.b16 %v1106, %v1106
      %v1231 = vpack.i.b16 %v1107, %v1107
      %v1232 = vpack.i.b16 %v1108, %v1108
      %v1233 = vpack.i.b16 %v1109, %v1109
      %v1234 = vpack.i.b16 %v1110, %v1110
      %v1235 = vpack.i.b16 %v1111, %v1111
      %v1236 = vlaneseq
      %v1237 = vshrl.u32 %v1236, 7
      %v1238 = vsub.s32 0, %v1237
      %v1239 = vrot.slane %v1220, %v1238
      %v1240 = vlaneseq
      %v1241 = vshrl.u32 %v1240, 7
      %v1242 = vsub.s32 0, %v1241
      %v1243 = vrot.slane %v1221, %v1242
      %v1244 = vlaneseq
      %v1245 = vshrl.u32 %v1244, 7
      %v1246 = vsub.s32 0, %v1245
      %v1247 = vrot.slane %v1222, %v1246
      %v1248 = vlaneseq
      %v1249 = vshrl.u32 %v1248, 7
      %v1250 = vsub.s32 0, %v1249
      %v1251 = vrot.slane %v1223, %v1250
      %v1252 = vlaneseq
      %v1253 = vshrl.u32 %v1252, 7
      %v1254 = vsub.s32 0, %v1253
      %v1255 = vrot.slane %v1224, %v1254
      %v1256 = vlaneseq
      %v1257 = vshrl.u32 %v1256, 7
      %v1258 = vsub.s32 0, %v1257
      %v1259 = vrot.slane %v1225, %v1258
      %v1260 = vlaneseq
      %v1261 = vshrl.u32 %v1260, 7
      %v1262 = vsub.s32 0, %v1261
      %v1263 = vrot.slane %v1226, %v1262
      %v1264 = vlaneseq
      %v1265 = vshrl.u32 %v1264, 7
      %v1266 = vsub.s32 0, %v1265
      %v1267 = vrot.slane %v1227, %v1266
      %v1268 = vlaneseq
      %v1269 = vshrl.u32 %v1268, 7
      %v1270 = vsub.s32 0, %v1269
      %v1271 = vrot.slane %v1228, %v1270
      %v1272 = vlaneseq
      %v1273 = vshrl.u32 %v1272, 7
      %v1274 = vsub.s32 0, %v1273
      %v1275 = vrot.slane %v1229, %v1274
      %v1276 = vlaneseq
      %v1277 = vshrl.u32 %v1276, 7
      %v1278 = vsub.s32 0, %v1277
      %v1279 = vrot.slane %v1230, %v1278
      %v1280 = vlaneseq
      %v1281 = vshrl.u32 %v1280, 7
      %v1282 = vsub.s32 0, %v1281
      %v1283 = vrot.slane %v1231, %v1282
      %v1284 = vlaneseq
      %v1285 = vshrl.u32 %v1284, 7
      %v1286 = vsub.s32 0, %v1285
      %v1287 = vrot.slane %v1232, %v1286
      %v1288 = vlaneseq
      %v1289 = vshrl.u32 %v1288, 7
      %v1290 = vsub.s32 0, %v1289
      %v1291 = vrot.slane %v1233, %v1290
      %v1292 = vlaneseq
      %v1293 = vshrl.u32 %v1292, 7
      %v1294 = vsub.s32 0, %v1293
      %v1295 = vrot.slane %v1234, %v1294
      %v1296 = vlaneseq
      %v1297 = vshrl.u32 %v1296, 7
      %v1298 = vsub.s32 0, %v1297
      %v1299 = vrot.slane %v1235, %v1298
      %v1316 = vpack.i.b16 %v1204, %v1204
      %v1317 = vpack.i.b16 %v1205, %v1205
      %v1318 = vpack.i.b16 %v1206, %v1206
      %v1319 = vpack.i.b16 %v1207, %v1207
      %v1320 = vpack.i.b16 %v1208, %v1208
      %v1321 = vpack.i.b16 %v1209, %v1209
      %v1322 = vpack.i.b16 %v1210, %v1210
      %v1323 = vpack.i.b16 %v1211, %v1211
      %v1324 = vpack.i.b16 %v1212, %v1212
      %v1325 = vpack.i.b16 %v1213, %v1213
      %v1326 = vpack.i.b16 %v1214, %v1214
      %v1327 = vpack.i.b16 %v1215, %v1215
      %v1328 = vpack.i.b16 %v1216, %v1216
      %v1329 = vpack.i.b16 %v1217, %v1217
      %v1330 = vpack.i.b16 %v1218, %v1218
      %v1331 = vpack.i.b16 %v1219, %v1219
      %v1332 = vlaneseq
      %v1333 = vshrl.u32 %v1332, 7
      %v1334 = vsub.s32 0, %v1333
      %v1335 = vrot.slane %v1316, %v1334
      %v1336 = vlaneseq
      %v1337 = vshrl.u32 %v1336, 7
      %v1338 = vsub.s32 0, %v1337
      %v1339 = vrot.slane %v1317, %v1338
      %v1340 = vlaneseq
      %v1341 = vshrl.u32 %v1340, 7
      %v1342 = vsub.s32 0, %v1341
      %v1343 = vrot.slane %v1318, %v1342
      %v1344 = vlaneseq
      %v1345 = vshrl.u32 %v1344, 7
      %v1346 = vsub.s32 0, %v1345
      %v1347 = vrot.slane %v1319, %v1346
      %v1348 = vlaneseq
      %v1349 = vshrl.u32 %v1348, 7
      %v1350 = vsub.s32 0, %v1349
      %v1351 = vrot.slane %v1320, %v1350
      %v1352 = vlaneseq
      %v1353 = vshrl.u32 %v1352, 7
      %v1354 = vsub.s32 0, %v1353
      %v1355 = vrot.slane %v1321, %v1354
      %v1356 = vlaneseq
      %v1357 = vshrl.u32 %v1356, 7
      %v1358 = vsub.s32 0, %v1357
      %v1359 = vrot.slane %v1322, %v1358
      %v1360 = vlaneseq
      %v1361 = vshrl.u32 %v1360, 7
      %v1362 = vsub.s32 0, %v1361
      %v1363 = vrot.slane %v1323, %v1362
      %v1364 = vlaneseq
      %v1365 = vshrl.u32 %v1364, 7
      %v1366 = vsub.s32 0, %v1365
      %v1367 = vrot.slane %v1324, %v1366
      %v1368 = vlaneseq
      %v1369 = vshrl.u32 %v1368, 7
      %v1370 = vsub.s32 0, %v1369
      %v1371 = vrot.slane %v1325, %v1370
      %v1372 = vlaneseq
      %v1373 = vshrl.u32 %v1372, 7
      %v1374 = vsub.s32 0, %v1373
      %v1375 = vrot.slane %v1326, %v1374
      %v1376 = vlaneseq
      %v1377 = vshrl.u32 %v1376, 7
      %v1378 = vsub.s32 0, %v1377
      %v1379 = vrot.slane %v1327, %v1378
      %v1380 = vlaneseq
      %v1381 = vshrl.u32 %v1380, 7
      %v1382 = vsub.s32 0, %v1381
      %v1383 = vrot.slane %v1328, %v1382
      %v1384 = vlaneseq
      %v1385 = vshrl.u32 %v1384, 7
      %v1386 = vsub.s32 0, %v1385
      %v1387 = vrot.slane %v1329, %v1386
      %v1388 = vlaneseq
      %v1389 = vshrl.u32 %v1388, 7
      %v1390 = vsub.s32 0, %v1389
      %v1391 = vrot.slane %v1330, %v1390
      %v1392 = vlaneseq
      %v1393 = vshrl.u32 %v1392, 7
      %v1394 = vsub.s32 0, %v1393
      %v1395 = vrot.slane %v1331, %v1394
      %v1412 = vsel %vm313, %v1239, %v1335
      %v1413 = vsel %vm313, %v1243, %v1339
      %v1414 = vsel %vm313, %v1247, %v1343
      %v1415 = vsel %vm313, %v1251, %v1347
      %v1416 = vsel %vm313, %v1255, %v1351
      %v1417 = vsel %vm313, %v1259, %v1355
      %v1418 = vsel %vm313, %v1263, %v1359
      %v1419 = vsel %vm313, %v1267, %v1363
      %v1420 = vsel %vm313, %v1271, %v1367
      %v1421 = vsel %vm313, %v1275, %v1371
      %v1422 = vsel %vm313, %v1279, %v1375
      %v1423 = vsel %vm313, %v1283, %v1379
      %v1424 = vsel %vm313, %v1287, %v1383
      %v1425 = vsel %vm313, %v1291, %v1387
      %v1426 = vsel %vm313, %v1295, %v1391
      %v1427 = vsel %vm313, %v1299, %v1395
      %v1433 = vunpack.c.l.s4 1966171168
      %v1434 = vunpack.c.0.s8 %v1433
      %v1435 = vlaneseq
      %v1436 = vshrl.u32 %v1435, 7
      %v1437 = vsub.s32 %v1434, %v1436
      %v1438 = vrot.slane %v996, %v1437
      %v1439 = vcombine.high %v1438, %v1438
      %v1441 = vunpack.c.l.s4 1966171168
      %v1442 = vunpack.c.0.s8 %v1441
      %v1443 = vlaneseq
      %v1444 = vshrl.u32 %v1443, 7
      %v1445 = vsub.s32 %v1442, %v1444
      %v1446 = vrot.slane %v1438, %v1445
      %v1448 = vunpack.c.l.s4 1966171168
      %v1449 = vunpack.c.0.s8 %v1448
      %v1450 = vlaneseq
      %v1451 = vshrl.u32 %v1450, 7
      %v1452 = vsub.s32 %v1449, %v1451
      %v1453 = vrot.slane %v1439, %v1452
      %v1455 = vunpack.c.l.s4 1966171168
      %v1456 = vunpack.c.0.s8 %v1455
      %v1457 = vlaneseq
      %v1458 = vshrl.u32 %v1457, 7
      %v1459 = vsub.s32 %v1456, %v1458
      %v1460 = vrot.slane %v997, %v1459
      %v1461 = vcombine.high %v1460, %v1460
      %v1463 = vunpack.c.l.s4 1966171168
      %v1464 = vunpack.c.0.s8 %v1463
      %v1465 = vlaneseq
      %v1466 = vshrl.u32 %v1465, 7
      %v1467 = vsub.s32 %v1464, %v1466
      %v1468 = vrot.slane %v1460, %v1467
      %v1470 = vunpack.c.l.s4 1966171168
      %v1471 = vunpack.c.0.s8 %v1470
      %v1472 = vlaneseq
      %v1473 = vshrl.u32 %v1472, 7
      %v1474 = vsub.s32 %v1471, %v1473
      %v1475 = vrot.slane %v1461, %v1474
      %v1477 = vunpack.c.l.s4 1966171168
      %v1478 = vunpack.c.0.s8 %v1477
      %v1479 = vlaneseq
      %v1480 = vshrl.u32 %v1479, 7
      %v1481 = vsub.s32 %v1478, %v1480
      %v1482 = vrot.slane %v998, %v1481
      %v1483 = vcombine.high %v1482, %v1482
      %v1485 = vunpack.c.l.s4 1966171168
      %v1486 = vunpack.c.0.s8 %v1485
      %v1487 = vlaneseq
      %v1488 = vshrl.u32 %v1487, 7
      %v1489 = vsub.s32 %v1486, %v1488
      %v1490 = vrot.slane %v1482, %v1489
      %v1492 = vunpack.c.l.s4 1966171168
      %v1493 = vunpack.c.0.s8 %v1492
      %v1494 = vlaneseq
      %v1495 = vshrl.u32 %v1494, 7
      %v1496 = vsub.s32 %v1493, %v1495
      %v1497 = vrot.slane %v1483, %v1496
      %v1499 = vunpack.c.l.s4 1966171168
      %v1500 = vunpack.c.0.s8 %v1499
      %v1501 = vlaneseq
      %v1502 = vshrl.u32 %v1501, 7
      %v1503 = vsub.s32 %v1500, %v1502
      %v1504 = vrot.slane %v999, %v1503
      %v1505 = vcombine.high %v1504, %v1504
      %v1507 = vunpack.c.l.s4 1966171168
      %v1508 = vunpack.c.0.s8 %v1507
      %v1509 = vlaneseq
      %v1510 = vshrl.u32 %v1509, 7
      %v1511 = vsub.s32 %v1508, %v1510
      %v1512 = vrot.slane %v1504, %v1511
      %v1514 = vunpack.c.l.s4 1966171168
      %v1515 = vunpack.c.0.s8 %v1514
      %v1516 = vlaneseq
      %v1517 = vshrl.u32 %v1516, 7
      %v1518 = vsub.s32 %v1515, %v1517
      %v1519 = vrot.slane %v1505, %v1518
      %v1520 = vunpack.i.l.s16 %v1446
      %v1521 = vunpack.i.h.s16 %v1446
      %v1522 = vunpack.i.l.s16 %v1453
      %v1523 = vunpack.i.h.s16 %v1453
      %v1524 = vunpack.i.l.s16 %v1468
      %v1525 = vunpack.i.h.s16 %v1468
      %v1526 = vunpack.i.l.s16 %v1475
      %v1527 = vunpack.i.h.s16 %v1475
      %v1528 = vunpack.i.l.s16 %v1490
      %v1529 = vunpack.i.h.s16 %v1490
      %v1530 = vunpack.i.l.s16 %v1497
      %v1531 = vunpack.i.h.s16 %v1497
      %v1532 = vunpack.i.l.s16 %v1512
      %v1533 = vunpack.i.h.s16 %v1512
      %v1534 = vunpack.i.l.s16 %v1519
      %v1535 = vunpack.i.h.s16 %v1519
      %v1541 = vunpack.c.l.s4 1966171168
      %v1542 = vunpack.c.0.s8 %v1541
      %v1543 = vlaneseq
      %v1544 = vshrl.u32 %v1543, 7
      %v1545 = vsub.s32 %v1542, %v1544
      %v1546 = vrot.slane %v1000, %v1545
      %v1547 = vcombine.high %v1546, %v1546
      %v1549 = vunpack.c.l.s4 1966171168
      %v1550 = vunpack.c.0.s8 %v1549
      %v1551 = vlaneseq
      %v1552 = vshrl.u32 %v1551, 7
      %v1553 = vsub.s32 %v1550, %v1552
      %v1554 = vrot.slane %v1546, %v1553
      %v1556 = vunpack.c.l.s4 1966171168
      %v1557 = vunpack.c.0.s8 %v1556
      %v1558 = vlaneseq
      %v1559 = vshrl.u32 %v1558, 7
      %v1560 = vsub.s32 %v1557, %v1559
      %v1561 = vrot.slane %v1547, %v1560
      %v1563 = vunpack.c.l.s4 1966171168
      %v1564 = vunpack.c.0.s8 %v1563
      %v1565 = vlaneseq
      %v1566 = vshrl.u32 %v1565, 7
      %v1567 = vsub.s32 %v1564, %v1566
      %v1568 = vrot.slane %v1001, %v1567
      %v1569 = vcombine.high %v1568, %v1568
      %v1571 = vunpack.c.l.s4 1966171168
      %v1572 = vunpack.c.0.s8 %v1571
      %v1573 = vlaneseq
      %v1574 = vshrl.u32 %v1573, 7
      %v1575 = vsub.s32 %v1572, %v1574
      %v1576 = vrot.slane %v1568, %v1575
      %v1578 = vunpack.c.l.s4 1966171168
      %v1579 = vunpack.c.0.s8 %v1578
      %v1580 = vlaneseq
      %v1581 = vshrl.u32 %v1580, 7
      %v1582 = vsub.s32 %v1579, %v1581
      %v1583 = vrot.slane %v1569, %v1582
      %v1585 = vunpack.c.l.s4 1966171168
      %v1586 = vunpack.c.0.s8 %v1585
      %v1587 = vlaneseq
      %v1588 = vshrl.u32 %v1587, 7
      %v1589 = vsub.s32 %v1586, %v1588
      %v1590 = vrot.slane %v1002, %v1589
      %v1591 = vcombine.high %v1590, %v1590
      %v1593 = vunpack.c.l.s4 1966171168
      %v1594 = vunpack.c.0.s8 %v1593
      %v1595 = vlaneseq
      %v1596 = vshrl.u32 %v1595, 7
      %v1597 = vsub.s32 %v1594, %v1596
      %v1598 = vrot.slane %v1590, %v1597
      %v1600 = vunpack.c.l.s4 1966171168
      %v1601 = vunpack.c.0.s8 %v1600
      %v1602 = vlaneseq
      %v1603 = vshrl.u32 %v1602, 7
      %v1604 = vsub.s32 %v1601, %v1603
      %v1605 = vrot.slane %v1591, %v1604
      %v1607 = vunpack.c.l.s4 1966171168
      %v1608 = vunpack.c.0.s8 %v1607
      %v1609 = vlaneseq
      %v1610 = vshrl.u32 %v1609, 7
      %v1611 = vsub.s32 %v1608, %v1610
      %v1612 = vrot.slane %v1003, %v1611
      %v1613 = vcombine.high %v1612, %v1612
      %v1615 = vunpack.c.l.s4 1966171168
      %v1616 = vunpack.c.0.s8 %v1615
      %v1617 = vlaneseq
      %v1618 = vshrl.u32 %v1617, 7
      %v1619 = vsub.s32 %v1616, %v1618
      %v1620 = vrot.slane %v1612, %v1619
      %v1622 = vunpack.c.l.s4 1966171168
      %v1623 = vunpack.c.0.s8 %v1622
      %v1624 = vlaneseq
      %v1625 = vshrl.u32 %v1624, 7
      %v1626 = vsub.s32 %v1623, %v1625
      %v1627 = vrot.slane %v1613, %v1626
      %v1628 = vunpack.i.l.s16 %v1554
      %v1629 = vunpack.i.h.s16 %v1554
      %v1630 = vunpack.i.l.s16 %v1561
      %v1631 = vunpack.i.h.s16 %v1561
      %v1632 = vunpack.i.l.s16 %v1576
      %v1633 = vunpack.i.h.s16 %v1576
      %v1634 = vunpack.i.l.s16 %v1583
      %v1635 = vunpack.i.h.s16 %v1583
      %v1636 = vunpack.i.l.s16 %v1598
      %v1637 = vunpack.i.h.s16 %v1598
      %v1638 = vunpack.i.l.s16 %v1605
      %v1639 = vunpack.i.h.s16 %v1605
      %v1640 = vunpack.i.l.s16 %v1620
      %v1641 = vunpack.i.h.s16 %v1620
      %v1642 = vunpack.i.l.s16 %v1627
      %v1643 = vunpack.i.h.s16 %v1627
      %v1644 = vpack.i.b16 %v1520, %v1520
      %v1645 = vpack.i.b16 %v1521, %v1521
      %v1646 = vpack.i.b16 %v1522, %v1522
      %v1647 = vpack.i.b16 %v1523, %v1523
      %v1648 = vpack.i.b16 %v1524, %v1524
      %v1649 = vpack.i.b16 %v1525, %v1525
      %v1650 = vpack.i.b16 %v1526, %v1526
      %v1651 = vpack.i.b16 %v1527, %v1527
      %v1652 = vpack.i.b16 %v1528, %v1528
      %v1653 = vpack.i.b16 %v1529, %v1529
      %v1654 = vpack.i.b16 %v1530, %v1530
      %v1655 = vpack.i.b16 %v1531, %v1531
      %v1656 = vpack.i.b16 %v1532, %v1532
      %v1657 = vpack.i.b16 %v1533, %v1533
      %v1658 = vpack.i.b16 %v1534, %v1534
      %v1659 = vpack.i.b16 %v1535, %v1535
      %v1660 = vlaneseq
      %v1661 = vshrl.u32 %v1660, 7
      %v1662 = vsub.s32 0, %v1661
      %v1663 = vrot.slane %v1644, %v1662
      %v1664 = vlaneseq
      %v1665 = vshrl.u32 %v1664, 7
      %v1666 = vsub.s32 0, %v1665
      %v1667 = vrot.slane %v1645, %v1666
      %v1668 = vlaneseq
      %v1669 = vshrl.u32 %v1668, 7
      %v1670 = vsub.s32 0, %v1669
      %v1671 = vrot.slane %v1646, %v1670
      %v1672 = vlaneseq
      %v1673 = vshrl.u32 %v1672, 7
      %v1674 = vsub.s32 0, %v1673
      %v1675 = vrot.slane %v1647, %v1674
      %v1676 = vlaneseq
      %v1677 = vshrl.u32 %v1676, 7
      %v1678 = vsub.s32 0, %v1677
      %v1679 = vrot.slane %v1648, %v1678
      %v1680 = vlaneseq
      %v1681 = vshrl.u32 %v1680, 7
      %v1682 = vsub.s32 0, %v1681
      %v1683 = vrot.slane %v1649, %v1682
      %v1684 = vlaneseq
      %v1685 = vshrl.u32 %v1684, 7
      %v1686 = vsub.s32 0, %v1685
      %v1687 = vrot.slane %v1650, %v1686
      %v1688 = vlaneseq
      %v1689 = vshrl.u32 %v1688, 7
      %v1690 = vsub.s32 0, %v1689
      %v1691 = vrot.slane %v1651, %v1690
      %v1692 = vlaneseq
      %v1693 = vshrl.u32 %v1692, 7
      %v1694 = vsub.s32 0, %v1693
      %v1695 = vrot.slane %v1652, %v1694
      %v1696 = vlaneseq
      %v1697 = vshrl.u32 %v1696, 7
      %v1698 = vsub.s32 0, %v1697
      %v1699 = vrot.slane %v1653, %v1698
      %v1700 = vlaneseq
      %v1701 = vshrl.u32 %v1700, 7
      %v1702 = vsub.s32 0, %v1701
      %v1703 = vrot.slane %v1654, %v1702
      %v1704 = vlaneseq
      %v1705 = vshrl.u32 %v1704, 7
      %v1706 = vsub.s32 0, %v1705
      %v1707 = vrot.slane %v1655, %v1706
      %v1708 = vlaneseq
      %v1709 = vshrl.u32 %v1708, 7
      %v1710 = vsub.s32 0, %v1709
      %v1711 = vrot.slane %v1656, %v1710
      %v1712 = vlaneseq
      %v1713 = vshrl.u32 %v1712, 7
      %v1714 = vsub.s32 0, %v1713
      %v1715 = vrot.slane %v1657, %v1714
      %v1716 = vlaneseq
      %v1717 = vshrl.u32 %v1716, 7
      %v1718 = vsub.s32 0, %v1717
      %v1719 = vrot.slane %v1658, %v1718
      %v1720 = vlaneseq
      %v1721 = vshrl.u32 %v1720, 7
      %v1722 = vsub.s32 0, %v1721
      %v1723 = vrot.slane %v1659, %v1722
      %v1740 = vpack.i.b16 %v1628, %v1628
      %v1741 = vpack.i.b16 %v1629, %v1629
      %v1742 = vpack.i.b16 %v1630, %v1630
      %v1743 = vpack.i.b16 %v1631, %v1631
      %v1744 = vpack.i.b16 %v1632, %v1632
      %v1745 = vpack.i.b16 %v1633, %v1633
      %v1746 = vpack.i.b16 %v1634, %v1634
      %v1747 = vpack.i.b16 %v1635, %v1635
      %v1748 = vpack.i.b16 %v1636, %v1636
      %v1749 = vpack.i.b16 %v1637, %v1637
      %v1750 = vpack.i.b16 %v1638, %v1638
      %v1751 = vpack.i.b16 %v1639, %v1639
      %v1752 = vpack.i.b16 %v1640, %v1640
      %v1753 = vpack.i.b16 %v1641, %v1641
      %v1754 = vpack.i.b16 %v1642, %v1642
      %v1755 = vpack.i.b16 %v1643, %v1643
      %v1756 = vlaneseq
      %v1757 = vshrl.u32 %v1756, 7
      %v1758 = vsub.s32 0, %v1757
      %v1759 = vrot.slane %v1740, %v1758
      %v1760 = vlaneseq
      %v1761 = vshrl.u32 %v1760, 7
      %v1762 = vsub.s32 0, %v1761
      %v1763 = vrot.slane %v1741, %v1762
      %v1764 = vlaneseq
      %v1765 = vshrl.u32 %v1764, 7
      %v1766 = vsub.s32 0, %v1765
      %v1767 = vrot.slane %v1742, %v1766
      %v1768 = vlaneseq
      %v1769 = vshrl.u32 %v1768, 7
      %v1770 = vsub.s32 0, %v1769
      %v1771 = vrot.slane %v1743, %v1770
      %v1772 = vlaneseq
      %v1773 = vshrl.u32 %v1772, 7
      %v1774 = vsub.s32 0, %v1773
      %v1775 = vrot.slane %v1744, %v1774
      %v1776 = vlaneseq
      %v1777 = vshrl.u32 %v1776, 7
      %v1778 = vsub.s32 0, %v1777
      %v1779 = vrot.slane %v1745, %v1778
      %v1780 = vlaneseq
      %v1781 = vshrl.u32 %v1780, 7
      %v1782 = vsub.s32 0, %v1781
      %v1783 = vrot.slane %v1746, %v1782
      %v1784 = vlaneseq
      %v1785 = vshrl.u32 %v1784, 7
      %v1786 = vsub.s32 0, %v1785
      %v1787 = vrot.slane %v1747, %v1786
      %v1788 = vlaneseq
      %v1789 = vshrl.u32 %v1788, 7
      %v1790 = vsub.s32 0, %v1789
      %v1791 = vrot.slane %v1748, %v1790
      %v1792 = vlaneseq
      %v1793 = vshrl.u32 %v1792, 7
      %v1794 = vsub.s32 0, %v1793
      %v1795 = vrot.slane %v1749, %v1794
      %v1796 = vlaneseq
      %v1797 = vshrl.u32 %v1796, 7
      %v1798 = vsub.s32 0, %v1797
      %v1799 = vrot.slane %v1750, %v1798
      %v1800 = vlaneseq
      %v1801 = vshrl.u32 %v1800, 7
      %v1802 = vsub.s32 0, %v1801
      %v1803 = vrot.slane %v1751, %v1802
      %v1804 = vlaneseq
      %v1805 = vshrl.u32 %v1804, 7
      %v1806 = vsub.s32 0, %v1805
      %v1807 = vrot.slane %v1752, %v1806
      %v1808 = vlaneseq
      %v1809 = vshrl.u32 %v1808, 7
      %v1810 = vsub.s32 0, %v1809
      %v1811 = vrot.slane %v1753, %v1810
      %v1812 = vlaneseq
      %v1813 = vshrl.u32 %v1812, 7
      %v1814 = vsub.s32 0, %v1813
      %v1815 = vrot.slane %v1754, %v1814
      %v1816 = vlaneseq
      %v1817 = vshrl.u32 %v1816, 7
      %v1818 = vsub.s32 0, %v1817
      %v1819 = vrot.slane %v1755, %v1818
      %v1836 = vsel %vm313, %v1663, %v1759
      %v1837 = vsel %vm313, %v1667, %v1763
      %v1838 = vsel %vm313, %v1671, %v1767
      %v1839 = vsel %vm313, %v1675, %v1771
      %v1840 = vsel %vm313, %v1679, %v1775
      %v1841 = vsel %vm313, %v1683, %v1779
      %v1842 = vsel %vm313, %v1687, %v1783
      %v1843 = vsel %vm313, %v1691, %v1787
      %v1844 = vsel %vm313, %v1695, %v1791
      %v1845 = vsel %vm313, %v1699, %v1795
      %v1846 = vsel %vm313, %v1703, %v1799
      %v1847 = vsel %vm313, %v1707, %v1803
      %v1848 = vsel %vm313, %v1711, %v1807
      %v1849 = vsel %vm313, %v1715, %v1811
      %v1850 = vsel %vm313, %v1719, %v1815
      %v1851 = vsel %vm313, %v1723, %v1819
      %v1884 = vcombine.low %v1412, %v1413
      %v1885 = vcombine.low %v1414, %v1415
      %v1887 = vunpack.c.l.s4 1966171168
      %v1888 = vunpack.c.0.s8 %v1887
      %v1889 = vlaneseq
      %v1890 = vshrl.u32 %v1889, 7
      %v1891 = vsub.s32 %v1888, %v1890
      %v1892 = vrot.slane %v1884, %v1891
      %v1894 = vunpack.c.l.s4 1966171168
      %v1895 = vunpack.c.0.s8 %v1894
      %v1896 = vlaneseq
      %v1897 = vshrl.u32 %v1896, 7
      %v1898 = vsub.s32 %v1895, %v1897
      %v1899 = vrot.slane %v1885, %v1898
      %v1900 = vcombine.low %v1892, %v1899
      %v1902 = vunpack.c.l.s4 1966171168
      %v1903 = vunpack.c.0.s8 %v1902
      %v1904 = vlaneseq
      %v1905 = vshrl.u32 %v1904, 7
      %v1906 = vsub.s32 %v1903, %v1905
      %v1907 = vrot.slane %v1900, %v1906
      %v1908 = vcombine.low %v1836, %v1837
      %v1909 = vcombine.low %v1838, %v1839
      %v1911 = vunpack.c.l.s4 1966171168
      %v1912 = vunpack.c.0.s8 %v1911
      %v1913 = vlaneseq
      %v1914 = vshrl.u32 %v1913, 7
      %v1915 = vsub.s32 %v1912, %v1914
      %v1916 = vrot.slane %v1908, %v1915
      %v1918 = vunpack.c.l.s4 1966171168
      %v1919 = vunpack.c.0.s8 %v1918
      %v1920 = vlaneseq
      %v1921 = vshrl.u32 %v1920, 7
      %v1922 = vsub.s32 %v1919, %v1921
      %v1923 = vrot.slane %v1909, %v1922
      %v1924 = vcombine.low %v1916, %v1923
      %v1926 = vunpack.c.l.s4 1966171168
      %v1927 = vunpack.c.0.s8 %v1926
      %v1928 = vlaneseq
      %v1929 = vshrl.u32 %v1928, 7
      %v1930 = vsub.s32 %v1927, %v1929
      %v1931 = vrot.slane %v1924, %v1930
      %v1932 = vcombine.low %v1416, %v1417
      %v1933 = vcombine.low %v1418, %v1419
      %v1935 = vunpack.c.l.s4 1966171168
      %v1936 = vunpack.c.0.s8 %v1935
      %v1937 = vlaneseq
      %v1938 = vshrl.u32 %v1937, 7
      %v1939 = vsub.s32 %v1936, %v1938
      %v1940 = vrot.slane %v1932, %v1939
      %v1942 = vunpack.c.l.s4 1966171168
      %v1943 = vunpack.c.0.s8 %v1942
      %v1944 = vlaneseq
      %v1945 = vshrl.u32 %v1944, 7
      %v1946 = vsub.s32 %v1943, %v1945
      %v1947 = vrot.slane %v1933, %v1946
      %v1948 = vcombine.low %v1940, %v1947
      %v1950 = vunpack.c.l.s4 1966171168
      %v1951 = vunpack.c.0.s8 %v1950
      %v1952 = vlaneseq
      %v1953 = vshrl.u32 %v1952, 7
      %v1954 = vsub.s32 %v1951, %v1953
      %v1955 = vrot.slane %v1948, %v1954
      %v1956 = vcombine.low %v1840, %v1841
      %v1957 = vcombine.low %v1842, %v1843
      %v1959 = vunpack.c.l.s4 1966171168
      %v1960 = vunpack.c.0.s8 %v1959
      %v1961 = vlaneseq
      %v1962 = vshrl.u32 %v1961, 7
      %v1963 = vsub.s32 %v1960, %v1962
      %v1964 = vrot.slane %v1956, %v1963
      %v1966 = vunpack.c.l.s4 1966171168
      %v1967 = vunpack.c.0.s8 %v1966
      %v1968 = vlaneseq
      %v1969 = vshrl.u32 %v1968, 7
      %v1970 = vsub.s32 %v1967, %v1969
      %v1971 = vrot.slane %v1957, %v1970
      %v1972 = vcombine.low %v1964, %v1971
      %v1974 = vunpack.c.l.s4 1966171168
      %v1975 = vunpack.c.0.s8 %v1974
      %v1976 = vlaneseq
      %v1977 = vshrl.u32 %v1976, 7
      %v1978 = vsub.s32 %v1975, %v1977
      %v1979 = vrot.slane %v1972, %v1978
      %v1980 = vcombine.low %v1420, %v1421
      %v1981 = vcombine.low %v1422, %v1423
      %v1983 = vunpack.c.l.s4 1966171168
      %v1984 = vunpack.c.0.s8 %v1983
      %v1985 = vlaneseq
      %v1986 = vshrl.u32 %v1985, 7
      %v1987 = vsub.s32 %v1984, %v1986
      %v1988 = vrot.slane %v1980, %v1987
      %v1990 = vunpack.c.l.s4 1966171168
      %v1991 = vunpack.c.0.s8 %v1990
      %v1992 = vlaneseq
      %v1993 = vshrl.u32 %v1992, 7
      %v1994 = vsub.s32 %v1991, %v1993
      %v1995 = vrot.slane %v1981, %v1994
      %v1996 = vcombine.low %v1988, %v1995
      %v1998 = vunpack.c.l.s4 1966171168
      %v1999 = vunpack.c.0.s8 %v1998
      %v2000 = vlaneseq
      %v2001 = vshrl.u32 %v2000, 7
      %v2002 = vsub.s32 %v1999, %v2001
      %v2003 = vrot.slane %v1996, %v2002
      %v2004 = vcombine.low %v1844, %v1845
      %v2005 = vcombine.low %v1846, %v1847
      %v2007 = vunpack.c.l.s4 1966171168
      %v2008 = vunpack.c.0.s8 %v2007
      %v2009 = vlaneseq
      %v2010 = vshrl.u32 %v2009, 7
      %v2011 = vsub.s32 %v2008, %v2010
      %v2012 = vrot.slane %v2004, %v2011
      %v2014 = vunpack.c.l.s4 1966171168
      %v2015 = vunpack.c.0.s8 %v2014
      %v2016 = vlaneseq
      %v2017 = vshrl.u32 %v2016, 7
      %v2018 = vsub.s32 %v2015, %v2017
      %v2019 = vrot.slane %v2005, %v2018
      %v2020 = vcombine.low %v2012, %v2019
      %v2022 = vunpack.c.l.s4 1966171168
      %v2023 = vunpack.c.0.s8 %v2022
      %v2024 = vlaneseq
      %v2025 = vshrl.u32 %v2024, 7
      %v2026 = vsub.s32 %v2023, %v2025
      %v2027 = vrot.slane %v2020, %v2026
      %v2028 = vcombine.low %v1424, %v1425
      %v2029 = vcombine.low %v1426, %v1427
      %v2031 = vunpack.c.l.s4 1966171168
      %v2032 = vunpack.c.0.s8 %v2031
      %v2033 = vlaneseq
      %v2034 = vshrl.u32 %v2033, 7
      %v2035 = vsub.s32 %v2032, %v2034
      %v2036 = vrot.slane %v2028, %v2035
      %v2038 = vunpack.c.l.s4 1966171168
      %v2039 = vunpack.c.0.s8 %v2038
      %v2040 = vlaneseq
      %v2041 = vshrl.u32 %v2040, 7
      %v2042 = vsub.s32 %v2039, %v2041
      %v2043 = vrot.slane %v2029, %v2042
      %v2044 = vcombine.low %v2036, %v2043
      %v2046 = vunpack.c.l.s4 1966171168
      %v2047 = vunpack.c.0.s8 %v2046
      %v2048 = vlaneseq
      %v2049 = vshrl.u32 %v2048, 7
      %v2050 = vsub.s32 %v2047, %v2049
      %v2051 = vrot.slane %v2044, %v2050
      %v2052 = vcombine.low %v1848, %v1849
      %v2053 = vcombine.low %v1850, %v1851
      %v2055 = vunpack.c.l.s4 1966171168
      %v2056 = vunpack.c.0.s8 %v2055
      %v2057 = vlaneseq
      %v2058 = vshrl.u32 %v2057, 7
      %v2059 = vsub.s32 %v2056, %v2058
      %v2060 = vrot.slane %v2052, %v2059
      %v2062 = vunpack.c.l.s4 1966171168
      %v2063 = vunpack.c.0.s8 %v2062
      %v2064 = vlaneseq
      %v2065 = vshrl.u32 %v2064, 7
      %v2066 = vsub.s32 %v2063, %v2065
      %v2067 = vrot.slane %v2053, %v2066
      %v2068 = vcombine.low %v2060, %v2067
      %v2070 = vunpack.c.l.s4 1966171168
      %v2071 = vunpack.c.0.s8 %v2070
      %v2072 = vlaneseq
      %v2073 = vshrl.u32 %v2072, 7
      %v2074 = vsub.s32 %v2071, %v2073
      %v2075 = vrot.slane %v2068, %v2074
      %vm2076 = vcmask 261120
      %v2078 = vsel %vm2076, %v1907, 1065369472
      %v2080 = vsel %vm2076, %v1931, 1065369472
      %v2082 = vsel %vm2076, %v1955, 1065369472
      %v2084 = vsel %vm2076, %v1979, 1065369472
      %v2086 = vsel %vm2076, %v2003, 1065369472
      %v2088 = vsel %vm2076, %v2027, 1065369472
      %v2090 = vsel %vm2076, %v2051, 1065369472
      %v2092 = vsel %vm2076, %v2075, 1065369472
      %v2093 = vshrl.u32 %v2078, 16
      %v2095 = vrot.slane %v2093, 7
      %v2096 = vshll.u32 %v2078, 16
      %v2098 = vor.u32 %v2095, %v2096
      %v2099 = vshrl.u32 %v2080, 16
      %v2101 = vrot.slane %v2099, 7
      %v2102 = vshll.u32 %v2080, 16
      %v2104 = vor.u32 %v2101, %v2102
      %v2105 = vshrl.u32 %v2082, 16
      %v2107 = vrot.slane %v2105, 7
      %v2108 = vshll.u32 %v2082, 16
      %v2110 = vor.u32 %v2107, %v2108
      %v2111 = vshrl.u32 %v2084, 16
      %v2113 = vrot.slane %v2111, 7
      %v2114 = vshll.u32 %v2084, 16
      %v2116 = vor.u32 %v2113, %v2114
      %v2117 = vshrl.u32 %v2086, 16
      %v2119 = vrot.slane %v2117, 7
      %v2120 = vshll.u32 %v2086, 16
      %v2122 = vor.u32 %v2119, %v2120
      %v2123 = vshrl.u32 %v2088, 16
      %v2125 = vrot.slane %v2123, 7
      %v2126 = vshll.u32 %v2088, 16
      %v2128 = vor.u32 %v2125, %v2126
      %v2129 = vshrl.u32 %v2090, 16
      %v2131 = vrot.slane %v2129, 7
      %v2132 = vshll.u32 %v2090, 16
      %v2134 = vor.u32 %v2131, %v2132
      %v2135 = vshrl.u32 %v2092, 16
      %v2137 = vrot.slane %v2135, 7
      %v2138 = vshll.u32 %v2092, 16
      %v2140 = vor.u32 %v2137, %v2138
      %v2149 = vsel %vm313, 0, %v2098
      %v2150 = vsel %vm313, 0, %v2104
      %v2151 = vsel %vm313, 0, %v2110
      %v2152 = vsel %vm313, 0, %v2116
      %v2153 = vsel %vm313, 0, %v2122
      %v2154 = vsel %vm313, 0, %v2128
      %v2155 = vsel %vm313, 0, %v2134
      %v2156 = vsel %vm313, 0, %v2140
      %vm2157 = vcmask 1044480
      %vm2158 = vsmask.f32 4352
      %vm2159 = vmand %vm2157, %vm2158
      %v2160 = vsel %vm2159, %v314, 0
      %v2161 = vsel %vm2159, %v2149, 0
      %v2162 = vsel %vm2159, %v2150, 0
      %v2163 = vsel %vm2159, %v2151, 0
      %v2164 = vsel %vm2159, %v2152, 0
      %v2165 = vsel %vm2159, %v2153, 0
      %v2166 = vsel %vm2159, %v2154, 0
      %v2167 = vsel %vm2159, %v2155, 0
      %v2168 = vsel %vm2159, %v2156, 0
      %v2170 = vshrl.u32 %v2160, 16
      %v2172 = vshll.u32 %v2160, 16
      %v2174 = vrot.slane %v2172, 1
      %v2175 = vor.u32 %v2170, %v2174
      %v2177 = vshrl.u32 %v2161, 16
      %v2179 = vshll.u32 %v2161, 16
      %v2181 = vrot.slane %v2179, 1
      %v2182 = vor.u32 %v2177, %v2181
      %v2184 = vshrl.u32 %v2162, 16
      %v2186 = vshll.u32 %v2162, 16
      %v2188 = vrot.slane %v2186, 1
      %v2189 = vor.u32 %v2184, %v2188
      %v2191 = vshrl.u32 %v2163, 16
      %v2193 = vshll.u32 %v2163, 16
      %v2195 = vrot.slane %v2193, 1
      %v2196 = vor.u32 %v2191, %v2195
      %v2198 = vshrl.u32 %v2164, 16
      %v2200 = vshll.u32 %v2164, 16
      %v2202 = vrot.slane %v2200, 1
      %v2203 = vor.u32 %v2198, %v2202
      %v2205 = vshrl.u32 %v2165, 16
      %v2207 = vshll.u32 %v2165, 16
      %v2209 = vrot.slane %v2207, 1
      %v2210 = vor.u32 %v2205, %v2209
      %v2212 = vshrl.u32 %v2166, 16
      %v2214 = vshll.u32 %v2166, 16
      %v2216 = vrot.slane %v2214, 1
      %v2217 = vor.u32 %v2212, %v2216
      %v2219 = vshrl.u32 %v2167, 16
      %v2221 = vshll.u32 %v2167, 16
      %v2223 = vrot.slane %v2221, 1
      %v2224 = vor.u32 %v2219, %v2223
      %2225 = vrot.lane.b32.xlu0 %v2175, 33
      %v2226 = vpop.permute.xlu0 %2225
      %2227 = vrot.lane.b32.xlu0 %v2182, 33
      %v2228 = vpop.permute.xlu0 %2227
      %2229 = vrot.lane.b32.xlu0 %v2189, 33
      %v2230 = vpop.permute.xlu0 %2229
      %2231 = vrot.lane.b32.xlu0 %v2196, 33
      %v2232 = vpop.permute.xlu0 %2231
      %2233 = vrot.lane.b32.xlu0 %v2203, 33
      %v2234 = vpop.permute.xlu0 %2233
      %2235 = vrot.lane.b32.xlu0 %v2210, 33
      %v2236 = vpop.permute.xlu0 %2235
      %2237 = vrot.lane.b32.xlu0 %v2217, 33
      %v2238 = vpop.permute.xlu0 %2237
      %2239 = vrot.lane.b32.xlu0 %v2224, 33
      %v2240 = vpop.permute.xlu0 %2239
      %2249 = vrot.lane.b32.xlu0 %v2161, 66
      %v2250 = vpop.permute.xlu0 %2249
      %2251 = vrot.lane.b32.xlu0 %v2162, 66
      %v2252 = vpop.permute.xlu0 %2251
      %2253 = vrot.lane.b32.xlu0 %v2163, 66
      %v2254 = vpop.permute.xlu0 %2253
      %2255 = vrot.lane.b32.xlu0 %v2164, 66
      %v2256 = vpop.permute.xlu0 %2255
      %2257 = vrot.lane.b32.xlu0 %v2165, 66
      %v2258 = vpop.permute.xlu0 %2257
      %2259 = vrot.lane.b32.xlu0 %v2166, 66
      %v2260 = vpop.permute.xlu0 %2259
      %2261 = vrot.lane.b32.xlu0 %v2167, 66
      %v2262 = vpop.permute.xlu0 %2261
      %2263 = vrot.lane.b32.xlu0 %v2168, 66
      %v2264 = vpop.permute.xlu0 %2263
      %v2266 = vshrl.u32 %v2168, 16
      %v2268 = vshll.u32 %v2168, 16
      %v2270 = vrot.slane %v2268, 1
      %v2271 = vor.u32 %v2266, %v2270
      %2272 = vrot.lane.b32.xlu0 %v2182, 99
      %v2273 = vpop.permute.xlu0 %2272
      %2274 = vrot.lane.b32.xlu0 %v2189, 99
      %v2275 = vpop.permute.xlu0 %2274
      %2276 = vrot.lane.b32.xlu0 %v2196, 99
      %v2277 = vpop.permute.xlu0 %2276
      %2278 = vrot.lane.b32.xlu0 %v2203, 99
      %v2279 = vpop.permute.xlu0 %2278
      %2280 = vrot.lane.b32.xlu0 %v2210, 99
      %v2281 = vpop.permute.xlu0 %2280
      %2282 = vrot.lane.b32.xlu0 %v2217, 99
      %v2283 = vpop.permute.xlu0 %2282
      %2284 = vrot.lane.b32.xlu0 %v2224, 99
      %v2285 = vpop.permute.xlu0 %2284
      %2286 = vrot.lane.b32.xlu0 %v2271, 99
      %v2287 = vpop.permute.xlu0 %2286
      %vm2288 = vcmask 269312
      %v2290 = vsel %vm2288, %v2160, %v2226
      %v2292 = vsel %vm2288, %v2161, %v2228
      %v2294 = vsel %vm2288, %v2162, %v2230
      %v2296 = vsel %vm2288, %v2163, %v2232
      %v2298 = vsel %vm2288, %v2164, %v2234
      %v2300 = vsel %vm2288, %v2165, %v2236
      %v2302 = vsel %vm2288, %v2166, %v2238
      %v2304 = vsel %vm2288, %v2167, %v2240
      %vm2305 = vcmask 539648
      %v2307 = vsel %vm2305, %v2290, %v2250
      %v2309 = vsel %vm2305, %v2292, %v2252
      %v2311 = vsel %vm2305, %v2294, %v2254
      %v2313 = vsel %vm2305, %v2296, %v2256
      %v2315 = vsel %vm2305, %v2298, %v2258
      %v2317 = vsel %vm2305, %v2300, %v2260
      %v2319 = vsel %vm2305, %v2302, %v2262
      %v2321 = vsel %vm2305, %v2304, %v2264
      %vm2322 = vcmask 809984
      %v2324 = vsel %vm2322, %v2307, %v2273
      %v2326 = vsel %vm2322, %v2309, %v2275
      %v2328 = vsel %vm2322, %v2311, %v2277
      %v2330 = vsel %vm2322, %v2313, %v2279
      %v2332 = vsel %vm2322, %v2315, %v2281
      %v2334 = vsel %vm2322, %v2317, %v2283
      %v2336 = vsel %vm2322, %v2319, %v2285
      %v2338 = vsel %vm2322, %v2321, %v2287
      %v2347 = vunpack.c.l.b16 %v2324
      %v2348 = vunpack.c.l.b16 %v2273
      %v2349 = vunpack.c.l.b16 %v2326
      %v2350 = vunpack.c.l.b16 %v2275
      %v2351 = vunpack.c.l.b16 %v2328
      %v2352 = vunpack.c.l.b16 %v2277
      %v2353 = vunpack.c.l.b16 %v2330
      %v2354 = vunpack.c.l.b16 %v2279
      %v2355 = vunpack.c.l.b16 %v2332
      %v2356 = vunpack.c.l.b16 %v2281
      %v2357 = vunpack.c.l.b16 %v2334
      %v2358 = vunpack.c.l.b16 %v2283
      %v2359 = vunpack.c.l.b16 %v2336
      %v2360 = vunpack.c.l.b16 %v2285
      %v2361 = vunpack.c.l.b16 %v2338
      %v2362 = vunpack.c.l.b16 %v2287
      %v2363 = vld [vmem:[%s3] sm:$0xf]
      %v2364 = vld [vmem:[%s3 + $0x4] sm:$0xf]
      %v2365 = vld [vmem:[%s3 + $0x8] sm:$0xf]
      %v2366 = vld [vmem:[%s3 + $0xc] sm:$0xf]
      %v2367 = vld [vmem:[%s3 + $0x10] sm:$0xf]
      %v2368 = vld [vmem:[%s3 + $0x14] sm:$0xf]
      %v2369 = vld [vmem:[%s3 + $0x18] sm:$0xf]
      %v2370 = vld [vmem:[%s3 + $0x1c] sm:$0xf]
      %v2371 = vld [vmem:[%s3 + $0x20] sm:$0xf]
      %v2372 = vld [vmem:[%s3 + $0x24] sm:$0xf]
      %v2373 = vld [vmem:[%s3 + $0x28] sm:$0xf]
      %v2374 = vld [vmem:[%s3 + $0x2c] sm:$0xf]
      %v2375 = vld [vmem:[%s3 + $0x30] sm:$0xf]
      %v2376 = vld [vmem:[%s3 + $0x34] sm:$0xf]
      %v2377 = vld [vmem:[%s3 + $0x38] sm:$0xf]
      %v2378 = vld [vmem:[%s3 + $0x3c] sm:$0xf]
      %v2379 = vld [vmem:[%s3 + $0x40] sm:$0x3]
      %v2380 = vld [vmem:[%s4] sm:$0x1]
      %v2382 = vlaneseq
      %v2383 = vshrl.u32 %v2382, 7
      %v2384 = vsub.s32 0, %v2383
      %v2385 = vrot.slane %v2380, %v2384
      %v2387 = vpack.c.b16 %v2349, %v2347
      %v2388 = vpack.c.b16 %v2350, %v2348
      %v2389 = vpack.c.b16 %v2353, %v2351
      %v2390 = vpack.c.b16 %v2354, %v2352
      %v2391 = vpack.c.b16 %v2357, %v2355
      %v2392 = vpack.c.b16 %v2358, %v2356
      %v2393 = vpack.c.b16 %v2361, %v2359
      %v2394 = vpack.c.b16 %v2362, %v2360
      %v2416 = vunpack.c.l.b16 %v2363
      %v2417 = vunpack.c.l.b16 %v2364
      %v2418 = vunpack.c.l.b16 %v2365
      %v2419 = vunpack.c.l.b16 %v2366
      %v2420 = vunpack.c.l.b16 %v2367
      %v2421 = vunpack.c.l.b16 %v2368
      %v2422 = vunpack.c.l.b16 %v2369
      %v2423 = vunpack.c.l.b16 %v2370
      %v2424 = vunpack.c.l.b16 %v2371
      %v2425 = vunpack.c.l.b16 %v2372
      %v2426 = vunpack.c.l.b16 %v2373
      %v2427 = vunpack.c.l.b16 %v2374
      %v2428 = vunpack.c.l.b16 %v2375
      %v2429 = vunpack.c.l.b16 %v2376
      %v2430 = vunpack.c.l.b16 %v2377
      %v2431 = vunpack.c.l.b16 %v2378
      %v2432 = vunpack.c.l.b16 %v2379
      %v2433 = vpack.c.b16 %v2417, %v2416
      %v2434 = vpack.c.b16 %v2419, %v2418
      %v2435 = vpack.c.b16 %v2421, %v2420
      %v2436 = vpack.c.b16 %v2423, %v2422
      %v2437 = vpack.c.b16 %v2425, %v2424
      %v2438 = vpack.c.b16 %v2427, %v2426
      %v2439 = vpack.c.b16 %v2429, %v2428
      %v2440 = vpack.c.b16 %v2431, %v2430
      %v2441 = vpack.c.b16 %v2432, %v2432
      %vm2450 = vcmask 31744
      %v2452 = vsel %vm2450, %v2388, 0
      %v2455 = vsel %vm2450, %v2390, 0
      %v2458 = vsel %vm2450, %v2392, 0
      %v2461 = vsel %vm2450, %v2394, 0
      %v2464 = vsel %vm485, %v2441, 0
      %2466 = vmatprep.subr.bf16.mxu0 0
      %2467 = vmatpush1.bf16.msra.mxu0 %v2433
      %2468 = vmatprep.subr.bf16.mxu0 0
      %2469 = vmatpush1.bf16.msra.mxu0 %v2434
      %2470 = vmatprep.subr.bf16.mxu0 0
      %2471 = vmatpush1.bf16.msra.mxu0 %v2435
      %2472 = vmatprep.subr.bf16.mxu0 0
      %2473 = vmatpush1.bf16.msra.mxu0 %v2436
      %2474 = vmatprep.subr.bf16.mxu0 0
      %2475 = vmatpush1.bf16.msra.mxu0 %v2437
      %2476 = vmatprep.subr.bf16.mxu0 0
      %2477 = vmatpush1.bf16.msra.mxu0 %v2438
      %2478 = vmatprep.subr.bf16.mxu0 0
      %2479 = vmatpush1.bf16.msra.mxu0 %v2439
      %2480 = vmatprep.subr.bf16.mxu0 0
      %2481 = vmatpush1.bf16.msra.mxu0 %v2440
      %2482 = vmatprep.subr.bf16.mxu0 0
      %2483 = vmatpush1.bf16.msra.mxu0 %v2464
      %2484 = vmatprep.subr.bf16.mxu0 0
      %2485 = vmatpush1.bf16.msra.mxu0 0
      %2486 = vmatprep.subr.bf16.mxu0 0
      %2487 = vmatpush1.bf16.msra.mxu0 0
      %2488 = vmatprep.subr.bf16.mxu0 0
      %2489 = vmatpush1.bf16.msra.mxu0 0
      %2490 = vmatprep.subr.bf16.mxu0 0
      %2491 = vmatpush1.bf16.msra.mxu0 0
      %2492 = vmatprep.subr.bf16.mxu0 0
      %2493 = vmatpush1.bf16.msra.mxu0 0
      %2494 = vmatprep.subr.bf16.mxu0 0
      %2495 = vmatpush1.bf16.msra.mxu0 0
      %2496 = vmatprep.subr.bf16.mxu0 0
      %2497 = vmatpush1.bf16.msra.mxu0 0
      %2498 = vmatprep.mubr.bf16.mxu0 %v2452
      %2499 = vmatmul.mubr.bf16.gmra.mrb[0].mxu0 %v2387
      %v2500 = vpop.f32.mrb[0].mxu0
      %v2501 = vadd.f32 %v2385, %v2500
      %v2502 = vpop.f32.mrb[0].mxu0
      %v2503 = vpop.f32.mrb[0].mxu0
      %v2504 = vadd.f32 %v2385, %v2503
      %v2505 = vpop.f32.mrb[0].mxu0
      %2506 = vmatprep.mubr.bf16.mxu0 %v2455
      %2507 = vmatmul.mubr.bf16.gmra.mrb[0].mxu0 %v2389
      %v2508 = vpop.f32.mrb[0].mxu0
      %v2509 = vadd.f32 %v2385, %v2508
      %v2510 = vpop.f32.mrb[0].mxu0
      %v2511 = vpop.f32.mrb[0].mxu0
      %v2512 = vadd.f32 %v2385, %v2511
      %v2513 = vpop.f32.mrb[0].mxu0
      %2514 = vmatprep.mubr.bf16.mxu0 %v2458
      %2515 = vmatmul.mubr.bf16.gmra.mrb[0].mxu0 %v2391
      %v2516 = vpop.f32.mrb[0].mxu0
      %v2517 = vadd.f32 %v2385, %v2516
      %v2518 = vpop.f32.mrb[0].mxu0
      %v2519 = vpop.f32.mrb[0].mxu0
      %v2520 = vadd.f32 %v2385, %v2519
      %v2521 = vpop.f32.mrb[0].mxu0
      %2522 = vmatprep.mubr.bf16.mxu0 %v2461
      %2523 = vmatmul.mubr.bf16.gmra.mrb[0].mxu0 %v2393
      %v2524 = vpop.f32.mrb[0].mxu0
      %v2525 = vadd.f32 %v2385, %v2524
      %v2526 = vpop.f32.mrb[0].mxu0
      %v2527 = vpop.f32.mrb[0].mxu0
      %v2528 = vadd.f32 %v2385, %v2527
      %v2529 = vpop.f32.mrb[0].mxu0
      %2530 = vdwg.mxu0
      %v2531 = vunpack.c.h.b16 %v2324
      %v2532 = vunpack.c.h.b16 %v2273
      %v2533 = vunpack.c.h.b16 %v2326
      %v2534 = vunpack.c.h.b16 %v2275
      %v2535 = vunpack.c.h.b16 %v2328
      %v2536 = vunpack.c.h.b16 %v2277
      %v2537 = vunpack.c.h.b16 %v2330
      %v2538 = vunpack.c.h.b16 %v2279
      %v2539 = vunpack.c.h.b16 %v2332
      %v2540 = vunpack.c.h.b16 %v2281
      %v2541 = vunpack.c.h.b16 %v2334
      %v2542 = vunpack.c.h.b16 %v2283
      %v2543 = vunpack.c.h.b16 %v2336
      %v2544 = vunpack.c.h.b16 %v2285
      %v2545 = vunpack.c.h.b16 %v2338
      %v2546 = vunpack.c.h.b16 %v2287
      %v2547 = vpack.c.b16 %v2348, %v2347
      %v2548 = vpack.c.b16 %v2532, %v2531
      %v2549 = vpack.c.b16 %v2350, %v2349
      %v2550 = vpack.c.b16 %v2534, %v2533
      %v2551 = vpack.c.b16 %v2352, %v2351
      %v2552 = vpack.c.b16 %v2536, %v2535
      %v2553 = vpack.c.b16 %v2354, %v2353
      %v2554 = vpack.c.b16 %v2538, %v2537
      %v2555 = vpack.c.b16 %v2356, %v2355
      %v2556 = vpack.c.b16 %v2540, %v2539
      %v2557 = vpack.c.b16 %v2358, %v2357
      %v2558 = vpack.c.b16 %v2542, %v2541
      %v2559 = vpack.c.b16 %v2360, %v2359
      %v2560 = vpack.c.b16 %v2544, %v2543
      %v2561 = vpack.c.b16 %v2362, %v2361
      %v2562 = vpack.c.b16 %v2546, %v2545
      %vm2563 = vsmask.f32 3328
      %vm2564 = vsmask.f32 7440
      %vm2565 = vmor %vm2563, %vm2564
      %v2567 = vshrl.u32 %v2547, 16
      %v2569 = vrot.slane %v2567, 4
      %v2570 = vshll.u32 %v2547, 16
      %v2572 = vrot.slane %v2570, 5
      %v2573 = vor.u32 %v2569, %v2572
      %v2574 = vrot.slane %v2573, 4
      %v2576 = vshll.u32 %v2548, 16
      %v2578 = vrot.slane %v2576, 5
      %v2579 = vsel %vm2565, %v2574, %v2578
      %v2581 = vshrl.u32 %v2549, 16
      %v2583 = vrot.slane %v2581, 4
      %v2584 = vshll.u32 %v2549, 16
      %v2586 = vrot.slane %v2584, 5
      %v2587 = vor.u32 %v2583, %v2586
      %v2588 = vrot.slane %v2587, 4
      %v2590 = vshll.u32 %v2550, 16
      %v2592 = vrot.slane %v2590, 5
      %v2593 = vsel %vm2565, %v2588, %v2592
      %v2595 = vshrl.u32 %v2551, 16
      %v2597 = vrot.slane %v2595, 4
      %v2598 = vshll.u32 %v2551, 16
      %v2600 = vrot.slane %v2598, 5
      %v2601 = vor.u32 %v2597, %v2600
      %v2602 = vrot.slane %v2601, 4
      %v2604 = vshll.u32 %v2552, 16
      %v2606 = vrot.slane %v2604, 5
      %v2607 = vsel %vm2565, %v2602, %v2606
      %v2609 = vshrl.u32 %v2553, 16
      %v2611 = vrot.slane %v2609, 4
      %v2612 = vshll.u32 %v2553, 16
      %v2614 = vrot.slane %v2612, 5
      %v2615 = vor.u32 %v2611, %v2614
      %v2616 = vrot.slane %v2615, 4
      %v2618 = vshll.u32 %v2554, 16
      %v2620 = vrot.slane %v2618, 5
      %v2621 = vsel %vm2565, %v2616, %v2620
      %v2623 = vshrl.u32 %v2555, 16
      %v2625 = vrot.slane %v2623, 4
      %v2626 = vshll.u32 %v2555, 16
      %v2628 = vrot.slane %v2626, 5
      %v2629 = vor.u32 %v2625, %v2628
      %v2630 = vrot.slane %v2629, 4
      %v2632 = vshll.u32 %v2556, 16
      %v2634 = vrot.slane %v2632, 5
      %v2635 = vsel %vm2565, %v2630, %v2634
      %v2637 = vshrl.u32 %v2557, 16
      %v2639 = vrot.slane %v2637, 4
      %v2640 = vshll.u32 %v2557, 16
      %v2642 = vrot.slane %v2640, 5
      %v2643 = vor.u32 %v2639, %v2642
      %v2644 = vrot.slane %v2643, 4
      %v2646 = vshll.u32 %v2558, 16
      %v2648 = vrot.slane %v2646, 5
      %v2649 = vsel %vm2565, %v2644, %v2648
      %v2651 = vshrl.u32 %v2559, 16
      %v2653 = vrot.slane %v2651, 4
      %v2654 = vshll.u32 %v2559, 16
      %v2656 = vrot.slane %v2654, 5
      %v2657 = vor.u32 %v2653, %v2656
      %v2658 = vrot.slane %v2657, 4
      %v2660 = vshll.u32 %v2560, 16
      %v2662 = vrot.slane %v2660, 5
      %v2663 = vsel %vm2565, %v2658, %v2662
      %v2665 = vshrl.u32 %v2561, 16
      %v2667 = vrot.slane %v2665, 4
      %v2668 = vshll.u32 %v2561, 16
      %v2670 = vrot.slane %v2668, 5
      %v2671 = vor.u32 %v2667, %v2670
      %v2672 = vrot.slane %v2671, 4
      %v2674 = vshll.u32 %v2562, 16
      %v2676 = vrot.slane %v2674, 5
      %v2677 = vsel %vm2565, %v2672, %v2676
      %s2678 = scalar_lea.vmem %s3, 68
      %v2679 = vld [vmem:[%s2678] sm:$0xf]
      %v2680 = vld [vmem:[%s2678 + $0x4] sm:$0xf]
      %v2681 = vld [vmem:[%s2678 + $0x8] sm:$0xf]
      %v2682 = vld [vmem:[%s2678 + $0xc] sm:$0xf]
      %v2683 = vld [vmem:[%s2678 + $0x10] sm:$0xf]
      %v2684 = vld [vmem:[%s2678 + $0x14] sm:$0xf]
      %v2685 = vld [vmem:[%s2678 + $0x18] sm:$0xf]
      %v2686 = vld [vmem:[%s2678 + $0x1c] sm:$0xf]
      %v2687 = vld [vmem:[%s2678 + $0x20] sm:$0xf]
      %v2688 = vld [vmem:[%s2678 + $0x24] sm:$0xf]
      %v2689 = vld [vmem:[%s2678 + $0x28] sm:$0xf]
      %v2690 = vld [vmem:[%s2678 + $0x2c] sm:$0xf]
      %v2691 = vld [vmem:[%s2678 + $0x30] sm:$0xf]
      %v2692 = vld [vmem:[%s2678 + $0x34] sm:$0xf]
      %v2693 = vld [vmem:[%s2678 + $0x38] sm:$0xf]
      %v2694 = vld [vmem:[%s2678 + $0x3c] sm:$0xf]
      %v2695 = vld [vmem:[%s2678 + $0x40] sm:$0x3]
      %v2696 = vunpack.c.l.b16 %v2579
      %v2697 = vunpack.c.h.b16 %v2579
      %v2698 = vunpack.c.l.b16 %v2593
      %v2699 = vunpack.c.h.b16 %v2593
      %v2700 = vunpack.c.l.b16 %v2607
      %v2701 = vunpack.c.h.b16 %v2607
      %v2702 = vunpack.c.l.b16 %v2621
      %v2703 = vunpack.c.h.b16 %v2621
      %v2704 = vunpack.c.l.b16 %v2635
      %v2705 = vunpack.c.h.b16 %v2635
      %v2706 = vunpack.c.l.b16 %v2649
      %v2707 = vunpack.c.h.b16 %v2649
      %v2708 = vunpack.c.l.b16 %v2663
      %v2709 = vunpack.c.h.b16 %v2663
      %v2710 = vunpack.c.l.b16 %v2677
      %v2711 = vunpack.c.h.b16 %v2677
      %v2712 = vpack.c.b16 %v2698, %v2696
      %v2713 = vpack.c.b16 %v2699, %v2697
      %v2714 = vpack.c.b16 %v2702, %v2700
      %v2715 = vpack.c.b16 %v2703, %v2701
      %v2716 = vpack.c.b16 %v2706, %v2704
      %v2717 = vpack.c.b16 %v2707, %v2705
      %v2718 = vpack.c.b16 %v2710, %v2708
      %v2719 = vpack.c.b16 %v2711, %v2709
      %v2741 = vunpack.c.l.b16 %v2679
      %v2742 = vunpack.c.l.b16 %v2680
      %v2743 = vunpack.c.l.b16 %v2681
      %v2744 = vunpack.c.l.b16 %v2682
      %v2745 = vunpack.c.l.b16 %v2683
      %v2746 = vunpack.c.l.b16 %v2684
      %v2747 = vunpack.c.l.b16 %v2685
      %v2748 = vunpack.c.l.b16 %v2686
      %v2749 = vunpack.c.l.b16 %v2687
      %v2750 = vunpack.c.l.b16 %v2688
      %v2751 = vunpack.c.l.b16 %v2689
      %v2752 = vunpack.c.l.b16 %v2690
      %v2753 = vunpack.c.l.b16 %v2691
      %v2754 = vunpack.c.l.b16 %v2692
      %v2755 = vunpack.c.l.b16 %v2693
      %v2756 = vunpack.c.l.b16 %v2694
      %v2757 = vunpack.c.l.b16 %v2695
      %v2758 = vpack.c.b16 %v2742, %v2741
      %v2759 = vpack.c.b16 %v2744, %v2743
      %v2760 = vpack.c.b16 %v2746, %v2745
      %v2761 = vpack.c.b16 %v2748, %v2747
      %v2762 = vpack.c.b16 %v2750, %v2749
      %v2763 = vpack.c.b16 %v2752, %v2751
      %v2764 = vpack.c.b16 %v2754, %v2753
      %v2765 = vpack.c.b16 %v2756, %v2755
      %v2766 = vpack.c.b16 %v2757, %v2757
      %v2776 = vsel %vm2450, %v2713, 0
      %v2779 = vsel %vm2450, %v2715, 0
      %v2782 = vsel %vm2450, %v2717, 0
      %v2785 = vsel %vm2450, %v2719, 0
      %v2788 = vsel %vm485, %v2766, 0
      %2790 = vmatprep.subr.bf16.mxu0 0
      %2791 = vmatpush1.bf16.msra.mxu0 %v2758
      %2792 = vmatprep.subr.bf16.mxu0 0
      %2793 = vmatpush1.bf16.msra.mxu0 %v2759
      %2794 = vmatprep.subr.bf16.mxu0 0
      %2795 = vmatpush1.bf16.msra.mxu0 %v2760
      %2796 = vmatprep.subr.bf16.mxu0 0
      %2797 = vmatpush1.bf16.msra.mxu0 %v2761
      %2798 = vmatprep.subr.bf16.mxu0 0
      %2799 = vmatpush1.bf16.msra.mxu0 %v2762
      %2800 = vmatprep.subr.bf16.mxu0 0
      %2801 = vmatpush1.bf16.msra.mxu0 %v2763
      %2802 = vmatprep.subr.bf16.mxu0 0
      %2803 = vmatpush1.bf16.msra.mxu0 %v2764
      %2804 = vmatprep.subr.bf16.mxu0 0
      %2805 = vmatpush1.bf16.msra.mxu0 %v2765
      %2806 = vmatprep.subr.bf16.mxu0 0
      %2807 = vmatpush1.bf16.msra.mxu0 %v2788
      %2808 = vmatprep.subr.bf16.mxu0 0
      %2809 = vmatpush1.bf16.msra.mxu0 0
      %2810 = vmatprep.subr.bf16.mxu0 0
      %2811 = vmatpush1.bf16.msra.mxu0 0
      %2812 = vmatprep.subr.bf16.mxu0 0
      %2813 = vmatpush1.bf16.msra.mxu0 0
      %2814 = vmatprep.subr.bf16.mxu0 0
      %2815 = vmatpush1.bf16.msra.mxu0 0
      %2816 = vmatprep.subr.bf16.mxu0 0
      %2817 = vmatpush1.bf16.msra.mxu0 0
      %2818 = vmatprep.subr.bf16.mxu0 0
      %2819 = vmatpush1.bf16.msra.mxu0 0
      %2820 = vmatprep.subr.bf16.mxu0 0
      %2821 = vmatpush1.bf16.msra.mxu0 0
      %2822 = vmatprep.mubr.bf16.mxu0 %v2776
      %2823 = vmatmul.mubr.bf16.gmra.mrb[0].mxu0 %v2712
      %v2824 = vpop.f32.mrb[0].mxu0
      %v2825 = vadd.f32 %v2385, %v2824
      %v2826 = vpop.f32.mrb[0].mxu0
      %v2827 = vpop.f32.mrb[0].mxu0
      %v2828 = vadd.f32 %v2385, %v2827
      %v2829 = vpop.f32.mrb[0].mxu0
      %2830 = vmatprep.mubr.bf16.mxu0 %v2779
      %2831 = vmatmul.mubr.bf16.gmra.mrb[0].mxu0 %v2714
      %v2832 = vpop.f32.mrb[0].mxu0
      %v2833 = vadd.f32 %v2385, %v2832
      %v2834 = vpop.f32.mrb[0].mxu0
      %v2835 = vpop.f32.mrb[0].mxu0
      %v2836 = vadd.f32 %v2385, %v2835
      %v2837 = vpop.f32.mrb[0].mxu0
      %2838 = vmatprep.mubr.bf16.mxu0 %v2782
      %2839 = vmatmul.mubr.bf16.gmra.mrb[0].mxu0 %v2716
      %v2840 = vpop.f32.mrb[0].mxu0
      %v2841 = vadd.f32 %v2385, %v2840
      %v2842 = vpop.f32.mrb[0].mxu0
      %v2843 = vpop.f32.mrb[0].mxu0
      %v2844 = vadd.f32 %v2385, %v2843
      %v2845 = vpop.f32.mrb[0].mxu0
      %2846 = vmatprep.mubr.bf16.mxu0 %v2785
      %2847 = vmatmul.mubr.bf16.gmra.mrb[0].mxu0 %v2718
      %v2848 = vpop.f32.mrb[0].mxu0
      %v2849 = vadd.f32 %v2385, %v2848
      %v2850 = vpop.f32.mrb[0].mxu0
      %v2851 = vpop.f32.mrb[0].mxu0
      %v2852 = vadd.f32 %v2385, %v2851
      %v2853 = vpop.f32.mrb[0].mxu0
      %2854 = vdwg.mxu0
      %2855 = vrot.lane.b32.xlu0 %v2271, 33
      %v2856 = vpop.permute.xlu0 %2855
      %2858 = vrot.lane.b32.xlu0 %v2160, 66
      %v2859 = vpop.permute.xlu0 %2858
      %2860 = vrot.lane.b32.xlu0 %v2175, 99
      %v2861 = vpop.permute.xlu0 %2860
      %v2863 = vsel %vm2288, %v2168, %v2856
      %v2865 = vsel %vm2305, %v2863, %v2859
      %v2867 = vsel %vm2322, %v2865, %v2861
      %v2869 = vunpack.c.l.b16 %v2867
      %v2870 = vunpack.c.l.b16 %v2861
      %s2871 = scalar_lea.vmem %s3, 136
      %v2872 = vld [vmem:[%s2871] sm:$0xf]
      %v2873 = vld [vmem:[%s2871 + $0x4] sm:$0xf]
      %v2874 = vld [vmem:[%s2871 + $0x8] sm:$0xf]
      %v2875 = vld [vmem:[%s2871 + $0xc] sm:$0xf]
      %v2876 = vld [vmem:[%s2871 + $0x10] sm:$0xf]
      %v2877 = vld [vmem:[%s2871 + $0x14] sm:$0xf]
      %v2878 = vld [vmem:[%s2871 + $0x18] sm:$0xf]
      %v2879 = vld [vmem:[%s2871 + $0x1c] sm:$0xf]
      %v2880 = vld [vmem:[%s2871 + $0x20] sm:$0xf]
      %v2881 = vld [vmem:[%s2871 + $0x24] sm:$0xf]
      %v2882 = vld [vmem:[%s2871 + $0x28] sm:$0xf]
      %v2883 = vld [vmem:[%s2871 + $0x2c] sm:$0xf]
      %v2884 = vld [vmem:[%s2871 + $0x30] sm:$0xf]
      %v2885 = vld [vmem:[%s2871 + $0x34] sm:$0xf]
      %v2886 = vld [vmem:[%s2871 + $0x38] sm:$0xf]
      %v2887 = vld [vmem:[%s2871 + $0x3c] sm:$0xf]
      %v2888 = vld [vmem:[%s2871 + $0x40] sm:$0x3]
      %v2889 = vpack.c.b16 %v2351, %v2349
      %v2890 = vpack.c.b16 %v2352, %v2350
      %v2891 = vpack.c.b16 %v2355, %v2353
      %v2892 = vpack.c.b16 %v2356, %v2354
      %v2893 = vpack.c.b16 %v2359, %v2357
      %v2894 = vpack.c.b16 %v2360, %v2358
      %v2895 = vpack.c.b16 %v2869, %v2361
      %v2896 = vpack.c.b16 %v2870, %v2362
      %v2918 = vunpack.c.l.b16 %v2872
      %v2919 = vunpack.c.l.b16 %v2873
      %v2920 = vunpack.c.l.b16 %v2874
      %v2921 = vunpack.c.l.b16 %v2875
      %v2922 = vunpack.c.l.b16 %v2876
      %v2923 = vunpack.c.l.b16 %v2877
      %v2924 = vunpack.c.l.b16 %v2878
      %v2925 = vunpack.c.l.b16 %v2879
      %v2926 = vunpack.c.l.b16 %v2880
      %v2927 = vunpack.c.l.b16 %v2881
      %v2928 = vunpack.c.l.b16 %v2882
      %v2929 = vunpack.c.l.b16 %v2883
      %v2930 = vunpack.c.l.b16 %v2884
      %v2931 = vunpack.c.l.b16 %v2885
      %v2932 = vunpack.c.l.b16 %v2886
      %v2933 = vunpack.c.l.b16 %v2887
      %v2934 = vunpack.c.l.b16 %v2888
      %v2935 = vpack.c.b16 %v2919, %v2918
      %v2936 = vpack.c.b16 %v2921, %v2920
      %v2937 = vpack.c.b16 %v2923, %v2922
      %v2938 = vpack.c.b16 %v2925, %v2924
      %v2939 = vpack.c.b16 %v2927, %v2926
      %v2940 = vpack.c.b16 %v2929, %v2928
      %v2941 = vpack.c.b16 %v2931, %v2930
      %v2942 = vpack.c.b16 %v2933, %v2932
      %v2943 = vpack.c.b16 %v2934, %v2934
      %v2953 = vsel %vm2450, %v2890, 0
      %v2956 = vsel %vm2450, %v2892, 0
      %v2959 = vsel %vm2450, %v2894, 0
      %v2962 = vsel %vm2450, %v2896, 0
      %v2965 = vsel %vm485, %v2943, 0
      %2967 = vmatprep.subr.bf16.mxu0 0
      %2968 = vmatpush1.bf16.msra.mxu0 %v2935
      %2969 = vmatprep.subr.bf16.mxu0 0
      %2970 = vmatpush1.bf16.msra.mxu0 %v2936
      %2971 = vmatprep.subr.bf16.mxu0 0
      %2972 = vmatpush1.bf16.msra.mxu0 %v2937
      %2973 = vmatprep.subr.bf16.mxu0 0
      %2974 = vmatpush1.bf16.msra.mxu0 %v2938
      %2975 = vmatprep.subr.bf16.mxu0 0
      %2976 = vmatpush1.bf16.msra.mxu0 %v2939
      %2977 = vmatprep.subr.bf16.mxu0 0
      %2978 = vmatpush1.bf16.msra.mxu0 %v2940
      %2979 = vmatprep.subr.bf16.mxu0 0
      %2980 = vmatpush1.bf16.msra.mxu0 %v2941
      %2981 = vmatprep.subr.bf16.mxu0 0
      %2982 = vmatpush1.bf16.msra.mxu0 %v2942
      %2983 = vmatprep.subr.bf16.mxu0 0
      %2984 = vmatpush1.bf16.msra.mxu0 %v2965
      %2985 = vmatprep.subr.bf16.mxu0 0
      %2986 = vmatpush1.bf16.msra.mxu0 0
      %2987 = vmatprep.subr.bf16.mxu0 0
      %2988 = vmatpush1.bf16.msra.mxu0 0
      %2989 = vmatprep.subr.bf16.mxu0 0
      %2990 = vmatpush1.bf16.msra.mxu0 0
      %2991 = vmatprep.subr.bf16.mxu0 0
      %2992 = vmatpush1.bf16.msra.mxu0 0
      %2993 = vmatprep.subr.bf16.mxu0 0
      %2994 = vmatpush1.bf16.msra.mxu0 0
      %2995 = vmatprep.subr.bf16.mxu0 0
      %2996 = vmatpush1.bf16.msra.mxu0 0
      %2997 = vmatprep.subr.bf16.mxu0 0
      %2998 = vmatpush1.bf16.msra.mxu0 0
      %2999 = vmatprep.mubr.bf16.mxu0 %v2953
      %3000 = vmatmul.mubr.bf16.gmra.mrb[0].mxu0 %v2889
      %v3001 = vpop.f32.mrb[0].mxu0
      %v3002 = vadd.f32 %v2385, %v3001
      %v3003 = vpop.f32.mrb[0].mxu0
      %v3004 = vpop.f32.mrb[0].mxu0
      %v3005 = vadd.f32 %v2385, %v3004
      %v3006 = vpop.f32.mrb[0].mxu0
      %3007 = vmatprep.mubr.bf16.mxu0 %v2956
      %3008 = vmatmul.mubr.bf16.gmra.mrb[0].mxu0 %v2891
      %v3009 = vpop.f32.mrb[0].mxu0
      %v3010 = vadd.f32 %v2385, %v3009
      %v3011 = vpop.f32.mrb[0].mxu0
      %v3012 = vpop.f32.mrb[0].mxu0
      %v3013 = vadd.f32 %v2385, %v3012
      %v3014 = vpop.f32.mrb[0].mxu0
      %3015 = vmatprep.mubr.bf16.mxu0 %v2959
      %3016 = vmatmul.mubr.bf16.gmra.mrb[0].mxu0 %v2893
      %v3017 = vpop.f32.mrb[0].mxu0
      %v3018 = vadd.f32 %v2385, %v3017
      %v3019 = vpop.f32.mrb[0].mxu0
      %v3020 = vpop.f32.mrb[0].mxu0
      %v3021 = vadd.f32 %v2385, %v3020
      %v3022 = vpop.f32.mrb[0].mxu0
      %3023 = vmatprep.mubr.bf16.mxu0 %v2962
      %3024 = vmatmul.mubr.bf16.gmra.mrb[0].mxu0 %v2895
      %v3025 = vpop.f32.mrb[0].mxu0
      %v3026 = vadd.f32 %v2385, %v3025
      %v3027 = vpop.f32.mrb[0].mxu0
      %v3028 = vpop.f32.mrb[0].mxu0
      %v3029 = vadd.f32 %v2385, %v3028
      %v3030 = vpop.f32.mrb[0].mxu0
      %3031 = vdwg.mxu0
      %v3032 = vunpack.c.h.b16 %v2867
      %v3033 = vunpack.c.h.b16 %v2861
      %v3034 = vpack.c.b16 %v2870, %v2869
      %v3035 = vpack.c.b16 %v3033, %v3032
      %v3037 = vshrl.u32 %v3034, 16
      %v3039 = vrot.slane %v3037, 4
      %v3040 = vshll.u32 %v3034, 16
      %v3042 = vrot.slane %v3040, 5
      %v3043 = vor.u32 %v3039, %v3042
      %v3044 = vrot.slane %v3043, 4
      %v3046 = vshll.u32 %v3035, 16
      %v3048 = vrot.slane %v3046, 5
      %v3049 = vsel %vm2565, %v3044, %v3048
      %s3050 = scalar_lea.vmem %s3, 204
      %v3051 = vld [vmem:[%s3050] sm:$0xf]
      %v3052 = vld [vmem:[%s3050 + $0x4] sm:$0xf]
      %v3053 = vld [vmem:[%s3050 + $0x8] sm:$0xf]
      %v3054 = vld [vmem:[%s3050 + $0xc] sm:$0xf]
      %v3055 = vld [vmem:[%s3050 + $0x10] sm:$0xf]
      %v3056 = vld [vmem:[%s3050 + $0x14] sm:$0xf]
      %v3057 = vld [vmem:[%s3050 + $0x18] sm:$0xf]
      %v3058 = vld [vmem:[%s3050 + $0x1c] sm:$0xf]
      %v3059 = vld [vmem:[%s3050 + $0x20] sm:$0xf]
      %v3060 = vld [vmem:[%s3050 + $0x24] sm:$0xf]
      %v3061 = vld [vmem:[%s3050 + $0x28] sm:$0xf]
      %v3062 = vld [vmem:[%s3050 + $0x2c] sm:$0xf]
      %v3063 = vld [vmem:[%s3050 + $0x30] sm:$0xf]
      %v3064 = vld [vmem:[%s3050 + $0x34] sm:$0xf]
      %v3065 = vld [vmem:[%s3050 + $0x38] sm:$0xf]
      %v3066 = vld [vmem:[%s3050 + $0x3c] sm:$0xf]
      %v3067 = vld [vmem:[%s3050 + $0x40] sm:$0x3]
      %v3068 = vunpack.c.l.b16 %v3049
      %v3069 = vunpack.c.h.b16 %v3049
      %v3070 = vpack.c.b16 %v2700, %v2698
      %v3071 = vpack.c.b16 %v2701, %v2699
      %v3072 = vpack.c.b16 %v2704, %v2702
      %v3073 = vpack.c.b16 %v2705, %v2703
      %v3074 = vpack.c.b16 %v2708, %v2706
      %v3075 = vpack.c.b16 %v2709, %v2707
      %v3076 = vpack.c.b16 %v3068, %v2710
      %v3077 = vpack.c.b16 %v3069, %v2711
      %v3099 = vunpack.c.l.b16 %v3051
      %v3100 = vunpack.c.l.b16 %v3052
      %v3101 = vunpack.c.l.b16 %v3053
      %v3102 = vunpack.c.l.b16 %v3054
      %v3103 = vunpack.c.l.b16 %v3055
      %v3104 = vunpack.c.l.b16 %v3056
      %v3105 = vunpack.c.l.b16 %v3057
      %v3106 = vunpack.c.l.b16 %v3058
      %v3107 = vunpack.c.l.b16 %v3059
      %v3108 = vunpack.c.l.b16 %v3060
      %v3109 = vunpack.c.l.b16 %v3061
      %v3110 = vunpack.c.l.b16 %v3062
      %v3111 = vunpack.c.l.b16 %v3063
      %v3112 = vunpack.c.l.b16 %v3064
      %v3113 = vunpack.c.l.b16 %v3065
      %v3114 = vunpack.c.l.b16 %v3066
      %v3115 = vunpack.c.l.b16 %v3067
      %v3116 = vpack.c.b16 %v3100, %v3099
      %v3117 = vpack.c.b16 %v3102, %v3101
      %v3118 = vpack.c.b16 %v3104, %v3103
      %v3119 = vpack.c.b16 %v3106, %v3105
      %v3120 = vpack.c.b16 %v3108, %v3107
      %v3121 = vpack.c.b16 %v3110, %v3109
      %v3122 = vpack.c.b16 %v3112, %v3111
      %v3123 = vpack.c.b16 %v3114, %v3113
      %v3124 = vpack.c.b16 %v3115, %v3115
      %v3134 = vsel %vm2450, %v3071, 0
      %v3137 = vsel %vm2450, %v3073, 0
      %v3140 = vsel %vm2450, %v3075, 0
      %v3143 = vsel %vm2450, %v3077, 0
      %v3146 = vsel %vm485, %v3124, 0
      %3148 = vmatprep.subr.bf16.mxu0 0
      %3149 = vmatpush1.bf16.msra.mxu0 %v3116
      %3150 = vmatprep.subr.bf16.mxu0 0
      %3151 = vmatpush1.bf16.msra.mxu0 %v3117
      %3152 = vmatprep.subr.bf16.mxu0 0
      %3153 = vmatpush1.bf16.msra.mxu0 %v3118
      %3154 = vmatprep.subr.bf16.mxu0 0
      %3155 = vmatpush1.bf16.msra.mxu0 %v3119
      %3156 = vmatprep.subr.bf16.mxu0 0
      %3157 = vmatpush1.bf16.msra.mxu0 %v3120
      %3158 = vmatprep.subr.bf16.mxu0 0
      %3159 = vmatpush1.bf16.msra.mxu0 %v3121
      %3160 = vmatprep.subr.bf16.mxu0 0
      %3161 = vmatpush1.bf16.msra.mxu0 %v3122
      %3162 = vmatprep.subr.bf16.mxu0 0
      %3163 = vmatpush1.bf16.msra.mxu0 %v3123
      %3164 = vmatprep.subr.bf16.mxu0 0
      %3165 = vmatpush1.bf16.msra.mxu0 %v3146
      %3166 = vmatprep.subr.bf16.mxu0 0
      %3167 = vmatpush1.bf16.msra.mxu0 0
      %3168 = vmatprep.subr.bf16.mxu0 0
      %3169 = vmatpush1.bf16.msra.mxu0 0
      %3170 = vmatprep.subr.bf16.mxu0 0
      %3171 = vmatpush1.bf16.msra.mxu0 0
      %3172 = vmatprep.subr.bf16.mxu0 0
      %3173 = vmatpush1.bf16.msra.mxu0 0
      %3174 = vmatprep.subr.bf16.mxu0 0
      %3175 = vmatpush1.bf16.msra.mxu0 0
      %3176 = vmatprep.subr.bf16.mxu0 0
      %3177 = vmatpush1.bf16.msra.mxu0 0
      %3178 = vmatprep.subr.bf16.mxu0 0
      %3179 = vmatpush1.bf16.msra.mxu0 0
      %3180 = vmatprep.mubr.bf16.mxu0 %v3134
      %3181 = vmatmul.mubr.bf16.gmra.mrb[0].mxu0 %v3070
      %v3182 = vpop.f32.mrb[0].mxu0
      %v3183 = vadd.f32 %v2385, %v3182
      %v3184 = vpop.f32.mrb[0].mxu0
      %v3185 = vpop.f32.mrb[0].mxu0
      %v3186 = vadd.f32 %v2385, %v3185
      %v3187 = vpop.f32.mrb[0].mxu0
      %3188 = vmatprep.mubr.bf16.mxu0 %v3137
      %3189 = vmatmul.mubr.bf16.gmra.mrb[0].mxu0 %v3072
      %v3190 = vpop.f32.mrb[0].mxu0
      %v3191 = vadd.f32 %v2385, %v3190
      %v3192 = vpop.f32.mrb[0].mxu0
      %v3193 = vpop.f32.mrb[0].mxu0
      %v3194 = vadd.f32 %v2385, %v3193
      %v3195 = vpop.f32.mrb[0].mxu0
      %3196 = vmatprep.mubr.bf16.mxu0 %v3140
      %3197 = vmatmul.mubr.bf16.gmra.mrb[0].mxu0 %v3074
      %v3198 = vpop.f32.mrb[0].mxu0
      %v3199 = vadd.f32 %v2385, %v3198
      %v3200 = vpop.f32.mrb[0].mxu0
      %v3201 = vpop.f32.mrb[0].mxu0
      %v3202 = vadd.f32 %v2385, %v3201
      %v3203 = vpop.f32.mrb[0].mxu0
      %3204 = vmatprep.mubr.bf16.mxu0 %v3143
      %3205 = vmatmul.mubr.bf16.gmra.mrb[0].mxu0 %v3076
      %v3206 = vpop.f32.mrb[0].mxu0
      %v3207 = vadd.f32 %v2385, %v3206
      %v3208 = vpop.f32.mrb[0].mxu0
      %v3209 = vpop.f32.mrb[0].mxu0
      %v3210 = vadd.f32 %v2385, %v3209
      %v3211 = vpop.f32.mrb[0].mxu0
      %3212 = vdwg.mxu0
      %v3221 = vcombine.high %v2501, %v2501
      %v3223 = vunpack.c.l.s4 1966171168
      %v3224 = vunpack.c.0.s8 %v3223
      %v3225 = vlaneseq
      %v3226 = vshrl.u32 %v3225, 7
      %v3227 = vsub.s32 %v3224, %v3226
      %v3228 = vrot.slane %v2501, %v3227
      %v3230 = vunpack.c.l.s4 1966171168
      %v3231 = vunpack.c.0.s8 %v3230
      %v3232 = vlaneseq
      %v3233 = vshrl.u32 %v3232, 7
      %v3234 = vsub.s32 %v3231, %v3233
      %v3235 = vrot.slane %v3221, %v3234
      %v3236 = vcombine.high %v3228, %v3228
      %v3237 = vcombine.high %v3235, %v3235
      %v3239 = vunpack.c.l.s4 1966171168
      %v3240 = vunpack.c.0.s8 %v3239
      %v3241 = vlaneseq
      %v3242 = vshrl.u32 %v3241, 7
      %v3243 = vsub.s32 %v3240, %v3242
      %v3244 = vrot.slane %v3228, %v3243
      %v3246 = vunpack.c.l.s4 1966171168
      %v3247 = vunpack.c.0.s8 %v3246
      %v3248 = vlaneseq
      %v3249 = vshrl.u32 %v3248, 7
      %v3250 = vsub.s32 %v3247, %v3249
      %v3251 = vrot.slane %v3235, %v3250
      %v3253 = vunpack.c.l.s4 1966171168
      %v3254 = vunpack.c.0.s8 %v3253
      %v3255 = vlaneseq
      %v3256 = vshrl.u32 %v3255, 7
      %v3257 = vsub.s32 %v3254, %v3256
      %v3258 = vrot.slane %v3236, %v3257
      %v3260 = vunpack.c.l.s4 1966171168
      %v3261 = vunpack.c.0.s8 %v3260
      %v3262 = vlaneseq
      %v3263 = vshrl.u32 %v3262, 7
      %v3264 = vsub.s32 %v3261, %v3263
      %v3265 = vrot.slane %v3237, %v3264
      %v3266 = vcombine.high %v3244, %v3244
      %v3267 = vcombine.high %v3251, %v3251
      %v3268 = vcombine.high %v3258, %v3258
      %v3269 = vcombine.high %v3265, %v3265
      %v3270 = vcombine.high %v2504, %v2504
      %v3272 = vunpack.c.l.s4 1966171168
      %v3273 = vunpack.c.0.s8 %v3272
      %v3274 = vlaneseq
      %v3275 = vshrl.u32 %v3274, 7
      %v3276 = vsub.s32 %v3273, %v3275
      %v3277 = vrot.slane %v2504, %v3276
      %v3279 = vunpack.c.l.s4 1966171168
      %v3280 = vunpack.c.0.s8 %v3279
      %v3281 = vlaneseq
      %v3282 = vshrl.u32 %v3281, 7
      %v3283 = vsub.s32 %v3280, %v3282
      %v3284 = vrot.slane %v3270, %v3283
      %v3285 = vcombine.high %v3277, %v3277
      %v3286 = vcombine.high %v3284, %v3284
      %v3288 = vunpack.c.l.s4 1966171168
      %v3289 = vunpack.c.0.s8 %v3288
      %v3290 = vlaneseq
      %v3291 = vshrl.u32 %v3290, 7
      %v3292 = vsub.s32 %v3289, %v3291
      %v3293 = vrot.slane %v3277, %v3292
      %v3295 = vunpack.c.l.s4 1966171168
      %v3296 = vunpack.c.0.s8 %v3295
      %v3297 = vlaneseq
      %v3298 = vshrl.u32 %v3297, 7
      %v3299 = vsub.s32 %v3296, %v3298
      %v3300 = vrot.slane %v3284, %v3299
      %v3302 = vunpack.c.l.s4 1966171168
      %v3303 = vunpack.c.0.s8 %v3302
      %v3304 = vlaneseq
      %v3305 = vshrl.u32 %v3304, 7
      %v3306 = vsub.s32 %v3303, %v3305
      %v3307 = vrot.slane %v3285, %v3306
      %v3309 = vunpack.c.l.s4 1966171168
      %v3310 = vunpack.c.0.s8 %v3309
      %v3311 = vlaneseq
      %v3312 = vshrl.u32 %v3311, 7
      %v3313 = vsub.s32 %v3310, %v3312
      %v3314 = vrot.slane %v3286, %v3313
      %v3315 = vcombine.high %v3293, %v3293
      %v3316 = vcombine.high %v3300, %v3300
      %v3317 = vcombine.high %v3307, %v3307
      %v3318 = vcombine.high %v3314, %v3314
      %v3319 = vcombine.high %v2509, %v2509
      %v3321 = vunpack.c.l.s4 1966171168
      %v3322 = vunpack.c.0.s8 %v3321
      %v3323 = vlaneseq
      %v3324 = vshrl.u32 %v3323, 7
      %v3325 = vsub.s32 %v3322, %v3324
      %v3326 = vrot.slane %v2509, %v3325
      %v3328 = vunpack.c.l.s4 1966171168
      %v3329 = vunpack.c.0.s8 %v3328
      %v3330 = vlaneseq
      %v3331 = vshrl.u32 %v3330, 7
      %v3332 = vsub.s32 %v3329, %v3331
      %v3333 = vrot.slane %v3319, %v3332
      %v3334 = vcombine.high %v3326, %v3326
      %v3335 = vcombine.high %v3333, %v3333
      %v3337 = vunpack.c.l.s4 1966171168
      %v3338 = vunpack.c.0.s8 %v3337
      %v3339 = vlaneseq
      %v3340 = vshrl.u32 %v3339, 7
      %v3341 = vsub.s32 %v3338, %v3340
      %v3342 = vrot.slane %v3326, %v3341
      %v3344 = vunpack.c.l.s4 1966171168
      %v3345 = vunpack.c.0.s8 %v3344
      %v3346 = vlaneseq
      %v3347 = vshrl.u32 %v3346, 7
      %v3348 = vsub.s32 %v3345, %v3347
      %v3349 = vrot.slane %v3333, %v3348
      %v3351 = vunpack.c.l.s4 1966171168
      %v3352 = vunpack.c.0.s8 %v3351
      %v3353 = vlaneseq
      %v3354 = vshrl.u32 %v3353, 7
      %v3355 = vsub.s32 %v3352, %v3354
      %v3356 = vrot.slane %v3334, %v3355
      %v3358 = vunpack.c.l.s4 1966171168
      %v3359 = vunpack.c.0.s8 %v3358
      %v3360 = vlaneseq
      %v3361 = vshrl.u32 %v3360, 7
      %v3362 = vsub.s32 %v3359, %v3361
      %v3363 = vrot.slane %v3335, %v3362
      %v3364 = vcombine.high %v3342, %v3342
      %v3365 = vcombine.high %v3349, %v3349
      %v3366 = vcombine.high %v3356, %v3356
      %v3367 = vcombine.high %v3363, %v3363
      %v3368 = vcombine.high %v2512, %v2512
      %v3370 = vunpack.c.l.s4 1966171168
      %v3371 = vunpack.c.0.s8 %v3370
      %v3372 = vlaneseq
      %v3373 = vshrl.u32 %v3372, 7
      %v3374 = vsub.s32 %v3371, %v3373
      %v3375 = vrot.slane %v2512, %v3374
      %v3377 = vunpack.c.l.s4 1966171168
      %v3378 = vunpack.c.0.s8 %v3377
      %v3379 = vlaneseq
      %v3380 = vshrl.u32 %v3379, 7
      %v3381 = vsub.s32 %v3378, %v3380
      %v3382 = vrot.slane %v3368, %v3381
      %v3383 = vcombine.high %v3375, %v3375
      %v3384 = vcombine.high %v3382, %v3382
      %v3386 = vunpack.c.l.s4 1966171168
      %v3387 = vunpack.c.0.s8 %v3386
      %v3388 = vlaneseq
      %v3389 = vshrl.u32 %v3388, 7
      %v3390 = vsub.s32 %v3387, %v3389
      %v3391 = vrot.slane %v3375, %v3390
      %v3393 = vunpack.c.l.s4 1966171168
      %v3394 = vunpack.c.0.s8 %v3393
      %v3395 = vlaneseq
      %v3396 = vshrl.u32 %v3395, 7
      %v3397 = vsub.s32 %v3394, %v3396
      %v3398 = vrot.slane %v3382, %v3397
      %v3400 = vunpack.c.l.s4 1966171168
      %v3401 = vunpack.c.0.s8 %v3400
      %v3402 = vlaneseq
      %v3403 = vshrl.u32 %v3402, 7
      %v3404 = vsub.s32 %v3401, %v3403
      %v3405 = vrot.slane %v3383, %v3404
      %v3407 = vunpack.c.l.s4 1966171168
      %v3408 = vunpack.c.0.s8 %v3407
      %v3409 = vlaneseq
      %v3410 = vshrl.u32 %v3409, 7
      %v3411 = vsub.s32 %v3408, %v3410
      %v3412 = vrot.slane %v3384, %v3411
      %v3413 = vcombine.high %v3391, %v3391
      %v3414 = vcombine.high %v3398, %v3398
      %v3415 = vcombine.high %v3405, %v3405
      %v3416 = vcombine.high %v3412, %v3412
      %v3417 = vcombine.high %v2517, %v2517
      %v3419 = vunpack.c.l.s4 1966171168
      %v3420 = vunpack.c.0.s8 %v3419
      %v3421 = vlaneseq
      %v3422 = vshrl.u32 %v3421, 7
      %v3423 = vsub.s32 %v3420, %v3422
      %v3424 = vrot.slane %v2517, %v3423
      %v3426 = vunpack.c.l.s4 1966171168
      %v3427 = vunpack.c.0.s8 %v3426
      %v3428 = vlaneseq
      %v3429 = vshrl.u32 %v3428, 7
      %v3430 = vsub.s32 %v3427, %v3429
      %v3431 = vrot.slane %v3417, %v3430
      %v3432 = vcombine.high %v3424, %v3424
      %v3433 = vcombine.high %v3431, %v3431
      %v3435 = vunpack.c.l.s4 1966171168
      %v3436 = vunpack.c.0.s8 %v3435
      %v3437 = vlaneseq
      %v3438 = vshrl.u32 %v3437, 7
      %v3439 = vsub.s32 %v3436, %v3438
      %v3440 = vrot.slane %v3424, %v3439
      %v3442 = vunpack.c.l.s4 1966171168
      %v3443 = vunpack.c.0.s8 %v3442
      %v3444 = vlaneseq
      %v3445 = vshrl.u32 %v3444, 7
      %v3446 = vsub.s32 %v3443, %v3445
      %v3447 = vrot.slane %v3431, %v3446
      %v3449 = vunpack.c.l.s4 1966171168
      %v3450 = vunpack.c.0.s8 %v3449
      %v3451 = vlaneseq
      %v3452 = vshrl.u32 %v3451, 7
      %v3453 = vsub.s32 %v3450, %v3452
      %v3454 = vrot.slane %v3432, %v3453
      %v3456 = vunpack.c.l.s4 1966171168
      %v3457 = vunpack.c.0.s8 %v3456
      %v3458 = vlaneseq
      %v3459 = vshrl.u32 %v3458, 7
      %v3460 = vsub.s32 %v3457, %v3459
      %v3461 = vrot.slane %v3433, %v3460
      %v3462 = vcombine.high %v3440, %v3440
      %v3463 = vcombine.high %v3447, %v3447
      %v3464 = vcombine.high %v3454, %v3454
      %v3465 = vcombine.high %v3461, %v3461
      %v3466 = vcombine.high %v2520, %v2520
      %v3468 = vunpack.c.l.s4 1966171168
      %v3469 = vunpack.c.0.s8 %v3468
      %v3470 = vlaneseq
      %v3471 = vshrl.u32 %v3470, 7
      %v3472 = vsub.s32 %v3469, %v3471
      %v3473 = vrot.slane %v2520, %v3472
      %v3475 = vunpack.c.l.s4 1966171168
      %v3476 = vunpack.c.0.s8 %v3475
      %v3477 = vlaneseq
      %v3478 = vshrl.u32 %v3477, 7
      %v3479 = vsub.s32 %v3476, %v3478
      %v3480 = vrot.slane %v3466, %v3479
      %v3481 = vcombine.high %v3473, %v3473
      %v3482 = vcombine.high %v3480, %v3480
      %v3484 = vunpack.c.l.s4 1966171168
      %v3485 = vunpack.c.0.s8 %v3484
      %v3486 = vlaneseq
      %v3487 = vshrl.u32 %v3486, 7
      %v3488 = vsub.s32 %v3485, %v3487
      %v3489 = vrot.slane %v3473, %v3488
      %v3491 = vunpack.c.l.s4 1966171168
      %v3492 = vunpack.c.0.s8 %v3491
      %v3493 = vlaneseq
      %v3494 = vshrl.u32 %v3493, 7
      %v3495 = vsub.s32 %v3492, %v3494
      %v3496 = vrot.slane %v3480, %v3495
      %v3498 = vunpack.c.l.s4 1966171168
      %v3499 = vunpack.c.0.s8 %v3498
      %v3500 = vlaneseq
      %v3501 = vshrl.u32 %v3500, 7
      %v3502 = vsub.s32 %v3499, %v3501
      %v3503 = vrot.slane %v3481, %v3502
      %v3505 = vunpack.c.l.s4 1966171168
      %v3506 = vunpack.c.0.s8 %v3505
      %v3507 = vlaneseq
      %v3508 = vshrl.u32 %v3507, 7
      %v3509 = vsub.s32 %v3506, %v3508
      %v3510 = vrot.slane %v3482, %v3509
      %v3511 = vcombine.high %v3489, %v3489
      %v3512 = vcombine.high %v3496, %v3496
      %v3513 = vcombine.high %v3503, %v3503
      %v3514 = vcombine.high %v3510, %v3510
      %v3515 = vcombine.high %v2525, %v2525
      %v3517 = vunpack.c.l.s4 1966171168
      %v3518 = vunpack.c.0.s8 %v3517
      %v3519 = vlaneseq
      %v3520 = vshrl.u32 %v3519, 7
      %v3521 = vsub.s32 %v3518, %v3520
      %v3522 = vrot.slane %v2525, %v3521
      %v3524 = vunpack.c.l.s4 1966171168
      %v3525 = vunpack.c.0.s8 %v3524
      %v3526 = vlaneseq
      %v3527 = vshrl.u32 %v3526, 7
      %v3528 = vsub.s32 %v3525, %v3527
      %v3529 = vrot.slane %v3515, %v3528
      %v3530 = vcombine.high %v3522, %v3522
      %v3531 = vcombine.high %v3529, %v3529
      %v3533 = vunpack.c.l.s4 1966171168
      %v3534 = vunpack.c.0.s8 %v3533
      %v3535 = vlaneseq
      %v3536 = vshrl.u32 %v3535, 7
      %v3537 = vsub.s32 %v3534, %v3536
      %v3538 = vrot.slane %v3522, %v3537
      %v3540 = vunpack.c.l.s4 1966171168
      %v3541 = vunpack.c.0.s8 %v3540
      %v3542 = vlaneseq
      %v3543 = vshrl.u32 %v3542, 7
      %v3544 = vsub.s32 %v3541, %v3543
      %v3545 = vrot.slane %v3529, %v3544
      %v3547 = vunpack.c.l.s4 1966171168
      %v3548 = vunpack.c.0.s8 %v3547
      %v3549 = vlaneseq
      %v3550 = vshrl.u32 %v3549, 7
      %v3551 = vsub.s32 %v3548, %v3550
      %v3552 = vrot.slane %v3530, %v3551
      %v3554 = vunpack.c.l.s4 1966171168
      %v3555 = vunpack.c.0.s8 %v3554
      %v3556 = vlaneseq
      %v3557 = vshrl.u32 %v3556, 7
      %v3558 = vsub.s32 %v3555, %v3557
      %v3559 = vrot.slane %v3531, %v3558
      %v3560 = vcombine.high %v3538, %v3538
      %v3561 = vcombine.high %v3545, %v3545
      %v3562 = vcombine.high %v3552, %v3552
      %v3563 = vcombine.high %v3559, %v3559
      %v3564 = vcombine.high %v2528, %v2528
      %v3566 = vunpack.c.l.s4 1966171168
      %v3567 = vunpack.c.0.s8 %v3566
      %v3568 = vlaneseq
      %v3569 = vshrl.u32 %v3568, 7
      %v3570 = vsub.s32 %v3567, %v3569
      %v3571 = vrot.slane %v2528, %v3570
      %v3573 = vunpack.c.l.s4 1966171168
      %v3574 = vunpack.c.0.s8 %v3573
      %v3575 = vlaneseq
      %v3576 = vshrl.u32 %v3575, 7
      %v3577 = vsub.s32 %v3574, %v3576
      %v3578 = vrot.slane %v3564, %v3577
      %v3579 = vcombine.high %v3571, %v3571
      %v3580 = vcombine.high %v3578, %v3578
      %v3582 = vunpack.c.l.s4 1966171168
      %v3583 = vunpack.c.0.s8 %v3582
      %v3584 = vlaneseq
      %v3585 = vshrl.u32 %v3584, 7
      %v3586 = vsub.s32 %v3583, %v3585
      %v3587 = vrot.slane %v3571, %v3586
      %v3589 = vunpack.c.l.s4 1966171168
      %v3590 = vunpack.c.0.s8 %v3589
      %v3591 = vlaneseq
      %v3592 = vshrl.u32 %v3591, 7
      %v3593 = vsub.s32 %v3590, %v3592
      %v3594 = vrot.slane %v3578, %v3593
      %v3596 = vunpack.c.l.s4 1966171168
      %v3597 = vunpack.c.0.s8 %v3596
      %v3598 = vlaneseq
      %v3599 = vshrl.u32 %v3598, 7
      %v3600 = vsub.s32 %v3597, %v3599
      %v3601 = vrot.slane %v3579, %v3600
      %v3603 = vunpack.c.l.s4 1966171168
      %v3604 = vunpack.c.0.s8 %v3603
      %v3605 = vlaneseq
      %v3606 = vshrl.u32 %v3605, 7
      %v3607 = vsub.s32 %v3604, %v3606
      %v3608 = vrot.slane %v3580, %v3607
      %v3609 = vcombine.high %v3587, %v3587
      %v3610 = vcombine.high %v3594, %v3594
      %v3611 = vcombine.high %v3601, %v3601
      %v3612 = vcombine.high %v3608, %v3608
      %v3685 = vcombine.high %v2825, %v2825
      %v3687 = vunpack.c.l.s4 1966171168
      %v3688 = vunpack.c.0.s8 %v3687
      %v3689 = vlaneseq
      %v3690 = vshrl.u32 %v3689, 7
      %v3691 = vsub.s32 %v3688, %v3690
      %v3692 = vrot.slane %v2825, %v3691
      %v3694 = vunpack.c.l.s4 1966171168
      %v3695 = vunpack.c.0.s8 %v3694
      %v3696 = vlaneseq
      %v3697 = vshrl.u32 %v3696, 7
      %v3698 = vsub.s32 %v3695, %v3697
      %v3699 = vrot.slane %v3685, %v3698
      %v3700 = vcombine.high %v3692, %v3692
      %v3701 = vcombine.high %v3699, %v3699
      %v3703 = vunpack.c.l.s4 1966171168
      %v3704 = vunpack.c.0.s8 %v3703
      %v3705 = vlaneseq
      %v3706 = vshrl.u32 %v3705, 7
      %v3707 = vsub.s32 %v3704, %v3706
      %v3708 = vrot.slane %v3692, %v3707
      %v3710 = vunpack.c.l.s4 1966171168
      %v3711 = vunpack.c.0.s8 %v3710
      %v3712 = vlaneseq
      %v3713 = vshrl.u32 %v3712, 7
      %v3714 = vsub.s32 %v3711, %v3713
      %v3715 = vrot.slane %v3699, %v3714
      %v3717 = vunpack.c.l.s4 1966171168
      %v3718 = vunpack.c.0.s8 %v3717
      %v3719 = vlaneseq
      %v3720 = vshrl.u32 %v3719, 7
      %v3721 = vsub.s32 %v3718, %v3720
      %v3722 = vrot.slane %v3700, %v3721
      %v3724 = vunpack.c.l.s4 1966171168
      %v3725 = vunpack.c.0.s8 %v3724
      %v3726 = vlaneseq
      %v3727 = vshrl.u32 %v3726, 7
      %v3728 = vsub.s32 %v3725, %v3727
      %v3729 = vrot.slane %v3701, %v3728
      %v3730 = vcombine.high %v3708, %v3708
      %v3731 = vcombine.high %v3715, %v3715
      %v3732 = vcombine.high %v3722, %v3722
      %v3733 = vcombine.high %v3729, %v3729
      %v3734 = vcombine.high %v2828, %v2828
      %v3736 = vunpack.c.l.s4 1966171168
      %v3737 = vunpack.c.0.s8 %v3736
      %v3738 = vlaneseq
      %v3739 = vshrl.u32 %v3738, 7
      %v3740 = vsub.s32 %v3737, %v3739
      %v3741 = vrot.slane %v2828, %v3740
      %v3743 = vunpack.c.l.s4 1966171168
      %v3744 = vunpack.c.0.s8 %v3743
      %v3745 = vlaneseq
      %v3746 = vshrl.u32 %v3745, 7
      %v3747 = vsub.s32 %v3744, %v3746
      %v3748 = vrot.slane %v3734, %v3747
      %v3749 = vcombine.high %v3741, %v3741
      %v3750 = vcombine.high %v3748, %v3748
      %v3752 = vunpack.c.l.s4 1966171168
      %v3753 = vunpack.c.0.s8 %v3752
      %v3754 = vlaneseq
      %v3755 = vshrl.u32 %v3754, 7
      %v3756 = vsub.s32 %v3753, %v3755
      %v3757 = vrot.slane %v3741, %v3756
      %v3759 = vunpack.c.l.s4 1966171168
      %v3760 = vunpack.c.0.s8 %v3759
      %v3761 = vlaneseq
      %v3762 = vshrl.u32 %v3761, 7
      %v3763 = vsub.s32 %v3760, %v3762
      %v3764 = vrot.slane %v3748, %v3763
      %v3766 = vunpack.c.l.s4 1966171168
      %v3767 = vunpack.c.0.s8 %v3766
      %v3768 = vlaneseq
      %v3769 = vshrl.u32 %v3768, 7
      %v3770 = vsub.s32 %v3767, %v3769
      %v3771 = vrot.slane %v3749, %v3770
      %v3773 = vunpack.c.l.s4 1966171168
      %v3774 = vunpack.c.0.s8 %v3773
      %v3775 = vlaneseq
      %v3776 = vshrl.u32 %v3775, 7
      %v3777 = vsub.s32 %v3774, %v3776
      %v3778 = vrot.slane %v3750, %v3777
      %v3779 = vcombine.high %v3757, %v3757
      %v3780 = vcombine.high %v3764, %v3764
      %v3781 = vcombine.high %v3771, %v3771
      %v3782 = vcombine.high %v3778, %v3778
      %v3783 = vcombine.high %v2833, %v2833
      %v3785 = vunpack.c.l.s4 1966171168
      %v3786 = vunpack.c.0.s8 %v3785
      %v3787 = vlaneseq
      %v3788 = vshrl.u32 %v3787, 7
      %v3789 = vsub.s32 %v3786, %v3788
      %v3790 = vrot.slane %v2833, %v3789
      %v3792 = vunpack.c.l.s4 1966171168
      %v3793 = vunpack.c.0.s8 %v3792
      %v3794 = vlaneseq
      %v3795 = vshrl.u32 %v3794, 7
      %v3796 = vsub.s32 %v3793, %v3795
      %v3797 = vrot.slane %v3783, %v3796
      %v3798 = vcombine.high %v3790, %v3790
      %v3799 = vcombine.high %v3797, %v3797
      %v3801 = vunpack.c.l.s4 1966171168
      %v3802 = vunpack.c.0.s8 %v3801
      %v3803 = vlaneseq
      %v3804 = vshrl.u32 %v3803, 7
      %v3805 = vsub.s32 %v3802, %v3804
      %v3806 = vrot.slane %v3790, %v3805
      %v3808 = vunpack.c.l.s4 1966171168
      %v3809 = vunpack.c.0.s8 %v3808
      %v3810 = vlaneseq
      %v3811 = vshrl.u32 %v3810, 7
      %v3812 = vsub.s32 %v3809, %v3811
      %v3813 = vrot.slane %v3797, %v3812
      %v3815 = vunpack.c.l.s4 1966171168
      %v3816 = vunpack.c.0.s8 %v3815
      %v3817 = vlaneseq
      %v3818 = vshrl.u32 %v3817, 7
      %v3819 = vsub.s32 %v3816, %v3818
      %v3820 = vrot.slane %v3798, %v3819
      %v3822 = vunpack.c.l.s4 1966171168
      %v3823 = vunpack.c.0.s8 %v3822
      %v3824 = vlaneseq
      %v3825 = vshrl.u32 %v3824, 7
      %v3826 = vsub.s32 %v3823, %v3825
      %v3827 = vrot.slane %v3799, %v3826
      %v3828 = vcombine.high %v3806, %v3806
      %v3829 = vcombine.high %v3813, %v3813
      %v3830 = vcombine.high %v3820, %v3820
      %v3831 = vcombine.high %v3827, %v3827
      %v3832 = vcombine.high %v2836, %v2836
      %v3834 = vunpack.c.l.s4 1966171168
      %v3835 = vunpack.c.0.s8 %v3834
      %v3836 = vlaneseq
      %v3837 = vshrl.u32 %v3836, 7
      %v3838 = vsub.s32 %v3835, %v3837
      %v3839 = vrot.slane %v2836, %v3838
      %v3841 = vunpack.c.l.s4 1966171168
      %v3842 = vunpack.c.0.s8 %v3841
      %v3843 = vlaneseq
      %v3844 = vshrl.u32 %v3843, 7
      %v3845 = vsub.s32 %v3842, %v3844
      %v3846 = vrot.slane %v3832, %v3845
      %v3847 = vcombine.high %v3839, %v3839
      %v3848 = vcombine.high %v3846, %v3846
      %v3850 = vunpack.c.l.s4 1966171168
      %v3851 = vunpack.c.0.s8 %v3850
      %v3852 = vlaneseq
      %v3853 = vshrl.u32 %v3852, 7
      %v3854 = vsub.s32 %v3851, %v3853
      %v3855 = vrot.slane %v3839, %v3854
      %v3857 = vunpack.c.l.s4 1966171168
      %v3858 = vunpack.c.0.s8 %v3857
      %v3859 = vlaneseq
      %v3860 = vshrl.u32 %v3859, 7
      %v3861 = vsub.s32 %v3858, %v3860
      %v3862 = vrot.slane %v3846, %v3861
      %v3864 = vunpack.c.l.s4 1966171168
      %v3865 = vunpack.c.0.s8 %v3864
      %v3866 = vlaneseq
      %v3867 = vshrl.u32 %v3866, 7
      %v3868 = vsub.s32 %v3865, %v3867
      %v3869 = vrot.slane %v3847, %v3868
      %v3871 = vunpack.c.l.s4 1966171168
      %v3872 = vunpack.c.0.s8 %v3871
      %v3873 = vlaneseq
      %v3874 = vshrl.u32 %v3873, 7
      %v3875 = vsub.s32 %v3872, %v3874
      %v3876 = vrot.slane %v3848, %v3875
      %v3877 = vcombine.high %v3855, %v3855
      %v3878 = vcombine.high %v3862, %v3862
      %v3879 = vcombine.high %v3869, %v3869
      %v3880 = vcombine.high %v3876, %v3876
      %v3881 = vcombine.high %v2841, %v2841
      %v3883 = vunpack.c.l.s4 1966171168
      %v3884 = vunpack.c.0.s8 %v3883
      %v3885 = vlaneseq
      %v3886 = vshrl.u32 %v3885, 7
      %v3887 = vsub.s32 %v3884, %v3886
      %v3888 = vrot.slane %v2841, %v3887
      %v3890 = vunpack.c.l.s4 1966171168
      %v3891 = vunpack.c.0.s8 %v3890
      %v3892 = vlaneseq
      %v3893 = vshrl.u32 %v3892, 7
      %v3894 = vsub.s32 %v3891, %v3893
      %v3895 = vrot.slane %v3881, %v3894
      %v3896 = vcombine.high %v3888, %v3888
      %v3897 = vcombine.high %v3895, %v3895
      %v3899 = vunpack.c.l.s4 1966171168
      %v3900 = vunpack.c.0.s8 %v3899
      %v3901 = vlaneseq
      %v3902 = vshrl.u32 %v3901, 7
      %v3903 = vsub.s32 %v3900, %v3902
      %v3904 = vrot.slane %v3888, %v3903
      %v3906 = vunpack.c.l.s4 1966171168
      %v3907 = vunpack.c.0.s8 %v3906
      %v3908 = vlaneseq
      %v3909 = vshrl.u32 %v3908, 7
      %v3910 = vsub.s32 %v3907, %v3909
      %v3911 = vrot.slane %v3895, %v3910
      %v3913 = vunpack.c.l.s4 1966171168
      %v3914 = vunpack.c.0.s8 %v3913
      %v3915 = vlaneseq
      %v3916 = vshrl.u32 %v3915, 7
      %v3917 = vsub.s32 %v3914, %v3916
      %v3918 = vrot.slane %v3896, %v3917
      %v3920 = vunpack.c.l.s4 1966171168
      %v3921 = vunpack.c.0.s8 %v3920
      %v3922 = vlaneseq
      %v3923 = vshrl.u32 %v3922, 7
      %v3924 = vsub.s32 %v3921, %v3923
      %v3925 = vrot.slane %v3897, %v3924
      %v3926 = vcombine.high %v3904, %v3904
      %v3927 = vcombine.high %v3911, %v3911
      %v3928 = vcombine.high %v3918, %v3918
      %v3929 = vcombine.high %v3925, %v3925
      %v3930 = vcombine.high %v2844, %v2844
      %v3932 = vunpack.c.l.s4 1966171168
      %v3933 = vunpack.c.0.s8 %v3932
      %v3934 = vlaneseq
      %v3935 = vshrl.u32 %v3934, 7
      %v3936 = vsub.s32 %v3933, %v3935
      %v3937 = vrot.slane %v2844, %v3936
      %v3939 = vunpack.c.l.s4 1966171168
      %v3940 = vunpack.c.0.s8 %v3939
      %v3941 = vlaneseq
      %v3942 = vshrl.u32 %v3941, 7
      %v3943 = vsub.s32 %v3940, %v3942
      %v3944 = vrot.slane %v3930, %v3943
      %v3945 = vcombine.high %v3937, %v3937
      %v3946 = vcombine.high %v3944, %v3944
      %v3948 = vunpack.c.l.s4 1966171168
      %v3949 = vunpack.c.0.s8 %v3948
      %v3950 = vlaneseq
      %v3951 = vshrl.u32 %v3950, 7
      %v3952 = vsub.s32 %v3949, %v3951
      %v3953 = vrot.slane %v3937, %v3952
      %v3955 = vunpack.c.l.s4 1966171168
      %v3956 = vunpack.c.0.s8 %v3955
      %v3957 = vlaneseq
      %v3958 = vshrl.u32 %v3957, 7
      %v3959 = vsub.s32 %v3956, %v3958
      %v3960 = vrot.slane %v3944, %v3959
      %v3962 = vunpack.c.l.s4 1966171168
      %v3963 = vunpack.c.0.s8 %v3962
      %v3964 = vlaneseq
      %v3965 = vshrl.u32 %v3964, 7
      %v3966 = vsub.s32 %v3963, %v3965
      %v3967 = vrot.slane %v3945, %v3966
      %v3969 = vunpack.c.l.s4 1966171168
      %v3970 = vunpack.c.0.s8 %v3969
      %v3971 = vlaneseq
      %v3972 = vshrl.u32 %v3971, 7
      %v3973 = vsub.s32 %v3970, %v3972
      %v3974 = vrot.slane %v3946, %v3973
      %v3975 = vcombine.high %v3953, %v3953
      %v3976 = vcombine.high %v3960, %v3960
      %v3977 = vcombine.high %v3967, %v3967
      %v3978 = vcombine.high %v3974, %v3974
      %v3979 = vcombine.high %v2849, %v2849
      %v3981 = vunpack.c.l.s4 1966171168
      %v3982 = vunpack.c.0.s8 %v3981
      %v3983 = vlaneseq
      %v3984 = vshrl.u32 %v3983, 7
      %v3985 = vsub.s32 %v3982, %v3984
      %v3986 = vrot.slane %v2849, %v3985
      %v3988 = vunpack.c.l.s4 1966171168
      %v3989 = vunpack.c.0.s8 %v3988
      %v3990 = vlaneseq
      %v3991 = vshrl.u32 %v3990, 7
      %v3992 = vsub.s32 %v3989, %v3991
      %v3993 = vrot.slane %v3979, %v3992
      %v3994 = vcombine.high %v3986, %v3986
      %v3995 = vcombine.high %v3993, %v3993
      %v3997 = vunpack.c.l.s4 1966171168
      %v3998 = vunpack.c.0.s8 %v3997
      %v3999 = vlaneseq
      %v4000 = vshrl.u32 %v3999, 7
      %v4001 = vsub.s32 %v3998, %v4000
      %v4002 = vrot.slane %v3986, %v4001
      %v4004 = vunpack.c.l.s4 1966171168
      %v4005 = vunpack.c.0.s8 %v4004
      %v4006 = vlaneseq
      %v4007 = vshrl.u32 %v4006, 7
      %v4008 = vsub.s32 %v4005, %v4007
      %v4009 = vrot.slane %v3993, %v4008
      %v4011 = vunpack.c.l.s4 1966171168
      %v4012 = vunpack.c.0.s8 %v4011
      %v4013 = vlaneseq
      %v4014 = vshrl.u32 %v4013, 7
      %v4015 = vsub.s32 %v4012, %v4014
      %v4016 = vrot.slane %v3994, %v4015
      %v4018 = vunpack.c.l.s4 1966171168
      %v4019 = vunpack.c.0.s8 %v4018
      %v4020 = vlaneseq
      %v4021 = vshrl.u32 %v4020, 7
      %v4022 = vsub.s32 %v4019, %v4021
      %v4023 = vrot.slane %v3995, %v4022
      %v4024 = vcombine.high %v4002, %v4002
      %v4025 = vcombine.high %v4009, %v4009
      %v4026 = vcombine.high %v4016, %v4016
      %v4027 = vcombine.high %v4023, %v4023
      %v4028 = vcombine.high %v2852, %v2852
      %v4030 = vunpack.c.l.s4 1966171168
      %v4031 = vunpack.c.0.s8 %v4030
      %v4032 = vlaneseq
      %v4033 = vshrl.u32 %v4032, 7
      %v4034 = vsub.s32 %v4031, %v4033
      %v4035 = vrot.slane %v2852, %v4034
      %v4037 = vunpack.c.l.s4 1966171168
      %v4038 = vunpack.c.0.s8 %v4037
      %v4039 = vlaneseq
      %v4040 = vshrl.u32 %v4039, 7
      %v4041 = vsub.s32 %v4038, %v4040
      %v4042 = vrot.slane %v4028, %v4041
      %v4043 = vcombine.high %v4035, %v4035
      %v4044 = vcombine.high %v4042, %v4042
      %v4046 = vunpack.c.l.s4 1966171168
      %v4047 = vunpack.c.0.s8 %v4046
      %v4048 = vlaneseq
      %v4049 = vshrl.u32 %v4048, 7
      %v4050 = vsub.s32 %v4047, %v4049
      %v4051 = vrot.slane %v4035, %v4050
      %v4053 = vunpack.c.l.s4 1966171168
      %v4054 = vunpack.c.0.s8 %v4053
      %v4055 = vlaneseq
      %v4056 = vshrl.u32 %v4055, 7
      %v4057 = vsub.s32 %v4054, %v4056
      %v4058 = vrot.slane %v4042, %v4057
      %v4060 = vunpack.c.l.s4 1966171168
      %v4061 = vunpack.c.0.s8 %v4060
      %v4062 = vlaneseq
      %v4063 = vshrl.u32 %v4062, 7
      %v4064 = vsub.s32 %v4061, %v4063
      %v4065 = vrot.slane %v4043, %v4064
      %v4067 = vunpack.c.l.s4 1966171168
      %v4068 = vunpack.c.0.s8 %v4067
      %v4069 = vlaneseq
      %v4070 = vshrl.u32 %v4069, 7
      %v4071 = vsub.s32 %v4068, %v4070
      %v4072 = vrot.slane %v4044, %v4071
      %v4073 = vcombine.high %v4051, %v4051
      %v4074 = vcombine.high %v4058, %v4058
      %v4075 = vcombine.high %v4065, %v4065
      %v4076 = vcombine.high %v4072, %v4072
      %v4077 = vlaneseq
      %v4078 = vshrl.u32 %v4077, 7
      %v4079 = vsub.s32 0, %v4078
      %v4080 = vrot.slane %v3708, %v4079
      %v4081 = vlaneseq
      %v4082 = vshrl.u32 %v4081, 7
      %v4083 = vsub.s32 0, %v4082
      %v4084 = vrot.slane %v3722, %v4083
      %v4085 = vlaneseq
      %v4086 = vshrl.u32 %v4085, 7
      %v4087 = vsub.s32 0, %v4086
      %v4088 = vrot.slane %v3730, %v4087
      %v4089 = vlaneseq
      %v4090 = vshrl.u32 %v4089, 7
      %v4091 = vsub.s32 0, %v4090
      %v4092 = vrot.slane %v3732, %v4091
      %v4093 = vlaneseq
      %v4094 = vshrl.u32 %v4093, 7
      %v4095 = vsub.s32 0, %v4094
      %v4096 = vrot.slane %v3715, %v4095
      %v4097 = vlaneseq
      %v4098 = vshrl.u32 %v4097, 7
      %v4099 = vsub.s32 0, %v4098
      %v4100 = vrot.slane %v3729, %v4099
      %v4101 = vlaneseq
      %v4102 = vshrl.u32 %v4101, 7
      %v4103 = vsub.s32 0, %v4102
      %v4104 = vrot.slane %v3731, %v4103
      %v4105 = vlaneseq
      %v4106 = vshrl.u32 %v4105, 7
      %v4107 = vsub.s32 0, %v4106
      %v4108 = vrot.slane %v3733, %v4107
      %v4109 = vlaneseq
      %v4110 = vshrl.u32 %v4109, 7
      %v4111 = vsub.s32 0, %v4110
      %v4112 = vrot.slane %v3757, %v4111
      %v4113 = vlaneseq
      %v4114 = vshrl.u32 %v4113, 7
      %v4115 = vsub.s32 0, %v4114
      %v4116 = vrot.slane %v3771, %v4115
      %v4117 = vlaneseq
      %v4118 = vshrl.u32 %v4117, 7
      %v4119 = vsub.s32 0, %v4118
      %v4120 = vrot.slane %v3779, %v4119
      %v4121 = vlaneseq
      %v4122 = vshrl.u32 %v4121, 7
      %v4123 = vsub.s32 0, %v4122
      %v4124 = vrot.slane %v3781, %v4123
      %v4125 = vlaneseq
      %v4126 = vshrl.u32 %v4125, 7
      %v4127 = vsub.s32 0, %v4126
      %v4128 = vrot.slane %v3764, %v4127
      %v4129 = vlaneseq
      %v4130 = vshrl.u32 %v4129, 7
      %v4131 = vsub.s32 0, %v4130
      %v4132 = vrot.slane %v3778, %v4131
      %v4133 = vlaneseq
      %v4134 = vshrl.u32 %v4133, 7
      %v4135 = vsub.s32 0, %v4134
      %v4136 = vrot.slane %v3780, %v4135
      %v4137 = vlaneseq
      %v4138 = vshrl.u32 %v4137, 7
      %v4139 = vsub.s32 0, %v4138
      %v4140 = vrot.slane %v3782, %v4139
      %v4141 = vlaneseq
      %v4142 = vshrl.u32 %v4141, 7
      %v4143 = vsub.s32 0, %v4142
      %v4144 = vrot.slane %v3806, %v4143
      %v4145 = vlaneseq
      %v4146 = vshrl.u32 %v4145, 7
      %v4147 = vsub.s32 0, %v4146
      %v4148 = vrot.slane %v3820, %v4147
      %v4149 = vlaneseq
      %v4150 = vshrl.u32 %v4149, 7
      %v4151 = vsub.s32 0, %v4150
      %v4152 = vrot.slane %v3828, %v4151
      %v4153 = vlaneseq
      %v4154 = vshrl.u32 %v4153, 7
      %v4155 = vsub.s32 0, %v4154
      %v4156 = vrot.slane %v3830, %v4155
      %v4157 = vlaneseq
      %v4158 = vshrl.u32 %v4157, 7
      %v4159 = vsub.s32 0, %v4158
      %v4160 = vrot.slane %v3813, %v4159
      %v4161 = vlaneseq
      %v4162 = vshrl.u32 %v4161, 7
      %v4163 = vsub.s32 0, %v4162
      %v4164 = vrot.slane %v3827, %v4163
      %v4165 = vlaneseq
      %v4166 = vshrl.u32 %v4165, 7
      %v4167 = vsub.s32 0, %v4166
      %v4168 = vrot.slane %v3829, %v4167
      %v4169 = vlaneseq
      %v4170 = vshrl.u32 %v4169, 7
      %v4171 = vsub.s32 0, %v4170
      %v4172 = vrot.slane %v3831, %v4171
      %v4173 = vlaneseq
      %v4174 = vshrl.u32 %v4173, 7
      %v4175 = vsub.s32 0, %v4174
      %v4176 = vrot.slane %v3855, %v4175
      %v4177 = vlaneseq
      %v4178 = vshrl.u32 %v4177, 7
      %v4179 = vsub.s32 0, %v4178
      %v4180 = vrot.slane %v3869, %v4179
      %v4181 = vlaneseq
      %v4182 = vshrl.u32 %v4181, 7
      %v4183 = vsub.s32 0, %v4182
      %v4184 = vrot.slane %v3877, %v4183
      %v4185 = vlaneseq
      %v4186 = vshrl.u32 %v4185, 7
      %v4187 = vsub.s32 0, %v4186
      %v4188 = vrot.slane %v3879, %v4187
      %v4189 = vlaneseq
      %v4190 = vshrl.u32 %v4189, 7
      %v4191 = vsub.s32 0, %v4190
      %v4192 = vrot.slane %v3862, %v4191
      %v4193 = vlaneseq
      %v4194 = vshrl.u32 %v4193, 7
      %v4195 = vsub.s32 0, %v4194
      %v4196 = vrot.slane %v3876, %v4195
      %v4197 = vlaneseq
      %v4198 = vshrl.u32 %v4197, 7
      %v4199 = vsub.s32 0, %v4198
      %v4200 = vrot.slane %v3878, %v4199
      %v4201 = vlaneseq
      %v4202 = vshrl.u32 %v4201, 7
      %v4203 = vsub.s32 0, %v4202
      %v4204 = vrot.slane %v3880, %v4203
      %v4205 = vlaneseq
      %v4206 = vshrl.u32 %v4205, 7
      %v4207 = vsub.s32 0, %v4206
      %v4208 = vrot.slane %v3904, %v4207
      %v4209 = vlaneseq
      %v4210 = vshrl.u32 %v4209, 7
      %v4211 = vsub.s32 0, %v4210
      %v4212 = vrot.slane %v3918, %v4211
      %v4213 = vlaneseq
      %v4214 = vshrl.u32 %v4213, 7
      %v4215 = vsub.s32 0, %v4214
      %v4216 = vrot.slane %v3926, %v4215
      %v4217 = vlaneseq
      %v4218 = vshrl.u32 %v4217, 7
      %v4219 = vsub.s32 0, %v4218
      %v4220 = vrot.slane %v3928, %v4219
      %v4221 = vlaneseq
      %v4222 = vshrl.u32 %v4221, 7
      %v4223 = vsub.s32 0, %v4222
      %v4224 = vrot.slane %v3911, %v4223
      %v4225 = vlaneseq
      %v4226 = vshrl.u32 %v4225, 7
      %v4227 = vsub.s32 0, %v4226
      %v4228 = vrot.slane %v3925, %v4227
      %v4229 = vlaneseq
      %v4230 = vshrl.u32 %v4229, 7
      %v4231 = vsub.s32 0, %v4230
      %v4232 = vrot.slane %v3927, %v4231
      %v4233 = vlaneseq
      %v4234 = vshrl.u32 %v4233, 7
      %v4235 = vsub.s32 0, %v4234
      %v4236 = vrot.slane %v3929, %v4235
      %v4237 = vlaneseq
      %v4238 = vshrl.u32 %v4237, 7
      %v4239 = vsub.s32 0, %v4238
      %v4240 = vrot.slane %v3953, %v4239
      %v4241 = vlaneseq
      %v4242 = vshrl.u32 %v4241, 7
      %v4243 = vsub.s32 0, %v4242
      %v4244 = vrot.slane %v3967, %v4243
      %v4245 = vlaneseq
      %v4246 = vshrl.u32 %v4245, 7
      %v4247 = vsub.s32 0, %v4246
      %v4248 = vrot.slane %v3975, %v4247
      %v4249 = vlaneseq
      %v4250 = vshrl.u32 %v4249, 7
      %v4251 = vsub.s32 0, %v4250
      %v4252 = vrot.slane %v3977, %v4251
      %v4253 = vlaneseq
      %v4254 = vshrl.u32 %v4253, 7
      %v4255 = vsub.s32 0, %v4254
      %v4256 = vrot.slane %v3960, %v4255
      %v4257 = vlaneseq
      %v4258 = vshrl.u32 %v4257, 7
      %v4259 = vsub.s32 0, %v4258
      %v4260 = vrot.slane %v3974, %v4259
      %v4261 = vlaneseq
      %v4262 = vshrl.u32 %v4261, 7
      %v4263 = vsub.s32 0, %v4262
      %v4264 = vrot.slane %v3976, %v4263
      %v4265 = vlaneseq
      %v4266 = vshrl.u32 %v4265, 7
      %v4267 = vsub.s32 0, %v4266
      %v4268 = vrot.slane %v3978, %v4267
      %v4269 = vlaneseq
      %v4270 = vshrl.u32 %v4269, 7
      %v4271 = vsub.s32 0, %v4270
      %v4272 = vrot.slane %v4002, %v4271
      %v4273 = vlaneseq
      %v4274 = vshrl.u32 %v4273, 7
      %v4275 = vsub.s32 0, %v4274
      %v4276 = vrot.slane %v4016, %v4275
      %v4277 = vlaneseq
      %v4278 = vshrl.u32 %v4277, 7
      %v4279 = vsub.s32 0, %v4278
      %v4280 = vrot.slane %v4024, %v4279
      %v4281 = vlaneseq
      %v4282 = vshrl.u32 %v4281, 7
      %v4283 = vsub.s32 0, %v4282
      %v4284 = vrot.slane %v4026, %v4283
      %v4285 = vlaneseq
      %v4286 = vshrl.u32 %v4285, 7
      %v4287 = vsub.s32 0, %v4286
      %v4288 = vrot.slane %v4009, %v4287
      %v4289 = vlaneseq
      %v4290 = vshrl.u32 %v4289, 7
      %v4291 = vsub.s32 0, %v4290
      %v4292 = vrot.slane %v4023, %v4291
      %v4293 = vlaneseq
      %v4294 = vshrl.u32 %v4293, 7
      %v4295 = vsub.s32 0, %v4294
      %v4296 = vrot.slane %v4025, %v4295
      %v4297 = vlaneseq
      %v4298 = vshrl.u32 %v4297, 7
      %v4299 = vsub.s32 0, %v4298
      %v4300 = vrot.slane %v4027, %v4299
      %v4301 = vlaneseq
      %v4302 = vshrl.u32 %v4301, 7
      %v4303 = vsub.s32 0, %v4302
      %v4304 = vrot.slane %v4051, %v4303
      %v4305 = vlaneseq
      %v4306 = vshrl.u32 %v4305, 7
      %v4307 = vsub.s32 0, %v4306
      %v4308 = vrot.slane %v4065, %v4307
      %v4309 = vlaneseq
      %v4310 = vshrl.u32 %v4309, 7
      %v4311 = vsub.s32 0, %v4310
      %v4312 = vrot.slane %v4073, %v4311
      %v4313 = vlaneseq
      %v4314 = vshrl.u32 %v4313, 7
      %v4315 = vsub.s32 0, %v4314
      %v4316 = vrot.slane %v4075, %v4315
      %v4317 = vlaneseq
      %v4318 = vshrl.u32 %v4317, 7
      %v4319 = vsub.s32 0, %v4318
      %v4320 = vrot.slane %v4058, %v4319
      %v4321 = vlaneseq
      %v4322 = vshrl.u32 %v4321, 7
      %v4323 = vsub.s32 0, %v4322
      %v4324 = vrot.slane %v4072, %v4323
      %v4325 = vlaneseq
      %v4326 = vshrl.u32 %v4325, 7
      %v4327 = vsub.s32 0, %v4326
      %v4328 = vrot.slane %v4074, %v4327
      %v4329 = vlaneseq
      %v4330 = vshrl.u32 %v4329, 7
      %v4331 = vsub.s32 0, %v4330
      %v4332 = vrot.slane %v4076, %v4331
      %vm4397 = vcmask 1040384
      %v4398 = vsel %vm4397, %v3244, %v4080
      %v4399 = vsel %vm4397, %v3258, %v4084
      %v4400 = vsel %vm4397, %v3266, %v4088
      %v4401 = vsel %vm4397, %v3268, %v4092
      %v4402 = vsel %vm4397, %v3251, %v4096
      %v4403 = vsel %vm4397, %v3265, %v4100
      %v4404 = vsel %vm4397, %v3267, %v4104
      %v4405 = vsel %vm4397, %v3269, %v4108
      %v4406 = vsel %vm4397, %v3293, %v4112
      %v4407 = vsel %vm4397, %v3307, %v4116
      %v4408 = vsel %vm4397, %v3315, %v4120
      %v4409 = vsel %vm4397, %v3317, %v4124
      %v4410 = vsel %vm4397, %v3300, %v4128
      %v4411 = vsel %vm4397, %v3314, %v4132
      %v4412 = vsel %vm4397, %v3316, %v4136
      %v4413 = vsel %vm4397, %v3318, %v4140
      %v4414 = vsel %vm4397, %v3342, %v4144
      %v4415 = vsel %vm4397, %v3356, %v4148
      %v4416 = vsel %vm4397, %v3364, %v4152
      %v4417 = vsel %vm4397, %v3366, %v4156
      %v4418 = vsel %vm4397, %v3349, %v4160
      %v4419 = vsel %vm4397, %v3363, %v4164
      %v4420 = vsel %vm4397, %v3365, %v4168
      %v4421 = vsel %vm4397, %v3367, %v4172
      %v4422 = vsel %vm4397, %v3391, %v4176
      %v4423 = vsel %vm4397, %v3405, %v4180
      %v4424 = vsel %vm4397, %v3413, %v4184
      %v4425 = vsel %vm4397, %v3415, %v4188
      %v4426 = vsel %vm4397, %v3398, %v4192
      %v4427 = vsel %vm4397, %v3412, %v4196
      %v4428 = vsel %vm4397, %v3414, %v4200
      %v4429 = vsel %vm4397, %v3416, %v4204
      %v4430 = vsel %vm4397, %v3440, %v4208
      %v4431 = vsel %vm4397, %v3454, %v4212
      %v4432 = vsel %vm4397, %v3462, %v4216
      %v4433 = vsel %vm4397, %v3464, %v4220
      %v4434 = vsel %vm4397, %v3447, %v4224
      %v4435 = vsel %vm4397, %v3461, %v4228
      %v4436 = vsel %vm4397, %v3463, %v4232
      %v4437 = vsel %vm4397, %v3465, %v4236
      %v4438 = vsel %vm4397, %v3489, %v4240
      %v4439 = vsel %vm4397, %v3503, %v4244
      %v4440 = vsel %vm4397, %v3511, %v4248
      %v4441 = vsel %vm4397, %v3513, %v4252
      %v4442 = vsel %vm4397, %v3496, %v4256
      %v4443 = vsel %vm4397, %v3510, %v4260
      %v4444 = vsel %vm4397, %v3512, %v4264
      %v4445 = vsel %vm4397, %v3514, %v4268
      %v4446 = vsel %vm4397, %v3538, %v4272
      %v4447 = vsel %vm4397, %v3552, %v4276
      %v4448 = vsel %vm4397, %v3560, %v4280
      %v4449 = vsel %vm4397, %v3562, %v4284
      %v4450 = vsel %vm4397, %v3545, %v4288
      %v4451 = vsel %vm4397, %v3559, %v4292
      %v4452 = vsel %vm4397, %v3561, %v4296
      %v4453 = vsel %vm4397, %v3563, %v4300
      %v4454 = vsel %vm4397, %v3587, %v4304
      %v4455 = vsel %vm4397, %v3601, %v4308
      %v4456 = vsel %vm4397, %v3609, %v4312
      %v4457 = vsel %vm4397, %v3611, %v4316
      %v4458 = vsel %vm4397, %v3594, %v4320
      %v4459 = vsel %vm4397, %v3608, %v4324
      %v4460 = vsel %vm4397, %v3610, %v4328
      %v4461 = vsel %vm4397, %v3612, %v4332
      %v4470 = vcombine.high %v3002, %v3002
      %v4472 = vunpack.c.l.s4 1966171168
      %v4473 = vunpack.c.0.s8 %v4472
      %v4474 = vlaneseq
      %v4475 = vshrl.u32 %v4474, 7
      %v4476 = vsub.s32 %v4473, %v4475
      %v4477 = vrot.slane %v3002, %v4476
      %v4479 = vunpack.c.l.s4 1966171168
      %v4480 = vunpack.c.0.s8 %v4479
      %v4481 = vlaneseq
      %v4482 = vshrl.u32 %v4481, 7
      %v4483 = vsub.s32 %v4480, %v4482
      %v4484 = vrot.slane %v4470, %v4483
      %v4485 = vcombine.high %v4477, %v4477
      %v4486 = vcombine.high %v4484, %v4484
      %v4488 = vunpack.c.l.s4 1966171168
      %v4489 = vunpack.c.0.s8 %v4488
      %v4490 = vlaneseq
      %v4491 = vshrl.u32 %v4490, 7
      %v4492 = vsub.s32 %v4489, %v4491
      %v4493 = vrot.slane %v4477, %v4492
      %v4495 = vunpack.c.l.s4 1966171168
      %v4496 = vunpack.c.0.s8 %v4495
      %v4497 = vlaneseq
      %v4498 = vshrl.u32 %v4497, 7
      %v4499 = vsub.s32 %v4496, %v4498
      %v4500 = vrot.slane %v4484, %v4499
      %v4502 = vunpack.c.l.s4 1966171168
      %v4503 = vunpack.c.0.s8 %v4502
      %v4504 = vlaneseq
      %v4505 = vshrl.u32 %v4504, 7
      %v4506 = vsub.s32 %v4503, %v4505
      %v4507 = vrot.slane %v4485, %v4506
      %v4509 = vunpack.c.l.s4 1966171168
      %v4510 = vunpack.c.0.s8 %v4509
      %v4511 = vlaneseq
      %v4512 = vshrl.u32 %v4511, 7
      %v4513 = vsub.s32 %v4510, %v4512
      %v4514 = vrot.slane %v4486, %v4513
      %v4515 = vcombine.high %v4493, %v4493
      %v4516 = vcombine.high %v4500, %v4500
      %v4517 = vcombine.high %v4507, %v4507
      %v4518 = vcombine.high %v4514, %v4514
      %v4519 = vcombine.high %v3005, %v3005
      %v4521 = vunpack.c.l.s4 1966171168
      %v4522 = vunpack.c.0.s8 %v4521
      %v4523 = vlaneseq
      %v4524 = vshrl.u32 %v4523, 7
      %v4525 = vsub.s32 %v4522, %v4524
      %v4526 = vrot.slane %v3005, %v4525
      %v4528 = vunpack.c.l.s4 1966171168
      %v4529 = vunpack.c.0.s8 %v4528
      %v4530 = vlaneseq
      %v4531 = vshrl.u32 %v4530, 7
      %v4532 = vsub.s32 %v4529, %v4531
      %v4533 = vrot.slane %v4519, %v4532
      %v4534 = vcombine.high %v4526, %v4526
      %v4535 = vcombine.high %v4533, %v4533
      %v4537 = vunpack.c.l.s4 1966171168
      %v4538 = vunpack.c.0.s8 %v4537
      %v4539 = vlaneseq
      %v4540 = vshrl.u32 %v4539, 7
      %v4541 = vsub.s32 %v4538, %v4540
      %v4542 = vrot.slane %v4526, %v4541
      %v4544 = vunpack.c.l.s4 1966171168
      %v4545 = vunpack.c.0.s8 %v4544
      %v4546 = vlaneseq
      %v4547 = vshrl.u32 %v4546, 7
      %v4548 = vsub.s32 %v4545, %v4547
      %v4549 = vrot.slane %v4533, %v4548
      %v4551 = vunpack.c.l.s4 1966171168
      %v4552 = vunpack.c.0.s8 %v4551
      %v4553 = vlaneseq
      %v4554 = vshrl.u32 %v4553, 7
      %v4555 = vsub.s32 %v4552, %v4554
      %v4556 = vrot.slane %v4534, %v4555
      %v4558 = vunpack.c.l.s4 1966171168
      %v4559 = vunpack.c.0.s8 %v4558
      %v4560 = vlaneseq
      %v4561 = vshrl.u32 %v4560, 7
      %v4562 = vsub.s32 %v4559, %v4561
      %v4563 = vrot.slane %v4535, %v4562
      %v4564 = vcombine.high %v4542, %v4542
      %v4565 = vcombine.high %v4549, %v4549
      %v4566 = vcombine.high %v4556, %v4556
      %v4567 = vcombine.high %v4563, %v4563
      %v4568 = vcombine.high %v3010, %v3010
      %v4570 = vunpack.c.l.s4 1966171168
      %v4571 = vunpack.c.0.s8 %v4570
      %v4572 = vlaneseq
      %v4573 = vshrl.u32 %v4572, 7
      %v4574 = vsub.s32 %v4571, %v4573
      %v4575 = vrot.slane %v3010, %v4574
      %v4577 = vunpack.c.l.s4 1966171168
      %v4578 = vunpack.c.0.s8 %v4577
      %v4579 = vlaneseq
      %v4580 = vshrl.u32 %v4579, 7
      %v4581 = vsub.s32 %v4578, %v4580
      %v4582 = vrot.slane %v4568, %v4581
      %v4583 = vcombine.high %v4575, %v4575
      %v4584 = vcombine.high %v4582, %v4582
      %v4586 = vunpack.c.l.s4 1966171168
      %v4587 = vunpack.c.0.s8 %v4586
      %v4588 = vlaneseq
      %v4589 = vshrl.u32 %v4588, 7
      %v4590 = vsub.s32 %v4587, %v4589
      %v4591 = vrot.slane %v4575, %v4590
      %v4593 = vunpack.c.l.s4 1966171168
      %v4594 = vunpack.c.0.s8 %v4593
      %v4595 = vlaneseq
      %v4596 = vshrl.u32 %v4595, 7
      %v4597 = vsub.s32 %v4594, %v4596
      %v4598 = vrot.slane %v4582, %v4597
      %v4600 = vunpack.c.l.s4 1966171168
      %v4601 = vunpack.c.0.s8 %v4600
      %v4602 = vlaneseq
      %v4603 = vshrl.u32 %v4602, 7
      %v4604 = vsub.s32 %v4601, %v4603
      %v4605 = vrot.slane %v4583, %v4604
      %v4607 = vunpack.c.l.s4 1966171168
      %v4608 = vunpack.c.0.s8 %v4607
      %v4609 = vlaneseq
      %v4610 = vshrl.u32 %v4609, 7
      %v4611 = vsub.s32 %v4608, %v4610
      %v4612 = vrot.slane %v4584, %v4611
      %v4613 = vcombine.high %v4591, %v4591
      %v4614 = vcombine.high %v4598, %v4598
      %v4615 = vcombine.high %v4605, %v4605
      %v4616 = vcombine.high %v4612, %v4612
      %v4617 = vcombine.high %v3013, %v3013
      %v4619 = vunpack.c.l.s4 1966171168
      %v4620 = vunpack.c.0.s8 %v4619
      %v4621 = vlaneseq
      %v4622 = vshrl.u32 %v4621, 7
      %v4623 = vsub.s32 %v4620, %v4622
      %v4624 = vrot.slane %v3013, %v4623
      %v4626 = vunpack.c.l.s4 1966171168
      %v4627 = vunpack.c.0.s8 %v4626
      %v4628 = vlaneseq
      %v4629 = vshrl.u32 %v4628, 7
      %v4630 = vsub.s32 %v4627, %v4629
      %v4631 = vrot.slane %v4617, %v4630
      %v4632 = vcombine.high %v4624, %v4624
      %v4633 = vcombine.high %v4631, %v4631
      %v4635 = vunpack.c.l.s4 1966171168
      %v4636 = vunpack.c.0.s8 %v4635
      %v4637 = vlaneseq
      %v4638 = vshrl.u32 %v4637, 7
      %v4639 = vsub.s32 %v4636, %v4638
      %v4640 = vrot.slane %v4624, %v4639
      %v4642 = vunpack.c.l.s4 1966171168
      %v4643 = vunpack.c.0.s8 %v4642
      %v4644 = vlaneseq
      %v4645 = vshrl.u32 %v4644, 7
      %v4646 = vsub.s32 %v4643, %v4645
      %v4647 = vrot.slane %v4631, %v4646
      %v4649 = vunpack.c.l.s4 1966171168
      %v4650 = vunpack.c.0.s8 %v4649
      %v4651 = vlaneseq
      %v4652 = vshrl.u32 %v4651, 7
      %v4653 = vsub.s32 %v4650, %v4652
      %v4654 = vrot.slane %v4632, %v4653
      %v4656 = vunpack.c.l.s4 1966171168
      %v4657 = vunpack.c.0.s8 %v4656
      %v4658 = vlaneseq
      %v4659 = vshrl.u32 %v4658, 7
      %v4660 = vsub.s32 %v4657, %v4659
      %v4661 = vrot.slane %v4633, %v4660
      %v4662 = vcombine.high %v4640, %v4640
      %v4663 = vcombine.high %v4647, %v4647
      %v4664 = vcombine.high %v4654, %v4654
      %v4665 = vcombine.high %v4661, %v4661
      %v4666 = vcombine.high %v3018, %v3018
      %v4668 = vunpack.c.l.s4 1966171168
      %v4669 = vunpack.c.0.s8 %v4668
      %v4670 = vlaneseq
      %v4671 = vshrl.u32 %v4670, 7
      %v4672 = vsub.s32 %v4669, %v4671
      %v4673 = vrot.slane %v3018, %v4672
      %v4675 = vunpack.c.l.s4 1966171168
      %v4676 = vunpack.c.0.s8 %v4675
      %v4677 = vlaneseq
      %v4678 = vshrl.u32 %v4677, 7
      %v4679 = vsub.s32 %v4676, %v4678
      %v4680 = vrot.slane %v4666, %v4679
      %v4681 = vcombine.high %v4673, %v4673
      %v4682 = vcombine.high %v4680, %v4680
      %v4684 = vunpack.c.l.s4 1966171168
      %v4685 = vunpack.c.0.s8 %v4684
      %v4686 = vlaneseq
      %v4687 = vshrl.u32 %v4686, 7
      %v4688 = vsub.s32 %v4685, %v4687
      %v4689 = vrot.slane %v4673, %v4688
      %v4691 = vunpack.c.l.s4 1966171168
      %v4692 = vunpack.c.0.s8 %v4691
      %v4693 = vlaneseq
      %v4694 = vshrl.u32 %v4693, 7
      %v4695 = vsub.s32 %v4692, %v4694
      %v4696 = vrot.slane %v4680, %v4695
      %v4698 = vunpack.c.l.s4 1966171168
      %v4699 = vunpack.c.0.s8 %v4698
      %v4700 = vlaneseq
      %v4701 = vshrl.u32 %v4700, 7
      %v4702 = vsub.s32 %v4699, %v4701
      %v4703 = vrot.slane %v4681, %v4702
      %v4705 = vunpack.c.l.s4 1966171168
      %v4706 = vunpack.c.0.s8 %v4705
      %v4707 = vlaneseq
      %v4708 = vshrl.u32 %v4707, 7
      %v4709 = vsub.s32 %v4706, %v4708
      %v4710 = vrot.slane %v4682, %v4709
      %v4711 = vcombine.high %v4689, %v4689
      %v4712 = vcombine.high %v4696, %v4696
      %v4713 = vcombine.high %v4703, %v4703
      %v4714 = vcombine.high %v4710, %v4710
      %v4715 = vcombine.high %v3021, %v3021
      %v4717 = vunpack.c.l.s4 1966171168
      %v4718 = vunpack.c.0.s8 %v4717
      %v4719 = vlaneseq
      %v4720 = vshrl.u32 %v4719, 7
      %v4721 = vsub.s32 %v4718, %v4720
      %v4722 = vrot.slane %v3021, %v4721
      %v4724 = vunpack.c.l.s4 1966171168
      %v4725 = vunpack.c.0.s8 %v4724
      %v4726 = vlaneseq
      %v4727 = vshrl.u32 %v4726, 7
      %v4728 = vsub.s32 %v4725, %v4727
      %v4729 = vrot.slane %v4715, %v4728
      %v4730 = vcombine.high %v4722, %v4722
      %v4731 = vcombine.high %v4729, %v4729
      %v4733 = vunpack.c.l.s4 1966171168
      %v4734 = vunpack.c.0.s8 %v4733
      %v4735 = vlaneseq
      %v4736 = vshrl.u32 %v4735, 7
      %v4737 = vsub.s32 %v4734, %v4736
      %v4738 = vrot.slane %v4722, %v4737
      %v4740 = vunpack.c.l.s4 1966171168
      %v4741 = vunpack.c.0.s8 %v4740
      %v4742 = vlaneseq
      %v4743 = vshrl.u32 %v4742, 7
      %v4744 = vsub.s32 %v4741, %v4743
      %v4745 = vrot.slane %v4729, %v4744
      %v4747 = vunpack.c.l.s4 1966171168
      %v4748 = vunpack.c.0.s8 %v4747
      %v4749 = vlaneseq
      %v4750 = vshrl.u32 %v4749, 7
      %v4751 = vsub.s32 %v4748, %v4750
      %v4752 = vrot.slane %v4730, %v4751
      %v4754 = vunpack.c.l.s4 1966171168
      %v4755 = vunpack.c.0.s8 %v4754
      %v4756 = vlaneseq
      %v4757 = vshrl.u32 %v4756, 7
      %v4758 = vsub.s32 %v4755, %v4757
      %v4759 = vrot.slane %v4731, %v4758
      %v4760 = vcombine.high %v4738, %v4738
      %v4761 = vcombine.high %v4745, %v4745
      %v4762 = vcombine.high %v4752, %v4752
      %v4763 = vcombine.high %v4759, %v4759
      %v4764 = vcombine.high %v3026, %v3026
      %v4766 = vunpack.c.l.s4 1966171168
      %v4767 = vunpack.c.0.s8 %v4766
      %v4768 = vlaneseq
      %v4769 = vshrl.u32 %v4768, 7
      %v4770 = vsub.s32 %v4767, %v4769
      %v4771 = vrot.slane %v3026, %v4770
      %v4773 = vunpack.c.l.s4 1966171168
      %v4774 = vunpack.c.0.s8 %v4773
      %v4775 = vlaneseq
      %v4776 = vshrl.u32 %v4775, 7
      %v4777 = vsub.s32 %v4774, %v4776
      %v4778 = vrot.slane %v4764, %v4777
      %v4779 = vcombine.high %v4771, %v4771
      %v4780 = vcombine.high %v4778, %v4778
      %v4782 = vunpack.c.l.s4 1966171168
      %v4783 = vunpack.c.0.s8 %v4782
      %v4784 = vlaneseq
      %v4785 = vshrl.u32 %v4784, 7
      %v4786 = vsub.s32 %v4783, %v4785
      %v4787 = vrot.slane %v4771, %v4786
      %v4789 = vunpack.c.l.s4 1966171168
      %v4790 = vunpack.c.0.s8 %v4789
      %v4791 = vlaneseq
      %v4792 = vshrl.u32 %v4791, 7
      %v4793 = vsub.s32 %v4790, %v4792
      %v4794 = vrot.slane %v4778, %v4793
      %v4796 = vunpack.c.l.s4 1966171168
      %v4797 = vunpack.c.0.s8 %v4796
      %v4798 = vlaneseq
      %v4799 = vshrl.u32 %v4798, 7
      %v4800 = vsub.s32 %v4797, %v4799
      %v4801 = vrot.slane %v4779, %v4800
      %v4803 = vunpack.c.l.s4 1966171168
      %v4804 = vunpack.c.0.s8 %v4803
      %v4805 = vlaneseq
      %v4806 = vshrl.u32 %v4805, 7
      %v4807 = vsub.s32 %v4804, %v4806
      %v4808 = vrot.slane %v4780, %v4807
      %v4809 = vcombine.high %v4787, %v4787
      %v4810 = vcombine.high %v4794, %v4794
      %v4811 = vcombine.high %v4801, %v4801
      %v4812 = vcombine.high %v4808, %v4808
      %v4813 = vcombine.high %v3029, %v3029
      %v4815 = vunpack.c.l.s4 1966171168
      %v4816 = vunpack.c.0.s8 %v4815
      %v4817 = vlaneseq
      %v4818 = vshrl.u32 %v4817, 7
      %v4819 = vsub.s32 %v4816, %v4818
      %v4820 = vrot.slane %v3029, %v4819
      %v4822 = vunpack.c.l.s4 1966171168
      %v4823 = vunpack.c.0.s8 %v4822
      %v4824 = vlaneseq
      %v4825 = vshrl.u32 %v4824, 7
      %v4826 = vsub.s32 %v4823, %v4825
      %v4827 = vrot.slane %v4813, %v4826
      %v4828 = vcombine.high %v4820, %v4820
      %v4829 = vcombine.high %v4827, %v4827
      %v4831 = vunpack.c.l.s4 1966171168
      %v4832 = vunpack.c.0.s8 %v4831
      %v4833 = vlaneseq
      %v4834 = vshrl.u32 %v4833, 7
      %v4835 = vsub.s32 %v4832, %v4834
      %v4836 = vrot.slane %v4820, %v4835
      %v4838 = vunpack.c.l.s4 1966171168
      %v4839 = vunpack.c.0.s8 %v4838
      %v4840 = vlaneseq
      %v4841 = vshrl.u32 %v4840, 7
      %v4842 = vsub.s32 %v4839, %v4841
      %v4843 = vrot.slane %v4827, %v4842
      %v4845 = vunpack.c.l.s4 1966171168
      %v4846 = vunpack.c.0.s8 %v4845
      %v4847 = vlaneseq
      %v4848 = vshrl.u32 %v4847, 7
      %v4849 = vsub.s32 %v4846, %v4848
      %v4850 = vrot.slane %v4828, %v4849
      %v4852 = vunpack.c.l.s4 1966171168
      %v4853 = vunpack.c.0.s8 %v4852
      %v4854 = vlaneseq
      %v4855 = vshrl.u32 %v4854, 7
      %v4856 = vsub.s32 %v4853, %v4855
      %v4857 = vrot.slane %v4829, %v4856
      %v4858 = vcombine.high %v4836, %v4836
      %v4859 = vcombine.high %v4843, %v4843
      %v4860 = vcombine.high %v4850, %v4850
      %v4861 = vcombine.high %v4857, %v4857
      %v4934 = vcombine.high %v3183, %v3183
      %v4936 = vunpack.c.l.s4 1966171168
      %v4937 = vunpack.c.0.s8 %v4936
      %v4938 = vlaneseq
      %v4939 = vshrl.u32 %v4938, 7
      %v4940 = vsub.s32 %v4937, %v4939
      %v4941 = vrot.slane %v3183, %v4940
      %v4943 = vunpack.c.l.s4 1966171168
      %v4944 = vunpack.c.0.s8 %v4943
      %v4945 = vlaneseq
      %v4946 = vshrl.u32 %v4945, 7
      %v4947 = vsub.s32 %v4944, %v4946
      %v4948 = vrot.slane %v4934, %v4947
      %v4949 = vcombine.high %v4941, %v4941
      %v4950 = vcombine.high %v4948, %v4948
      %v4952 = vunpack.c.l.s4 1966171168
      %v4953 = vunpack.c.0.s8 %v4952
      %v4954 = vlaneseq
      %v4955 = vshrl.u32 %v4954, 7
      %v4956 = vsub.s32 %v4953, %v4955
      %v4957 = vrot.slane %v4941, %v4956
      %v4959 = vunpack.c.l.s4 1966171168
      %v4960 = vunpack.c.0.s8 %v4959
      %v4961 = vlaneseq
      %v4962 = vshrl.u32 %v4961, 7
      %v4963 = vsub.s32 %v4960, %v4962
      %v4964 = vrot.slane %v4948, %v4963
      %v4966 = vunpack.c.l.s4 1966171168
      %v4967 = vunpack.c.0.s8 %v4966
      %v4968 = vlaneseq
      %v4969 = vshrl.u32 %v4968, 7
      %v4970 = vsub.s32 %v4967, %v4969
      %v4971 = vrot.slane %v4949, %v4970
      %v4973 = vunpack.c.l.s4 1966171168
      %v4974 = vunpack.c.0.s8 %v4973
      %v4975 = vlaneseq
      %v4976 = vshrl.u32 %v4975, 7
      %v4977 = vsub.s32 %v4974, %v4976
      %v4978 = vrot.slane %v4950, %v4977
      %v4979 = vcombine.high %v4957, %v4957
      %v4980 = vcombine.high %v4964, %v4964
      %v4981 = vcombine.high %v4971, %v4971
      %v4982 = vcombine.high %v4978, %v4978
      %v4983 = vcombine.high %v3186, %v3186
      %v4985 = vunpack.c.l.s4 1966171168
      %v4986 = vunpack.c.0.s8 %v4985
      %v4987 = vlaneseq
      %v4988 = vshrl.u32 %v4987, 7
      %v4989 = vsub.s32 %v4986, %v4988
      %v4990 = vrot.slane %v3186, %v4989
      %v4992 = vunpack.c.l.s4 1966171168
      %v4993 = vunpack.c.0.s8 %v4992
      %v4994 = vlaneseq
      %v4995 = vshrl.u32 %v4994, 7
      %v4996 = vsub.s32 %v4993, %v4995
      %v4997 = vrot.slane %v4983, %v4996
      %v4998 = vcombine.high %v4990, %v4990
      %v4999 = vcombine.high %v4997, %v4997
      %v5001 = vunpack.c.l.s4 1966171168
      %v5002 = vunpack.c.0.s8 %v5001
      %v5003 = vlaneseq
      %v5004 = vshrl.u32 %v5003, 7
      %v5005 = vsub.s32 %v5002, %v5004
      %v5006 = vrot.slane %v4990, %v5005
      %v5008 = vunpack.c.l.s4 1966171168
      %v5009 = vunpack.c.0.s8 %v5008
      %v5010 = vlaneseq
      %v5011 = vshrl.u32 %v5010, 7
      %v5012 = vsub.s32 %v5009, %v5011
      %v5013 = vrot.slane %v4997, %v5012
      %v5015 = vunpack.c.l.s4 1966171168
      %v5016 = vunpack.c.0.s8 %v5015
      %v5017 = vlaneseq
      %v5018 = vshrl.u32 %v5017, 7
      %v5019 = vsub.s32 %v5016, %v5018
      %v5020 = vrot.slane %v4998, %v5019
      %v5022 = vunpack.c.l.s4 1966171168
      %v5023 = vunpack.c.0.s8 %v5022
      %v5024 = vlaneseq
      %v5025 = vshrl.u32 %v5024, 7
      %v5026 = vsub.s32 %v5023, %v5025
      %v5027 = vrot.slane %v4999, %v5026
      %v5028 = vcombine.high %v5006, %v5006
      %v5029 = vcombine.high %v5013, %v5013
      %v5030 = vcombine.high %v5020, %v5020
      %v5031 = vcombine.high %v5027, %v5027
      %v5032 = vcombine.high %v3191, %v3191
      %v5034 = vunpack.c.l.s4 1966171168
      %v5035 = vunpack.c.0.s8 %v5034
      %v5036 = vlaneseq
      %v5037 = vshrl.u32 %v5036, 7
      %v5038 = vsub.s32 %v5035, %v5037
      %v5039 = vrot.slane %v3191, %v5038
      %v5041 = vunpack.c.l.s4 1966171168
      %v5042 = vunpack.c.0.s8 %v5041
      %v5043 = vlaneseq
      %v5044 = vshrl.u32 %v5043, 7
      %v5045 = vsub.s32 %v5042, %v5044
      %v5046 = vrot.slane %v5032, %v5045
      %v5047 = vcombine.high %v5039, %v5039
      %v5048 = vcombine.high %v5046, %v5046
      %v5050 = vunpack.c.l.s4 1966171168
      %v5051 = vunpack.c.0.s8 %v5050
      %v5052 = vlaneseq
      %v5053 = vshrl.u32 %v5052, 7
      %v5054 = vsub.s32 %v5051, %v5053
      %v5055 = vrot.slane %v5039, %v5054
      %v5057 = vunpack.c.l.s4 1966171168
      %v5058 = vunpack.c.0.s8 %v5057
      %v5059 = vlaneseq
      %v5060 = vshrl.u32 %v5059, 7
      %v5061 = vsub.s32 %v5058, %v5060
      %v5062 = vrot.slane %v5046, %v5061
      %v5064 = vunpack.c.l.s4 1966171168
      %v5065 = vunpack.c.0.s8 %v5064
      %v5066 = vlaneseq
      %v5067 = vshrl.u32 %v5066, 7
      %v5068 = vsub.s32 %v5065, %v5067
      %v5069 = vrot.slane %v5047, %v5068
      %v5071 = vunpack.c.l.s4 1966171168
      %v5072 = vunpack.c.0.s8 %v5071
      %v5073 = vlaneseq
      %v5074 = vshrl.u32 %v5073, 7
      %v5075 = vsub.s32 %v5072, %v5074
      %v5076 = vrot.slane %v5048, %v5075
      %v5077 = vcombine.high %v5055, %v5055
      %v5078 = vcombine.high %v5062, %v5062
      %v5079 = vcombine.high %v5069, %v5069
      %v5080 = vcombine.high %v5076, %v5076
      %v5081 = vcombine.high %v3194, %v3194
      %v5083 = vunpack.c.l.s4 1966171168
      %v5084 = vunpack.c.0.s8 %v5083
      %v5085 = vlaneseq
      %v5086 = vshrl.u32 %v5085, 7
      %v5087 = vsub.s32 %v5084, %v5086
      %v5088 = vrot.slane %v3194, %v5087
      %v5090 = vunpack.c.l.s4 1966171168
      %v5091 = vunpack.c.0.s8 %v5090
      %v5092 = vlaneseq
      %v5093 = vshrl.u32 %v5092, 7
      %v5094 = vsub.s32 %v5091, %v5093
      %v5095 = vrot.slane %v5081, %v5094
      %v5096 = vcombine.high %v5088, %v5088
      %v5097 = vcombine.high %v5095, %v5095
      %v5099 = vunpack.c.l.s4 1966171168
      %v5100 = vunpack.c.0.s8 %v5099
      %v5101 = vlaneseq
      %v5102 = vshrl.u32 %v5101, 7
      %v5103 = vsub.s32 %v5100, %v5102
      %v5104 = vrot.slane %v5088, %v5103
      %v5106 = vunpack.c.l.s4 1966171168
      %v5107 = vunpack.c.0.s8 %v5106
      %v5108 = vlaneseq
      %v5109 = vshrl.u32 %v5108, 7
      %v5110 = vsub.s32 %v5107, %v5109
      %v5111 = vrot.slane %v5095, %v5110
      %v5113 = vunpack.c.l.s4 1966171168
      %v5114 = vunpack.c.0.s8 %v5113
      %v5115 = vlaneseq
      %v5116 = vshrl.u32 %v5115, 7
      %v5117 = vsub.s32 %v5114, %v5116
      %v5118 = vrot.slane %v5096, %v5117
      %v5120 = vunpack.c.l.s4 1966171168
      %v5121 = vunpack.c.0.s8 %v5120
      %v5122 = vlaneseq
      %v5123 = vshrl.u32 %v5122, 7
      %v5124 = vsub.s32 %v5121, %v5123
      %v5125 = vrot.slane %v5097, %v5124
      %v5126 = vcombine.high %v5104, %v5104
      %v5127 = vcombine.high %v5111, %v5111
      %v5128 = vcombine.high %v5118, %v5118
      %v5129 = vcombine.high %v5125, %v5125
      %v5130 = vcombine.high %v3199, %v3199
      %v5132 = vunpack.c.l.s4 1966171168
      %v5133 = vunpack.c.0.s8 %v5132
      %v5134 = vlaneseq
      %v5135 = vshrl.u32 %v5134, 7
      %v5136 = vsub.s32 %v5133, %v5135
      %v5137 = vrot.slane %v3199, %v5136
      %v5139 = vunpack.c.l.s4 1966171168
      %v5140 = vunpack.c.0.s8 %v5139
      %v5141 = vlaneseq
      %v5142 = vshrl.u32 %v5141, 7
      %v5143 = vsub.s32 %v5140, %v5142
      %v5144 = vrot.slane %v5130, %v5143
      %v5145 = vcombine.high %v5137, %v5137
      %v5146 = vcombine.high %v5144, %v5144
      %v5148 = vunpack.c.l.s4 1966171168
      %v5149 = vunpack.c.0.s8 %v5148
      %v5150 = vlaneseq
      %v5151 = vshrl.u32 %v5150, 7
      %v5152 = vsub.s32 %v5149, %v5151
      %v5153 = vrot.slane %v5137, %v5152
      %v5155 = vunpack.c.l.s4 1966171168
      %v5156 = vunpack.c.0.s8 %v5155
      %v5157 = vlaneseq
      %v5158 = vshrl.u32 %v5157, 7
      %v5159 = vsub.s32 %v5156, %v5158
      %v5160 = vrot.slane %v5144, %v5159
      %v5162 = vunpack.c.l.s4 1966171168
      %v5163 = vunpack.c.0.s8 %v5162
      %v5164 = vlaneseq
      %v5165 = vshrl.u32 %v5164, 7
      %v5166 = vsub.s32 %v5163, %v5165
      %v5167 = vrot.slane %v5145, %v5166
      %v5169 = vunpack.c.l.s4 1966171168
      %v5170 = vunpack.c.0.s8 %v5169
      %v5171 = vlaneseq
      %v5172 = vshrl.u32 %v5171, 7
      %v5173 = vsub.s32 %v5170, %v5172
      %v5174 = vrot.slane %v5146, %v5173
      %v5175 = vcombine.high %v5153, %v5153
      %v5176 = vcombine.high %v5160, %v5160
      %v5177 = vcombine.high %v5167, %v5167
      %v5178 = vcombine.high %v5174, %v5174
      %v5179 = vcombine.high %v3202, %v3202
      %v5181 = vunpack.c.l.s4 1966171168
      %v5182 = vunpack.c.0.s8 %v5181
      %v5183 = vlaneseq
      %v5184 = vshrl.u32 %v5183, 7
      %v5185 = vsub.s32 %v5182, %v5184
      %v5186 = vrot.slane %v3202, %v5185
      %v5188 = vunpack.c.l.s4 1966171168
      %v5189 = vunpack.c.0.s8 %v5188
      %v5190 = vlaneseq
      %v5191 = vshrl.u32 %v5190, 7
      %v5192 = vsub.s32 %v5189, %v5191
      %v5193 = vrot.slane %v5179, %v5192
      %v5194 = vcombine.high %v5186, %v5186
      %v5195 = vcombine.high %v5193, %v5193
      %v5197 = vunpack.c.l.s4 1966171168
      %v5198 = vunpack.c.0.s8 %v5197
      %v5199 = vlaneseq
      %v5200 = vshrl.u32 %v5199, 7
      %v5201 = vsub.s32 %v5198, %v5200
      %v5202 = vrot.slane %v5186, %v5201
      %v5204 = vunpack.c.l.s4 1966171168
      %v5205 = vunpack.c.0.s8 %v5204
      %v5206 = vlaneseq
      %v5207 = vshrl.u32 %v5206, 7
      %v5208 = vsub.s32 %v5205, %v5207
      %v5209 = vrot.slane %v5193, %v5208
      %v5211 = vunpack.c.l.s4 1966171168
      %v5212 = vunpack.c.0.s8 %v5211
      %v5213 = vlaneseq
      %v5214 = vshrl.u32 %v5213, 7
      %v5215 = vsub.s32 %v5212, %v5214
      %v5216 = vrot.slane %v5194, %v5215
      %v5218 = vunpack.c.l.s4 1966171168
      %v5219 = vunpack.c.0.s8 %v5218
      %v5220 = vlaneseq
      %v5221 = vshrl.u32 %v5220, 7
      %v5222 = vsub.s32 %v5219, %v5221
      %v5223 = vrot.slane %v5195, %v5222
      %v5224 = vcombine.high %v5202, %v5202
      %v5225 = vcombine.high %v5209, %v5209
      %v5226 = vcombine.high %v5216, %v5216
      %v5227 = vcombine.high %v5223, %v5223
      %v5228 = vcombine.high %v3207, %v3207
      %v5230 = vunpack.c.l.s4 1966171168
      %v5231 = vunpack.c.0.s8 %v5230
      %v5232 = vlaneseq
      %v5233 = vshrl.u32 %v5232, 7
      %v5234 = vsub.s32 %v5231, %v5233
      %v5235 = vrot.slane %v3207, %v5234
      %v5237 = vunpack.c.l.s4 1966171168
      %v5238 = vunpack.c.0.s8 %v5237
      %v5239 = vlaneseq
      %v5240 = vshrl.u32 %v5239, 7
      %v5241 = vsub.s32 %v5238, %v5240
      %v5242 = vrot.slane %v5228, %v5241
      %v5243 = vcombine.high %v5235, %v5235
      %v5244 = vcombine.high %v5242, %v5242
      %v5246 = vunpack.c.l.s4 1966171168
      %v5247 = vunpack.c.0.s8 %v5246
      %v5248 = vlaneseq
      %v5249 = vshrl.u32 %v5248, 7
      %v5250 = vsub.s32 %v5247, %v5249
      %v5251 = vrot.slane %v5235, %v5250
      %v5253 = vunpack.c.l.s4 1966171168
      %v5254 = vunpack.c.0.s8 %v5253
      %v5255 = vlaneseq
      %v5256 = vshrl.u32 %v5255, 7
      %v5257 = vsub.s32 %v5254, %v5256
      %v5258 = vrot.slane %v5242, %v5257
      %v5260 = vunpack.c.l.s4 1966171168
      %v5261 = vunpack.c.0.s8 %v5260
      %v5262 = vlaneseq
      %v5263 = vshrl.u32 %v5262, 7
      %v5264 = vsub.s32 %v5261, %v5263
      %v5265 = vrot.slane %v5243, %v5264
      %v5267 = vunpack.c.l.s4 1966171168
      %v5268 = vunpack.c.0.s8 %v5267
      %v5269 = vlaneseq
      %v5270 = vshrl.u32 %v5269, 7
      %v5271 = vsub.s32 %v5268, %v5270
      %v5272 = vrot.slane %v5244, %v5271
      %v5273 = vcombine.high %v5251, %v5251
      %v5274 = vcombine.high %v5258, %v5258
      %v5275 = vcombine.high %v5265, %v5265
      %v5276 = vcombine.high %v5272, %v5272
      %v5277 = vcombine.high %v3210, %v3210
      %v5279 = vunpack.c.l.s4 1966171168
      %v5280 = vunpack.c.0.s8 %v5279
      %v5281 = vlaneseq
      %v5282 = vshrl.u32 %v5281, 7
      %v5283 = vsub.s32 %v5280, %v5282
      %v5284 = vrot.slane %v3210, %v5283
      %v5286 = vunpack.c.l.s4 1966171168
      %v5287 = vunpack.c.0.s8 %v5286
      %v5288 = vlaneseq
      %v5289 = vshrl.u32 %v5288, 7
      %v5290 = vsub.s32 %v5287, %v5289
      %v5291 = vrot.slane %v5277, %v5290
      %v5292 = vcombine.high %v5284, %v5284
      %v5293 = vcombine.high %v5291, %v5291
      %v5295 = vunpack.c.l.s4 1966171168
      %v5296 = vunpack.c.0.s8 %v5295
      %v5297 = vlaneseq
      %v5298 = vshrl.u32 %v5297, 7
      %v5299 = vsub.s32 %v5296, %v5298
      %v5300 = vrot.slane %v5284, %v5299
      %v5302 = vunpack.c.l.s4 1966171168
      %v5303 = vunpack.c.0.s8 %v5302
      %v5304 = vlaneseq
      %v5305 = vshrl.u32 %v5304, 7
      %v5306 = vsub.s32 %v5303, %v5305
      %v5307 = vrot.slane %v5291, %v5306
      %v5309 = vunpack.c.l.s4 1966171168
      %v5310 = vunpack.c.0.s8 %v5309
      %v5311 = vlaneseq
      %v5312 = vshrl.u32 %v5311, 7
      %v5313 = vsub.s32 %v5310, %v5312
      %v5314 = vrot.slane %v5292, %v5313
      %v5316 = vunpack.c.l.s4 1966171168
      %v5317 = vunpack.c.0.s8 %v5316
      %v5318 = vlaneseq
      %v5319 = vshrl.u32 %v5318, 7
      %v5320 = vsub.s32 %v5317, %v5319
      %v5321 = vrot.slane %v5293, %v5320
      %v5322 = vcombine.high %v5300, %v5300
      %v5323 = vcombine.high %v5307, %v5307
      %v5324 = vcombine.high %v5314, %v5314
      %v5325 = vcombine.high %v5321, %v5321
      %v5326 = vlaneseq
      %v5327 = vshrl.u32 %v5326, 7
      %v5328 = vsub.s32 0, %v5327
      %v5329 = vrot.slane %v4957, %v5328
      %v5330 = vlaneseq
      %v5331 = vshrl.u32 %v5330, 7
      %v5332 = vsub.s32 0, %v5331
      %v5333 = vrot.slane %v4971, %v5332
      %v5334 = vlaneseq
      %v5335 = vshrl.u32 %v5334, 7
      %v5336 = vsub.s32 0, %v5335
      %v5337 = vrot.slane %v4979, %v5336
      %v5338 = vlaneseq
      %v5339 = vshrl.u32 %v5338, 7
      %v5340 = vsub.s32 0, %v5339
      %v5341 = vrot.slane %v4981, %v5340
      %v5342 = vlaneseq
      %v5343 = vshrl.u32 %v5342, 7
      %v5344 = vsub.s32 0, %v5343
      %v5345 = vrot.slane %v4964, %v5344
      %v5346 = vlaneseq
      %v5347 = vshrl.u32 %v5346, 7
      %v5348 = vsub.s32 0, %v5347
      %v5349 = vrot.slane %v4978, %v5348
      %v5350 = vlaneseq
      %v5351 = vshrl.u32 %v5350, 7
      %v5352 = vsub.s32 0, %v5351
      %v5353 = vrot.slane %v4980, %v5352
      %v5354 = vlaneseq
      %v5355 = vshrl.u32 %v5354, 7
      %v5356 = vsub.s32 0, %v5355
      %v5357 = vrot.slane %v4982, %v5356
      %v5358 = vlaneseq
      %v5359 = vshrl.u32 %v5358, 7
      %v5360 = vsub.s32 0, %v5359
      %v5361 = vrot.slane %v5006, %v5360
      %v5362 = vlaneseq
      %v5363 = vshrl.u32 %v5362, 7
      %v5364 = vsub.s32 0, %v5363
      %v5365 = vrot.slane %v5020, %v5364
      %v5366 = vlaneseq
      %v5367 = vshrl.u32 %v5366, 7
      %v5368 = vsub.s32 0, %v5367
      %v5369 = vrot.slane %v5028, %v5368
      %v5370 = vlaneseq
      %v5371 = vshrl.u32 %v5370, 7
      %v5372 = vsub.s32 0, %v5371
      %v5373 = vrot.slane %v5030, %v5372
      %v5374 = vlaneseq
      %v5375 = vshrl.u32 %v5374, 7
      %v5376 = vsub.s32 0, %v5375
      %v5377 = vrot.slane %v5013, %v5376
      %v5378 = vlaneseq
      %v5379 = vshrl.u32 %v5378, 7
      %v5380 = vsub.s32 0, %v5379
      %v5381 = vrot.slane %v5027, %v5380
      %v5382 = vlaneseq
      %v5383 = vshrl.u32 %v5382, 7
      %v5384 = vsub.s32 0, %v5383
      %v5385 = vrot.slane %v5029, %v5384
      %v5386 = vlaneseq
      %v5387 = vshrl.u32 %v5386, 7
      %v5388 = vsub.s32 0, %v5387
      %v5389 = vrot.slane %v5031, %v5388
      %v5390 = vlaneseq
      %v5391 = vshrl.u32 %v5390, 7
      %v5392 = vsub.s32 0, %v5391
      %v5393 = vrot.slane %v5055, %v5392
      %v5394 = vlaneseq
      %v5395 = vshrl.u32 %v5394, 7
      %v5396 = vsub.s32 0, %v5395
      %v5397 = vrot.slane %v5069, %v5396
      %v5398 = vlaneseq
      %v5399 = vshrl.u32 %v5398, 7
      %v5400 = vsub.s32 0, %v5399
      %v5401 = vrot.slane %v5077, %v5400
      %v5402 = vlaneseq
      %v5403 = vshrl.u32 %v5402, 7
      %v5404 = vsub.s32 0, %v5403
      %v5405 = vrot.slane %v5079, %v5404
      %v5406 = vlaneseq
      %v5407 = vshrl.u32 %v5406, 7
      %v5408 = vsub.s32 0, %v5407
      %v5409 = vrot.slane %v5062, %v5408
      %v5410 = vlaneseq
      %v5411 = vshrl.u32 %v5410, 7
      %v5412 = vsub.s32 0, %v5411
      %v5413 = vrot.slane %v5076, %v5412
      %v5414 = vlaneseq
      %v5415 = vshrl.u32 %v5414, 7
      %v5416 = vsub.s32 0, %v5415
      %v5417 = vrot.slane %v5078, %v5416
      %v5418 = vlaneseq
      %v5419 = vshrl.u32 %v5418, 7
      %v5420 = vsub.s32 0, %v5419
      %v5421 = vrot.slane %v5080, %v5420
      %v5422 = vlaneseq
      %v5423 = vshrl.u32 %v5422, 7
      %v5424 = vsub.s32 0, %v5423
      %v5425 = vrot.slane %v5104, %v5424
      %v5426 = vlaneseq
      %v5427 = vshrl.u32 %v5426, 7
      %v5428 = vsub.s32 0, %v5427
      %v5429 = vrot.slane %v5118, %v5428
      %v5430 = vlaneseq
      %v5431 = vshrl.u32 %v5430, 7
      %v5432 = vsub.s32 0, %v5431
      %v5433 = vrot.slane %v5126, %v5432
      %v5434 = vlaneseq
      %v5435 = vshrl.u32 %v5434, 7
      %v5436 = vsub.s32 0, %v5435
      %v5437 = vrot.slane %v5128, %v5436
      %v5438 = vlaneseq
      %v5439 = vshrl.u32 %v5438, 7
      %v5440 = vsub.s32 0, %v5439
      %v5441 = vrot.slane %v5111, %v5440
      %v5442 = vlaneseq
      %v5443 = vshrl.u32 %v5442, 7
      %v5444 = vsub.s32 0, %v5443
      %v5445 = vrot.slane %v5125, %v5444
      %v5446 = vlaneseq
      %v5447 = vshrl.u32 %v5446, 7
      %v5448 = vsub.s32 0, %v5447
      %v5449 = vrot.slane %v5127, %v5448
      %v5450 = vlaneseq
      %v5451 = vshrl.u32 %v5450, 7
      %v5452 = vsub.s32 0, %v5451
      %v5453 = vrot.slane %v5129, %v5452
      %v5454 = vlaneseq
      %v5455 = vshrl.u32 %v5454, 7
      %v5456 = vsub.s32 0, %v5455
      %v5457 = vrot.slane %v5153, %v5456
      %v5458 = vlaneseq
      %v5459 = vshrl.u32 %v5458, 7
      %v5460 = vsub.s32 0, %v5459
      %v5461 = vrot.slane %v5167, %v5460
      %v5462 = vlaneseq
      %v5463 = vshrl.u32 %v5462, 7
      %v5464 = vsub.s32 0, %v5463
      %v5465 = vrot.slane %v5175, %v5464
      %v5466 = vlaneseq
      %v5467 = vshrl.u32 %v5466, 7
      %v5468 = vsub.s32 0, %v5467
      %v5469 = vrot.slane %v5177, %v5468
      %v5470 = vlaneseq
      %v5471 = vshrl.u32 %v5470, 7
      %v5472 = vsub.s32 0, %v5471
      %v5473 = vrot.slane %v5160, %v5472
      %v5474 = vlaneseq
      %v5475 = vshrl.u32 %v5474, 7
      %v5476 = vsub.s32 0, %v5475
      %v5477 = vrot.slane %v5174, %v5476
      %v5478 = vlaneseq
      %v5479 = vshrl.u32 %v5478, 7
      %v5480 = vsub.s32 0, %v5479
      %v5481 = vrot.slane %v5176, %v5480
      %v5482 = vlaneseq
      %v5483 = vshrl.u32 %v5482, 7
      %v5484 = vsub.s32 0, %v5483
      %v5485 = vrot.slane %v5178, %v5484
      %v5486 = vlaneseq
      %v5487 = vshrl.u32 %v5486, 7
      %v5488 = vsub.s32 0, %v5487
      %v5489 = vrot.slane %v5202, %v5488
      %v5490 = vlaneseq
      %v5491 = vshrl.u32 %v5490, 7
      %v5492 = vsub.s32 0, %v5491
      %v5493 = vrot.slane %v5216, %v5492
      %v5494 = vlaneseq
      %v5495 = vshrl.u32 %v5494, 7
      %v5496 = vsub.s32 0, %v5495
      %v5497 = vrot.slane %v5224, %v5496
      %v5498 = vlaneseq
      %v5499 = vshrl.u32 %v5498, 7
      %v5500 = vsub.s32 0, %v5499
      %v5501 = vrot.slane %v5226, %v5500
      %v5502 = vlaneseq
      %v5503 = vshrl.u32 %v5502, 7
      %v5504 = vsub.s32 0, %v5503
      %v5505 = vrot.slane %v5209, %v5504
      %v5506 = vlaneseq
      %v5507 = vshrl.u32 %v5506, 7
      %v5508 = vsub.s32 0, %v5507
      %v5509 = vrot.slane %v5223, %v5508
      %v5510 = vlaneseq
      %v5511 = vshrl.u32 %v5510, 7
      %v5512 = vsub.s32 0, %v5511
      %v5513 = vrot.slane %v5225, %v5512
      %v5514 = vlaneseq
      %v5515 = vshrl.u32 %v5514, 7
      %v5516 = vsub.s32 0, %v5515
      %v5517 = vrot.slane %v5227, %v5516
      %v5518 = vlaneseq
      %v5519 = vshrl.u32 %v5518, 7
      %v5520 = vsub.s32 0, %v5519
      %v5521 = vrot.slane %v5251, %v5520
      %v5522 = vlaneseq
      %v5523 = vshrl.u32 %v5522, 7
      %v5524 = vsub.s32 0, %v5523
      %v5525 = vrot.slane %v5265, %v5524
      %v5526 = vlaneseq
      %v5527 = vshrl.u32 %v5526, 7
      %v5528 = vsub.s32 0, %v5527
      %v5529 = vrot.slane %v5273, %v5528
      %v5530 = vlaneseq
      %v5531 = vshrl.u32 %v5530, 7
      %v5532 = vsub.s32 0, %v5531
      %v5533 = vrot.slane %v5275, %v5532
      %v5534 = vlaneseq
      %v5535 = vshrl.u32 %v5534, 7
      %v5536 = vsub.s32 0, %v5535
      %v5537 = vrot.slane %v5258, %v5536
      %v5538 = vlaneseq
      %v5539 = vshrl.u32 %v5538, 7
      %v5540 = vsub.s32 0, %v5539
      %v5541 = vrot.slane %v5272, %v5540
      %v5542 = vlaneseq
      %v5543 = vshrl.u32 %v5542, 7
      %v5544 = vsub.s32 0, %v5543
      %v5545 = vrot.slane %v5274, %v5544
      %v5546 = vlaneseq
      %v5547 = vshrl.u32 %v5546, 7
      %v5548 = vsub.s32 0, %v5547
      %v5549 = vrot.slane %v5276, %v5548
      %v5550 = vlaneseq
      %v5551 = vshrl.u32 %v5550, 7
      %v5552 = vsub.s32 0, %v5551
      %v5553 = vrot.slane %v5300, %v5552
      %v5554 = vlaneseq
      %v5555 = vshrl.u32 %v5554, 7
      %v5556 = vsub.s32 0, %v5555
      %v5557 = vrot.slane %v5314, %v5556
      %v5558 = vlaneseq
      %v5559 = vshrl.u32 %v5558, 7
      %v5560 = vsub.s32 0, %v5559
      %v5561 = vrot.slane %v5322, %v5560
      %v5562 = vlaneseq
      %v5563 = vshrl.u32 %v5562, 7
      %v5564 = vsub.s32 0, %v5563
      %v5565 = vrot.slane %v5324, %v5564
      %v5566 = vlaneseq
      %v5567 = vshrl.u32 %v5566, 7
      %v5568 = vsub.s32 0, %v5567
      %v5569 = vrot.slane %v5307, %v5568
      %v5570 = vlaneseq
      %v5571 = vshrl.u32 %v5570, 7
      %v5572 = vsub.s32 0, %v5571
      %v5573 = vrot.slane %v5321, %v5572
      %v5574 = vlaneseq
      %v5575 = vshrl.u32 %v5574, 7
      %v5576 = vsub.s32 0, %v5575
      %v5577 = vrot.slane %v5323, %v5576
      %v5578 = vlaneseq
      %v5579 = vshrl.u32 %v5578, 7
      %v5580 = vsub.s32 0, %v5579
      %v5581 = vrot.slane %v5325, %v5580
      %v5646 = vsel %vm4397, %v4493, %v5329
      %v5647 = vsel %vm4397, %v4507, %v5333
      %v5648 = vsel %vm4397, %v4515, %v5337
      %v5649 = vsel %vm4397, %v4517, %v5341
      %v5650 = vsel %vm4397, %v4500, %v5345
      %v5651 = vsel %vm4397, %v4514, %v5349
      %v5652 = vsel %vm4397, %v4516, %v5353
      %v5653 = vsel %vm4397, %v4518, %v5357
      %v5654 = vsel %vm4397, %v4542, %v5361
      %v5655 = vsel %vm4397, %v4556, %v5365
      %v5656 = vsel %vm4397, %v4564, %v5369
      %v5657 = vsel %vm4397, %v4566, %v5373
      %v5658 = vsel %vm4397, %v4549, %v5377
      %v5659 = vsel %vm4397, %v4563, %v5381
      %v5660 = vsel %vm4397, %v4565, %v5385
      %v5661 = vsel %vm4397, %v4567, %v5389
      %v5662 = vsel %vm4397, %v4591, %v5393
      %v5663 = vsel %vm4397, %v4605, %v5397
      %v5664 = vsel %vm4397, %v4613, %v5401
      %v5665 = vsel %vm4397, %v4615, %v5405
      %v5666 = vsel %vm4397, %v4598, %v5409
      %v5667 = vsel %vm4397, %v4612, %v5413
      %v5668 = vsel %vm4397, %v4614, %v5417
      %v5669 = vsel %vm4397, %v4616, %v5421
      %v5670 = vsel %vm4397, %v4640, %v5425
      %v5671 = vsel %vm4397, %v4654, %v5429
      %v5672 = vsel %vm4397, %v4662, %v5433
      %v5673 = vsel %vm4397, %v4664, %v5437
      %v5674 = vsel %vm4397, %v4647, %v5441
      %v5675 = vsel %vm4397, %v4661, %v5445
      %v5676 = vsel %vm4397, %v4663, %v5449
      %v5677 = vsel %vm4397, %v4665, %v5453
      %v5678 = vsel %vm4397, %v4689, %v5457
      %v5679 = vsel %vm4397, %v4703, %v5461
      %v5680 = vsel %vm4397, %v4711, %v5465
      %v5681 = vsel %vm4397, %v4713, %v5469
      %v5682 = vsel %vm4397, %v4696, %v5473
      %v5683 = vsel %vm4397, %v4710, %v5477
      %v5684 = vsel %vm4397, %v4712, %v5481
      %v5685 = vsel %vm4397, %v4714, %v5485
      %v5686 = vsel %vm4397, %v4738, %v5489
      %v5687 = vsel %vm4397, %v4752, %v5493
      %v5688 = vsel %vm4397, %v4760, %v5497
      %v5689 = vsel %vm4397, %v4762, %v5501
      %v5690 = vsel %vm4397, %v4745, %v5505
      %v5691 = vsel %vm4397, %v4759, %v5509
      %v5692 = vsel %vm4397, %v4761, %v5513
      %v5693 = vsel %vm4397, %v4763, %v5517
      %v5694 = vsel %vm4397, %v4787, %v5521
      %v5695 = vsel %vm4397, %v4801, %v5525
      %v5696 = vsel %vm4397, %v4809, %v5529
      %v5697 = vsel %vm4397, %v4811, %v5533
      %v5698 = vsel %vm4397, %v4794, %v5537
      %v5699 = vsel %vm4397, %v4808, %v5541
      %v5700 = vsel %vm4397, %v4810, %v5545
      %v5701 = vsel %vm4397, %v4812, %v5549
      %v5702 = vsel %vm4397, %v4836, %v5553
      %v5703 = vsel %vm4397, %v4850, %v5557
      %v5704 = vsel %vm4397, %v4858, %v5561
      %v5705 = vsel %vm4397, %v4860, %v5565
      %v5706 = vsel %vm4397, %v4843, %v5569
      %v5707 = vsel %vm4397, %v4857, %v5573
      %v5708 = vsel %vm4397, %v4859, %v5577
      %v5709 = vsel %vm4397, %v4861, %v5581
      %v5710 = vcombine.low %v4398, %v5646
      %v5712 = vunpack.c.l.s4 1934713408
      %v5713 = vunpack.c.0.s8 %v5712
      %v5714 = vlaneseq
      %v5715 = vshrl.u32 %v5714, 7
      %v5716 = vsub.s32 %v5713, %v5715
      %v5717 = vrot.slane %v5710, %v5716
      %v5718 = vcombine.high %v5717, 0.0
      %v5719 = vcombine.low %v4406, %v5654
      %v5721 = vunpack.c.l.s4 1934713408
      %v5722 = vunpack.c.0.s8 %v5721
      %v5723 = vlaneseq
      %v5724 = vshrl.u32 %v5723, 7
      %v5725 = vsub.s32 %v5722, %v5724
      %v5726 = vrot.slane %v5719, %v5725
      %v5727 = vcombine.high %v5726, 0.0
      %v5728 = vcombine.low %v4414, %v5662
      %v5730 = vunpack.c.l.s4 1934713408
      %v5731 = vunpack.c.0.s8 %v5730
      %v5732 = vlaneseq
      %v5733 = vshrl.u32 %v5732, 7
      %v5734 = vsub.s32 %v5731, %v5733
      %v5735 = vrot.slane %v5728, %v5734
      %v5736 = vcombine.high %v5735, 0.0
      %v5737 = vcombine.low %v4422, %v5670
      %v5739 = vunpack.c.l.s4 1934713408
      %v5740 = vunpack.c.0.s8 %v5739
      %v5741 = vlaneseq
      %v5742 = vshrl.u32 %v5741, 7
      %v5743 = vsub.s32 %v5740, %v5742
      %v5744 = vrot.slane %v5737, %v5743
      %v5745 = vcombine.high %v5744, 0.0
      %v5746 = vcombine.low %v4430, %v5678
      %v5748 = vunpack.c.l.s4 1934713408
      %v5749 = vunpack.c.0.s8 %v5748
      %v5750 = vlaneseq
      %v5751 = vshrl.u32 %v5750, 7
      %v5752 = vsub.s32 %v5749, %v5751
      %v5753 = vrot.slane %v5746, %v5752
      %v5754 = vcombine.high %v5753, 0.0
      %v5755 = vcombine.low %v4438, %v5686
      %v5757 = vunpack.c.l.s4 1934713408
      %v5758 = vunpack.c.0.s8 %v5757
      %v5759 = vlaneseq
      %v5760 = vshrl.u32 %v5759, 7
      %v5761 = vsub.s32 %v5758, %v5760
      %v5762 = vrot.slane %v5755, %v5761
      %v5763 = vcombine.high %v5762, 0.0
      %v5764 = vcombine.low %v4446, %v5694
      %v5766 = vunpack.c.l.s4 1934713408
      %v5767 = vunpack.c.0.s8 %v5766
      %v5768 = vlaneseq
      %v5769 = vshrl.u32 %v5768, 7
      %v5770 = vsub.s32 %v5767, %v5769
      %v5771 = vrot.slane %v5764, %v5770
      %v5772 = vcombine.high %v5771, 0.0
      %v5773 = vcombine.low %v4454, %v5702
      %v5775 = vunpack.c.l.s4 1934713408
      %v5776 = vunpack.c.0.s8 %v5775
      %v5777 = vlaneseq
      %v5778 = vshrl.u32 %v5777, 7
      %v5779 = vsub.s32 %v5776, %v5778
      %v5780 = vrot.slane %v5773, %v5779
      %v5781 = vcombine.high %v5780, 0.0
      %v5782 = vcombine.low %v4399, %v5647
      %v5784 = vunpack.c.l.s4 1934713408
      %v5785 = vunpack.c.0.s8 %v5784
      %v5786 = vlaneseq
      %v5787 = vshrl.u32 %v5786, 7
      %v5788 = vsub.s32 %v5785, %v5787
      %v5789 = vrot.slane %v5782, %v5788
      %v5790 = vcombine.high %v5789, 0.0
      %v5791 = vcombine.low %v4407, %v5655
      %v5793 = vunpack.c.l.s4 1934713408
      %v5794 = vunpack.c.0.s8 %v5793
      %v5795 = vlaneseq
      %v5796 = vshrl.u32 %v5795, 7
      %v5797 = vsub.s32 %v5794, %v5796
      %v5798 = vrot.slane %v5791, %v5797
      %v5799 = vcombine.high %v5798, 0.0
      %v5800 = vcombine.low %v4415, %v5663
      %v5802 = vunpack.c.l.s4 1934713408
      %v5803 = vunpack.c.0.s8 %v5802
      %v5804 = vlaneseq
      %v5805 = vshrl.u32 %v5804, 7
      %v5806 = vsub.s32 %v5803, %v5805
      %v5807 = vrot.slane %v5800, %v5806
      %v5808 = vcombine.high %v5807, 0.0
      %v5809 = vcombine.low %v4423, %v5671
      %v5811 = vunpack.c.l.s4 1934713408
      %v5812 = vunpack.c.0.s8 %v5811
      %v5813 = vlaneseq
      %v5814 = vshrl.u32 %v5813, 7
      %v5815 = vsub.s32 %v5812, %v5814
      %v5816 = vrot.slane %v5809, %v5815
      %v5817 = vcombine.high %v5816, 0.0
      %v5818 = vcombine.low %v4431, %v5679
      %v5820 = vunpack.c.l.s4 1934713408
      %v5821 = vunpack.c.0.s8 %v5820
      %v5822 = vlaneseq
      %v5823 = vshrl.u32 %v5822, 7
      %v5824 = vsub.s32 %v5821, %v5823
      %v5825 = vrot.slane %v5818, %v5824
      %v5826 = vcombine.high %v5825, 0.0
      %v5827 = vcombine.low %v4439, %v5687
      %v5829 = vunpack.c.l.s4 1934713408
      %v5830 = vunpack.c.0.s8 %v5829
      %v5831 = vlaneseq
      %v5832 = vshrl.u32 %v5831, 7
      %v5833 = vsub.s32 %v5830, %v5832
      %v5834 = vrot.slane %v5827, %v5833
      %v5835 = vcombine.high %v5834, 0.0
      %v5836 = vcombine.low %v4447, %v5695
      %v5838 = vunpack.c.l.s4 1934713408
      %v5839 = vunpack.c.0.s8 %v5838
      %v5840 = vlaneseq
      %v5841 = vshrl.u32 %v5840, 7
      %v5842 = vsub.s32 %v5839, %v5841
      %v5843 = vrot.slane %v5836, %v5842
      %v5844 = vcombine.high %v5843, 0.0
      %v5845 = vcombine.low %v4455, %v5703
      %v5847 = vunpack.c.l.s4 1934713408
      %v5848 = vunpack.c.0.s8 %v5847
      %v5849 = vlaneseq
      %v5850 = vshrl.u32 %v5849, 7
      %v5851 = vsub.s32 %v5848, %v5850
      %v5852 = vrot.slane %v5845, %v5851
      %v5853 = vcombine.high %v5852, 0.0
      %v5854 = vcombine.low %v4400, %v5648
      %v5856 = vunpack.c.l.s4 1934713408
      %v5857 = vunpack.c.0.s8 %v5856
      %v5858 = vlaneseq
      %v5859 = vshrl.u32 %v5858, 7
      %v5860 = vsub.s32 %v5857, %v5859
      %v5861 = vrot.slane %v5854, %v5860
      %v5862 = vcombine.high %v5861, 0.0
      %v5863 = vcombine.low %v4408, %v5656
      %v5865 = vunpack.c.l.s4 1934713408
      %v5866 = vunpack.c.0.s8 %v5865
      %v5867 = vlaneseq
      %v5868 = vshrl.u32 %v5867, 7
      %v5869 = vsub.s32 %v5866, %v5868
      %v5870 = vrot.slane %v5863, %v5869
      %v5871 = vcombine.high %v5870, 0.0
      %v5872 = vcombine.low %v4416, %v5664
      %v5874 = vunpack.c.l.s4 1934713408
      %v5875 = vunpack.c.0.s8 %v5874
      %v5876 = vlaneseq
      %v5877 = vshrl.u32 %v5876, 7
      %v5878 = vsub.s32 %v5875, %v5877
      %v5879 = vrot.slane %v5872, %v5878
      %v5880 = vcombine.high %v5879, 0.0
      %v5881 = vcombine.low %v4424, %v5672
      %v5883 = vunpack.c.l.s4 1934713408
      %v5884 = vunpack.c.0.s8 %v5883
      %v5885 = vlaneseq
      %v5886 = vshrl.u32 %v5885, 7
      %v5887 = vsub.s32 %v5884, %v5886
      %v5888 = vrot.slane %v5881, %v5887
      %v5889 = vcombine.high %v5888, 0.0
      %v5890 = vcombine.low %v4432, %v5680
      %v5892 = vunpack.c.l.s4 1934713408
      %v5893 = vunpack.c.0.s8 %v5892
      %v5894 = vlaneseq
      %v5895 = vshrl.u32 %v5894, 7
      %v5896 = vsub.s32 %v5893, %v5895
      %v5897 = vrot.slane %v5890, %v5896
      %v5898 = vcombine.high %v5897, 0.0
      %v5899 = vcombine.low %v4440, %v5688
      %v5901 = vunpack.c.l.s4 1934713408
      %v5902 = vunpack.c.0.s8 %v5901
      %v5903 = vlaneseq
      %v5904 = vshrl.u32 %v5903, 7
      %v5905 = vsub.s32 %v5902, %v5904
      %v5906 = vrot.slane %v5899, %v5905
      %v5907 = vcombine.high %v5906, 0.0
      %v5908 = vcombine.low %v4448, %v5696
      %v5910 = vunpack.c.l.s4 1934713408
      %v5911 = vunpack.c.0.s8 %v5910
      %v5912 = vlaneseq
      %v5913 = vshrl.u32 %v5912, 7
      %v5914 = vsub.s32 %v5911, %v5913
      %v5915 = vrot.slane %v5908, %v5914
      %v5916 = vcombine.high %v5915, 0.0
      %v5917 = vcombine.low %v4456, %v5704
      %v5919 = vunpack.c.l.s4 1934713408
      %v5920 = vunpack.c.0.s8 %v5919
      %v5921 = vlaneseq
      %v5922 = vshrl.u32 %v5921, 7
      %v5923 = vsub.s32 %v5920, %v5922
      %v5924 = vrot.slane %v5917, %v5923
      %v5925 = vcombine.high %v5924, 0.0
      %v5926 = vcombine.low %v4401, %v5649
      %v5928 = vunpack.c.l.s4 1934713408
      %v5929 = vunpack.c.0.s8 %v5928
      %v5930 = vlaneseq
      %v5931 = vshrl.u32 %v5930, 7
      %v5932 = vsub.s32 %v5929, %v5931
      %v5933 = vrot.slane %v5926, %v5932
      %v5934 = vcombine.high %v5933, 0.0
      %v5935 = vcombine.low %v4409, %v5657
      %v5937 = vunpack.c.l.s4 1934713408
      %v5938 = vunpack.c.0.s8 %v5937
      %v5939 = vlaneseq
      %v5940 = vshrl.u32 %v5939, 7
      %v5941 = vsub.s32 %v5938, %v5940
      %v5942 = vrot.slane %v5935, %v5941
      %v5943 = vcombine.high %v5942, 0.0
      %v5944 = vcombine.low %v4417, %v5665
      %v5946 = vunpack.c.l.s4 1934713408
      %v5947 = vunpack.c.0.s8 %v5946
      %v5948 = vlaneseq
      %v5949 = vshrl.u32 %v5948, 7
      %v5950 = vsub.s32 %v5947, %v5949
      %v5951 = vrot.slane %v5944, %v5950
      %v5952 = vcombine.high %v5951, 0.0
      %v5953 = vcombine.low %v4425, %v5673
      %v5955 = vunpack.c.l.s4 1934713408
      %v5956 = vunpack.c.0.s8 %v5955
      %v5957 = vlaneseq
      %v5958 = vshrl.u32 %v5957, 7
      %v5959 = vsub.s32 %v5956, %v5958
      %v5960 = vrot.slane %v5953, %v5959
      %v5961 = vcombine.high %v5960, 0.0
      %v5962 = vcombine.low %v4433, %v5681
      %v5964 = vunpack.c.l.s4 1934713408
      %v5965 = vunpack.c.0.s8 %v5964
      %v5966 = vlaneseq
      %v5967 = vshrl.u32 %v5966, 7
      %v5968 = vsub.s32 %v5965, %v5967
      %v5969 = vrot.slane %v5962, %v5968
      %v5970 = vcombine.high %v5969, 0.0
      %v5971 = vcombine.low %v4441, %v5689
      %v5973 = vunpack.c.l.s4 1934713408
      %v5974 = vunpack.c.0.s8 %v5973
      %v5975 = vlaneseq
      %v5976 = vshrl.u32 %v5975, 7
      %v5977 = vsub.s32 %v5974, %v5976
      %v5978 = vrot.slane %v5971, %v5977
      %v5979 = vcombine.high %v5978, 0.0
      %v5980 = vcombine.low %v4449, %v5697
      %v5982 = vunpack.c.l.s4 1934713408
      %v5983 = vunpack.c.0.s8 %v5982
      %v5984 = vlaneseq
      %v5985 = vshrl.u32 %v5984, 7
      %v5986 = vsub.s32 %v5983, %v5985
      %v5987 = vrot.slane %v5980, %v5986
      %v5988 = vcombine.high %v5987, 0.0
      %v5989 = vcombine.low %v4457, %v5705
      %v5991 = vunpack.c.l.s4 1934713408
      %v5992 = vunpack.c.0.s8 %v5991
      %v5993 = vlaneseq
      %v5994 = vshrl.u32 %v5993, 7
      %v5995 = vsub.s32 %v5992, %v5994
      %v5996 = vrot.slane %v5989, %v5995
      %v5997 = vcombine.high %v5996, 0.0
      %v5998 = vcombine.low %v4402, %v5650
      %v6000 = vunpack.c.l.s4 1934713408
      %v6001 = vunpack.c.0.s8 %v6000
      %v6002 = vlaneseq
      %v6003 = vshrl.u32 %v6002, 7
      %v6004 = vsub.s32 %v6001, %v6003
      %v6005 = vrot.slane %v5998, %v6004
      %v6006 = vcombine.high %v6005, 0.0
      %v6007 = vcombine.low %v4410, %v5658
      %v6009 = vunpack.c.l.s4 1934713408
      %v6010 = vunpack.c.0.s8 %v6009
      %v6011 = vlaneseq
      %v6012 = vshrl.u32 %v6011, 7
      %v6013 = vsub.s32 %v6010, %v6012
      %v6014 = vrot.slane %v6007, %v6013
      %v6015 = vcombine.high %v6014, 0.0
      %v6016 = vcombine.low %v4418, %v5666
      %v6018 = vunpack.c.l.s4 1934713408
      %v6019 = vunpack.c.0.s8 %v6018
      %v6020 = vlaneseq
      %v6021 = vshrl.u32 %v6020, 7
      %v6022 = vsub.s32 %v6019, %v6021
      %v6023 = vrot.slane %v6016, %v6022
      %v6024 = vcombine.high %v6023, 0.0
      %v6025 = vcombine.low %v4426, %v5674
      %v6027 = vunpack.c.l.s4 1934713408
      %v6028 = vunpack.c.0.s8 %v6027
      %v6029 = vlaneseq
      %v6030 = vshrl.u32 %v6029, 7
      %v6031 = vsub.s32 %v6028, %v6030
      %v6032 = vrot.slane %v6025, %v6031
      %v6033 = vcombine.high %v6032, 0.0
      %v6034 = vcombine.low %v4434, %v5682
      %v6036 = vunpack.c.l.s4 1934713408
      %v6037 = vunpack.c.0.s8 %v6036
      %v6038 = vlaneseq
      %v6039 = vshrl.u32 %v6038, 7
      %v6040 = vsub.s32 %v6037, %v6039
      %v6041 = vrot.slane %v6034, %v6040
      %v6042 = vcombine.high %v6041, 0.0
      %v6043 = vcombine.low %v4442, %v5690
      %v6045 = vunpack.c.l.s4 1934713408
      %v6046 = vunpack.c.0.s8 %v6045
      %v6047 = vlaneseq
      %v6048 = vshrl.u32 %v6047, 7
      %v6049 = vsub.s32 %v6046, %v6048
      %v6050 = vrot.slane %v6043, %v6049
      %v6051 = vcombine.high %v6050, 0.0
      %v6052 = vcombine.low %v4450, %v5698
      %v6054 = vunpack.c.l.s4 1934713408
      %v6055 = vunpack.c.0.s8 %v6054
      %v6056 = vlaneseq
      %v6057 = vshrl.u32 %v6056, 7
      %v6058 = vsub.s32 %v6055, %v6057
      %v6059 = vrot.slane %v6052, %v6058
      %v6060 = vcombine.high %v6059, 0.0
      %v6061 = vcombine.low %v4458, %v5706
      %v6063 = vunpack.c.l.s4 1934713408
      %v6064 = vunpack.c.0.s8 %v6063
      %v6065 = vlaneseq
      %v6066 = vshrl.u32 %v6065, 7
      %v6067 = vsub.s32 %v6064, %v6066
      %v6068 = vrot.slane %v6061, %v6067
      %v6069 = vcombine.high %v6068, 0.0
      %v6070 = vcombine.low %v4403, %v5651
      %v6072 = vunpack.c.l.s4 1934713408
      %v6073 = vunpack.c.0.s8 %v6072
      %v6074 = vlaneseq
      %v6075 = vshrl.u32 %v6074, 7
      %v6076 = vsub.s32 %v6073, %v6075
      %v6077 = vrot.slane %v6070, %v6076
      %v6078 = vcombine.high %v6077, 0.0
      %v6079 = vcombine.low %v4411, %v5659
      %v6081 = vunpack.c.l.s4 1934713408
      %v6082 = vunpack.c.0.s8 %v6081
      %v6083 = vlaneseq
      %v6084 = vshrl.u32 %v6083, 7
      %v6085 = vsub.s32 %v6082, %v6084
      %v6086 = vrot.slane %v6079, %v6085
      %v6087 = vcombine.high %v6086, 0.0
      %v6088 = vcombine.low %v4419, %v5667
      %v6090 = vunpack.c.l.s4 1934713408
      %v6091 = vunpack.c.0.s8 %v6090
      %v6092 = vlaneseq
      %v6093 = vshrl.u32 %v6092, 7
      %v6094 = vsub.s32 %v6091, %v6093
      %v6095 = vrot.slane %v6088, %v6094
      %v6096 = vcombine.high %v6095, 0.0
      %v6097 = vcombine.low %v4427, %v5675
      %v6099 = vunpack.c.l.s4 1934713408
      %v6100 = vunpack.c.0.s8 %v6099
      %v6101 = vlaneseq
      %v6102 = vshrl.u32 %v6101, 7
      %v6103 = vsub.s32 %v6100, %v6102
      %v6104 = vrot.slane %v6097, %v6103
      %v6105 = vcombine.high %v6104, 0.0
      %v6106 = vcombine.low %v4435, %v5683
      %v6108 = vunpack.c.l.s4 1934713408
      %v6109 = vunpack.c.0.s8 %v6108
      %v6110 = vlaneseq
      %v6111 = vshrl.u32 %v6110, 7
      %v6112 = vsub.s32 %v6109, %v6111
      %v6113 = vrot.slane %v6106, %v6112
      %v6114 = vcombine.high %v6113, 0.0
      %v6115 = vcombine.low %v4443, %v5691
      %v6117 = vunpack.c.l.s4 1934713408
      %v6118 = vunpack.c.0.s8 %v6117
      %v6119 = vlaneseq
      %v6120 = vshrl.u32 %v6119, 7
      %v6121 = vsub.s32 %v6118, %v6120
      %v6122 = vrot.slane %v6115, %v6121
      %v6123 = vcombine.high %v6122, 0.0
      %v6124 = vcombine.low %v4451, %v5699
      %v6126 = vunpack.c.l.s4 1934713408
      %v6127 = vunpack.c.0.s8 %v6126
      %v6128 = vlaneseq
      %v6129 = vshrl.u32 %v6128, 7
      %v6130 = vsub.s32 %v6127, %v6129
      %v6131 = vrot.slane %v6124, %v6130
      %v6132 = vcombine.high %v6131, 0.0
      %v6133 = vcombine.low %v4459, %v5707
      %v6135 = vunpack.c.l.s4 1934713408
      %v6136 = vunpack.c.0.s8 %v6135
      %v6137 = vlaneseq
      %v6138 = vshrl.u32 %v6137, 7
      %v6139 = vsub.s32 %v6136, %v6138
      %v6140 = vrot.slane %v6133, %v6139
      %v6141 = vcombine.high %v6140, 0.0
      %v6142 = vcombine.low %v4404, %v5652
      %v6144 = vunpack.c.l.s4 1934713408
      %v6145 = vunpack.c.0.s8 %v6144
      %v6146 = vlaneseq
      %v6147 = vshrl.u32 %v6146, 7
      %v6148 = vsub.s32 %v6145, %v6147
      %v6149 = vrot.slane %v6142, %v6148
      %v6150 = vcombine.high %v6149, 0.0
      %v6151 = vcombine.low %v4412, %v5660
      %v6153 = vunpack.c.l.s4 1934713408
      %v6154 = vunpack.c.0.s8 %v6153
      %v6155 = vlaneseq
      %v6156 = vshrl.u32 %v6155, 7
      %v6157 = vsub.s32 %v6154, %v6156
      %v6158 = vrot.slane %v6151, %v6157
      %v6159 = vcombine.high %v6158, 0.0
      %v6160 = vcombine.low %v4420, %v5668
      %v6162 = vunpack.c.l.s4 1934713408
      %v6163 = vunpack.c.0.s8 %v6162
      %v6164 = vlaneseq
      %v6165 = vshrl.u32 %v6164, 7
      %v6166 = vsub.s32 %v6163, %v6165
      %v6167 = vrot.slane %v6160, %v6166
      %v6168 = vcombine.high %v6167, 0.0
      %v6169 = vcombine.low %v4428, %v5676
      %v6171 = vunpack.c.l.s4 1934713408
      %v6172 = vunpack.c.0.s8 %v6171
      %v6173 = vlaneseq
      %v6174 = vshrl.u32 %v6173, 7
      %v6175 = vsub.s32 %v6172, %v6174
      %v6176 = vrot.slane %v6169, %v6175
      %v6177 = vcombine.high %v6176, 0.0
      %v6178 = vcombine.low %v4436, %v5684
      %v6180 = vunpack.c.l.s4 1934713408
      %v6181 = vunpack.c.0.s8 %v6180
      %v6182 = vlaneseq
      %v6183 = vshrl.u32 %v6182, 7
      %v6184 = vsub.s32 %v6181, %v6183
      %v6185 = vrot.slane %v6178, %v6184
      %v6186 = vcombine.high %v6185, 0.0
      %v6187 = vcombine.low %v4444, %v5692
      %v6189 = vunpack.c.l.s4 1934713408
      %v6190 = vunpack.c.0.s8 %v6189
      %v6191 = vlaneseq
      %v6192 = vshrl.u32 %v6191, 7
      %v6193 = vsub.s32 %v6190, %v6192
      %v6194 = vrot.slane %v6187, %v6193
      %v6195 = vcombine.high %v6194, 0.0
      %v6196 = vcombine.low %v4452, %v5700
      %v6198 = vunpack.c.l.s4 1934713408
      %v6199 = vunpack.c.0.s8 %v6198
      %v6200 = vlaneseq
      %v6201 = vshrl.u32 %v6200, 7
      %v6202 = vsub.s32 %v6199, %v6201
      %v6203 = vrot.slane %v6196, %v6202
      %v6204 = vcombine.high %v6203, 0.0
      %v6205 = vcombine.low %v4460, %v5708
      %v6207 = vunpack.c.l.s4 1934713408
      %v6208 = vunpack.c.0.s8 %v6207
      %v6209 = vlaneseq
      %v6210 = vshrl.u32 %v6209, 7
      %v6211 = vsub.s32 %v6208, %v6210
      %v6212 = vrot.slane %v6205, %v6211
      %v6213 = vcombine.high %v6212, 0.0
      %v6214 = vcombine.low %v4405, %v5653
      %v6216 = vunpack.c.l.s4 1934713408
      %v6217 = vunpack.c.0.s8 %v6216
      %v6218 = vlaneseq
      %v6219 = vshrl.u32 %v6218, 7
      %v6220 = vsub.s32 %v6217, %v6219
      %v6221 = vrot.slane %v6214, %v6220
      %v6222 = vcombine.high %v6221, 0.0
      %v6223 = vcombine.low %v4413, %v5661
      %v6225 = vunpack.c.l.s4 1934713408
      %v6226 = vunpack.c.0.s8 %v6225
      %v6227 = vlaneseq
      %v6228 = vshrl.u32 %v6227, 7
      %v6229 = vsub.s32 %v6226, %v6228
      %v6230 = vrot.slane %v6223, %v6229
      %v6231 = vcombine.high %v6230, 0.0
      %v6232 = vcombine.low %v4421, %v5669
      %v6234 = vunpack.c.l.s4 1934713408
      %v6235 = vunpack.c.0.s8 %v6234
      %v6236 = vlaneseq
      %v6237 = vshrl.u32 %v6236, 7
      %v6238 = vsub.s32 %v6235, %v6237
      %v6239 = vrot.slane %v6232, %v6238
      %v6240 = vcombine.high %v6239, 0.0
      %v6241 = vcombine.low %v4429, %v5677
      %v6243 = vunpack.c.l.s4 1934713408
      %v6244 = vunpack.c.0.s8 %v6243
      %v6245 = vlaneseq
      %v6246 = vshrl.u32 %v6245, 7
      %v6247 = vsub.s32 %v6244, %v6246
      %v6248 = vrot.slane %v6241, %v6247
      %v6249 = vcombine.high %v6248, 0.0
      %v6250 = vcombine.low %v4437, %v5685
      %v6252 = vunpack.c.l.s4 1934713408
      %v6253 = vunpack.c.0.s8 %v6252
      %v6254 = vlaneseq
      %v6255 = vshrl.u32 %v6254, 7
      %v6256 = vsub.s32 %v6253, %v6255
      %v6257 = vrot.slane %v6250, %v6256
      %v6258 = vcombine.high %v6257, 0.0
      %v6259 = vcombine.low %v4445, %v5693
      %v6261 = vunpack.c.l.s4 1934713408
      %v6262 = vunpack.c.0.s8 %v6261
      %v6263 = vlaneseq
      %v6264 = vshrl.u32 %v6263, 7
      %v6265 = vsub.s32 %v6262, %v6264
      %v6266 = vrot.slane %v6259, %v6265
      %v6267 = vcombine.high %v6266, 0.0
      %v6268 = vcombine.low %v4453, %v5701
      %v6270 = vunpack.c.l.s4 1934713408
      %v6271 = vunpack.c.0.s8 %v6270
      %v6272 = vlaneseq
      %v6273 = vshrl.u32 %v6272, 7
      %v6274 = vsub.s32 %v6271, %v6273
      %v6275 = vrot.slane %v6268, %v6274
      %v6276 = vcombine.high %v6275, 0.0
      %v6277 = vcombine.low %v4461, %v5709
      %v6279 = vunpack.c.l.s4 1934713408
      %v6280 = vunpack.c.0.s8 %v6279
      %v6281 = vlaneseq
      %v6282 = vshrl.u32 %v6281, 7
      %v6283 = vsub.s32 %v6280, %v6282
      %v6284 = vrot.slane %v6277, %v6283
      %v6285 = vcombine.high %v6284, 0.0
      %v6294 = vcombine.low %v5717, %v5726
      %v6295 = vcombine.low %v5735, %v5744
      %v6297 = vunpack.c.l.s4 1983009808
      %v6298 = vunpack.c.0.s8 %v6297
      %v6299 = vlaneseq
      %v6300 = vshrl.u32 %v6299, 7
      %v6301 = vsub.s32 %v6298, %v6300
      %v6302 = vrot.slane %v6294, %v6301
      %v6304 = vunpack.c.l.s4 1983009808
      %v6305 = vunpack.c.0.s8 %v6304
      %v6306 = vlaneseq
      %v6307 = vshrl.u32 %v6306, 7
      %v6308 = vsub.s32 %v6305, %v6307
      %v6309 = vrot.slane %v6295, %v6308
      %v6310 = vcombine.low %v6302, %v6309
      %v6311 = vcombine.low %v5753, %v5762
      %v6312 = vcombine.low %v5771, %v5780
      %v6314 = vunpack.c.l.s4 1983009808
      %v6315 = vunpack.c.0.s8 %v6314
      %v6316 = vlaneseq
      %v6317 = vshrl.u32 %v6316, 7
      %v6318 = vsub.s32 %v6315, %v6317
      %v6319 = vrot.slane %v6311, %v6318
      %v6321 = vunpack.c.l.s4 1983009808
      %v6322 = vunpack.c.0.s8 %v6321
      %v6323 = vlaneseq
      %v6324 = vshrl.u32 %v6323, 7
      %v6325 = vsub.s32 %v6322, %v6324
      %v6326 = vrot.slane %v6312, %v6325
      %v6327 = vcombine.low %v6319, %v6326
      %v6338 = vcombine.low %v5718, %v5727
      %v6339 = vcombine.low %v5736, %v5745
      %v6341 = vunpack.c.l.s4 1983009808
      %v6342 = vunpack.c.0.s8 %v6341
      %v6343 = vlaneseq
      %v6344 = vshrl.u32 %v6343, 7
      %v6345 = vsub.s32 %v6342, %v6344
      %v6346 = vrot.slane %v6338, %v6345
      %v6348 = vunpack.c.l.s4 1983009808
      %v6349 = vunpack.c.0.s8 %v6348
      %v6350 = vlaneseq
      %v6351 = vshrl.u32 %v6350, 7
      %v6352 = vsub.s32 %v6349, %v6351
      %v6353 = vrot.slane %v6339, %v6352
      %v6354 = vcombine.low %v6346, %v6353
      %v6355 = vcombine.low %v5754, %v5763
      %v6356 = vcombine.low %v5772, %v5781
      %v6358 = vunpack.c.l.s4 1983009808
      %v6359 = vunpack.c.0.s8 %v6358
      %v6360 = vlaneseq
      %v6361 = vshrl.u32 %v6360, 7
      %v6362 = vsub.s32 %v6359, %v6361
      %v6363 = vrot.slane %v6355, %v6362
      %v6365 = vunpack.c.l.s4 1983009808
      %v6366 = vunpack.c.0.s8 %v6365
      %v6367 = vlaneseq
      %v6368 = vshrl.u32 %v6367, 7
      %v6369 = vsub.s32 %v6366, %v6368
      %v6370 = vrot.slane %v6356, %v6369
      %v6371 = vcombine.low %v6363, %v6370
      %6372 = vrot.lane.b32.xlu0 %v6354, 16
      %v6373 = vpop.permute.xlu0 %6372
      %6374 = vrot.lane.b32.xlu0 %v6371, 16
      %v6375 = vpop.permute.xlu0 %6374
      %v6386 = vcombine.low %v5789, %v5798
      %v6387 = vcombine.low %v5807, %v5816
      %v6389 = vunpack.c.l.s4 1983009808
      %v6390 = vunpack.c.0.s8 %v6389
      %v6391 = vlaneseq
      %v6392 = vshrl.u32 %v6391, 7
      %v6393 = vsub.s32 %v6390, %v6392
      %v6394 = vrot.slane %v6386, %v6393
      %v6396 = vunpack.c.l.s4 1983009808
      %v6397 = vunpack.c.0.s8 %v6396
      %v6398 = vlaneseq
      %v6399 = vshrl.u32 %v6398, 7
      %v6400 = vsub.s32 %v6397, %v6399
      %v6401 = vrot.slane %v6387, %v6400
      %v6402 = vcombine.low %v6394, %v6401
      %v6403 = vcombine.low %v5825, %v5834
      %v6404 = vcombine.low %v5843, %v5852
      %v6406 = vunpack.c.l.s4 1983009808
      %v6407 = vunpack.c.0.s8 %v6406
      %v6408 = vlaneseq
      %v6409 = vshrl.u32 %v6408, 7
      %v6410 = vsub.s32 %v6407, %v6409
      %v6411 = vrot.slane %v6403, %v6410
      %v6413 = vunpack.c.l.s4 1983009808
      %v6414 = vunpack.c.0.s8 %v6413
      %v6415 = vlaneseq
      %v6416 = vshrl.u32 %v6415, 7
      %v6417 = vsub.s32 %v6414, %v6416
      %v6418 = vrot.slane %v6404, %v6417
      %v6419 = vcombine.low %v6411, %v6418
      %6420 = vrot.lane.b32.xlu0 %v6402, 32
      %v6421 = vpop.permute.xlu0 %6420
      %6422 = vrot.lane.b32.xlu0 %v6419, 32
      %v6423 = vpop.permute.xlu0 %6422
      %v6434 = vcombine.low %v5790, %v5799
      %v6435 = vcombine.low %v5808, %v5817
      %v6437 = vunpack.c.l.s4 1983009808
      %v6438 = vunpack.c.0.s8 %v6437
      %v6439 = vlaneseq
      %v6440 = vshrl.u32 %v6439, 7
      %v6441 = vsub.s32 %v6438, %v6440
      %v6442 = vrot.slane %v6434, %v6441
      %v6444 = vunpack.c.l.s4 1983009808
      %v6445 = vunpack.c.0.s8 %v6444
      %v6446 = vlaneseq
      %v6447 = vshrl.u32 %v6446, 7
      %v6448 = vsub.s32 %v6445, %v6447
      %v6449 = vrot.slane %v6435, %v6448
      %v6450 = vcombine.low %v6442, %v6449
      %v6451 = vcombine.low %v5826, %v5835
      %v6452 = vcombine.low %v5844, %v5853
      %v6454 = vunpack.c.l.s4 1983009808
      %v6455 = vunpack.c.0.s8 %v6454
      %v6456 = vlaneseq
      %v6457 = vshrl.u32 %v6456, 7
      %v6458 = vsub.s32 %v6455, %v6457
      %v6459 = vrot.slane %v6451, %v6458
      %v6461 = vunpack.c.l.s4 1983009808
      %v6462 = vunpack.c.0.s8 %v6461
      %v6463 = vlaneseq
      %v6464 = vshrl.u32 %v6463, 7
      %v6465 = vsub.s32 %v6462, %v6464
      %v6466 = vrot.slane %v6452, %v6465
      %v6467 = vcombine.low %v6459, %v6466
      %6468 = vrot.lane.b32.xlu0 %v6450, 48
      %v6469 = vpop.permute.xlu0 %6468
      %6470 = vrot.lane.b32.xlu0 %v6467, 48
      %v6471 = vpop.permute.xlu0 %6470
      %v6482 = vcombine.low %v5861, %v5870
      %v6483 = vcombine.low %v5879, %v5888
      %v6485 = vunpack.c.l.s4 1983009808
      %v6486 = vunpack.c.0.s8 %v6485
      %v6487 = vlaneseq
      %v6488 = vshrl.u32 %v6487, 7
      %v6489 = vsub.s32 %v6486, %v6488
      %v6490 = vrot.slane %v6482, %v6489
      %v6492 = vunpack.c.l.s4 1983009808
      %v6493 = vunpack.c.0.s8 %v6492
      %v6494 = vlaneseq
      %v6495 = vshrl.u32 %v6494, 7
      %v6496 = vsub.s32 %v6493, %v6495
      %v6497 = vrot.slane %v6483, %v6496
      %v6498 = vcombine.low %v6490, %v6497
      %v6499 = vcombine.low %v5897, %v5906
      %v6500 = vcombine.low %v5915, %v5924
      %v6502 = vunpack.c.l.s4 1983009808
      %v6503 = vunpack.c.0.s8 %v6502
      %v6504 = vlaneseq
      %v6505 = vshrl.u32 %v6504, 7
      %v6506 = vsub.s32 %v6503, %v6505
      %v6507 = vrot.slane %v6499, %v6506
      %v6509 = vunpack.c.l.s4 1983009808
      %v6510 = vunpack.c.0.s8 %v6509
      %v6511 = vlaneseq
      %v6512 = vshrl.u32 %v6511, 7
      %v6513 = vsub.s32 %v6510, %v6512
      %v6514 = vrot.slane %v6500, %v6513
      %v6515 = vcombine.low %v6507, %v6514
      %6516 = vrot.lane.b32.xlu0 %v6498, 64
      %v6517 = vpop.permute.xlu0 %6516
      %6518 = vrot.lane.b32.xlu0 %v6515, 64
      %v6519 = vpop.permute.xlu0 %6518
      %v6530 = vcombine.low %v5862, %v5871
      %v6531 = vcombine.low %v5880, %v5889
      %v6533 = vunpack.c.l.s4 1983009808
      %v6534 = vunpack.c.0.s8 %v6533
      %v6535 = vlaneseq
      %v6536 = vshrl.u32 %v6535, 7
      %v6537 = vsub.s32 %v6534, %v6536
      %v6538 = vrot.slane %v6530, %v6537
      %v6540 = vunpack.c.l.s4 1983009808
      %v6541 = vunpack.c.0.s8 %v6540
      %v6542 = vlaneseq
      %v6543 = vshrl.u32 %v6542, 7
      %v6544 = vsub.s32 %v6541, %v6543
      %v6545 = vrot.slane %v6531, %v6544
      %v6546 = vcombine.low %v6538, %v6545
      %v6547 = vcombine.low %v5898, %v5907
      %v6548 = vcombine.low %v5916, %v5925
      %v6550 = vunpack.c.l.s4 1983009808
      %v6551 = vunpack.c.0.s8 %v6550
      %v6552 = vlaneseq
      %v6553 = vshrl.u32 %v6552, 7
      %v6554 = vsub.s32 %v6551, %v6553
      %v6555 = vrot.slane %v6547, %v6554
      %v6557 = vunpack.c.l.s4 1983009808
      %v6558 = vunpack.c.0.s8 %v6557
      %v6559 = vlaneseq
      %v6560 = vshrl.u32 %v6559, 7
      %v6561 = vsub.s32 %v6558, %v6560
      %v6562 = vrot.slane %v6548, %v6561
      %v6563 = vcombine.low %v6555, %v6562
      %6564 = vrot.lane.b32.xlu0 %v6546, 80
      %v6565 = vpop.permute.xlu0 %6564
      %6566 = vrot.lane.b32.xlu0 %v6563, 80
      %v6567 = vpop.permute.xlu0 %6566
      %v6578 = vcombine.low %v5933, %v5942
      %v6579 = vcombine.low %v5951, %v5960
      %v6581 = vunpack.c.l.s4 1983009808
      %v6582 = vunpack.c.0.s8 %v6581
      %v6583 = vlaneseq
      %v6584 = vshrl.u32 %v6583, 7
      %v6585 = vsub.s32 %v6582, %v6584
      %v6586 = vrot.slane %v6578, %v6585
      %v6588 = vunpack.c.l.s4 1983009808
      %v6589 = vunpack.c.0.s8 %v6588
      %v6590 = vlaneseq
      %v6591 = vshrl.u32 %v6590, 7
      %v6592 = vsub.s32 %v6589, %v6591
      %v6593 = vrot.slane %v6579, %v6592
      %v6594 = vcombine.low %v6586, %v6593
      %v6595 = vcombine.low %v5969, %v5978
      %v6596 = vcombine.low %v5987, %v5996
      %v6598 = vunpack.c.l.s4 1983009808
      %v6599 = vunpack.c.0.s8 %v6598
      %v6600 = vlaneseq
      %v6601 = vshrl.u32 %v6600, 7
      %v6602 = vsub.s32 %v6599, %v6601
      %v6603 = vrot.slane %v6595, %v6602
      %v6605 = vunpack.c.l.s4 1983009808
      %v6606 = vunpack.c.0.s8 %v6605
      %v6607 = vlaneseq
      %v6608 = vshrl.u32 %v6607, 7
      %v6609 = vsub.s32 %v6606, %v6608
      %v6610 = vrot.slane %v6596, %v6609
      %v6611 = vcombine.low %v6603, %v6610
      %6612 = vrot.lane.b32.xlu0 %v6594, 96
      %v6613 = vpop.permute.xlu0 %6612
      %6614 = vrot.lane.b32.xlu0 %v6611, 96
      %v6615 = vpop.permute.xlu0 %6614
      %v6626 = vcombine.low %v5934, %v5943
      %v6627 = vcombine.low %v5952, %v5961
      %v6629 = vunpack.c.l.s4 1983009808
      %v6630 = vunpack.c.0.s8 %v6629
      %v6631 = vlaneseq
      %v6632 = vshrl.u32 %v6631, 7
      %v6633 = vsub.s32 %v6630, %v6632
      %v6634 = vrot.slane %v6626, %v6633
      %v6636 = vunpack.c.l.s4 1983009808
      %v6637 = vunpack.c.0.s8 %v6636
      %v6638 = vlaneseq
      %v6639 = vshrl.u32 %v6638, 7
      %v6640 = vsub.s32 %v6637, %v6639
      %v6641 = vrot.slane %v6627, %v6640
      %v6642 = vcombine.low %v6634, %v6641
      %v6643 = vcombine.low %v5970, %v5979
      %v6644 = vcombine.low %v5988, %v5997
      %v6646 = vunpack.c.l.s4 1983009808
      %v6647 = vunpack.c.0.s8 %v6646
      %v6648 = vlaneseq
      %v6649 = vshrl.u32 %v6648, 7
      %v6650 = vsub.s32 %v6647, %v6649
      %v6651 = vrot.slane %v6643, %v6650
      %v6653 = vunpack.c.l.s4 1983009808
      %v6654 = vunpack.c.0.s8 %v6653
      %v6655 = vlaneseq
      %v6656 = vshrl.u32 %v6655, 7
      %v6657 = vsub.s32 %v6654, %v6656
      %v6658 = vrot.slane %v6644, %v6657
      %v6659 = vcombine.low %v6651, %v6658
      %6660 = vrot.lane.b32.xlu0 %v6642, 112
      %v6661 = vpop.permute.xlu0 %6660
      %6662 = vrot.lane.b32.xlu0 %v6659, 112
      %v6663 = vpop.permute.xlu0 %6662
      %v6674 = vcombine.low %v6005, %v6014
      %v6675 = vcombine.low %v6023, %v6032
      %v6677 = vunpack.c.l.s4 1983009808
      %v6678 = vunpack.c.0.s8 %v6677
      %v6679 = vlaneseq
      %v6680 = vshrl.u32 %v6679, 7
      %v6681 = vsub.s32 %v6678, %v6680
      %v6682 = vrot.slane %v6674, %v6681
      %v6684 = vunpack.c.l.s4 1983009808
      %v6685 = vunpack.c.0.s8 %v6684
      %v6686 = vlaneseq
      %v6687 = vshrl.u32 %v6686, 7
      %v6688 = vsub.s32 %v6685, %v6687
      %v6689 = vrot.slane %v6675, %v6688
      %v6690 = vcombine.low %v6682, %v6689
      %v6691 = vcombine.low %v6041, %v6050
      %v6692 = vcombine.low %v6059, %v6068
      %v6694 = vunpack.c.l.s4 1983009808
      %v6695 = vunpack.c.0.s8 %v6694
      %v6696 = vlaneseq
      %v6697 = vshrl.u32 %v6696, 7
      %v6698 = vsub.s32 %v6695, %v6697
      %v6699 = vrot.slane %v6691, %v6698
      %v6701 = vunpack.c.l.s4 1983009808
      %v6702 = vunpack.c.0.s8 %v6701
      %v6703 = vlaneseq
      %v6704 = vshrl.u32 %v6703, 7
      %v6705 = vsub.s32 %v6702, %v6704
      %v6706 = vrot.slane %v6692, %v6705
      %v6707 = vcombine.low %v6699, %v6706
      %v6718 = vcombine.low %v6006, %v6015
      %v6719 = vcombine.low %v6024, %v6033
      %v6721 = vunpack.c.l.s4 1983009808
      %v6722 = vunpack.c.0.s8 %v6721
      %v6723 = vlaneseq
      %v6724 = vshrl.u32 %v6723, 7
      %v6725 = vsub.s32 %v6722, %v6724
      %v6726 = vrot.slane %v6718, %v6725
      %v6728 = vunpack.c.l.s4 1983009808
      %v6729 = vunpack.c.0.s8 %v6728
      %v6730 = vlaneseq
      %v6731 = vshrl.u32 %v6730, 7
      %v6732 = vsub.s32 %v6729, %v6731
      %v6733 = vrot.slane %v6719, %v6732
      %v6734 = vcombine.low %v6726, %v6733
      %v6735 = vcombine.low %v6042, %v6051
      %v6736 = vcombine.low %v6060, %v6069
      %v6738 = vunpack.c.l.s4 1983009808
      %v6739 = vunpack.c.0.s8 %v6738
      %v6740 = vlaneseq
      %v6741 = vshrl.u32 %v6740, 7
      %v6742 = vsub.s32 %v6739, %v6741
      %v6743 = vrot.slane %v6735, %v6742
      %v6745 = vunpack.c.l.s4 1983009808
      %v6746 = vunpack.c.0.s8 %v6745
      %v6747 = vlaneseq
      %v6748 = vshrl.u32 %v6747, 7
      %v6749 = vsub.s32 %v6746, %v6748
      %v6750 = vrot.slane %v6736, %v6749
      %v6751 = vcombine.low %v6743, %v6750
      %6752 = vrot.lane.b32.xlu0 %v6734, 16
      %v6753 = vpop.permute.xlu0 %6752
      %6754 = vrot.lane.b32.xlu0 %v6751, 16
      %v6755 = vpop.permute.xlu0 %6754
      %v6766 = vcombine.low %v6077, %v6086
      %v6767 = vcombine.low %v6095, %v6104
      %v6769 = vunpack.c.l.s4 1983009808
      %v6770 = vunpack.c.0.s8 %v6769
      %v6771 = vlaneseq
      %v6772 = vshrl.u32 %v6771, 7
      %v6773 = vsub.s32 %v6770, %v6772
      %v6774 = vrot.slane %v6766, %v6773
      %v6776 = vunpack.c.l.s4 1983009808
      %v6777 = vunpack.c.0.s8 %v6776
      %v6778 = vlaneseq
      %v6779 = vshrl.u32 %v6778, 7
      %v6780 = vsub.s32 %v6777, %v6779
      %v6781 = vrot.slane %v6767, %v6780
      %v6782 = vcombine.low %v6774, %v6781
      %v6783 = vcombine.low %v6113, %v6122
      %v6784 = vcombine.low %v6131, %v6140
      %v6786 = vunpack.c.l.s4 1983009808
      %v6787 = vunpack.c.0.s8 %v6786
      %v6788 = vlaneseq
      %v6789 = vshrl.u32 %v6788, 7
      %v6790 = vsub.s32 %v6787, %v6789
      %v6791 = vrot.slane %v6783, %v6790
      %v6793 = vunpack.c.l.s4 1983009808
      %v6794 = vunpack.c.0.s8 %v6793
      %v6795 = vlaneseq
      %v6796 = vshrl.u32 %v6795, 7
      %v6797 = vsub.s32 %v6794, %v6796
      %v6798 = vrot.slane %v6784, %v6797
      %v6799 = vcombine.low %v6791, %v6798
      %6800 = vrot.lane.b32.xlu0 %v6782, 32
      %v6801 = vpop.permute.xlu0 %6800
      %6802 = vrot.lane.b32.xlu0 %v6799, 32
      %v6803 = vpop.permute.xlu0 %6802
      %v6814 = vcombine.low %v6078, %v6087
      %v6815 = vcombine.low %v6096, %v6105
      %v6817 = vunpack.c.l.s4 1983009808
      %v6818 = vunpack.c.0.s8 %v6817
      %v6819 = vlaneseq
      %v6820 = vshrl.u32 %v6819, 7
      %v6821 = vsub.s32 %v6818, %v6820
      %v6822 = vrot.slane %v6814, %v6821
      %v6824 = vunpack.c.l.s4 1983009808
      %v6825 = vunpack.c.0.s8 %v6824
      %v6826 = vlaneseq
      %v6827 = vshrl.u32 %v6826, 7
      %v6828 = vsub.s32 %v6825, %v6827
      %v6829 = vrot.slane %v6815, %v6828
      %v6830 = vcombine.low %v6822, %v6829
      %v6831 = vcombine.low %v6114, %v6123
      %v6832 = vcombine.low %v6132, %v6141
      %v6834 = vunpack.c.l.s4 1983009808
      %v6835 = vunpack.c.0.s8 %v6834
      %v6836 = vlaneseq
      %v6837 = vshrl.u32 %v6836, 7
      %v6838 = vsub.s32 %v6835, %v6837
      %v6839 = vrot.slane %v6831, %v6838
      %v6841 = vunpack.c.l.s4 1983009808
      %v6842 = vunpack.c.0.s8 %v6841
      %v6843 = vlaneseq
      %v6844 = vshrl.u32 %v6843, 7
      %v6845 = vsub.s32 %v6842, %v6844
      %v6846 = vrot.slane %v6832, %v6845
      %v6847 = vcombine.low %v6839, %v6846
      %6848 = vrot.lane.b32.xlu0 %v6830, 48
      %v6849 = vpop.permute.xlu0 %6848
      %6850 = vrot.lane.b32.xlu0 %v6847, 48
      %v6851 = vpop.permute.xlu0 %6850
      %v6862 = vcombine.low %v6149, %v6158
      %v6863 = vcombine.low %v6167, %v6176
      %v6865 = vunpack.c.l.s4 1983009808
      %v6866 = vunpack.c.0.s8 %v6865
      %v6867 = vlaneseq
      %v6868 = vshrl.u32 %v6867, 7
      %v6869 = vsub.s32 %v6866, %v6868
      %v6870 = vrot.slane %v6862, %v6869
      %v6872 = vunpack.c.l.s4 1983009808
      %v6873 = vunpack.c.0.s8 %v6872
      %v6874 = vlaneseq
      %v6875 = vshrl.u32 %v6874, 7
      %v6876 = vsub.s32 %v6873, %v6875
      %v6877 = vrot.slane %v6863, %v6876
      %v6878 = vcombine.low %v6870, %v6877
      %v6879 = vcombine.low %v6185, %v6194
      %v6880 = vcombine.low %v6203, %v6212
      %v6882 = vunpack.c.l.s4 1983009808
      %v6883 = vunpack.c.0.s8 %v6882
      %v6884 = vlaneseq
      %v6885 = vshrl.u32 %v6884, 7
      %v6886 = vsub.s32 %v6883, %v6885
      %v6887 = vrot.slane %v6879, %v6886
      %v6889 = vunpack.c.l.s4 1983009808
      %v6890 = vunpack.c.0.s8 %v6889
      %v6891 = vlaneseq
      %v6892 = vshrl.u32 %v6891, 7
      %v6893 = vsub.s32 %v6890, %v6892
      %v6894 = vrot.slane %v6880, %v6893
      %v6895 = vcombine.low %v6887, %v6894
      %6896 = vrot.lane.b32.xlu0 %v6878, 64
      %v6897 = vpop.permute.xlu0 %6896
      %6898 = vrot.lane.b32.xlu0 %v6895, 64
      %v6899 = vpop.permute.xlu0 %6898
      %v6910 = vcombine.low %v6150, %v6159
      %v6911 = vcombine.low %v6168, %v6177
      %v6913 = vunpack.c.l.s4 1983009808
      %v6914 = vunpack.c.0.s8 %v6913
      %v6915 = vlaneseq
      %v6916 = vshrl.u32 %v6915, 7
      %v6917 = vsub.s32 %v6914, %v6916
      %v6918 = vrot.slane %v6910, %v6917
      %v6920 = vunpack.c.l.s4 1983009808
      %v6921 = vunpack.c.0.s8 %v6920
      %v6922 = vlaneseq
      %v6923 = vshrl.u32 %v6922, 7
      %v6924 = vsub.s32 %v6921, %v6923
      %v6925 = vrot.slane %v6911, %v6924
      %v6926 = vcombine.low %v6918, %v6925
      %v6927 = vcombine.low %v6186, %v6195
      %v6928 = vcombine.low %v6204, %v6213
      %v6930 = vunpack.c.l.s4 1983009808
      %v6931 = vunpack.c.0.s8 %v6930
      %v6932 = vlaneseq
      %v6933 = vshrl.u32 %v6932, 7
      %v6934 = vsub.s32 %v6931, %v6933
      %v6935 = vrot.slane %v6927, %v6934
      %v6937 = vunpack.c.l.s4 1983009808
      %v6938 = vunpack.c.0.s8 %v6937
      %v6939 = vlaneseq
      %v6940 = vshrl.u32 %v6939, 7
      %v6941 = vsub.s32 %v6938, %v6940
      %v6942 = vrot.slane %v6928, %v6941
      %v6943 = vcombine.low %v6935, %v6942
      %6944 = vrot.lane.b32.xlu0 %v6926, 80
      %v6945 = vpop.permute.xlu0 %6944
      %6946 = vrot.lane.b32.xlu0 %v6943, 80
      %v6947 = vpop.permute.xlu0 %6946
      %v6958 = vcombine.low %v6221, %v6230
      %v6959 = vcombine.low %v6239, %v6248
      %v6961 = vunpack.c.l.s4 1983009808
      %v6962 = vunpack.c.0.s8 %v6961
      %v6963 = vlaneseq
      %v6964 = vshrl.u32 %v6963, 7
      %v6965 = vsub.s32 %v6962, %v6964
      %v6966 = vrot.slane %v6958, %v6965
      %v6968 = vunpack.c.l.s4 1983009808
      %v6969 = vunpack.c.0.s8 %v6968
      %v6970 = vlaneseq
      %v6971 = vshrl.u32 %v6970, 7
      %v6972 = vsub.s32 %v6969, %v6971
      %v6973 = vrot.slane %v6959, %v6972
      %v6974 = vcombine.low %v6966, %v6973
      %v6975 = vcombine.low %v6257, %v6266
      %v6976 = vcombine.low %v6275, %v6284
      %v6978 = vunpack.c.l.s4 1983009808
      %v6979 = vunpack.c.0.s8 %v6978
      %v6980 = vlaneseq
      %v6981 = vshrl.u32 %v6980, 7
      %v6982 = vsub.s32 %v6979, %v6981
      %v6983 = vrot.slane %v6975, %v6982
      %v6985 = vunpack.c.l.s4 1983009808
      %v6986 = vunpack.c.0.s8 %v6985
      %v6987 = vlaneseq
      %v6988 = vshrl.u32 %v6987, 7
      %v6989 = vsub.s32 %v6986, %v6988
      %v6990 = vrot.slane %v6976, %v6989
      %v6991 = vcombine.low %v6983, %v6990
      %6992 = vrot.lane.b32.xlu0 %v6974, 96
      %v6993 = vpop.permute.xlu0 %6992
      %6994 = vrot.lane.b32.xlu0 %v6991, 96
      %v6995 = vpop.permute.xlu0 %6994
      %v7006 = vcombine.low %v6222, %v6231
      %v7007 = vcombine.low %v6240, %v6249
      %v7009 = vunpack.c.l.s4 1983009808
      %v7010 = vunpack.c.0.s8 %v7009
      %v7011 = vlaneseq
      %v7012 = vshrl.u32 %v7011, 7
      %v7013 = vsub.s32 %v7010, %v7012
      %v7014 = vrot.slane %v7006, %v7013
      %v7016 = vunpack.c.l.s4 1983009808
      %v7017 = vunpack.c.0.s8 %v7016
      %v7018 = vlaneseq
      %v7019 = vshrl.u32 %v7018, 7
      %v7020 = vsub.s32 %v7017, %v7019
      %v7021 = vrot.slane %v7007, %v7020
      %v7022 = vcombine.low %v7014, %v7021
      %v7023 = vcombine.low %v6258, %v6267
      %v7024 = vcombine.low %v6276, %v6285
      %v7026 = vunpack.c.l.s4 1983009808
      %v7027 = vunpack.c.0.s8 %v7026
      %v7028 = vlaneseq
      %v7029 = vshrl.u32 %v7028, 7
      %v7030 = vsub.s32 %v7027, %v7029
      %v7031 = vrot.slane %v7023, %v7030
      %v7033 = vunpack.c.l.s4 1983009808
      %v7034 = vunpack.c.0.s8 %v7033
      %v7035 = vlaneseq
      %v7036 = vshrl.u32 %v7035, 7
      %v7037 = vsub.s32 %v7034, %v7036
      %v7038 = vrot.slane %v7024, %v7037
      %v7039 = vcombine.low %v7031, %v7038
      %7040 = vrot.lane.b32.xlu0 %v7022, 112
      %v7041 = vpop.permute.xlu0 %7040
      %7042 = vrot.lane.b32.xlu0 %v7039, 112
      %v7043 = vpop.permute.xlu0 %7042
      %v7046 = vsel %vm265, %v6310, %v6373
      %v7047 = vsel %vm265, %v6327, %v6375
      %v7048 = vsel %vm2076, %v7046, %v6421
      %v7049 = vsel %vm2076, %v7047, %v6423
      %vm7050 = vcmask 392192
      %v7051 = vsel %vm7050, %v7048, %v6469
      %v7052 = vsel %vm7050, %v7049, %v6471
      %vm7053 = vcmask 523264
      %v7054 = vsel %vm7053, %v7051, %v6517
      %v7055 = vsel %vm7053, %v7052, %v6519
      %vm7056 = vcmask 654336
      %v7057 = vsel %vm7056, %v7054, %v6565
      %v7058 = vsel %vm7056, %v7055, %v6567
      %vm7059 = vcmask 785408
      %v7060 = vsel %vm7059, %v7057, %v6613
      %v7061 = vsel %vm7059, %v7058, %v6615
      %vm7062 = vcmask 916480
      %v7063 = vsel %vm7062, %v7060, %v6661
      %v7064 = vsel %vm7062, %v7061, %v6663
      %v7065 = vsel %vm265, %v6690, %v6753
      %v7066 = vsel %vm265, %v6707, %v6755
      %v7067 = vsel %vm2076, %v7065, %v6801
      %v7068 = vsel %vm2076, %v7066, %v6803
      %v7069 = vsel %vm7050, %v7067, %v6849
      %v7070 = vsel %vm7050, %v7068, %v6851
      %v7071 = vsel %vm7053, %v7069, %v6897
      %v7072 = vsel %vm7053, %v7070, %v6899
      %v7073 = vsel %vm7056, %v7071, %v6945
      %v7074 = vsel %vm7056, %v7072, %v6947
      %v7075 = vsel %vm7059, %v7073, %v6993
      %v7076 = vsel %vm7059, %v7074, %v6995
      %v7077 = vsel %vm7062, %v7075, %v7041
      %v7078 = vsel %vm7062, %v7076, %v7043
      %7079 = vst [vmem:[%s221] sm:$0xff] %v7063
      %7080 = vst [vmem:[%s221 + $0x8] sm:$0xff] %v7077
      %7081 = vst [vmem:[%s221 + $0x10] sm:$0xff] %v7064
      %7082 = vst [vmem:[%s221 + $0x18] sm:$0xff] %v7078
      %p7083 = scmp.lt.s32.totalorder %s16, 1
      %s7084 = scalar_select %p7083, %s16, 1
      %s7085 = smul.addr %s7084, 4
      %s7086 = smul.addr %s7085, 8
      %s7087 = scalar_lea.vmem %s5, %s7086
      // Predicated region
      $region41: #{encoder_upsampler_forward.5} parent=39 // pred_check
        %p7088 = pneg %p144
      $region42: #{encoder_upsampler_forward.5} parent=39 // pred_check_branch
        %7090 = sbr.rel (%p7088) target = $region44
      $region43: #{encoder_upsampler_forward.5} parent=39 // pred_region
        _
      $region44: #{encoder_upsampler_forward.5} parent=39 // pred_fallthru
        _
    $region40: #{encoder_upsampler_forward.5} parent=5 // pred_fallthru
      _
    %p7091 = scmp.le.s32.totalorder 2, %s11
    // Predicated region
    $region45: #{encoder_upsampler_forward.5} parent=5 // pred_check
      %p7092 = pneg %p7091
    $region46: #{encoder_upsampler_forward.5} parent=5 // pred_check_branch
      %7094 = sbr.rel (%p7092) target = $region48
    $region47: #{encoder_upsampler_forward.5} parent=5 // pred_region
      %s7095 = ssub.s32 %s11, 2
      // Predicated region
      $region49: #{encoder_upsampler_forward.5} parent=47 // pred_check
        %p7096 = pneg %p150
      $region50: #{encoder_upsampler_forward.5} parent=47 // pred_check_branch
        %7098 = sbr.rel (%p7096) target = $region52
      $region51: #{encoder_upsampler_forward.5} parent=47 // pred_region
        %p7099 = scmp.lt.s32.totalorder %s17, 1
        %s7100 = scalar_select %p7099, %s17, 1
        %s7101 = smul.addr %s7100, 4
        %s7102 = smul.addr %s7101, 8
        %s7103 = scalar_lea.vmem %s5, %s7102
      $region52: #{encoder_upsampler_forward.5} parent=47 // pred_fallthru
        _
    $region48: #{encoder_upsampler_forward.5} parent=5 // pred_fallthru
      _
  $region6: #{encoder_upsampler_forward.5} parent=0 // loop_footer
    %s15 = sadd.s32 1, %s11
  $region7: #{encoder_upsampler_forward.5} parent=0 // loop_footer_branch
    %10 = sbr.rel target = $region3
  $region8: #{encoder_upsampler_forward.5} parent=0 // loop_exit
    _

</llo_original>
